<compile_context>
chip_gen: v6e
topology: v6e:2x2x1
jax: 0.10.0
libtpu: 0.0.40
codegen_flags: <defaults>
</compile_context>

<pallas_src>
import jax
import jax.numpy as jnp
from jax.experimental import pallas as pl
from jax.experimental.pallas import tpu as pltpu


def _round_up(x, m):
    return (x + m - 1) // m * m


# ----------------------------------------------------------------------------
# Kernel: one grid step = one (batch_shard, K-timestep chunk).  h/c live in
# VMEM scratch and are carried across the sequential ("arbitrary") chunk axis;
# they are re-initialized at chunk==0 for every batch shard.
# ----------------------------------------------------------------------------
def decoder_chunk_kernel(
    features_ref,                  # (Bs, N, E_enc)
    u_hs_ref,                      # (Bs, N, A)   = features @ U + u_b + w_b
    emb_gates_ref,                 # (Bs, K, 4D)  = emb @ W_ih_emb + b_ih + b_hh
    h_fused_w_ref,                 # (D, A + 4D)  = [w_w | hh_w]
    a_w_ref,                       # (1, A)
    ih_w_ctx_ref,                  # (E_enc, 4D)
    init_h_w_ref, init_h_b_ref,    # (E_enc, D), (1, D)
    init_c_w_ref, init_c_b_ref,    # (E_enc, D), (1, D)
    hs_ref,                        # out: (Bs, K, D)      hidden states
    alphas_ref,                    # out: (Bs, K, N_pad)  attention weights
    h_ref, c_ref,                  # scratch: (Bs, D) each, carried across chunks
):
    g = pl.program_id(1)
    feats = features_ref[...]                                   # (Bs, N, E_enc)
    u_hs = u_hs_ref[...]                                        # (Bs, N, A)

    # init_hidden_state(features) once per batch shard (first chunk only).
    @pl.when(g == 0)
    def _():
        mean_f = jnp.mean(feats, axis=1)                        # (Bs, E_enc)
        mf = mean_f.astype(init_h_w_ref.dtype)
        h_ref[...] = (
            jnp.dot(mf, init_h_w_ref[...], preferred_element_type=jnp.float32)
            + init_h_b_ref[...]
        )
        c_ref[...] = (
            jnp.dot(mf, init_c_w_ref[...], preferred_element_type=jnp.float32)
            + init_c_b_ref[...]
        )

    # Hoist all weight loads out of the unrolled time loop.
    h_fused_w = h_fused_w_ref[...]
    a_w = a_w_ref[...]
    ih_w_ctx = ih_w_ctx_ref[...]
    cdt = h_fused_w.dtype                                       # MXU compute dtype

    D = h_ref.shape[1]
    A = a_w_ref.shape[1]
    K = emb_gates_ref.shape[1]
    N = feats.shape[1]
    N_pad = alphas_ref.shape[2]

    h = h_ref[...]                                              # (Bs, D)
    c = c_ref[...]                                              # (Bs, D)

    hs_steps = []
    alpha_steps = []

    # Statically unrolled K-step recurrence (all ref indices are static).
    # NOTE: padded tail timesteps (S_pad > S) run on zeroed emb_gates and keep
    # updating the h/c carry; harmless because those outputs are stripped and
    # the final carry is never returned.
    for t in range(K):
        # --- fused h projection: one MXU launch -> w_ah AND h gate part -----
        h_proj = jnp.dot(h.astype(cdt), h_fused_w,
                         preferred_element_type=jnp.float32)    # (Bs, A + 4D)
        w_ah = h_proj[:, :A]                                    # (Bs, A)
        h_gates = h_proj[:, A:]                                 # (Bs, 4D)

        # --- attention (u_hs already holds u_b + w_b; a_b dropped) ----------
        combined = jnp.tanh(u_hs + w_ah[:, None, :])            # (Bs, N, A)
        scores = jnp.sum(combined * a_w[:, None, :], axis=-1)   # (Bs, N)
        scores = scores - jnp.max(scores, axis=1, keepdims=True)
        e = jnp.exp(scores)
        alpha = e * pl.reciprocal(jnp.sum(e, axis=1, keepdims=True), approx=True)
        context = jnp.sum(feats * alpha[:, :, None], axis=1)    # (Bs, E_enc)

        # --- LSTMCell (torch gate order i, f, g, o), concat-free ------------
        gates = (
            emb_gates_ref[:, t, :]                               # emb part + biases
            + jnp.dot(context.astype(cdt), ih_w_ctx,
                      preferred_element_type=jnp.float32)
            + h_gates
        )                                                        # (Bs, 4D)
        i_g = jax.nn.sigmoid(gates[:, 0 * D:1 * D])
        f_g = jax.nn.sigmoid(gates[:, 1 * D:2 * D])
        g_g = jnp.tanh(gates[:, 2 * D:3 * D])
        o_g = jax.nn.sigmoid(gates[:, 3 * D:4 * D])
        c = f_g * c + i_g * g_g
        h = o_g * jnp.tanh(c)

        hs_steps.append(h)
        alpha_steps.append(alpha)

    h_ref[...] = h
    c_ref[...] = c

    # One lane-dense full-block store per chunk for each output.
    hs_ref[...] = jnp.stack(hs_steps, axis=1)                    # (Bs, K, D)
    alphas_chunk = jnp.stack(alpha_steps, axis=1)                # (Bs, K, N)
    if N_pad != N:
        alphas_chunk = jnp.concatenate(
            [alphas_chunk, jnp.zeros((alphas_chunk.shape[0], K, N_pad - N),
                                     jnp.float32)], axis=-1)
    alphas_ref[...] = alphas_chunk


# ----------------------------------------------------------------------------
# Wrapper
# ----------------------------------------------------------------------------
def decoder_forward(params, features, captions, *, batch_shards=1, chunk=8,
                    compute_dtype=jnp.float32):
    B, N, E_enc = features.shape
    T = captions.shape[1]
    S = T - 1                                               # seq_length
    E_emb = params["embedding"].shape[1]
    A = params["u_w"].shape[1]
    D = params["init_h_w"].shape[1]
    V = params["fcn_w"].shape[1]

    # --- pad batch to a sublane-friendly multiple of 8 (stripped at the end) -
    B_pad = _round_up(B, 8)
    features_p = features
    captions_p = captions
    if B_pad != B:
        features_p = jnp.pad(features, ((0, B_pad - B), (0, 0), (0, 0)))
        captions_p = jnp.pad(captions, ((0, B_pad - B), (0, 0)))

    assert B_pad % batch_shards == 0, "padded batch must divide into shards"
    Bs = B_pad // batch_shards

    K = chunk                                               # timesteps per grid step
    S_pad = _round_up(S, K)
    N_pad = _round_up(N, 128)                               # lane-dense alphas stores
    num_chunks = S_pad // K

    # ---- one-shot parallel precompute (off the serial critical path) ----
    # Embedding gather (glue) + input-to-hidden gate contribution, biases folded.
    embeds = params["embedding"][captions_p[:, :S]]         # (B_pad, S, E_emb)
    ih_w_emb = params["ih_w"][:E_emb]                       # (E_emb, 4D)
    ih_w_ctx = params["ih_w"][E_emb:].astype(compute_dtype) # (E_enc, 4D)
    gate_bias = params["ih_b"] + params["hh_b"]             # (1, 4D)
    emb_gates = jnp.einsum("bse,ef->bsf", embeds, ih_w_emb) + gate_bias
    if S_pad != S:
        emb_gates = jnp.pad(emb_gates, ((0, 0), (0, S_pad - S), (0, 0)))

    # Time-invariant attention projection of the encoder features, with both
    # u_b AND w_b folded in (a_b is dropped: softmax is shift-invariant).
    u_hs = (jnp.einsum("bne,ea->bna", features_p, params["u_w"])
            + params["u_b"] + params["w_b"])

    # Fused h-weight: one MXU launch per step gives w_ah and the h gate part.
    h_fused_w = jnp.concatenate([params["w_w"], params["hh_w"]],
                                axis=1).astype(compute_dtype)   # (D, A + 4D)

    weights = [
        h_fused_w, params["a_w"], ih_w_ctx,
        params["init_h_w"], params["init_h_b"],
        params["init_c_w"], params["init_c_b"],
    ]

    def full_spec(x):
        nd = x.ndim
        # For v7x production sizes consider pipeline_mode=pl.Buffered(1) here
        # (constant-index weights don't need double-buffering).
        return pl.BlockSpec(x.shape, lambda b, g, nd=nd: (0,) * nd)

    in_specs = (
        [
            pl.BlockSpec((Bs, N, E_enc), lambda b, g: (b, 0, 0)),   # features
            pl.BlockSpec((Bs, N, A), lambda b, g: (b, 0, 0)),       # u_hs
            pl.BlockSpec((Bs, K, 4 * D), lambda b, g: (b, g, 0)),   # emb_gates chunk
        ]
        + [full_spec(w) for w in weights]
    )
    out_specs = [
        pl.BlockSpec((Bs, K, D), lambda b, g: (b, g, 0)),           # hs (batch-major)
        pl.BlockSpec((Bs, K, N_pad), lambda b, g: (b, g, 0)),       # alphas (lane-padded)
    ]
    out_shape = (
        jax.ShapeDtypeStruct((B_pad, S_pad, D), jnp.float32),
        jax.ShapeDtypeStruct((B_pad, S_pad, N_pad), jnp.float32),
    )

    hs_full, alphas_full = pl.pallas_call(
        decoder_chunk_kernel,
        out_shape=out_shape,
        grid_spec=pltpu.PrefetchScalarGridSpec(
            num_scalar_prefetch=0,
            grid=(batch_shards, num_chunks),
            in_specs=in_specs,
            out_specs=out_specs,
            scratch_shapes=[
                pltpu.VMEM((Bs, D), jnp.float32),   # h carry (per batch shard)
                pltpu.VMEM((Bs, D), jnp.float32),   # c carry (per batch shard)
            ],
        ),
        compiler_params=pltpu.CompilerParams(
            # batch-shard axis is embarrassingly parallel (megacore on v7x);
            # chunk axis carries the h/c recurrence -> sequential.
            dimension_semantics=("parallel", "arbitrary"),
        ),
    )(features_p, u_hs, emb_gates, *weights)

    hs = hs_full[:B, :S, :]                                     # (B, S, D)
    alphas = alphas_full[:B, :S, :N]                            # (B, S, N)

    # Vocab projection as one big parallel GEMM OUTSIDE the serial kernel
    # (dropout == identity at eval).
    preds = jnp.einsum("bsd,dv->bsv", hs, params["fcn_w"]) + params["fcn_b"]
    return preds, alphas


# ----------------------------------------------------------------------------
# Pure-JAX reference (mirrors the PyTorch forward) for correctness checking
# ----------------------------------------------------------------------------
def reference_forward(params, features, captions):
    B, N, E_enc = features.shape
    T = captions.shape[1]
    S = T - 1
    embeds = params["embedding"][captions]
    D = params["init_h_w"].shape[1]

    mean_f = features.mean(axis=1)
    h = mean_f @ params["init_h_w"] + params["init_h_b"][0]
    c = mean_f @ params["init_c_w"] + params["init_c_b"][0]

    preds, alphas = [], []
    for s in range(S):
        u_hs = jnp.einsum("bne,ea->bna", features, params["u_w"]) + params["u_b"][0]
        w_ah = h @ params["w_w"] + params["w_b"][0]
        comb = jnp.tanh(u_hs + w_ah[:, None, :])
        scores = jnp.einsum("bna,a->bn", comb, params["a_w"][0]) + params["a_b"][0, 0]
        alpha = jax.nn.softmax(scores, axis=1)
        context = (features * alpha[:, :, None]).sum(axis=1)
        x = jnp.concatenate([embeds[:, s], context], axis=1)
        gates = (x @ params["ih_w"] + params["ih_b"][0]
                 + h @ params["hh_w"] + params["hh_b"][0])
        i_g = jax.nn.sigmoid(gates[:, 0 * D:1 * D])
        f_g = jax.nn.sigmoid(gates[:, 1 * D:2 * D])
        g_g = jnp.tanh(gates[:, 2 * D:3 * D])
        o_g = jax.nn.sigmoid(gates[:, 3 * D:4 * D])
        c = f_g * c + i_g * g_g
        h = o_g * jnp.tanh(c)
        out = h @ params["fcn_w"] + params["fcn_b"][0]
        preds.append(out)
        alphas.append(alpha)
    return jnp.stack(preds, axis=1), jnp.stack(alphas, axis=1)


# ----------------------------------------------------------------------------
if __name__ == "__main__":
    # DecoderRNN(embed_size, vocab_size, attention_dim, encoder_dim, decoder_dim)
    B, N = 2, 8                  # batch, num image feature locations
    E_enc, D, A = 32, 32, 32     # encoder_dim, decoder_dim, attention_dim
    E_emb, V = 32, 64            # embed_size, vocab_size
    T = 9                        # caption length -> seq_length = 8

    key = jax.random.PRNGKey(0)
    ks = jax.random.split(key, 20)

    def init(k, shape, scale=0.05):
        return (scale * jax.random.normal(k, shape)).astype(jnp.float32)

    params = {
        "embedding": init(ks[0], (V, E_emb), 0.1),
        # Attention
        "u_w": init(ks[1], (E_enc, A)), "u_b": init(ks[2], (1, A)),
        "w_w": init(ks[3], (D, A)),     "w_b": init(ks[4], (1, A)),
        "a_w": init(ks[5], (1, A)),     "a_b": init(ks[6], (1, 1)),
        # LSTMCell (gate order i, f, g, o; weights stored as (in, 4D))
        "ih_w": init(ks[7], (E_emb + E_enc, 4 * D)), "ih_b": init(ks[8], (1, 4 * D)),
        "hh_w": init(ks[9], (D, 4 * D)),             "hh_b": init(ks[10], (1, 4 * D)),
        # init_h / init_c
        "init_h_w": init(ks[11], (E_enc, D)), "init_h_b": init(ks[12], (1, D)),
        "init_c_w": init(ks[13], (E_enc, D)), "init_c_b": init(ks[14], (1, D)),
        # fcn
        "fcn_w": init(ks[15], (D, V)), "fcn_b": init(ks[16], (1, V)),
    }
    # NOTE: f_beta linear exists in __init__ but is unused in forward(); omitted.
    # TODO(synk): greedy generate_caption() (data-dependent argmax loop) not ported.

    features = init(ks[17], (B, N, E_enc), 1.0)
    captions = jax.random.randint(ks[18], (B, T), 0, V, dtype=jnp.int32)

    preds, alphas = decoder_forward(params, features, captions)
    jax.block_until_ready((preds, alphas))

    ref_p, ref_a = reference_forward(params, features, captions)
    assert preds.shape == (B, T - 1, V) and alphas.shape == (B, T - 1, N)
    assert jnp.allclose(preds, ref_p, atol=1e-2, rtol=1e-2)
    assert jnp.allclose(alphas, ref_a, atol=1e-2, rtol=1e-2)

    print("KERNEL_OK")
</pallas_src>

<mosaic_0001>
module attributes {stable_mosaic.version = 11 : i64} {
  func.func @decoder_chunk_kernel(%arg0: i32, %arg1: i32, %arg2: memref<8x8x32xf32, #tpu.memory_space<vmem>>, %arg3: memref<8x8x32xf32, #tpu.memory_space<vmem>>, %arg4: memref<8x8x128xf32, #tpu.memory_space<vmem>>, %arg5: memref<32x160xf32, #tpu.memory_space<vmem>>, %arg6: memref<1x32xf32, #tpu.memory_space<vmem>>, %arg7: memref<32x128xf32, #tpu.memory_space<vmem>>, %arg8: memref<32x32xf32, #tpu.memory_space<vmem>>, %arg9: memref<1x32xf32, #tpu.memory_space<vmem>>, %arg10: memref<32x32xf32, #tpu.memory_space<vmem>>, %arg11: memref<1x32xf32, #tpu.memory_space<vmem>>, %arg12: memref<8x8x32xf32, #tpu.memory_space<vmem>>, %arg13: memref<8x8x128xf32, #tpu.memory_space<vmem>>, %arg14: memref<8x32xf32, #tpu.memory_space<vmem>>, %arg15: memref<8x32xf32, #tpu.memory_space<vmem>>) attributes {dimension_semantics = [#tpu.dimension_semantics<parallel>, #tpu.dimension_semantics<arbitrary>], iteration_bounds = array<i64: 1, 1>, scalar_prefetch = 0 : i64, scratch_operands = 2 : i64, tpu.core_type = #tpu.core_type<tc>, window_params = [{transform_indices = @transform_0, window_bounds = array<i64: 8, 8, 32>}, {transform_indices = @transform_1, window_bounds = array<i64: 8, 8, 32>}, {transform_indices = @transform_2, window_bounds = array<i64: 8, 8, 128>}, {pipeline_mode = #tpu.pipeline_mode<synchronous>, transform_indices = @transform_3, window_bounds = array<i64: 32, 160>}, {pipeline_mode = #tpu.pipeline_mode<synchronous>, transform_indices = @transform_4, window_bounds = array<i64: 1, 32>}, {pipeline_mode = #tpu.pipeline_mode<synchronous>, transform_indices = @transform_5, window_bounds = array<i64: 32, 128>}, {pipeline_mode = #tpu.pipeline_mode<synchronous>, transform_indices = @transform_6, window_bounds = array<i64: 32, 32>}, {pipeline_mode = #tpu.pipeline_mode<synchronous>, transform_indices = @transform_7, window_bounds = array<i64: 1, 32>}, {pipeline_mode = #tpu.pipeline_mode<synchronous>, transform_indices = @transform_8, window_bounds = array<i64: 32, 32>}, {pipeline_mode = #tpu.pipeline_mode<synchronous>, transform_indices = @transform_9, window_bounds = array<i64: 1, 32>}, {transform_indices = @transform_10, window_bounds = array<i64: 8, 8, 32>}, {transform_indices = @transform_11, window_bounds = array<i64: 8, 8, 128>}]} {
    %c0 = arith.constant 0 : index
    %c0_0 = arith.constant 0 : index
    %c0_1 = arith.constant 0 : index
    %0 = vector.load %arg2[%c0, %c0_0, %c0_1] : memref<8x8x32xf32, #tpu.memory_space<vmem>>, vector<8x8x32xf32>
    %c0_2 = arith.constant 0 : index
    %c0_3 = arith.constant 0 : index
    %c0_4 = arith.constant 0 : index
    %1 = vector.load %arg3[%c0_2, %c0_3, %c0_4] : memref<8x8x32xf32, #tpu.memory_space<vmem>>, vector<8x8x32xf32>
    %c0_i32 = arith.constant 0 : i32
    %2 = arith.cmpi eq, %arg1, %c0_i32 : i32
    %3 = arith.extui %2 : i1 to i32
    %c0_i32_5 = arith.constant 0 : i32
    %4 = arith.cmpi ne, %3, %c0_i32_5 : i32
    scf.if %4 {
      %cst_115 = arith.constant dense<0.000000e+00> : vector<8x32xf32>
      %474 = vector.multi_reduction <add>, %0, %cst_115 [1] : vector<8x8x32xf32> to vector<8x32xf32>
      %cst_116 = arith.constant 8.000000e+00 : f32
      %475 = vector.broadcast %cst_116 : f32 to vector<8x32xf32>
      %476 = arith.divf %474, %475 : vector<8x32xf32>
      %c0_117 = arith.constant 0 : index
      %c0_118 = arith.constant 0 : index
      %477 = vector.load %arg8[%c0_117, %c0_118] : memref<32x32xf32, #tpu.memory_space<vmem>>, vector<32x32xf32>
      %cst_119 = arith.constant dense<0.000000e+00> : vector<8x32xf32>
      %478 = tpu.matmul %476, %477, %cst_119 {dimension_numbers = #tpu.dot_dimension_numbers<[1], [0], [0], [1], [0, 0, 1, 1], [], []>} : vector<8x32xf32>, vector<32x32xf32>, vector<8x32xf32> -> vector<8x32xf32>
      %c0_120 = arith.constant 0 : index
      %c0_121 = arith.constant 0 : index
      %479 = vector.load %arg9[%c0_120, %c0_121] : memref<1x32xf32, #tpu.memory_space<vmem>>, vector<1x32xf32>
      %480 = vector.broadcast %479 : vector<1x32xf32> to vector<8x32xf32>
      %481 = arith.addf %478, %480 : vector<8x32xf32>
      %c0_122 = arith.constant 0 : index
      %c0_123 = arith.constant 0 : index
      %482 = vector.load %arg14[%c0_122, %c0_123] : memref<8x32xf32, #tpu.memory_space<vmem>>, vector<8x32xf32>
      tpu.vector_store %arg14[%c0_122, %c0_123], %481 {strides = array<i32>} : memref<8x32xf32, #tpu.memory_space<vmem>>, vector<8x32xf32>,
      %c0_124 = arith.constant 0 : index
      %c0_125 = arith.constant 0 : index
      %483 = vector.load %arg10[%c0_124, %c0_125] : memref<32x32xf32, #tpu.memory_space<vmem>>, vector<32x32xf32>
      %cst_126 = arith.constant dense<0.000000e+00> : vector<8x32xf32>
      %484 = tpu.matmul %476, %483, %cst_126 {dimension_numbers = #tpu.dot_dimension_numbers<[1], [0], [0], [1], [0, 0, 1, 1], [], []>} : vector<8x32xf32>, vector<32x32xf32>, vector<8x32xf32> -> vector<8x32xf32>
      %c0_127 = arith.constant 0 : index
      %c0_128 = arith.constant 0 : index
      %485 = vector.load %arg11[%c0_127, %c0_128] : memref<1x32xf32, #tpu.memory_space<vmem>>, vector<1x32xf32>
      %486 = vector.broadcast %485 : vector<1x32xf32> to vector<8x32xf32>
      %487 = arith.addf %484, %486 : vector<8x32xf32>
      %c0_129 = arith.constant 0 : index
      %c0_130 = arith.constant 0 : index
      %488 = vector.load %arg15[%c0_129, %c0_130] : memref<8x32xf32, #tpu.memory_space<vmem>>, vector<8x32xf32>
      tpu.vector_store %arg15[%c0_129, %c0_130], %487 {strides = array<i32>} : memref<8x32xf32, #tpu.memory_space<vmem>>, vector<8x32xf32>,
    } else {
    }
    %c0_6 = arith.constant 0 : index
    %c0_7 = arith.constant 0 : index
    %5 = vector.load %arg5[%c0_6, %c0_7] : memref<32x160xf32, #tpu.memory_space<vmem>>, vector<32x160xf32>
    %c0_8 = arith.constant 0 : index
    %c0_9 = arith.constant 0 : index
    %6 = vector.load %arg6[%c0_8, %c0_9] : memref<1x32xf32, #tpu.memory_space<vmem>>, vector<1x32xf32>
    %c0_10 = arith.constant 0 : index
    %c0_11 = arith.constant 0 : index
    %7 = vector.load %arg7[%c0_10, %c0_11] : memref<32x128xf32, #tpu.memory_space<vmem>>, vector<32x128xf32>
    %c0_12 = arith.constant 0 : index
    %c0_13 = arith.constant 0 : index
    %8 = vector.load %arg14[%c0_12, %c0_13] : memref<8x32xf32, #tpu.memory_space<vmem>>, vector<8x32xf32>
    %c0_14 = arith.constant 0 : index
    %c0_15 = arith.constant 0 : index
    %9 = vector.load %arg15[%c0_14, %c0_15] : memref<8x32xf32, #tpu.memory_space<vmem>>, vector<8x32xf32>
    %cst = arith.constant dense<0.000000e+00> : vector<8x160xf32>
    %10 = tpu.matmul %8, %5, %cst {dimension_numbers = #tpu.dot_dimension_numbers<[1], [0], [0], [1], [0, 0, 1, 1], [], []>} : vector<8x32xf32>, vector<32x160xf32>, vector<8x160xf32> -> vector<8x160xf32>
    %11 = vector.extract_strided_slice %10 {offsets = [0, 0], sizes = [8, 32], strides = [1, 1]} : vector<8x160xf32> to vector<8x32xf32>
    %12 = vector.extract_strided_slice %10 {offsets = [0, 32], sizes = [8, 128], strides = [1, 1]} : vector<8x160xf32> to vector<8x128xf32>
    %13 = vector.shape_cast %11 : vector<8x32xf32> to vector<8x1x32xf32>
    %14 = vector.broadcast %13 : vector<8x1x32xf32> to vector<8x8x32xf32>
    %15 = arith.addf %1, %14 : vector<8x8x32xf32>
    %16 = math.tanh %15 : vector<8x8x32xf32>
    %17 = vector.shape_cast %6 : vector<1x32xf32> to vector<1x1x32xf32>
    %18 = vector.broadcast %17 : vector<1x1x32xf32> to vector<8x8x32xf32>
    %19 = arith.mulf %16, %18 : vector<8x8x32xf32>
    %cst_16 = arith.constant dense<0.000000e+00> : vector<8x8xf32>
    %20 = vector.multi_reduction <add>, %19, %cst_16 [2] : vector<8x8x32xf32> to vector<8x8xf32>
    %cst_17 = arith.constant dense<0xFF800000> : vector<8xf32>
    %21 = vector.multi_reduction <maximumf>, %20, %cst_17 [1] : vector<8x8xf32> to vector<8xf32>
    %22 = vector.shape_cast %21 : vector<8xf32> to vector<8x1xf32>
    %23 = vector.broadcast %22 : vector<8x1xf32> to vector<8x8xf32>
    %24 = arith.subf %20, %23 : vector<8x8xf32>
    %25 = math.exp %24 : vector<8x8xf32>
    %cst_18 = arith.constant dense<0.000000e+00> : vector<8xf32>
    %26 = vector.multi_reduction <add>, %25, %cst_18 [1] : vector<8x8xf32> to vector<8xf32>
    %27 = vector.shape_cast %26 : vector<8xf32> to vector<8x1xf32>
    %28 = tpu.reciprocal %27 {approx = true} : vector<8x1xf32> -> vector<8x1xf32>
    %29 = vector.broadcast %28 : vector<8x1xf32> to vector<8x8xf32>
    %30 = arith.mulf %25, %29 : vector<8x8xf32>
    %31 = vector.shape_cast %30 : vector<8x8xf32> to vector<8x8x1xf32>
    %32 = vector.broadcast %31 : vector<8x8x1xf32> to vector<8x8x32xf32>
    %33 = arith.mulf %0, %32 : vector<8x8x32xf32>
    %cst_19 = arith.constant dense<0.000000e+00> : vector<8x32xf32>
    %34 = vector.multi_reduction <add>, %33, %cst_19 [1] : vector<8x8x32xf32> to vector<8x32xf32>
    %c0_20 = arith.constant 0 : index
    %c0_21 = arith.constant 0 : index
    %c0_22 = arith.constant 0 : index
    %35 = vector.load %arg4[%c0_20, %c0_21, %c0_22] : memref<8x8x128xf32, #tpu.memory_space<vmem>>, vector<8x1x128xf32>
    %36 = vector.shape_cast %35 : vector<8x1x128xf32> to vector<8x128xf32>
    %cst_23 = arith.constant dense<0.000000e+00> : vector<8x128xf32>
    %37 = tpu.matmul %34, %7, %cst_23 {dimension_numbers = #tpu.dot_dimension_numbers<[1], [0], [0], [1], [0, 0, 1, 1], [], []>} : vector<8x32xf32>, vector<32x128xf32>, vector<8x128xf32> -> vector<8x128xf32>
    %38 = arith.addf %36, %37 : vector<8x128xf32>
    %39 = arith.addf %38, %12 : vector<8x128xf32>
    %40 = vector.extract_strided_slice %39 {offsets = [0, 0], sizes = [8, 32], strides = [1, 1]} : vector<8x128xf32> to vector<8x32xf32>
    %41 = arith.negf %40 : vector<8x32xf32>
    %42 = math.exp %41 : vector<8x32xf32>
    %cst_24 = arith.constant 1.000000e+00 : f32
    %43 = vector.broadcast %cst_24 : f32 to vector<8x32xf32>
    %44 = arith.addf %43, %42 : vector<8x32xf32>
    %45 = arith.divf %43, %44 : vector<8x32xf32>
    %46 = vector.extract_strided_slice %39 {offsets = [0, 32], sizes = [8, 32], strides = [1, 1]} : vector<8x128xf32> to vector<8x32xf32>
    %47 = arith.negf %46 : vector<8x32xf32>
    %48 = math.exp %47 : vector<8x32xf32>
    %cst_25 = arith.constant 1.000000e+00 : f32
    %49 = vector.broadcast %cst_25 : f32 to vector<8x32xf32>
    %50 = arith.addf %49, %48 : vector<8x32xf32>
    %51 = arith.divf %49, %50 : vector<8x32xf32>
    %52 = vector.extract_strided_slice %39 {offsets = [0, 64], sizes = [8, 32], strides = [1, 1]} : vector<8x128xf32> to vector<8x32xf32>
    %53 = math.tanh %52 : vector<8x32xf32>
    %54 = vector.extract_strided_slice %39 {offsets = [0, 96], sizes = [8, 32], strides = [1, 1]} : vector<8x128xf32> to vector<8x32xf32>
    %55 = arith.negf %54 : vector<8x32xf32>
    %56 = math.exp %55 : vector<8x32xf32>
    %cst_26 = arith.constant 1.000000e+00 : f32
    %57 = vector.broadcast %cst_26 : f32 to vector<8x32xf32>
    %58 = arith.addf %57, %56 : vector<8x32xf32>
    %59 = arith.divf %57, %58 : vector<8x32xf32>
    %60 = arith.mulf %51, %9 : vector<8x32xf32>
    %61 = arith.mulf %45, %53 : vector<8x32xf32>
    %62 = arith.addf %60, %61 : vector<8x32xf32>
    %63 = math.tanh %62 : vector<8x32xf32>
    %64 = arith.mulf %59, %63 : vector<8x32xf32>
    %cst_27 = arith.constant dense<0.000000e+00> : vector<8x160xf32>
    %65 = tpu.matmul %64, %5, %cst_27 {dimension_numbers = #tpu.dot_dimension_numbers<[1], [0], [0], [1], [0, 0, 1, 1], [], []>} : vector<8x32xf32>, vector<32x160xf32>, vector<8x160xf32> -> vector<8x160xf32>
    %66 = vector.extract_strided_slice %65 {offsets = [0, 0], sizes = [8, 32], strides = [1, 1]} : vector<8x160xf32> to vector<8x32xf32>
    %67 = vector.extract_strided_slice %65 {offsets = [0, 32], sizes = [8, 128], strides = [1, 1]} : vector<8x160xf32> to vector<8x128xf32>
    %68 = vector.shape_cast %66 : vector<8x32xf32> to vector<8x1x32xf32>
    %69 = vector.broadcast %68 : vector<8x1x32xf32> to vector<8x8x32xf32>
    %70 = arith.addf %1, %69 : vector<8x8x32xf32>
    %71 = math.tanh %70 : vector<8x8x32xf32>
    %72 = vector.shape_cast %6 : vector<1x32xf32> to vector<1x1x32xf32>
    %73 = vector.broadcast %72 : vector<1x1x32xf32> to vector<8x8x32xf32>
    %74 = arith.mulf %71, %73 : vector<8x8x32xf32>
    %cst_28 = arith.constant dense<0.000000e+00> : vector<8x8xf32>
    %75 = vector.multi_reduction <add>, %74, %cst_28 [2] : vector<8x8x32xf32> to vector<8x8xf32>
    %cst_29 = arith.constant dense<0xFF800000> : vector<8xf32>
    %76 = vector.multi_reduction <maximumf>, %75, %cst_29 [1] : vector<8x8xf32> to vector<8xf32>
    %77 = vector.shape_cast %76 : vector<8xf32> to vector<8x1xf32>
    %78 = vector.broadcast %77 : vector<8x1xf32> to vector<8x8xf32>
    %79 = arith.subf %75, %78 : vector<8x8xf32>
    %80 = math.exp %79 : vector<8x8xf32>
    %cst_30 = arith.constant dense<0.000000e+00> : vector<8xf32>
    %81 = vector.multi_reduction <add>, %80, %cst_30 [1] : vector<8x8xf32> to vector<8xf32>
    %82 = vector.shape_cast %81 : vector<8xf32> to vector<8x1xf32>
    %83 = tpu.reciprocal %82 {approx = true} : vector<8x1xf32> -> vector<8x1xf32>
    %84 = vector.broadcast %83 : vector<8x1xf32> to vector<8x8xf32>
    %85 = arith.mulf %80, %84 : vector<8x8xf32>
    %86 = vector.shape_cast %85 : vector<8x8xf32> to vector<8x8x1xf32>
    %87 = vector.broadcast %86 : vector<8x8x1xf32> to vector<8x8x32xf32>
    %88 = arith.mulf %0, %87 : vector<8x8x32xf32>
    %cst_31 = arith.constant dense<0.000000e+00> : vector<8x32xf32>
    %89 = vector.multi_reduction <add>, %88, %cst_31 [1] : vector<8x8x32xf32> to vector<8x32xf32>
    %c0_32 = arith.constant 0 : index
    %c1 = arith.constant 1 : index
    %c0_33 = arith.constant 0 : index
    %90 = vector.load %arg4[%c0_32, %c1, %c0_33] : memref<8x8x128xf32, #tpu.memory_space<vmem>>, vector<8x1x128xf32>
    %91 = vector.shape_cast %90 : vector<8x1x128xf32> to vector<8x128xf32>
    %cst_34 = arith.constant dense<0.000000e+00> : vector<8x128xf32>
    %92 = tpu.matmul %89, %7, %cst_34 {dimension_numbers = #tpu.dot_dimension_numbers<[1], [0], [0], [1], [0, 0, 1, 1], [], []>} : vector<8x32xf32>, vector<32x128xf32>, vector<8x128xf32> -> vector<8x128xf32>
    %93 = arith.addf %91, %92 : vector<8x128xf32>
    %94 = arith.addf %93, %67 : vector<8x128xf32>
    %95 = vector.extract_strided_slice %94 {offsets = [0, 0], sizes = [8, 32], strides = [1, 1]} : vector<8x128xf32> to vector<8x32xf32>
    %96 = arith.negf %95 : vector<8x32xf32>
    %97 = math.exp %96 : vector<8x32xf32>
    %cst_35 = arith.constant 1.000000e+00 : f32
    %98 = vector.broadcast %cst_35 : f32 to vector<8x32xf32>
    %99 = arith.addf %98, %97 : vector<8x32xf32>
    %100 = arith.divf %98, %99 : vector<8x32xf32>
    %101 = vector.extract_strided_slice %94 {offsets = [0, 32], sizes = [8, 32], strides = [1, 1]} : vector<8x128xf32> to vector<8x32xf32>
    %102 = arith.negf %101 : vector<8x32xf32>
    %103 = math.exp %102 : vector<8x32xf32>
    %cst_36 = arith.constant 1.000000e+00 : f32
    %104 = vector.broadcast %cst_36 : f32 to vector<8x32xf32>
    %105 = arith.addf %104, %103 : vector<8x32xf32>
    %106 = arith.divf %104, %105 : vector<8x32xf32>
    %107 = vector.extract_strided_slice %94 {offsets = [0, 64], sizes = [8, 32], strides = [1, 1]} : vector<8x128xf32> to vector<8x32xf32>
    %108 = math.tanh %107 : vector<8x32xf32>
    %109 = vector.extract_strided_slice %94 {offsets = [0, 96], sizes = [8, 32], strides = [1, 1]} : vector<8x128xf32> to vector<8x32xf32>
    %110 = arith.negf %109 : vector<8x32xf32>
    %111 = math.exp %110 : vector<8x32xf32>
    %cst_37 = arith.constant 1.000000e+00 : f32
    %112 = vector.broadcast %cst_37 : f32 to vector<8x32xf32>
    %113 = arith.addf %112, %111 : vector<8x32xf32>
    %114 = arith.divf %112, %113 : vector<8x32xf32>
    %115 = arith.mulf %106, %62 : vector<8x32xf32>
    %116 = arith.mulf %100, %108 : vector<8x32xf32>
    %117 = arith.addf %115, %116 : vector<8x32xf32>
    %118 = math.tanh %117 : vector<8x32xf32>
    %119 = arith.mulf %114, %118 : vector<8x32xf32>
    %cst_38 = arith.constant dense<0.000000e+00> : vector<8x160xf32>
    %120 = tpu.matmul %119, %5, %cst_38 {dimension_numbers = #tpu.dot_dimension_numbers<[1], [0], [0], [1], [0, 0, 1, 1], [], []>} : vector<8x32xf32>, vector<32x160xf32>, vector<8x160xf32> -> vector<8x160xf32>
    %121 = vector.extract_strided_slice %120 {offsets = [0, 0], sizes = [8, 32], strides = [1, 1]} : vector<8x160xf32> to vector<8x32xf32>
    %122 = vector.extract_strided_slice %120 {offsets = [0, 32], sizes = [8, 128], strides = [1, 1]} : vector<8x160xf32> to vector<8x128xf32>
    %123 = vector.shape_cast %121 : vector<8x32xf32> to vector<8x1x32xf32>
    %124 = vector.broadcast %123 : vector<8x1x32xf32> to vector<8x8x32xf32>
    %125 = arith.addf %1, %124 : vector<8x8x32xf32>
    %126 = math.tanh %125 : vector<8x8x32xf32>
    %127 = vector.shape_cast %6 : vector<1x32xf32> to vector<1x1x32xf32>
    %128 = vector.broadcast %127 : vector<1x1x32xf32> to vector<8x8x32xf32>
    %129 = arith.mulf %126, %128 : vector<8x8x32xf32>
    %cst_39 = arith.constant dense<0.000000e+00> : vector<8x8xf32>
    %130 = vector.multi_reduction <add>, %129, %cst_39 [2] : vector<8x8x32xf32> to vector<8x8xf32>
    %cst_40 = arith.constant dense<0xFF800000> : vector<8xf32>
    %131 = vector.multi_reduction <maximumf>, %130, %cst_40 [1] : vector<8x8xf32> to vector<8xf32>
    %132 = vector.shape_cast %131 : vector<8xf32> to vector<8x1xf32>
    %133 = vector.broadcast %132 : vector<8x1xf32> to vector<8x8xf32>
    %134 = arith.subf %130, %133 : vector<8x8xf32>
    %135 = math.exp %134 : vector<8x8xf32>
    %cst_41 = arith.constant dense<0.000000e+00> : vector<8xf32>
    %136 = vector.multi_reduction <add>, %135, %cst_41 [1] : vector<8x8xf32> to vector<8xf32>
    %137 = vector.shape_cast %136 : vector<8xf32> to vector<8x1xf32>
    %138 = tpu.reciprocal %137 {approx = true} : vector<8x1xf32> -> vector<8x1xf32>
    %139 = vector.broadcast %138 : vector<8x1xf32> to vector<8x8xf32>
    %140 = arith.mulf %135, %139 : vector<8x8xf32>
    %141 = vector.shape_cast %140 : vector<8x8xf32> to vector<8x8x1xf32>
    %142 = vector.broadcast %141 : vector<8x8x1xf32> to vector<8x8x32xf32>
    %143 = arith.mulf %0, %142 : vector<8x8x32xf32>
    %cst_42 = arith.constant dense<0.000000e+00> : vector<8x32xf32>
    %144 = vector.multi_reduction <add>, %143, %cst_42 [1] : vector<8x8x32xf32> to vector<8x32xf32>
    %c0_43 = arith.constant 0 : index
    %c2 = arith.constant 2 : index
    %c0_44 = arith.constant 0 : index
    %145 = vector.load %arg4[%c0_43, %c2, %c0_44] : memref<8x8x128xf32, #tpu.memory_space<vmem>>, vector<8x1x128xf32>
    %146 = vector.shape_cast %145 : vector<8x1x128xf32> to vector<8x128xf32>
    %cst_45 = arith.constant dense<0.000000e+00> : vector<8x128xf32>
    %147 = tpu.matmul %144, %7, %cst_45 {dimension_numbers = #tpu.dot_dimension_numbers<[1], [0], [0], [1], [0, 0, 1, 1], [], []>} : vector<8x32xf32>, vector<32x128xf32>, vector<8x128xf32> -> vector<8x128xf32>
    %148 = arith.addf %146, %147 : vector<8x128xf32>
    %149 = arith.addf %148, %122 : vector<8x128xf32>
    %150 = vector.extract_strided_slice %149 {offsets = [0, 0], sizes = [8, 32], strides = [1, 1]} : vector<8x128xf32> to vector<8x32xf32>
    %151 = arith.negf %150 : vector<8x32xf32>
    %152 = math.exp %151 : vector<8x32xf32>
    %cst_46 = arith.constant 1.000000e+00 : f32
    %153 = vector.broadcast %cst_46 : f32 to vector<8x32xf32>
    %154 = arith.addf %153, %152 : vector<8x32xf32>
    %155 = arith.divf %153, %154 : vector<8x32xf32>
    %156 = vector.extract_strided_slice %149 {offsets = [0, 32], sizes = [8, 32], strides = [1, 1]} : vector<8x128xf32> to vector<8x32xf32>
    %157 = arith.negf %156 : vector<8x32xf32>
    %158 = math.exp %157 : vector<8x32xf32>
    %cst_47 = arith.constant 1.000000e+00 : f32
    %159 = vector.broadcast %cst_47 : f32 to vector<8x32xf32>
    %160 = arith.addf %159, %158 : vector<8x32xf32>
    %161 = arith.divf %159, %160 : vector<8x32xf32>
    %162 = vector.extract_strided_slice %149 {offsets = [0, 64], sizes = [8, 32], strides = [1, 1]} : vector<8x128xf32> to vector<8x32xf32>
    %163 = math.tanh %162 : vector<8x32xf32>
    %164 = vector.extract_strided_slice %149 {offsets = [0, 96], sizes = [8, 32], strides = [1, 1]} : vector<8x128xf32> to vector<8x32xf32>
    %165 = arith.negf %164 : vector<8x32xf32>
    %166 = math.exp %165 : vector<8x32xf32>
    %cst_48 = arith.constant 1.000000e+00 : f32
    %167 = vector.broadcast %cst_48 : f32 to vector<8x32xf32>
    %168 = arith.addf %167, %166 : vector<8x32xf32>
    %169 = arith.divf %167, %168 : vector<8x32xf32>
    %170 = arith.mulf %161, %117 : vector<8x32xf32>
    %171 = arith.mulf %155, %163 : vector<8x32xf32>
    %172 = arith.addf %170, %171 : vector<8x32xf32>
    %173 = math.tanh %172 : vector<8x32xf32>
    %174 = arith.mulf %169, %173 : vector<8x32xf32>
    %cst_49 = arith.constant dense<0.000000e+00> : vector<8x160xf32>
    %175 = tpu.matmul %174, %5, %cst_49 {dimension_numbers = #tpu.dot_dimension_numbers<[1], [0], [0], [1], [0, 0, 1, 1], [], []>} : vector<8x32xf32>, vector<32x160xf32>, vector<8x160xf32> -> vector<8x160xf32>
    %176 = vector.extract_strided_slice %175 {offsets = [0, 0], sizes = [8, 32], strides = [1, 1]} : vector<8x160xf32> to vector<8x32xf32>
    %177 = vector.extract_strided_slice %175 {offsets = [0, 32], sizes = [8, 128], strides = [1, 1]} : vector<8x160xf32> to vector<8x128xf32>
    %178 = vector.shape_cast %176 : vector<8x32xf32> to vector<8x1x32xf32>
    %179 = vector.broadcast %178 : vector<8x1x32xf32> to vector<8x8x32xf32>
    %180 = arith.addf %1, %179 : vector<8x8x32xf32>
    %181 = math.tanh %180 : vector<8x8x32xf32>
    %182 = vector.shape_cast %6 : vector<1x32xf32> to vector<1x1x32xf32>
    %183 = vector.broadcast %182 : vector<1x1x32xf32> to vector<8x8x32xf32>
    %184 = arith.mulf %181, %183 : vector<8x8x32xf32>
    %cst_50 = arith.constant dense<0.000000e+00> : vector<8x8xf32>
    %185 = vector.multi_reduction <add>, %184, %cst_50 [2] : vector<8x8x32xf32> to vector<8x8xf32>
    %cst_51 = arith.constant dense<0xFF800000> : vector<8xf32>
    %186 = vector.multi_reduction <maximumf>, %185, %cst_51 [1] : vector<8x8xf32> to vector<8xf32>
    %187 = vector.shape_cast %186 : vector<8xf32> to vector<8x1xf32>
    %188 = vector.broadcast %187 : vector<8x1xf32> to vector<8x8xf32>
    %189 = arith.subf %185, %188 : vector<8x8xf32>
    %190 = math.exp %189 : vector<8x8xf32>
    %cst_52 = arith.constant dense<0.000000e+00> : vector<8xf32>
    %191 = vector.multi_reduction <add>, %190, %cst_52 [1] : vector<8x8xf32> to vector<8xf32>
    %192 = vector.shape_cast %191 : vector<8xf32> to vector<8x1xf32>
    %193 = tpu.reciprocal %192 {approx = true} : vector<8x1xf32> -> vector<8x1xf32>
    %194 = vector.broadcast %193 : vector<8x1xf32> to vector<8x8xf32>
    %195 = arith.mulf %190, %194 : vector<8x8xf32>
    %196 = vector.shape_cast %195 : vector<8x8xf32> to vector<8x8x1xf32>
    %197 = vector.broadcast %196 : vector<8x8x1xf32> to vector<8x8x32xf32>
    %198 = arith.mulf %0, %197 : vector<8x8x32xf32>
    %cst_53 = arith.constant dense<0.000000e+00> : vector<8x32xf32>
    %199 = vector.multi_reduction <add>, %198, %cst_53 [1] : vector<8x8x32xf32> to vector<8x32xf32>
    %c0_54 = arith.constant 0 : index
    %c3 = arith.constant 3 : index
    %c0_55 = arith.constant 0 : index
    %200 = vector.load %arg4[%c0_54, %c3, %c0_55] : memref<8x8x128xf32, #tpu.memory_space<vmem>>, vector<8x1x128xf32>
    %201 = vector.shape_cast %200 : vector<8x1x128xf32> to vector<8x128xf32>
    %cst_56 = arith.constant dense<0.000000e+00> : vector<8x128xf32>
    %202 = tpu.matmul %199, %7, %cst_56 {dimension_numbers = #tpu.dot_dimension_numbers<[1], [0], [0], [1], [0, 0, 1, 1], [], []>} : vector<8x32xf32>, vector<32x128xf32>, vector<8x128xf32> -> vector<8x128xf32>
    %203 = arith.addf %201, %202 : vector<8x128xf32>
    %204 = arith.addf %203, %177 : vector<8x128xf32>
    %205 = vector.extract_strided_slice %204 {offsets = [0, 0], sizes = [8, 32], strides = [1, 1]} : vector<8x128xf32> to vector<8x32xf32>
    %206 = arith.negf %205 : vector<8x32xf32>
    %207 = math.exp %206 : vector<8x32xf32>
    %cst_57 = arith.constant 1.000000e+00 : f32
    %208 = vector.broadcast %cst_57 : f32 to vector<8x32xf32>
    %209 = arith.addf %208, %207 : vector<8x32xf32>
    %210 = arith.divf %208, %209 : vector<8x32xf32>
    %211 = vector.extract_strided_slice %204 {offsets = [0, 32], sizes = [8, 32], strides = [1, 1]} : vector<8x128xf32> to vector<8x32xf32>
    %212 = arith.negf %211 : vector<8x32xf32>
    %213 = math.exp %212 : vector<8x32xf32>
    %cst_58 = arith.constant 1.000000e+00 : f32
    %214 = vector.broadcast %cst_58 : f32 to vector<8x32xf32>
    %215 = arith.addf %214, %213 : vector<8x32xf32>
    %216 = arith.divf %214, %215 : vector<8x32xf32>
    %217 = vector.extract_strided_slice %204 {offsets = [0, 64], sizes = [8, 32], strides = [1, 1]} : vector<8x128xf32> to vector<8x32xf32>
    %218 = math.tanh %217 : vector<8x32xf32>
    %219 = vector.extract_strided_slice %204 {offsets = [0, 96], sizes = [8, 32], strides = [1, 1]} : vector<8x128xf32> to vector<8x32xf32>
    %220 = arith.negf %219 : vector<8x32xf32>
    %221 = math.exp %220 : vector<8x32xf32>
    %cst_59 = arith.constant 1.000000e+00 : f32
    %222 = vector.broadcast %cst_59 : f32 to vector<8x32xf32>
    %223 = arith.addf %222, %221 : vector<8x32xf32>
    %224 = arith.divf %222, %223 : vector<8x32xf32>
    %225 = arith.mulf %216, %172 : vector<8x32xf32>
    %226 = arith.mulf %210, %218 : vector<8x32xf32>
    %227 = arith.addf %225, %226 : vector<8x32xf32>
    %228 = math.tanh %227 : vector<8x32xf32>
    %229 = arith.mulf %224, %228 : vector<8x32xf32>
    %cst_60 = arith.constant dense<0.000000e+00> : vector<8x160xf32>
    %230 = tpu.matmul %229, %5, %cst_60 {dimension_numbers = #tpu.dot_dimension_numbers<[1], [0], [0], [1], [0, 0, 1, 1], [], []>} : vector<8x32xf32>, vector<32x160xf32>, vector<8x160xf32> -> vector<8x160xf32>
    %231 = vector.extract_strided_slice %230 {offsets = [0, 0], sizes = [8, 32], strides = [1, 1]} : vector<8x160xf32> to vector<8x32xf32>
    %232 = vector.extract_strided_slice %230 {offsets = [0, 32], sizes = [8, 128], strides = [1, 1]} : vector<8x160xf32> to vector<8x128xf32>
    %233 = vector.shape_cast %231 : vector<8x32xf32> to vector<8x1x32xf32>
    %234 = vector.broadcast %233 : vector<8x1x32xf32> to vector<8x8x32xf32>
    %235 = arith.addf %1, %234 : vector<8x8x32xf32>
    %236 = math.tanh %235 : vector<8x8x32xf32>
    %237 = vector.shape_cast %6 : vector<1x32xf32> to vector<1x1x32xf32>
    %238 = vector.broadcast %237 : vector<1x1x32xf32> to vector<8x8x32xf32>
    %239 = arith.mulf %236, %238 : vector<8x8x32xf32>
    %cst_61 = arith.constant dense<0.000000e+00> : vector<8x8xf32>
    %240 = vector.multi_reduction <add>, %239, %cst_61 [2] : vector<8x8x32xf32> to vector<8x8xf32>
    %cst_62 = arith.constant dense<0xFF800000> : vector<8xf32>
    %241 = vector.multi_reduction <maximumf>, %240, %cst_62 [1] : vector<8x8xf32> to vector<8xf32>
    %242 = vector.shape_cast %241 : vector<8xf32> to vector<8x1xf32>
    %243 = vector.broadcast %242 : vector<8x1xf32> to vector<8x8xf32>
    %244 = arith.subf %240, %243 : vector<8x8xf32>
    %245 = math.exp %244 : vector<8x8xf32>
    %cst_63 = arith.constant dense<0.000000e+00> : vector<8xf32>
    %246 = vector.multi_reduction <add>, %245, %cst_63 [1] : vector<8x8xf32> to vector<8xf32>
    %247 = vector.shape_cast %246 : vector<8xf32> to vector<8x1xf32>
    %248 = tpu.reciprocal %247 {approx = true} : vector<8x1xf32> -> vector<8x1xf32>
    %249 = vector.broadcast %248 : vector<8x1xf32> to vector<8x8xf32>
    %250 = arith.mulf %245, %249 : vector<8x8xf32>
    %251 = vector.shape_cast %250 : vector<8x8xf32> to vector<8x8x1xf32>
    %252 = vector.broadcast %251 : vector<8x8x1xf32> to vector<8x8x32xf32>
    %253 = arith.mulf %0, %252 : vector<8x8x32xf32>
    %cst_64 = arith.constant dense<0.000000e+00> : vector<8x32xf32>
    %254 = vector.multi_reduction <add>, %253, %cst_64 [1] : vector<8x8x32xf32> to vector<8x32xf32>
    %c0_65 = arith.constant 0 : index
    %c4 = arith.constant 4 : index
    %c0_66 = arith.constant 0 : index
    %255 = vector.load %arg4[%c0_65, %c4, %c0_66] : memref<8x8x128xf32, #tpu.memory_space<vmem>>, vector<8x1x128xf32>
    %256 = vector.shape_cast %255 : vector<8x1x128xf32> to vector<8x128xf32>
    %cst_67 = arith.constant dense<0.000000e+00> : vector<8x128xf32>
    %257 = tpu.matmul %254, %7, %cst_67 {dimension_numbers = #tpu.dot_dimension_numbers<[1], [0], [0], [1], [0, 0, 1, 1], [], []>} : vector<8x32xf32>, vector<32x128xf32>, vector<8x128xf32> -> vector<8x128xf32>
    %258 = arith.addf %256, %257 : vector<8x128xf32>
    %259 = arith.addf %258, %232 : vector<8x128xf32>
    %260 = vector.extract_strided_slice %259 {offsets = [0, 0], sizes = [8, 32], strides = [1, 1]} : vector<8x128xf32> to vector<8x32xf32>
    %261 = arith.negf %260 : vector<8x32xf32>
    %262 = math.exp %261 : vector<8x32xf32>
    %cst_68 = arith.constant 1.000000e+00 : f32
    %263 = vector.broadcast %cst_68 : f32 to vector<8x32xf32>
    %264 = arith.addf %263, %262 : vector<8x32xf32>
    %265 = arith.divf %263, %264 : vector<8x32xf32>
    %266 = vector.extract_strided_slice %259 {offsets = [0, 32], sizes = [8, 32], strides = [1, 1]} : vector<8x128xf32> to vector<8x32xf32>
    %267 = arith.negf %266 : vector<8x32xf32>
    %268 = math.exp %267 : vector<8x32xf32>
    %cst_69 = arith.constant 1.000000e+00 : f32
    %269 = vector.broadcast %cst_69 : f32 to vector<8x32xf32>
    %270 = arith.addf %269, %268 : vector<8x32xf32>
    %271 = arith.divf %269, %270 : vector<8x32xf32>
    %272 = vector.extract_strided_slice %259 {offsets = [0, 64], sizes = [8, 32], strides = [1, 1]} : vector<8x128xf32> to vector<8x32xf32>
    %273 = math.tanh %272 : vector<8x32xf32>
    %274 = vector.extract_strided_slice %259 {offsets = [0, 96], sizes = [8, 32], strides = [1, 1]} : vector<8x128xf32> to vector<8x32xf32>
    %275 = arith.negf %274 : vector<8x32xf32>
    %276 = math.exp %275 : vector<8x32xf32>
    %cst_70 = arith.constant 1.000000e+00 : f32
    %277 = vector.broadcast %cst_70 : f32 to vector<8x32xf32>
    %278 = arith.addf %277, %276 : vector<8x32xf32>
    %279 = arith.divf %277, %278 : vector<8x32xf32>
    %280 = arith.mulf %271, %227 : vector<8x32xf32>
    %281 = arith.mulf %265, %273 : vector<8x32xf32>
    %282 = arith.addf %280, %281 : vector<8x32xf32>
    %283 = math.tanh %282 : vector<8x32xf32>
    %284 = arith.mulf %279, %283 : vector<8x32xf32>
    %cst_71 = arith.constant dense<0.000000e+00> : vector<8x160xf32>
    %285 = tpu.matmul %284, %5, %cst_71 {dimension_numbers = #tpu.dot_dimension_numbers<[1], [0], [0], [1], [0, 0, 1, 1], [], []>} : vector<8x32xf32>, vector<32x160xf32>, vector<8x160xf32> -> vector<8x160xf32>
    %286 = vector.extract_strided_slice %285 {offsets = [0, 0], sizes = [8, 32], strides = [1, 1]} : vector<8x160xf32> to vector<8x32xf32>
    %287 = vector.extract_strided_slice %285 {offsets = [0, 32], sizes = [8, 128], strides = [1, 1]} : vector<8x160xf32> to vector<8x128xf32>
    %288 = vector.shape_cast %286 : vector<8x32xf32> to vector<8x1x32xf32>
    %289 = vector.broadcast %288 : vector<8x1x32xf32> to vector<8x8x32xf32>
    %290 = arith.addf %1, %289 : vector<8x8x32xf32>
    %291 = math.tanh %290 : vector<8x8x32xf32>
    %292 = vector.shape_cast %6 : vector<1x32xf32> to vector<1x1x32xf32>
    %293 = vector.broadcast %292 : vector<1x1x32xf32> to vector<8x8x32xf32>
    %294 = arith.mulf %291, %293 : vector<8x8x32xf32>
    %cst_72 = arith.constant dense<0.000000e+00> : vector<8x8xf32>
    %295 = vector.multi_reduction <add>, %294, %cst_72 [2] : vector<8x8x32xf32> to vector<8x8xf32>
    %cst_73 = arith.constant dense<0xFF800000> : vector<8xf32>
    %296 = vector.multi_reduction <maximumf>, %295, %cst_73 [1] : vector<8x8xf32> to vector<8xf32>
    %297 = vector.shape_cast %296 : vector<8xf32> to vector<8x1xf32>
    %298 = vector.broadcast %297 : vector<8x1xf32> to vector<8x8xf32>
    %299 = arith.subf %295, %298 : vector<8x8xf32>
    %300 = math.exp %299 : vector<8x8xf32>
    %cst_74 = arith.constant dense<0.000000e+00> : vector<8xf32>
    %301 = vector.multi_reduction <add>, %300, %cst_74 [1] : vector<8x8xf32> to vector<8xf32>
    %302 = vector.shape_cast %301 : vector<8xf32> to vector<8x1xf32>
    %303 = tpu.reciprocal %302 {approx = true} : vector<8x1xf32> -> vector<8x1xf32>
    %304 = vector.broadcast %303 : vector<8x1xf32> to vector<8x8xf32>
    %305 = arith.mulf %300, %304 : vector<8x8xf32>
    %306 = vector.shape_cast %305 : vector<8x8xf32> to vector<8x8x1xf32>
    %307 = vector.broadcast %306 : vector<8x8x1xf32> to vector<8x8x32xf32>
    %308 = arith.mulf %0, %307 : vector<8x8x32xf32>
    %cst_75 = arith.constant dense<0.000000e+00> : vector<8x32xf32>
    %309 = vector.multi_reduction <add>, %308, %cst_75 [1] : vector<8x8x32xf32> to vector<8x32xf32>
    %c0_76 = arith.constant 0 : index
    %c5 = arith.constant 5 : index
    %c0_77 = arith.constant 0 : index
    %310 = vector.load %arg4[%c0_76, %c5, %c0_77] : memref<8x8x128xf32, #tpu.memory_space<vmem>>, vector<8x1x128xf32>
    %311 = vector.shape_cast %310 : vector<8x1x128xf32> to vector<8x128xf32>
    %cst_78 = arith.constant dense<0.000000e+00> : vector<8x128xf32>
    %312 = tpu.matmul %309, %7, %cst_78 {dimension_numbers = #tpu.dot_dimension_numbers<[1], [0], [0], [1], [0, 0, 1, 1], [], []>} : vector<8x32xf32>, vector<32x128xf32>, vector<8x128xf32> -> vector<8x128xf32>
    %313 = arith.addf %311, %312 : vector<8x128xf32>
    %314 = arith.addf %313, %287 : vector<8x128xf32>
    %315 = vector.extract_strided_slice %314 {offsets = [0, 0], sizes = [8, 32], strides = [1, 1]} : vector<8x128xf32> to vector<8x32xf32>
    %316 = arith.negf %315 : vector<8x32xf32>
    %317 = math.exp %316 : vector<8x32xf32>
    %cst_79 = arith.constant 1.000000e+00 : f32
    %318 = vector.broadcast %cst_79 : f32 to vector<8x32xf32>
    %319 = arith.addf %318, %317 : vector<8x32xf32>
    %320 = arith.divf %318, %319 : vector<8x32xf32>
    %321 = vector.extract_strided_slice %314 {offsets = [0, 32], sizes = [8, 32], strides = [1, 1]} : vector<8x128xf32> to vector<8x32xf32>
    %322 = arith.negf %321 : vector<8x32xf32>
    %323 = math.exp %322 : vector<8x32xf32>
    %cst_80 = arith.constant 1.000000e+00 : f32
    %324 = vector.broadcast %cst_80 : f32 to vector<8x32xf32>
    %325 = arith.addf %324, %323 : vector<8x32xf32>
    %326 = arith.divf %324, %325 : vector<8x32xf32>
    %327 = vector.extract_strided_slice %314 {offsets = [0, 64], sizes = [8, 32], strides = [1, 1]} : vector<8x128xf32> to vector<8x32xf32>
    %328 = math.tanh %327 : vector<8x32xf32>
    %329 = vector.extract_strided_slice %314 {offsets = [0, 96], sizes = [8, 32], strides = [1, 1]} : vector<8x128xf32> to vector<8x32xf32>
    %330 = arith.negf %329 : vector<8x32xf32>
    %331 = math.exp %330 : vector<8x32xf32>
    %cst_81 = arith.constant 1.000000e+00 : f32
    %332 = vector.broadcast %cst_81 : f32 to vector<8x32xf32>
    %333 = arith.addf %332, %331 : vector<8x32xf32>
    %334 = arith.divf %332, %333 : vector<8x32xf32>
    %335 = arith.mulf %326, %282 : vector<8x32xf32>
    %336 = arith.mulf %320, %328 : vector<8x32xf32>
    %337 = arith.addf %335, %336 : vector<8x32xf32>
    %338 = math.tanh %337 : vector<8x32xf32>
    %339 = arith.mulf %334, %338 : vector<8x32xf32>
    %cst_82 = arith.constant dense<0.000000e+00> : vector<8x160xf32>
    %340 = tpu.matmul %339, %5, %cst_82 {dimension_numbers = #tpu.dot_dimension_numbers<[1], [0], [0], [1], [0, 0, 1, 1], [], []>} : vector<8x32xf32>, vector<32x160xf32>, vector<8x160xf32> -> vector<8x160xf32>
    %341 = vector.extract_strided_slice %340 {offsets = [0, 0], sizes = [8, 32], strides = [1, 1]} : vector<8x160xf32> to vector<8x32xf32>
    %342 = vector.extract_strided_slice %340 {offsets = [0, 32], sizes = [8, 128], strides = [1, 1]} : vector<8x160xf32> to vector<8x128xf32>
    %343 = vector.shape_cast %341 : vector<8x32xf32> to vector<8x1x32xf32>
    %344 = vector.broadcast %343 : vector<8x1x32xf32> to vector<8x8x32xf32>
    %345 = arith.addf %1, %344 : vector<8x8x32xf32>
    %346 = math.tanh %345 : vector<8x8x32xf32>
    %347 = vector.shape_cast %6 : vector<1x32xf32> to vector<1x1x32xf32>
    %348 = vector.broadcast %347 : vector<1x1x32xf32> to vector<8x8x32xf32>
    %349 = arith.mulf %346, %348 : vector<8x8x32xf32>
    %cst_83 = arith.constant dense<0.000000e+00> : vector<8x8xf32>
    %350 = vector.multi_reduction <add>, %349, %cst_83 [2] : vector<8x8x32xf32> to vector<8x8xf32>
    %cst_84 = arith.constant dense<0xFF800000> : vector<8xf32>
    %351 = vector.multi_reduction <maximumf>, %350, %cst_84 [1] : vector<8x8xf32> to vector<8xf32>
    %352 = vector.shape_cast %351 : vector<8xf32> to vector<8x1xf32>
    %353 = vector.broadcast %352 : vector<8x1xf32> to vector<8x8xf32>
    %354 = arith.subf %350, %353 : vector<8x8xf32>
    %355 = math.exp %354 : vector<8x8xf32>
    %cst_85 = arith.constant dense<0.000000e+00> : vector<8xf32>
    %356 = vector.multi_reduction <add>, %355, %cst_85 [1] : vector<8x8xf32> to vector<8xf32>
    %357 = vector.shape_cast %356 : vector<8xf32> to vector<8x1xf32>
    %358 = tpu.reciprocal %357 {approx = true} : vector<8x1xf32> -> vector<8x1xf32>
    %359 = vector.broadcast %358 : vector<8x1xf32> to vector<8x8xf32>
    %360 = arith.mulf %355, %359 : vector<8x8xf32>
    %361 = vector.shape_cast %360 : vector<8x8xf32> to vector<8x8x1xf32>
    %362 = vector.broadcast %361 : vector<8x8x1xf32> to vector<8x8x32xf32>
    %363 = arith.mulf %0, %362 : vector<8x8x32xf32>
    %cst_86 = arith.constant dense<0.000000e+00> : vector<8x32xf32>
    %364 = vector.multi_reduction <add>, %363, %cst_86 [1] : vector<8x8x32xf32> to vector<8x32xf32>
    %c0_87 = arith.constant 0 : index
    %c6 = arith.constant 6 : index
    %c0_88 = arith.constant 0 : index
    %365 = vector.load %arg4[%c0_87, %c6, %c0_88] : memref<8x8x128xf32, #tpu.memory_space<vmem>>, vector<8x1x128xf32>
    %366 = vector.shape_cast %365 : vector<8x1x128xf32> to vector<8x128xf32>
    %cst_89 = arith.constant dense<0.000000e+00> : vector<8x128xf32>
    %367 = tpu.matmul %364, %7, %cst_89 {dimension_numbers = #tpu.dot_dimension_numbers<[1], [0], [0], [1], [0, 0, 1, 1], [], []>} : vector<8x32xf32>, vector<32x128xf32>, vector<8x128xf32> -> vector<8x128xf32>
    %368 = arith.addf %366, %367 : vector<8x128xf32>
    %369 = arith.addf %368, %342 : vector<8x128xf32>
    %370 = vector.extract_strided_slice %369 {offsets = [0, 0], sizes = [8, 32], strides = [1, 1]} : vector<8x128xf32> to vector<8x32xf32>
    %371 = arith.negf %370 : vector<8x32xf32>
    %372 = math.exp %371 : vector<8x32xf32>
    %cst_90 = arith.constant 1.000000e+00 : f32
    %373 = vector.broadcast %cst_90 : f32 to vector<8x32xf32>
    %374 = arith.addf %373, %372 : vector<8x32xf32>
    %375 = arith.divf %373, %374 : vector<8x32xf32>
    %376 = vector.extract_strided_slice %369 {offsets = [0, 32], sizes = [8, 32], strides = [1, 1]} : vector<8x128xf32> to vector<8x32xf32>
    %377 = arith.negf %376 : vector<8x32xf32>
    %378 = math.exp %377 : vector<8x32xf32>
    %cst_91 = arith.constant 1.000000e+00 : f32
    %379 = vector.broadcast %cst_91 : f32 to vector<8x32xf32>
    %380 = arith.addf %379, %378 : vector<8x32xf32>
    %381 = arith.divf %379, %380 : vector<8x32xf32>
    %382 = vector.extract_strided_slice %369 {offsets = [0, 64], sizes = [8, 32], strides = [1, 1]} : vector<8x128xf32> to vector<8x32xf32>
    %383 = math.tanh %382 : vector<8x32xf32>
    %384 = vector.extract_strided_slice %369 {offsets = [0, 96], sizes = [8, 32], strides = [1, 1]} : vector<8x128xf32> to vector<8x32xf32>
    %385 = arith.negf %384 : vector<8x32xf32>
    %386 = math.exp %385 : vector<8x32xf32>
    %cst_92 = arith.constant 1.000000e+00 : f32
    %387 = vector.broadcast %cst_92 : f32 to vector<8x32xf32>
    %388 = arith.addf %387, %386 : vector<8x32xf32>
    %389 = arith.divf %387, %388 : vector<8x32xf32>
    %390 = arith.mulf %381, %337 : vector<8x32xf32>
    %391 = arith.mulf %375, %383 : vector<8x32xf32>
    %392 = arith.addf %390, %391 : vector<8x32xf32>
    %393 = math.tanh %392 : vector<8x32xf32>
    %394 = arith.mulf %389, %393 : vector<8x32xf32>
    %cst_93 = arith.constant dense<0.000000e+00> : vector<8x160xf32>
    %395 = tpu.matmul %394, %5, %cst_93 {dimension_numbers = #tpu.dot_dimension_numbers<[1], [0], [0], [1], [0, 0, 1, 1], [], []>} : vector<8x32xf32>, vector<32x160xf32>, vector<8x160xf32> -> vector<8x160xf32>
    %396 = vector.extract_strided_slice %395 {offsets = [0, 0], sizes = [8, 32], strides = [1, 1]} : vector<8x160xf32> to vector<8x32xf32>
    %397 = vector.extract_strided_slice %395 {offsets = [0, 32], sizes = [8, 128], strides = [1, 1]} : vector<8x160xf32> to vector<8x128xf32>
    %398 = vector.shape_cast %396 : vector<8x32xf32> to vector<8x1x32xf32>
    %399 = vector.broadcast %398 : vector<8x1x32xf32> to vector<8x8x32xf32>
    %400 = arith.addf %1, %399 : vector<8x8x32xf32>
    %401 = math.tanh %400 : vector<8x8x32xf32>
    %402 = vector.shape_cast %6 : vector<1x32xf32> to vector<1x1x32xf32>
    %403 = vector.broadcast %402 : vector<1x1x32xf32> to vector<8x8x32xf32>
    %404 = arith.mulf %401, %403 : vector<8x8x32xf32>
    %cst_94 = arith.constant dense<0.000000e+00> : vector<8x8xf32>
    %405 = vector.multi_reduction <add>, %404, %cst_94 [2] : vector<8x8x32xf32> to vector<8x8xf32>
    %cst_95 = arith.constant dense<0xFF800000> : vector<8xf32>
    %406 = vector.multi_reduction <maximumf>, %405, %cst_95 [1] : vector<8x8xf32> to vector<8xf32>
    %407 = vector.shape_cast %406 : vector<8xf32> to vector<8x1xf32>
    %408 = vector.broadcast %407 : vector<8x1xf32> to vector<8x8xf32>
    %409 = arith.subf %405, %408 : vector<8x8xf32>
    %410 = math.exp %409 : vector<8x8xf32>
    %cst_96 = arith.constant dense<0.000000e+00> : vector<8xf32>
    %411 = vector.multi_reduction <add>, %410, %cst_96 [1] : vector<8x8xf32> to vector<8xf32>
    %412 = vector.shape_cast %411 : vector<8xf32> to vector<8x1xf32>
    %413 = tpu.reciprocal %412 {approx = true} : vector<8x1xf32> -> vector<8x1xf32>
    %414 = vector.broadcast %413 : vector<8x1xf32> to vector<8x8xf32>
    %415 = arith.mulf %410, %414 : vector<8x8xf32>
    %416 = vector.shape_cast %415 : vector<8x8xf32> to vector<8x8x1xf32>
    %417 = vector.broadcast %416 : vector<8x8x1xf32> to vector<8x8x32xf32>
    %418 = arith.mulf %0, %417 : vector<8x8x32xf32>
    %cst_97 = arith.constant dense<0.000000e+00> : vector<8x32xf32>
    %419 = vector.multi_reduction <add>, %418, %cst_97 [1] : vector<8x8x32xf32> to vector<8x32xf32>
    %c0_98 = arith.constant 0 : index
    %c7 = arith.constant 7 : index
    %c0_99 = arith.constant 0 : index
    %420 = vector.load %arg4[%c0_98, %c7, %c0_99] : memref<8x8x128xf32, #tpu.memory_space<vmem>>, vector<8x1x128xf32>
    %421 = vector.shape_cast %420 : vector<8x1x128xf32> to vector<8x128xf32>
    %cst_100 = arith.constant dense<0.000000e+00> : vector<8x128xf32>
    %422 = tpu.matmul %419, %7, %cst_100 {dimension_numbers = #tpu.dot_dimension_numbers<[1], [0], [0], [1], [0, 0, 1, 1], [], []>} : vector<8x32xf32>, vector<32x128xf32>, vector<8x128xf32> -> vector<8x128xf32>
    %423 = arith.addf %421, %422 : vector<8x128xf32>
    %424 = arith.addf %423, %397 : vector<8x128xf32>
    %425 = vector.extract_strided_slice %424 {offsets = [0, 0], sizes = [8, 32], strides = [1, 1]} : vector<8x128xf32> to vector<8x32xf32>
    %426 = arith.negf %425 : vector<8x32xf32>
    %427 = math.exp %426 : vector<8x32xf32>
    %cst_101 = arith.constant 1.000000e+00 : f32
    %428 = vector.broadcast %cst_101 : f32 to vector<8x32xf32>
    %429 = arith.addf %428, %427 : vector<8x32xf32>
    %430 = arith.divf %428, %429 : vector<8x32xf32>
    %431 = vector.extract_strided_slice %424 {offsets = [0, 32], sizes = [8, 32], strides = [1, 1]} : vector<8x128xf32> to vector<8x32xf32>
    %432 = arith.negf %431 : vector<8x32xf32>
    %433 = math.exp %432 : vector<8x32xf32>
    %cst_102 = arith.constant 1.000000e+00 : f32
    %434 = vector.broadcast %cst_102 : f32 to vector<8x32xf32>
    %435 = arith.addf %434, %433 : vector<8x32xf32>
    %436 = arith.divf %434, %435 : vector<8x32xf32>
    %437 = vector.extract_strided_slice %424 {offsets = [0, 64], sizes = [8, 32], strides = [1, 1]} : vector<8x128xf32> to vector<8x32xf32>
    %438 = math.tanh %437 : vector<8x32xf32>
    %439 = vector.extract_strided_slice %424 {offsets = [0, 96], sizes = [8, 32], strides = [1, 1]} : vector<8x128xf32> to vector<8x32xf32>
    %440 = arith.negf %439 : vector<8x32xf32>
    %441 = math.exp %440 : vector<8x32xf32>
    %cst_103 = arith.constant 1.000000e+00 : f32
    %442 = vector.broadcast %cst_103 : f32 to vector<8x32xf32>
    %443 = arith.addf %442, %441 : vector<8x32xf32>
    %444 = arith.divf %442, %443 : vector<8x32xf32>
    %445 = arith.mulf %436, %392 : vector<8x32xf32>
    %446 = arith.mulf %430, %438 : vector<8x32xf32>
    %447 = arith.addf %445, %446 : vector<8x32xf32>
    %448 = math.tanh %447 : vector<8x32xf32>
    %449 = arith.mulf %444, %448 : vector<8x32xf32>
    %c0_104 = arith.constant 0 : index
    %c0_105 = arith.constant 0 : index
    %450 = vector.load %arg14[%c0_104, %c0_105] : memref<8x32xf32, #tpu.memory_space<vmem>>, vector<8x32xf32>
    tpu.vector_store %arg14[%c0_104, %c0_105], %449 {strides = array<i32>} : memref<8x32xf32, #tpu.memory_space<vmem>>, vector<8x32xf32>,
    %c0_106 = arith.constant 0 : index
    %c0_107 = arith.constant 0 : index
    %451 = vector.load %arg15[%c0_106, %c0_107] : memref<8x32xf32, #tpu.memory_space<vmem>>, vector<8x32xf32>
    tpu.vector_store %arg15[%c0_106, %c0_107], %447 {strides = array<i32>} : memref<8x32xf32, #tpu.memory_space<vmem>>, vector<8x32xf32>,
    %452 = vector.shape_cast %64 : vector<8x32xf32> to vector<8x1x32xf32>
    %453 = vector.shape_cast %119 : vector<8x32xf32> to vector<8x1x32xf32>
    %454 = vector.shape_cast %174 : vector<8x32xf32> to vector<8x1x32xf32>
    %455 = vector.shape_cast %229 : vector<8x32xf32> to vector<8x1x32xf32>
    %456 = vector.shape_cast %284 : vector<8x32xf32> to vector<8x1x32xf32>
    %457 = vector.shape_cast %339 : vector<8x32xf32> to vector<8x1x32xf32>
    %458 = vector.shape_cast %394 : vector<8x32xf32> to vector<8x1x32xf32>
    %459 = vector.shape_cast %449 : vector<8x32xf32> to vector<8x1x32xf32>
    %460 = tpu.concatenate %452, %453, %454, %455, %456, %457, %458, %459 in 1 : vector<8x1x32xf32>, vector<8x1x32xf32>, vector<8x1x32xf32>, vector<8x1x32xf32>, vector<8x1x32xf32>, vector<8x1x32xf32>, vector<8x1x32xf32>, vector<8x1x32xf32> -> vector<8x8x32xf32>
    %c0_108 = arith.constant 0 : index
    %c0_109 = arith.constant 0 : index
    %c0_110 = arith.constant 0 : index
    %461 = vector.load %arg12[%c0_108, %c0_109, %c0_110] : memref<8x8x32xf32, #tpu.memory_space<vmem>>, vector<8x8x32xf32>
    tpu.vector_store %arg12[%c0_108, %c0_109, %c0_110], %460 {strides = array<i32>} : memref<8x8x32xf32, #tpu.memory_space<vmem>>, vector<8x8x32xf32>,
    %462 = vector.shape_cast %30 : vector<8x8xf32> to vector<8x1x8xf32>
    %463 = vector.shape_cast %85 : vector<8x8xf32> to vector<8x1x8xf32>
    %464 = vector.shape_cast %140 : vector<8x8xf32> to vector<8x1x8xf32>
    %465 = vector.shape_cast %195 : vector<8x8xf32> to vector<8x1x8xf32>
    %466 = vector.shape_cast %250 : vector<8x8xf32> to vector<8x1x8xf32>
    %467 = vector.shape_cast %305 : vector<8x8xf32> to vector<8x1x8xf32>
    %468 = vector.shape_cast %360 : vector<8x8xf32> to vector<8x1x8xf32>
    %469 = vector.shape_cast %415 : vector<8x8xf32> to vector<8x1x8xf32>
    %470 = tpu.concatenate %462, %463, %464, %465, %466, %467, %468, %469 in 1 : vector<8x1x8xf32>, vector<8x1x8xf32>, vector<8x1x8xf32>, vector<8x1x8xf32>, vector<8x1x8xf32>, vector<8x1x8xf32>, vector<8x1x8xf32>, vector<8x1x8xf32> -> vector<8x8x8xf32>
    %cst_111 = arith.constant 0.000000e+00 : f32
    %471 = vector.broadcast %cst_111 : f32 to vector<8x8x120xf32>
    %472 = tpu.concatenate %470, %471 in 2 : vector<8x8x8xf32>, vector<8x8x120xf32> -> vector<8x8x128xf32>
    %c0_112 = arith.constant 0 : index
    %c0_113 = arith.constant 0 : index
    %c0_114 = arith.constant 0 : index
    %473 = vector.load %arg13[%c0_112, %c0_113, %c0_114] : memref<8x8x128xf32, #tpu.memory_space<vmem>>, vector<8x8x128xf32>
    tpu.vector_store %arg13[%c0_112, %c0_113, %c0_114], %472 {strides = array<i32>} : memref<8x8x128xf32, #tpu.memory_space<vmem>>, vector<8x8x128xf32>,
    return
  }
  func.func @transform_0(%arg0: i32, %arg1: i32) -> (i32, i32, i32) {
    %c0_i32 = arith.constant 0 : i32
    %c0_i32_0 = arith.constant 0 : i32
    %c0_i32_1 = arith.constant 0 : i32
    return %arg0, %c0_i32, %c0_i32_0 : i32, i32, i32
  }
  func.func @transform_1(%arg0: i32, %arg1: i32) -> (i32, i32, i32) {
    %c0_i32 = arith.constant 0 : i32
    %c0_i32_0 = arith.constant 0 : i32
    %c0_i32_1 = arith.constant 0 : i32
    return %arg0, %c0_i32, %c0_i32_0 : i32, i32, i32
  }
  func.func @transform_2(%arg0: i32, %arg1: i32) -> (i32, i32, i32) {
    %c0_i32 = arith.constant 0 : i32
    %c0_i32_0 = arith.constant 0 : i32
    return %arg0, %arg1, %c0_i32 : i32, i32, i32
  }
  func.func @transform_3(%arg0: i32, %arg1: i32) -> (i32, i32) {
    %c0_i32 = arith.constant 0 : i32
    %c0_i32_0 = arith.constant 0 : i32
    %c0_i32_1 = arith.constant 0 : i32
    return %c0_i32, %c0_i32_0 : i32, i32
  }
  func.func @transform_4(%arg0: i32, %arg1: i32) -> (i32, i32) {
    %c0_i32 = arith.constant 0 : i32
    %c0_i32_0 = arith.constant 0 : i32
    %c0_i32_1 = arith.constant 0 : i32
    return %c0_i32, %c0_i32_0 : i32, i32
  }
  func.func @transform_5(%arg0: i32, %arg1: i32) -> (i32, i32) {
    %c0_i32 = arith.constant 0 : i32
    %c0_i32_0 = arith.constant 0 : i32
    %c0_i32_1 = arith.constant 0 : i32
    return %c0_i32, %c0_i32_0 : i32, i32
  }
  func.func @transform_6(%arg0: i32, %arg1: i32) -> (i32, i32) {
    %c0_i32 = arith.constant 0 : i32
    %c0_i32_0 = arith.constant 0 : i32
    %c0_i32_1 = arith.constant 0 : i32
    return %c0_i32, %c0_i32_0 : i32, i32
  }
  func.func @transform_7(%arg0: i32, %arg1: i32) -> (i32, i32) {
    %c0_i32 = arith.constant 0 : i32
    %c0_i32_0 = arith.constant 0 : i32
    %c0_i32_1 = arith.constant 0 : i32
    return %c0_i32, %c0_i32_0 : i32, i32
  }
  func.func @transform_8(%arg0: i32, %arg1: i32) -> (i32, i32) {
    %c0_i32 = arith.constant 0 : i32
    %c0_i32_0 = arith.constant 0 : i32
    %c0_i32_1 = arith.constant 0 : i32
    return %c0_i32, %c0_i32_0 : i32, i32
  }
  func.func @transform_9(%arg0: i32, %arg1: i32) -> (i32, i32) {
    %c0_i32 = arith.constant 0 : i32
    %c0_i32_0 = arith.constant 0 : i32
    %c0_i32_1 = arith.constant 0 : i32
    return %c0_i32, %c0_i32_0 : i32, i32
  }
  func.func @transform_10(%arg0: i32, %arg1: i32) -> (i32, i32, i32) {
    %c0_i32 = arith.constant 0 : i32
    %c0_i32_0 = arith.constant 0 : i32
    return %arg0, %arg1, %c0_i32 : i32, i32, i32
  }
  func.func @transform_11(%arg0: i32, %arg1: i32) -> (i32, i32, i32) {
    %c0_i32 = arith.constant 0 : i32
    %c0_i32_0 = arith.constant 0 : i32
    return %arg0, %arg1, %c0_i32 : i32, i32, i32
  }
}

</mosaic_0001>

<llo_original>
// kernel: tpu_custom_call.1
$region0: #{tpu_custom_call.1}
  #allocation0 [shape = 'u32[]', space=smem, size = 0x4, offset = 0x4, fixed_abs, tag = 'smem constant byte address 0x4 - core index']
  #allocation1 [shape = 'u32[144,128]{1,0:T(1,128)}', space=vmem, size = 0x12000, scoped, tag = 'internal scratch']
  #allocation2 [shape = 'f32[8,32]{1,0:T(8,128)}', space=vmem, size = 0x1000, scoped, tag = 'scratch operand']
  #allocation3 [shape = 'f32[8,32]{1,0:T(8,128)}', space=vmem, size = 0x1000, scoped, tag = 'scratch operand']
  %s0 = inlined_call_operand.hbm [shape: f32[8,8,32], index: 0, kind: input, shape index: {}]
  %s1 = inlined_call_operand.hbm [shape: f32[8,8,32], index: 1, kind: input, shape index: {}]
  %s2 = inlined_call_operand.hbm [shape: f32[8,8,128], index: 2, kind: input, shape index: {}]
  %s3 = inlined_call_operand.hbm [shape: f32[32,160], index: 3, kind: input, shape index: {}]
  %s4 = inlined_call_operand.vmem [shape: f32[1,32], index: 4, kind: input, shape index: {}]
  %s5 = inlined_call_operand.hbm [shape: f32[32,128], index: 5, kind: input, shape index: {}]
  %s6 = inlined_call_operand.hbm [shape: f32[32,32], index: 6, kind: input, shape index: {}]
  %s7 = inlined_call_operand.vmem [shape: f32[1,32], index: 7, kind: input, shape index: {}]
  %s8 = inlined_call_operand.hbm [shape: f32[32,32], index: 8, kind: input, shape index: {}]
  %s9 = inlined_call_operand.vmem [shape: f32[1,32], index: 9, kind: input, shape index: {}]
  %s10 = inlined_call_operand.hbm [shape: f32[8,8,32], index: 10, kind: output, shape index: {0}]
  %s11 = inlined_call_operand.hbm [shape: f32[8,8,128], index: 11, kind: output, shape index: {1}]
  %12 = xla_tuple %s10, %s11
  %s13 = sld [smem:[#allocation0]]
  $region90: #{tpu_custom_call.1} parent=0
    _
  %s15 = ssub.s32 1, %s13
  %s16 = scalar_select 0, %s15, %s13
  $region1: #{tpu_custom_call.1} parent=0
    #allocation4 [shape = 'u8[32768]{0}', space=vmem, size = 0x8000, scoped, tag = 'input window, operand 0, single buffered']
    #allocation5 [shape = 's32[1]{0}', space=sflag, size = 0x4, scoped, tag = 'scoped memory for tpu_custom_call.1']
    #allocation6 [shape = 's32[1]{0}', space=sflag, size = 0x4, scoped, tag = 'scoped memory for tpu_custom_call.1']
    #allocation7 [shape = 'u8[32768]{0}', space=vmem, size = 0x8000, scoped, tag = 'input window, operand 1, single buffered']
    #allocation8 [shape = 's32[1]{0}', space=sflag, size = 0x4, scoped, tag = 'scoped memory for tpu_custom_call.1']
    #allocation9 [shape = 'u8[32768]{0}', space=vmem, size = 0x8000, scoped, tag = 'input window, operand 2, single buffered']
    #allocation10 [shape = 'u8[32768]{0}', space=vmem, size = 0x8000, scoped, tag = 'input window, operand 3, single buffered']
    #allocation11 [shape = 's32[1]{0}', space=sflag, size = 0x4, scoped, tag = 'scoped memory for tpu_custom_call.1']
    #allocation12 [shape = 'u8[16384]{0}', space=vmem, size = 0x4000, scoped, tag = 'input window, operand 5, single buffered']
    #allocation13 [shape = 'u8[16384]{0}', space=vmem, size = 0x4000, scoped, tag = 'input window, operand 6, single buffered']
    #allocation14 [shape = 's32[1]{0}', space=sflag, size = 0x4, scoped, tag = 'scoped memory for tpu_custom_call.1']
    #allocation15 [shape = 'u8[16384]{0}', space=vmem, size = 0x4000, scoped, tag = 'input window, operand 8, single buffered']
    #allocation16 [shape = 'u8[32768]{0}', space=vmem, size = 0x8000, scoped, tag = 'output window, operand 0, single buffered']
    #allocation17 [shape = 'u8[32768]{0}', space=vmem, size = 0x8000, scoped, tag = 'output window, operand 1, single buffered']
    #allocation18 [shape = 's32[1]{0}', space=sflag, size = 0x4, scoped, tag = 'scoped memory for tpu_custom_call.1']
    %17 = vsyncpa [#allocation5], 0
    %18 = vsyncpa [#allocation8], 0
    %19 = vsyncpa [#allocation11], 0
    %20 = vsyncpa [#allocation14], 0
    %21 = vsyncpa [#allocation6], 0
    %22 = vsyncpa [#allocation18], 0
    // Predicated region
    $region2: #{tpu_custom_call.1} parent=1 // pred_check
      _
    $region3: #{tpu_custom_call.1} parent=1 // pred_check_branch
      %24 = sbr.rel (0) target = $region5
    $region4: #{tpu_custom_call.1} parent=1 // pred_region
      %s26 = ssub.s32 1024, 1024
      %27 = vsyncadd [#allocation5], %s26
      %s28 = sshll.u32 [#allocation4], 4
      %s29 = int_to_ptr.vmem [resolvable:$true] %s28
      %34 = dma.hbm_to_vmem [thread:$0]  %s0, 1024, %s29, [#allocation5], 128, 128, 8
    $region5: #{tpu_custom_call.1} parent=1 // pred_fallthru
      _
    // Predicated region
    $region6: #{tpu_custom_call.1} parent=1 // pred_check
      _
    $region7: #{tpu_custom_call.1} parent=1 // pred_check_branch
      %36 = sbr.rel (0) target = $region9
    $region8: #{tpu_custom_call.1} parent=1 // pred_region
      %s38 = ssub.s32 1024, 1024
      %39 = vsyncadd [#allocation8], %s38
      %s40 = sshll.u32 [#allocation7], 4
      %s41 = int_to_ptr.vmem [resolvable:$true] %s40
      %46 = dma.hbm_to_vmem [thread:$0]  %s1, 1024, %s41, [#allocation8], 128, 128, 8
    $region9: #{tpu_custom_call.1} parent=1 // pred_fallthru
      _
    // Predicated region
    $region10: #{tpu_custom_call.1} parent=1 // pred_check
      _
    $region11: #{tpu_custom_call.1} parent=1 // pred_check_branch
      %48 = sbr.rel (0) target = $region13
    $region12: #{tpu_custom_call.1} parent=1 // pred_region
      %s50 = ssub.s32 1024, 1024
      %51 = vsyncadd [#allocation8], %s50
      %s52 = sshll.u32 [#allocation9], 4
      %s53 = int_to_ptr.vmem [resolvable:$true] %s52
      %58 = dma.hbm_to_vmem [thread:$0]  %s2, 1024, %s53, [#allocation8], 128, 128, 8
    $region13: #{tpu_custom_call.1} parent=1 // pred_fallthru
      _
    // Predicated region
    $region14: #{tpu_custom_call.1} parent=1 // pred_check
      _
    $region15: #{tpu_custom_call.1} parent=1 // pred_check_branch
      %60 = sbr.rel (0) target = $region17
    $region16: #{tpu_custom_call.1} parent=1 // pred_region
      %s62 = ssub.s32 1024, 1024
      %63 = vsyncadd [#allocation11], %s62
      %s64 = sshll.u32 [#allocation10], 4
      %s65 = int_to_ptr.vmem [resolvable:$true] %s64
      %70 = dma.hbm_to_vmem [thread:$0]  %s3, 1024, %s65, [#allocation11], 256, 256, 16
    $region17: #{tpu_custom_call.1} parent=1 // pred_fallthru
      _
    // Predicated region
    $region18: #{tpu_custom_call.1} parent=1 // pred_check
      _
    $region19: #{tpu_custom_call.1} parent=1 // pred_check_branch
      %72 = sbr.rel (0) target = $region21
    $region20: #{tpu_custom_call.1} parent=1 // pred_region
      _
    $region21: #{tpu_custom_call.1} parent=1 // pred_fallthru
      _
    // Predicated region
    $region22: #{tpu_custom_call.1} parent=1 // pred_check
      _
    $region23: #{tpu_custom_call.1} parent=1 // pred_check_branch
      %74 = sbr.rel (0) target = $region25
    $region24: #{tpu_custom_call.1} parent=1 // pred_region
      %s76 = ssub.s32 512, 512
      %77 = vsyncadd [#allocation11], %s76
      %s78 = sshll.u32 [#allocation12], 4
      %s79 = int_to_ptr.vmem [resolvable:$true] %s78
      %84 = dma.hbm_to_vmem [thread:$0]  %s5, 512, %s79, [#allocation11], 128, 128, 8
    $region25: #{tpu_custom_call.1} parent=1 // pred_fallthru
      _
    // Predicated region
    $region26: #{tpu_custom_call.1} parent=1 // pred_check
      _
    $region27: #{tpu_custom_call.1} parent=1 // pred_check_branch
      %86 = sbr.rel (0) target = $region29
    $region28: #{tpu_custom_call.1} parent=1 // pred_region
      %s88 = ssub.s32 512, 512
      %89 = vsyncadd [#allocation14], %s88
      %s90 = sshll.u32 [#allocation13], 4
      %s91 = int_to_ptr.vmem [resolvable:$true] %s90
      %96 = dma.hbm_to_vmem [thread:$0]  %s6, 512, %s91, [#allocation14], 128, 128, 8
    $region29: #{tpu_custom_call.1} parent=1 // pred_fallthru
      _
    // Predicated region
    $region30: #{tpu_custom_call.1} parent=1 // pred_check
      _
    $region31: #{tpu_custom_call.1} parent=1 // pred_check_branch
      %98 = sbr.rel (0) target = $region33
    $region32: #{tpu_custom_call.1} parent=1 // pred_region
      _
    $region33: #{tpu_custom_call.1} parent=1 // pred_fallthru
      _
    // Predicated region
    $region34: #{tpu_custom_call.1} parent=1 // pred_check
      _
    $region35: #{tpu_custom_call.1} parent=1 // pred_check_branch
      %100 = sbr.rel (0) target = $region37
    $region36: #{tpu_custom_call.1} parent=1 // pred_region
      %s102 = ssub.s32 512, 512
      %103 = vsyncadd [#allocation14], %s102
      %s104 = sshll.u32 [#allocation15], 4
      %s105 = int_to_ptr.vmem [resolvable:$true] %s104
      %110 = dma.hbm_to_vmem [thread:$0]  %s8, 512, %s105, [#allocation14], 128, 128, 8
    $region37: #{tpu_custom_call.1} parent=1 // pred_fallthru
      _
    // Predicated region
    $region38: #{tpu_custom_call.1} parent=1 // pred_check
      _
    $region39: #{tpu_custom_call.1} parent=1 // pred_check_branch
      %112 = sbr.rel (0) target = $region41
    $region40: #{tpu_custom_call.1} parent=1 // pred_region
      _
    $region41: #{tpu_custom_call.1} parent=1 // pred_fallthru
      _
    // Predicated region
    $region42: #{tpu_custom_call.1} parent=1 // pred_check
      _
    $region43: #{tpu_custom_call.1} parent=1 // pred_check_branch
      %114 = sbr.rel (0) target = $region45
    $region44: #{tpu_custom_call.1} parent=1 // pred_region
      %115 = dma.done [#allocation5], 1024
    $region45: #{tpu_custom_call.1} parent=1 // pred_fallthru
      _
    // Predicated region
    $region46: #{tpu_custom_call.1} parent=1 // pred_check
      _
    $region47: #{tpu_custom_call.1} parent=1 // pred_check_branch
      %117 = sbr.rel (0) target = $region49
    $region48: #{tpu_custom_call.1} parent=1 // pred_region
      %118 = dma.done [#allocation8], 1024
    $region49: #{tpu_custom_call.1} parent=1 // pred_fallthru
      _
    // Predicated region
    $region50: #{tpu_custom_call.1} parent=1 // pred_check
      _
    $region51: #{tpu_custom_call.1} parent=1 // pred_check_branch
      %120 = sbr.rel (0) target = $region53
    $region52: #{tpu_custom_call.1} parent=1 // pred_region
      %121 = dma.done [#allocation8], 1024
    $region53: #{tpu_custom_call.1} parent=1 // pred_fallthru
      _
    // Predicated region
    $region54: #{tpu_custom_call.1} parent=1 // pred_check
      _
    $region55: #{tpu_custom_call.1} parent=1 // pred_check_branch
      %123 = sbr.rel (0) target = $region57
    $region56: #{tpu_custom_call.1} parent=1 // pred_region
      %124 = dma.done [#allocation11], 1024
    $region57: #{tpu_custom_call.1} parent=1 // pred_fallthru
      _
    // Predicated region
    $region58: #{tpu_custom_call.1} parent=1 // pred_check
      _
    $region59: #{tpu_custom_call.1} parent=1 // pred_check_branch
      %126 = sbr.rel (0) target = $region61
    $region60: #{tpu_custom_call.1} parent=1 // pred_region
      %127 = dma.done [#allocation11], 512
    $region61: #{tpu_custom_call.1} parent=1 // pred_fallthru
      _
    // Predicated region
    $region62: #{tpu_custom_call.1} parent=1 // pred_check
      _
    $region63: #{tpu_custom_call.1} parent=1 // pred_check_branch
      %129 = sbr.rel (0) target = $region65
    $region64: #{tpu_custom_call.1} parent=1 // pred_region
      %130 = dma.done [#allocation14], 512
    $region65: #{tpu_custom_call.1} parent=1 // pred_fallthru
      _
    // Predicated region
    $region66: #{tpu_custom_call.1} parent=1 // pred_check
      _
    $region67: #{tpu_custom_call.1} parent=1 // pred_check_branch
      %132 = sbr.rel (0) target = $region69
    $region68: #{tpu_custom_call.1} parent=1 // pred_region
      %133 = dma.done [#allocation14], 512
    $region69: #{tpu_custom_call.1} parent=1 // pred_fallthru
      _
    %v134 = vld [vmem:[#allocation4] sm:$0xff]
    %v135 = vld [vmem:[#allocation4 + $0x8] sm:$0xff]
    %v136 = vld [vmem:[#allocation4 + $0x10] sm:$0xff]
    %v137 = vld [vmem:[#allocation4 + $0x18] sm:$0xff]
    %v138 = vld [vmem:[#allocation4 + $0x20] sm:$0xff]
    %v139 = vld [vmem:[#allocation4 + $0x28] sm:$0xff]
    %v140 = vld [vmem:[#allocation4 + $0x30] sm:$0xff]
    %v141 = vld [vmem:[#allocation4 + $0x38] sm:$0xff]
    %v142 = vld [vmem:[#allocation7] sm:$0xff]
    %v143 = vld [vmem:[#allocation7 + $0x8] sm:$0xff]
    %v144 = vld [vmem:[#allocation7 + $0x10] sm:$0xff]
    %v145 = vld [vmem:[#allocation7 + $0x18] sm:$0xff]
    %v146 = vld [vmem:[#allocation7 + $0x20] sm:$0xff]
    %v147 = vld [vmem:[#allocation7 + $0x28] sm:$0xff]
    %v148 = vld [vmem:[#allocation7 + $0x30] sm:$0xff]
    %v149 = vld [vmem:[#allocation7 + $0x38] sm:$0xff]
    %p150 = scmp.eq.s32.totalorder 0, 0
    // Predicated region
    $region70: #{tpu_custom_call.1} parent=1 // pred_check
      %p151 = pneg %p150
    $region71: #{tpu_custom_call.1} parent=1 // pred_check_branch
      %153 = sbr.rel (%p151) target = $region73
    $region72: #{tpu_custom_call.1} parent=1 // pred_region
      %vm154 = vcmask 261120
      %v155 = vsel %vm154, %v134, 0.0
      %v156 = vrot.slane %v155, 4
      %v157 = vadd.f32 %v155, %v156
      %v158 = vrot.slane %v157, 2
      %v159 = vadd.f32 %v157, %v158
      %v160 = vrot.slane %v159, 1
      %v161 = vadd.f32 %v159, %v160
      %v162 = vsel %vm154, %v135, 0.0
      %v163 = vrot.slane %v162, 4
      %v164 = vadd.f32 %v162, %v163
      %v165 = vrot.slane %v164, 2
      %v166 = vadd.f32 %v164, %v165
      %v167 = vrot.slane %v166, 1
      %v168 = vadd.f32 %v166, %v167
      %v169 = vsel %vm154, %v136, 0.0
      %v170 = vrot.slane %v169, 4
      %v171 = vadd.f32 %v169, %v170
      %v172 = vrot.slane %v171, 2
      %v173 = vadd.f32 %v171, %v172
      %v174 = vrot.slane %v173, 1
      %v175 = vadd.f32 %v173, %v174
      %v176 = vsel %vm154, %v137, 0.0
      %v177 = vrot.slane %v176, 4
      %v178 = vadd.f32 %v176, %v177
      %v179 = vrot.slane %v178, 2
      %v180 = vadd.f32 %v178, %v179
      %v181 = vrot.slane %v180, 1
      %v182 = vadd.f32 %v180, %v181
      %v183 = vsel %vm154, %v138, 0.0
      %v184 = vrot.slane %v183, 4
      %v185 = vadd.f32 %v183, %v184
      %v186 = vrot.slane %v185, 2
      %v187 = vadd.f32 %v185, %v186
      %v188 = vrot.slane %v187, 1
      %v189 = vadd.f32 %v187, %v188
      %v190 = vsel %vm154, %v139, 0.0
      %v191 = vrot.slane %v190, 4
      %v192 = vadd.f32 %v190, %v191
      %v193 = vrot.slane %v192, 2
      %v194 = vadd.f32 %v192, %v193
      %v195 = vrot.slane %v194, 1
      %v196 = vadd.f32 %v194, %v195
      %v197 = vsel %vm154, %v140, 0.0
      %v198 = vrot.slane %v197, 4
      %v199 = vadd.f32 %v197, %v198
      %v200 = vrot.slane %v199, 2
      %v201 = vadd.f32 %v199, %v200
      %v202 = vrot.slane %v201, 1
      %v203 = vadd.f32 %v201, %v202
      %v204 = vsel %vm154, %v141, 0.0
      %v205 = vrot.slane %v204, 4
      %v206 = vadd.f32 %v204, %v205
      %v207 = vrot.slane %v206, 2
      %v208 = vadd.f32 %v206, %v207
      %v209 = vrot.slane %v208, 1
      %v210 = vadd.f32 %v208, %v209
      %v211 = vrcp.pop 8.0
      %v212 = vmul.f32 %v161, %v211
      %v213 = vmul.f32 %v168, %v211
      %v214 = vmul.f32 %v175, %v211
      %v215 = vmul.f32 %v182, %v211
      %v216 = vmul.f32 %v189, %v211
      %v217 = vmul.f32 %v196, %v211
      %v218 = vmul.f32 %v203, %v211
      %v219 = vmul.f32 %v210, %v211
      %v220 = vld [vmem:[#allocation13] sm:$0xff]
      %v221 = vld [vmem:[#allocation13 + $0x8] sm:$0xff]
      %v222 = vld [vmem:[#allocation13 + $0x10] sm:$0xff]
      %v223 = vld [vmem:[#allocation13 + $0x18] sm:$0xff]
      %v224 = vld [vmem:[%s7] sm:$0x1]
      %v226 = vlaneseq
      %v227 = vshrl.u32 %v226, 7
      %v228 = vsub.s32 0, %v227
      %v229 = vrot.slane %v224, %v228
      %vm239 = vcmask 1041409
      %v240 = vsel %vm239, %v213, %v212
      %vm241 = vcmask 1042434
      %v242 = vsel %vm241, %v214, %v240
      %vm243 = vcmask 1043459
      %v244 = vsel %vm243, %v215, %v242
      %vm245 = vcmask 1044484
      %v246 = vsel %vm245, %v216, %v244
      %vm247 = vcmask 1045509
      %v248 = vsel %vm247, %v217, %v246
      %vm249 = vcmask 1046534
      %v250 = vsel %vm249, %v218, %v248
      %vm251 = vcmask 1047559
      %v252 = vsel %vm251, %v219, %v250
      %v253 = vsel %vm154, %v252, 0
      %255 = vmatprep.subr.mxu0 0.0
      %256 = vmatpush1.msra.mxu0 0.0
      %257 = vmatprep.subr.mxu0 0.0
      %258 = vmatpush1.msra.mxu0 0.0
      %259 = vmatprep.subr.mxu0 0.0
      %260 = vmatpush1.msra.mxu0 0.0
      %261 = vmatprep.subr.mxu0 0.0
      %262 = vmatpush1.msra.mxu0 0.0
      %263 = vmatprep.subr.mxu0 0.0
      %264 = vmatpush1.msra.mxu0 0.0
      %265 = vmatprep.subr.mxu0 0.0
      %266 = vmatpush1.msra.mxu0 0.0
      %267 = vmatprep.subr.mxu0 0.0
      %268 = vmatpush1.msra.mxu0 0.0
      %269 = vmatprep.subr.mxu0 0.0
      %270 = vmatpush1.msra.mxu0 0.0
      %271 = vmatprep.subr.mxu0 0.0
      %272 = vmatpush1.msra.mxu0 0.0
      %273 = vmatprep.subr.mxu0 0.0
      %274 = vmatpush1.msra.mxu0 0.0
      %275 = vmatprep.subr.mxu0 0.0
      %276 = vmatpush1.msra.mxu0 0.0
      %277 = vmatprep.subr.mxu0 0.0
      %278 = vmatpush1.msra.mxu0 0.0
      %279 = vmatprep.subr.mxu0 0.0
      %280 = vmatpush1.msra.mxu0 %v223
      %281 = vmatprep.subr.mxu0 0.0
      %282 = vmatpush1.msra.mxu0 %v222
      %283 = vmatprep.subr.mxu0 0.0
      %284 = vmatpush1.msra.mxu0 %v221
      %285 = vmatprep.subr.mxu0 0.0
      %286 = vmatpush1.msra.mxu0 %v220
      %287 = vmatprep.subr.mxu0 0.0
      %288 = vmatpush2.msra.mxu0 0.0
      %289 = vmatprep.subr.mxu0 0.0
      %290 = vmatpush2.msra.mxu0 0.0
      %291 = vmatprep.subr.mxu0 0.0
      %292 = vmatpush2.msra.mxu0 0.0
      %293 = vmatprep.subr.mxu0 0.0
      %294 = vmatpush2.msra.mxu0 0.0
      %295 = vmatprep.subr.mxu0 0.0
      %296 = vmatpush2.msra.mxu0 0.0
      %297 = vmatprep.subr.mxu0 0.0
      %298 = vmatpush2.msra.mxu0 0.0
      %299 = vmatprep.subr.mxu0 0.0
      %300 = vmatpush2.msra.mxu0 0.0
      %301 = vmatprep.subr.mxu0 0.0
      %302 = vmatpush2.msra.mxu0 0.0
      %303 = vmatprep.subr.mxu0 0.0
      %304 = vmatpush2.msra.mxu0 0.0
      %305 = vmatprep.subr.mxu0 0.0
      %306 = vmatpush2.msra.mxu0 0.0
      %307 = vmatprep.subr.mxu0 0.0
      %308 = vmatpush2.msra.mxu0 0.0
      %309 = vmatprep.subr.mxu0 0.0
      %310 = vmatpush2.msra.mxu0 0.0
      %311 = vmatprep.subr.mxu0 0.0
      %312 = vmatpush2.msra.mxu0 0.0
      %313 = vmatprep.subr.mxu0 0.0
      %314 = vmatpush2.msra.mxu0 0.0
      %315 = vmatprep.subr.mxu0 0.0
      %316 = vmatpush2.msra.mxu0 0.0
      %317 = vmatprep.subr.mxu0 0.0
      %318 = vmatpush2.msra.mxu0 0.0
      %319 = vmatprep.mubr.f32.mxu0 0.0
      %320 = vmatmul.mubr.f32.gmra.mxu0 %v253
      %v321 = vpop.f32.mrf.mxu0
      %v322 = vadd.f32 %v229, %v321
      %v323 = vpop.f32.mrf.mxu0
      %324 = vdwg.mxu0
      %325 = vst.msk [vmem:[#allocation2] sm:$0xff] %vm154, %v322
      %v326 = vld [vmem:[#allocation15] sm:$0xff]
      %v327 = vld [vmem:[#allocation15 + $0x8] sm:$0xff]
      %v328 = vld [vmem:[#allocation15 + $0x10] sm:$0xff]
      %v329 = vld [vmem:[#allocation15 + $0x18] sm:$0xff]
      %v330 = vld [vmem:[%s9] sm:$0x1]
      %v332 = vlaneseq
      %v333 = vshrl.u32 %v332, 7
      %v334 = vsub.s32 0, %v333
      %v335 = vrot.slane %v330, %v334
      %337 = vmatprep.subr.mxu0 0.0
      %338 = vmatpush1.msra.mxu0 0.0
      %339 = vmatprep.subr.mxu0 0.0
      %340 = vmatpush1.msra.mxu0 0.0
      %341 = vmatprep.subr.mxu0 0.0
      %342 = vmatpush1.msra.mxu0 0.0
      %343 = vmatprep.subr.mxu0 0.0
      %344 = vmatpush1.msra.mxu0 0.0
      %345 = vmatprep.subr.mxu0 0.0
      %346 = vmatpush1.msra.mxu0 0.0
      %347 = vmatprep.subr.mxu0 0.0
      %348 = vmatpush1.msra.mxu0 0.0
      %349 = vmatprep.subr.mxu0 0.0
      %350 = vmatpush1.msra.mxu0 0.0
      %351 = vmatprep.subr.mxu0 0.0
      %352 = vmatpush1.msra.mxu0 0.0
      %353 = vmatprep.subr.mxu0 0.0
      %354 = vmatpush1.msra.mxu0 0.0
      %355 = vmatprep.subr.mxu0 0.0
      %356 = vmatpush1.msra.mxu0 0.0
      %357 = vmatprep.subr.mxu0 0.0
      %358 = vmatpush1.msra.mxu0 0.0
      %359 = vmatprep.subr.mxu0 0.0
      %360 = vmatpush1.msra.mxu0 0.0
      %361 = vmatprep.subr.mxu0 0.0
      %362 = vmatpush1.msra.mxu0 %v329
      %363 = vmatprep.subr.mxu0 0.0
      %364 = vmatpush1.msra.mxu0 %v328
      %365 = vmatprep.subr.mxu0 0.0
      %366 = vmatpush1.msra.mxu0 %v327
      %367 = vmatprep.subr.mxu0 0.0
      %368 = vmatpush1.msra.mxu0 %v326
      %369 = vmatprep.subr.mxu0 0.0
      %370 = vmatpush2.msra.mxu0 0.0
      %371 = vmatprep.subr.mxu0 0.0
      %372 = vmatpush2.msra.mxu0 0.0
      %373 = vmatprep.subr.mxu0 0.0
      %374 = vmatpush2.msra.mxu0 0.0
      %375 = vmatprep.subr.mxu0 0.0
      %376 = vmatpush2.msra.mxu0 0.0
      %377 = vmatprep.subr.mxu0 0.0
      %378 = vmatpush2.msra.mxu0 0.0
      %379 = vmatprep.subr.mxu0 0.0
      %380 = vmatpush2.msra.mxu0 0.0
      %381 = vmatprep.subr.mxu0 0.0
      %382 = vmatpush2.msra.mxu0 0.0
      %383 = vmatprep.subr.mxu0 0.0
      %384 = vmatpush2.msra.mxu0 0.0
      %385 = vmatprep.subr.mxu0 0.0
      %386 = vmatpush2.msra.mxu0 0.0
      %387 = vmatprep.subr.mxu0 0.0
      %388 = vmatpush2.msra.mxu0 0.0
      %389 = vmatprep.subr.mxu0 0.0
      %390 = vmatpush2.msra.mxu0 0.0
      %391 = vmatprep.subr.mxu0 0.0
      %392 = vmatpush2.msra.mxu0 0.0
      %393 = vmatprep.subr.mxu0 0.0
      %394 = vmatpush2.msra.mxu0 0.0
      %395 = vmatprep.subr.mxu0 0.0
      %396 = vmatpush2.msra.mxu0 0.0
      %397 = vmatprep.subr.mxu0 0.0
      %398 = vmatpush2.msra.mxu0 0.0
      %399 = vmatprep.subr.mxu0 0.0
      %400 = vmatpush2.msra.mxu0 0.0
      %401 = vmatprep.mubr.f32.mxu0 0.0
      %402 = vmatmul.mubr.f32.gmra.mxu0 %v253
      %v403 = vpop.f32.mrf.mxu0
      %v404 = vadd.f32 %v335, %v403
      %v405 = vpop.f32.mrf.mxu0
      %406 = vdwg.mxu0
      %407 = vst.msk [vmem:[#allocation3] sm:$0xff] %vm154, %v404
    $region73: #{tpu_custom_call.1} parent=1 // pred_fallthru
      _
    %v408 = vld [vmem:[#allocation10] sm:$0xff]
    %v409 = vld [vmem:[#allocation10 + $0x8] sm:$0xff]
    %v410 = vld [vmem:[#allocation10 + $0x10] sm:$0xff]
    %v411 = vld [vmem:[#allocation10 + $0x18] sm:$0xff]
    %v412 = vld [vmem:[#allocation10 + $0x20] sm:$0xff]
    %v413 = vld [vmem:[#allocation10 + $0x28] sm:$0xff]
    %v414 = vld [vmem:[#allocation10 + $0x30] sm:$0xff]
    %v415 = vld [vmem:[#allocation10 + $0x38] sm:$0xff]
    %v416 = vld [vmem:[%s4] sm:$0x1]
    %v417 = vld [vmem:[#allocation12] sm:$0xff]
    %v418 = vld [vmem:[#allocation12 + $0x8] sm:$0xff]
    %v419 = vld [vmem:[#allocation12 + $0x10] sm:$0xff]
    %v420 = vld [vmem:[#allocation12 + $0x18] sm:$0xff]
    %v421 = vld [vmem:[#allocation2] sm:$0xff]
    %v422 = vld [vmem:[#allocation3] sm:$0xff]
    %vm423 = vcmask 261120
    %v425 = vsel %vm423, %v421, 0
    %427 = vmatprep.subr.mxu0 0.0
    %428 = vmatpush1.msra.mxu0 0.0
    %429 = vmatprep.subr.mxu0 0.0
    %430 = vmatpush1.msra.mxu0 0.0
    %431 = vmatprep.subr.mxu0 0.0
    %432 = vmatpush1.msra.mxu0 0.0
    %433 = vmatprep.subr.mxu0 0.0
    %434 = vmatpush1.msra.mxu0 0.0
    %435 = vmatprep.subr.mxu0 0.0
    %436 = vmatpush1.msra.mxu0 0.0
    %437 = vmatprep.subr.mxu0 0.0
    %438 = vmatpush1.msra.mxu0 0.0
    %439 = vmatprep.subr.mxu0 0.0
    %440 = vmatpush1.msra.mxu0 0.0
    %441 = vmatprep.subr.mxu0 0.0
    %442 = vmatpush1.msra.mxu0 0.0
    %443 = vmatprep.subr.mxu0 0.0
    %444 = vmatpush1.msra.mxu0 0.0
    %445 = vmatprep.subr.mxu0 0.0
    %446 = vmatpush1.msra.mxu0 0.0
    %447 = vmatprep.subr.mxu0 0.0
    %448 = vmatpush1.msra.mxu0 0.0
    %449 = vmatprep.subr.mxu0 0.0
    %450 = vmatpush1.msra.mxu0 0.0
    %451 = vmatprep.subr.mxu0 %v415
    %452 = vmatpush1.msra.mxu0 %v414
    %453 = vmatprep.subr.mxu0 %v413
    %454 = vmatpush1.msra.mxu0 %v412
    %455 = vmatprep.subr.mxu0 %v411
    %456 = vmatpush1.msra.mxu0 %v410
    %457 = vmatprep.subr.mxu0 %v409
    %458 = vmatpush1.msra.mxu0 %v408
    %459 = vmatprep.subr.mxu0 0.0
    %460 = vmatpush2.msra.mxu0 0.0
    %461 = vmatprep.subr.mxu0 0.0
    %462 = vmatpush2.msra.mxu0 0.0
    %463 = vmatprep.subr.mxu0 0.0
    %464 = vmatpush2.msra.mxu0 0.0
    %465 = vmatprep.subr.mxu0 0.0
    %466 = vmatpush2.msra.mxu0 0.0
    %467 = vmatprep.subr.mxu0 0.0
    %468 = vmatpush2.msra.mxu0 0.0
    %469 = vmatprep.subr.mxu0 0.0
    %470 = vmatpush2.msra.mxu0 0.0
    %471 = vmatprep.subr.mxu0 0.0
    %472 = vmatpush2.msra.mxu0 0.0
    %473 = vmatprep.subr.mxu0 0.0
    %474 = vmatpush2.msra.mxu0 0.0
    %475 = vmatprep.subr.mxu0 0.0
    %476 = vmatpush2.msra.mxu0 0.0
    %477 = vmatprep.subr.mxu0 0.0
    %478 = vmatpush2.msra.mxu0 0.0
    %479 = vmatprep.subr.mxu0 0.0
    %480 = vmatpush2.msra.mxu0 0.0
    %481 = vmatprep.subr.mxu0 0.0
    %482 = vmatpush2.msra.mxu0 0.0
    %483 = vmatprep.subr.mxu0 0.0
    %484 = vmatpush2.msra.mxu0 0.0
    %485 = vmatprep.subr.mxu0 0.0
    %486 = vmatpush2.msra.mxu0 0.0
    %487 = vmatprep.subr.mxu0 0.0
    %488 = vmatpush2.msra.mxu0 0.0
    %489 = vmatprep.subr.mxu0 0.0
    %490 = vmatpush2.msra.mxu0 0.0
    %491 = vmatprep.mubr.f32.mxu0 0.0
    %492 = vmatmul.mubr.f32.gmra.mxu0 %v425
    %v493 = vpop.f32.mrf.mxu0
    %v494 = vadd.f32 0.0, %v493
    %v495 = vpop.f32.mrf.mxu0
    %v496 = vadd.f32 0.0, %v495
    %497 = vdwg.mxu0
    %v499 = vcombine.high %v494, %v494
    %v501 = vunpack.c.l.s4 1966171168
    %v502 = vunpack.c.0.s8 %v501
    %v503 = vlaneseq
    %v504 = vshrl.u32 %v503, 7
    %v505 = vsub.s32 %v502, %v504
    %v506 = vrot.slane %v494, %v505
    %v508 = vunpack.c.l.s4 1966171168
    %v509 = vunpack.c.0.s8 %v508
    %v510 = vlaneseq
    %v511 = vshrl.u32 %v510, 7
    %v512 = vsub.s32 %v509, %v511
    %v513 = vrot.slane %v499, %v512
    %v514 = vcombine.high %v506, %v506
    %v515 = vcombine.high %v513, %v513
    %v517 = vunpack.c.l.s4 1966171168
    %v518 = vunpack.c.0.s8 %v517
    %v519 = vlaneseq
    %v520 = vshrl.u32 %v519, 7
    %v521 = vsub.s32 %v518, %v520
    %v522 = vrot.slane %v506, %v521
    %v524 = vunpack.c.l.s4 1966171168
    %v525 = vunpack.c.0.s8 %v524
    %v526 = vlaneseq
    %v527 = vshrl.u32 %v526, 7
    %v528 = vsub.s32 %v525, %v527
    %v529 = vrot.slane %v513, %v528
    %v531 = vunpack.c.l.s4 1966171168
    %v532 = vunpack.c.0.s8 %v531
    %v533 = vlaneseq
    %v534 = vshrl.u32 %v533, 7
    %v535 = vsub.s32 %v532, %v534
    %v536 = vrot.slane %v514, %v535
    %v538 = vunpack.c.l.s4 1966171168
    %v539 = vunpack.c.0.s8 %v538
    %v540 = vlaneseq
    %v541 = vshrl.u32 %v540, 7
    %v542 = vsub.s32 %v539, %v541
    %v543 = vrot.slane %v515, %v542
    %v544 = vcombine.high %v522, %v522
    %v545 = vcombine.high %v529, %v529
    %v546 = vcombine.high %v536, %v536
    %v547 = vcombine.high %v543, %v543
    %v548 = vlaneseq
    %v549 = vshrl.u32 %v548, 7
    %v550 = vsub.s32 0, %v549
    %v551 = vrot.slane %v522, %v550
    %v552 = vlaneseq
    %v553 = vshrl.u32 %v552, 7
    %v554 = vsub.s32 0, %v553
    %v555 = vrot.slane %v536, %v554
    %v556 = vlaneseq
    %v557 = vshrl.u32 %v556, 7
    %v558 = vsub.s32 0, %v557
    %v559 = vrot.slane %v544, %v558
    %v560 = vlaneseq
    %v561 = vshrl.u32 %v560, 7
    %v562 = vsub.s32 0, %v561
    %v563 = vrot.slane %v546, %v562
    %v564 = vlaneseq
    %v565 = vshrl.u32 %v564, 7
    %v566 = vsub.s32 0, %v565
    %v567 = vrot.slane %v529, %v566
    %v568 = vlaneseq
    %v569 = vshrl.u32 %v568, 7
    %v570 = vsub.s32 0, %v569
    %v571 = vrot.slane %v543, %v570
    %v572 = vlaneseq
    %v573 = vshrl.u32 %v572, 7
    %v574 = vsub.s32 0, %v573
    %v575 = vrot.slane %v545, %v574
    %v576 = vlaneseq
    %v577 = vshrl.u32 %v576, 7
    %v578 = vsub.s32 0, %v577
    %v579 = vrot.slane %v547, %v578
    %v588 = vadd.f32 %v142, %v551
    %v589 = vadd.f32 %v143, %v555
    %v590 = vadd.f32 %v144, %v559
    %v591 = vadd.f32 %v145, %v563
    %v592 = vadd.f32 %v146, %v567
    %v593 = vadd.f32 %v147, %v571
    %v594 = vadd.f32 %v148, %v575
    %v595 = vadd.f32 %v149, %v579
    %v596 = vtanh.pop %v588
    %v597 = vtanh.pop %v589
    %v598 = vtanh.pop %v590
    %v599 = vtanh.pop %v591
    %v600 = vtanh.pop %v592
    %v601 = vtanh.pop %v593
    %v602 = vtanh.pop %v594
    %v603 = vtanh.pop %v595
    %v605 = vlaneseq
    %v606 = vshrl.u32 %v605, 7
    %v607 = vsub.s32 0, %v606
    %v608 = vrot.slane %v416, %v607
    %v610 = vmul.f32 %v596, %v608
    %v611 = vmul.f32 %v597, %v608
    %v612 = vmul.f32 %v598, %v608
    %v613 = vmul.f32 %v599, %v608
    %v614 = vmul.f32 %v600, %v608
    %v615 = vmul.f32 %v601, %v608
    %v616 = vmul.f32 %v602, %v608
    %v617 = vmul.f32 %v603, %v608
    %v618 = vsel %vm423, %v610, 0.0
    %619 = vadd.xlane.f32.xlu0 %v618
    %v620 = vpop.xlane.xlu0 %619
    %v621 = vsel %vm423, %v611, 0.0
    %622 = vadd.xlane.f32.xlu0 %v621
    %v623 = vpop.xlane.xlu0 %622
    %v624 = vsel %vm423, %v612, 0.0
    %625 = vadd.xlane.f32.xlu0 %v624
    %v626 = vpop.xlane.xlu0 %625
    %v627 = vsel %vm423, %v613, 0.0
    %628 = vadd.xlane.f32.xlu0 %v627
    %v629 = vpop.xlane.xlu0 %628
    %v630 = vsel %vm423, %v614, 0.0
    %631 = vadd.xlane.f32.xlu0 %v630
    %v632 = vpop.xlane.xlu0 %631
    %v633 = vsel %vm423, %v615, 0.0
    %634 = vadd.xlane.f32.xlu0 %v633
    %v635 = vpop.xlane.xlu0 %634
    %v636 = vsel %vm423, %v616, 0.0
    %637 = vadd.xlane.f32.xlu0 %v636
    %v638 = vpop.xlane.xlu0 %637
    %v639 = vsel %vm423, %v617, 0.0
    %640 = vadd.xlane.f32.xlu0 %v639
    %v641 = vpop.xlane.xlu0 %640
    %v650 = vlaneseq
    %v651 = vand.u32 %v650, 127
    %v652 = vlaneseq
    %v653 = vshrl.u32 %v652, 7
    %v654 = vsub.s32 %v651, %v653
    %v655 = vrot.slane %v620, %v654
    %v656 = vlaneseq
    %v657 = vshrl.u32 %v656, 7
    %v658 = vsub.s32 %v651, %v657
    %v659 = vrot.slane %v623, %v658
    %v660 = vlaneseq
    %v661 = vshrl.u32 %v660, 7
    %v662 = vsub.s32 %v651, %v661
    %v663 = vrot.slane %v626, %v662
    %v664 = vlaneseq
    %v665 = vshrl.u32 %v664, 7
    %v666 = vsub.s32 %v651, %v665
    %v667 = vrot.slane %v629, %v666
    %v668 = vlaneseq
    %v669 = vshrl.u32 %v668, 7
    %v670 = vsub.s32 %v651, %v669
    %v671 = vrot.slane %v632, %v670
    %v672 = vlaneseq
    %v673 = vshrl.u32 %v672, 7
    %v674 = vsub.s32 %v651, %v673
    %v675 = vrot.slane %v635, %v674
    %v676 = vlaneseq
    %v677 = vshrl.u32 %v676, 7
    %v678 = vsub.s32 %v651, %v677
    %v679 = vrot.slane %v638, %v678
    %v680 = vlaneseq
    %v681 = vshrl.u32 %v680, 7
    %v682 = vsub.s32 %v651, %v681
    %v683 = vrot.slane %v641, %v682
    %vm684 = vcmask 1041409
    %v685 = vsel %vm684, %v659, %v655
    %vm686 = vcmask 1042434
    %v687 = vsel %vm686, %v663, %v685
    %vm688 = vcmask 1043459
    %v689 = vsel %vm688, %v667, %v687
    %vm690 = vcmask 1044484
    %v691 = vsel %vm690, %v671, %v689
    %vm692 = vcmask 1045509
    %v693 = vsel %vm692, %v675, %v691
    %vm694 = vcmask 1046534
    %v695 = vsel %vm694, %v679, %v693
    %vm696 = vcmask 1047559
    %v697 = vsel %vm696, %v683, %v695
    %vm699 = vcmask 64512
    %v700 = vsel %vm699, %v697, -inf
    %701 = vmax.xlane.f32.xlu0 %v700
    %v702 = vpop.xlane.xlu0 %701
    %v704 = vlaneseq
    %v705 = vshrl.u32 %v704, 7
    %v706 = vsub.s32 0, %v705
    %v707 = vrot.slane %v702, %v706
    %v708 = vlaneseq
    %v709 = vshrl.u32 %v708, 7
    %v710 = vsub.s32 1, %v709
    %v711 = vrot.slane %v702, %v710
    %v712 = vlaneseq
    %v713 = vshrl.u32 %v712, 7
    %v714 = vsub.s32 2, %v713
    %v715 = vrot.slane %v702, %v714
    %v716 = vlaneseq
    %v717 = vshrl.u32 %v716, 7
    %v718 = vsub.s32 3, %v717
    %v719 = vrot.slane %v702, %v718
    %v720 = vlaneseq
    %v721 = vshrl.u32 %v720, 7
    %v722 = vsub.s32 4, %v721
    %v723 = vrot.slane %v702, %v722
    %v724 = vlaneseq
    %v725 = vshrl.u32 %v724, 7
    %v726 = vsub.s32 5, %v725
    %v727 = vrot.slane %v702, %v726
    %v728 = vlaneseq
    %v729 = vshrl.u32 %v728, 7
    %v730 = vsub.s32 6, %v729
    %v731 = vrot.slane %v702, %v730
    %v732 = vlaneseq
    %v733 = vshrl.u32 %v732, 7
    %v734 = vsub.s32 7, %v733
    %v735 = vrot.slane %v702, %v734
    %v744 = vsub.f32 %v620, %v707
    %v745 = vsub.f32 %v623, %v711
    %v746 = vsub.f32 %v626, %v715
    %v747 = vsub.f32 %v629, %v719
    %v748 = vsub.f32 %v632, %v723
    %v749 = vsub.f32 %v635, %v727
    %v750 = vsub.f32 %v638, %v731
    %v751 = vsub.f32 %v641, %v735
    %v752 = vmul.f32 %v744, 1.442695
    %v753 = vpow.pop %v752
    %v754 = vmul.f32 %v745, 1.442695
    %v755 = vpow.pop %v754
    %v756 = vmul.f32 %v746, 1.442695
    %v757 = vpow.pop %v756
    %v758 = vmul.f32 %v747, 1.442695
    %v759 = vpow.pop %v758
    %v760 = vmul.f32 %v748, 1.442695
    %v761 = vpow.pop %v760
    %v762 = vmul.f32 %v749, 1.442695
    %v763 = vpow.pop %v762
    %v764 = vmul.f32 %v750, 1.442695
    %v765 = vpow.pop %v764
    %v766 = vmul.f32 %v751, 1.442695
    %v767 = vpow.pop %v766
    %776 = vset.pattern.permute.xlu0 0
    %777 = vperm.xlu0 %776, %v753
    %v778 = vpop.permute.xlu0 %777
    %779 = vset.pattern.permute.xlu0 0
    %780 = vperm.xlu0 %779, %v755
    %v781 = vpop.permute.xlu0 %780
    %782 = vset.pattern.permute.xlu0 0
    %783 = vperm.xlu0 %782, %v757
    %v784 = vpop.permute.xlu0 %783
    %785 = vset.pattern.permute.xlu0 0
    %786 = vperm.xlu0 %785, %v759
    %v787 = vpop.permute.xlu0 %786
    %788 = vset.pattern.permute.xlu0 0
    %789 = vperm.xlu0 %788, %v761
    %v790 = vpop.permute.xlu0 %789
    %791 = vset.pattern.permute.xlu0 0
    %792 = vperm.xlu0 %791, %v763
    %v793 = vpop.permute.xlu0 %792
    %794 = vset.pattern.permute.xlu0 0
    %795 = vperm.xlu0 %794, %v765
    %v796 = vpop.permute.xlu0 %795
    %797 = vset.pattern.permute.xlu0 0
    %798 = vperm.xlu0 %797, %v767
    %v799 = vpop.permute.xlu0 %798
    %v800 = vlaneseq
    %v801 = vshrl.u32 %v800, 7
    %v802 = vsub.s32 %v651, %v801
    %v803 = vrot.slane %v778, %v802
    %v804 = vlaneseq
    %v805 = vshrl.u32 %v804, 7
    %v806 = vsub.s32 %v651, %v805
    %v807 = vrot.slane %v781, %v806
    %v808 = vlaneseq
    %v809 = vshrl.u32 %v808, 7
    %v810 = vsub.s32 %v651, %v809
    %v811 = vrot.slane %v784, %v810
    %v812 = vlaneseq
    %v813 = vshrl.u32 %v812, 7
    %v814 = vsub.s32 %v651, %v813
    %v815 = vrot.slane %v787, %v814
    %v816 = vlaneseq
    %v817 = vshrl.u32 %v816, 7
    %v818 = vsub.s32 %v651, %v817
    %v819 = vrot.slane %v790, %v818
    %v820 = vlaneseq
    %v821 = vshrl.u32 %v820, 7
    %v822 = vsub.s32 %v651, %v821
    %v823 = vrot.slane %v793, %v822
    %v824 = vlaneseq
    %v825 = vshrl.u32 %v824, 7
    %v826 = vsub.s32 %v651, %v825
    %v827 = vrot.slane %v796, %v826
    %v828 = vlaneseq
    %v829 = vshrl.u32 %v828, 7
    %v830 = vsub.s32 %v651, %v829
    %v831 = vrot.slane %v799, %v830
    %v832 = vsel %vm684, %v807, %v803
    %v833 = vsel %vm686, %v811, %v832
    %v834 = vsel %vm688, %v815, %v833
    %v835 = vsel %vm690, %v819, %v834
    %v836 = vsel %vm692, %v823, %v835
    %v837 = vsel %vm694, %v827, %v836
    %v838 = vsel %vm696, %v831, %v837
    %v840 = vsel %vm699, %v838, 0.0
    %841 = vadd.xlane.f32.xlu0 %v840
    %v842 = vpop.xlane.xlu0 %841
    %v843 = vrcp.pop %v842
    %v845 = vlaneseq
    %v846 = vshrl.u32 %v845, 7
    %v847 = vsub.s32 0, %v846
    %v848 = vrot.slane %v843, %v847
    %v849 = vlaneseq
    %v850 = vshrl.u32 %v849, 7
    %v851 = vsub.s32 1, %v850
    %v852 = vrot.slane %v843, %v851
    %v853 = vlaneseq
    %v854 = vshrl.u32 %v853, 7
    %v855 = vsub.s32 2, %v854
    %v856 = vrot.slane %v843, %v855
    %v857 = vlaneseq
    %v858 = vshrl.u32 %v857, 7
    %v859 = vsub.s32 3, %v858
    %v860 = vrot.slane %v843, %v859
    %v861 = vlaneseq
    %v862 = vshrl.u32 %v861, 7
    %v863 = vsub.s32 4, %v862
    %v864 = vrot.slane %v843, %v863
    %v865 = vlaneseq
    %v866 = vshrl.u32 %v865, 7
    %v867 = vsub.s32 5, %v866
    %v868 = vrot.slane %v843, %v867
    %v869 = vlaneseq
    %v870 = vshrl.u32 %v869, 7
    %v871 = vsub.s32 6, %v870
    %v872 = vrot.slane %v843, %v871
    %v873 = vlaneseq
    %v874 = vshrl.u32 %v873, 7
    %v875 = vsub.s32 7, %v874
    %v876 = vrot.slane %v843, %v875
    %v885 = vmul.f32 %v753, %v848
    %v886 = vmul.f32 %v755, %v852
    %v887 = vmul.f32 %v757, %v856
    %v888 = vmul.f32 %v759, %v860
    %v889 = vmul.f32 %v761, %v864
    %v890 = vmul.f32 %v763, %v868
    %v891 = vmul.f32 %v765, %v872
    %v892 = vmul.f32 %v767, %v876
    %894 = vset.pattern.permute.xlu0 0
    %895 = vperm.xlu0 %894, %v885
    %v896 = vpop.permute.xlu0 %895
    %899 = vset.pattern.permute.xlu0 0
    %900 = vperm.xlu0 %899, %v886
    %v901 = vpop.permute.xlu0 %900
    %904 = vset.pattern.permute.xlu0 0
    %905 = vperm.xlu0 %904, %v887
    %v906 = vpop.permute.xlu0 %905
    %909 = vset.pattern.permute.xlu0 0
    %910 = vperm.xlu0 %909, %v888
    %v911 = vpop.permute.xlu0 %910
    %914 = vset.pattern.permute.xlu0 0
    %915 = vperm.xlu0 %914, %v889
    %v916 = vpop.permute.xlu0 %915
    %919 = vset.pattern.permute.xlu0 0
    %920 = vperm.xlu0 %919, %v890
    %v921 = vpop.permute.xlu0 %920
    %924 = vset.pattern.permute.xlu0 0
    %925 = vperm.xlu0 %924, %v891
    %v926 = vpop.permute.xlu0 %925
    %929 = vset.pattern.permute.xlu0 0
    %930 = vperm.xlu0 %929, %v892
    %v931 = vpop.permute.xlu0 %930
    %v933 = vmul.f32 %v134, %v896
    %v934 = vmul.f32 %v135, %v901
    %v935 = vmul.f32 %v136, %v906
    %v936 = vmul.f32 %v137, %v911
    %v937 = vmul.f32 %v138, %v916
    %v938 = vmul.f32 %v139, %v921
    %v939 = vmul.f32 %v140, %v926
    %v940 = vmul.f32 %v141, %v931
    %v941 = vsel %vm423, %v933, 0.0
    %v942 = vrot.slane %v941, 4
    %v943 = vadd.f32 %v941, %v942
    %v944 = vrot.slane %v943, 2
    %v945 = vadd.f32 %v943, %v944
    %v946 = vrot.slane %v945, 1
    %v947 = vadd.f32 %v945, %v946
    %v948 = vsel %vm423, %v934, 0.0
    %v949 = vrot.slane %v948, 4
    %v950 = vadd.f32 %v948, %v949
    %v951 = vrot.slane %v950, 2
    %v952 = vadd.f32 %v950, %v951
    %v953 = vrot.slane %v952, 1
    %v954 = vadd.f32 %v952, %v953
    %v955 = vsel %vm423, %v935, 0.0
    %v956 = vrot.slane %v955, 4
    %v957 = vadd.f32 %v955, %v956
    %v958 = vrot.slane %v957, 2
    %v959 = vadd.f32 %v957, %v958
    %v960 = vrot.slane %v959, 1
    %v961 = vadd.f32 %v959, %v960
    %v962 = vsel %vm423, %v936, 0.0
    %v963 = vrot.slane %v962, 4
    %v964 = vadd.f32 %v962, %v963
    %v965 = vrot.slane %v964, 2
    %v966 = vadd.f32 %v964, %v965
    %v967 = vrot.slane %v966, 1
    %v968 = vadd.f32 %v966, %v967
    %v969 = vsel %vm423, %v937, 0.0
    %v970 = vrot.slane %v969, 4
    %v971 = vadd.f32 %v969, %v970
    %v972 = vrot.slane %v971, 2
    %v973 = vadd.f32 %v971, %v972
    %v974 = vrot.slane %v973, 1
    %v975 = vadd.f32 %v973, %v974
    %v976 = vsel %vm423, %v938, 0.0
    %v977 = vrot.slane %v976, 4
    %v978 = vadd.f32 %v976, %v977
    %v979 = vrot.slane %v978, 2
    %v980 = vadd.f32 %v978, %v979
    %v981 = vrot.slane %v980, 1
    %v982 = vadd.f32 %v980, %v981
    %v983 = vsel %vm423, %v939, 0.0
    %v984 = vrot.slane %v983, 4
    %v985 = vadd.f32 %v983, %v984
    %v986 = vrot.slane %v985, 2
    %v987 = vadd.f32 %v985, %v986
    %v988 = vrot.slane %v987, 1
    %v989 = vadd.f32 %v987, %v988
    %v990 = vsel %vm423, %v940, 0.0
    %v991 = vrot.slane %v990, 4
    %v992 = vadd.f32 %v990, %v991
    %v993 = vrot.slane %v992, 2
    %v994 = vadd.f32 %v992, %v993
    %v995 = vrot.slane %v994, 1
    %v996 = vadd.f32 %v994, %v995
    %v997 = vld [vmem:[#allocation9] sm:$0x1]
    %v998 = vld [vmem:[#allocation9 + $0x8] sm:$0x1]
    %v999 = vld [vmem:[#allocation9 + $0x10] sm:$0x1]
    %v1000 = vld [vmem:[#allocation9 + $0x18] sm:$0x1]
    %v1001 = vld [vmem:[#allocation9 + $0x20] sm:$0x1]
    %v1002 = vld [vmem:[#allocation9 + $0x28] sm:$0x1]
    %v1003 = vld [vmem:[#allocation9 + $0x30] sm:$0x1]
    %v1004 = vld [vmem:[#allocation9 + $0x38] sm:$0x1]
    %v1013 = vsel %vm684, %v954, %v947
    %v1014 = vsel %vm686, %v961, %v1013
    %v1015 = vsel %vm688, %v968, %v1014
    %v1016 = vsel %vm690, %v975, %v1015
    %v1017 = vsel %vm692, %v982, %v1016
    %v1018 = vsel %vm694, %v989, %v1017
    %v1019 = vsel %vm696, %v996, %v1018
    %v1020 = vsel %vm423, %v1019, 0
    %1022 = vmatprep.subr.mxu0 0.0
    %1023 = vmatpush1.msra.mxu0 0.0
    %1024 = vmatprep.subr.mxu0 0.0
    %1025 = vmatpush1.msra.mxu0 0.0
    %1026 = vmatprep.subr.mxu0 0.0
    %1027 = vmatpush1.msra.mxu0 0.0
    %1028 = vmatprep.subr.mxu0 0.0
    %1029 = vmatpush1.msra.mxu0 0.0
    %1030 = vmatprep.subr.mxu0 0.0
    %1031 = vmatpush1.msra.mxu0 0.0
    %1032 = vmatprep.subr.mxu0 0.0
    %1033 = vmatpush1.msra.mxu0 0.0
    %1034 = vmatprep.subr.mxu0 0.0
    %1035 = vmatpush1.msra.mxu0 0.0
    %1036 = vmatprep.subr.mxu0 0.0
    %1037 = vmatpush1.msra.mxu0 0.0
    %1038 = vmatprep.subr.mxu0 0.0
    %1039 = vmatpush1.msra.mxu0 0.0
    %1040 = vmatprep.subr.mxu0 0.0
    %1041 = vmatpush1.msra.mxu0 0.0
    %1042 = vmatprep.subr.mxu0 0.0
    %1043 = vmatpush1.msra.mxu0 0.0
    %1044 = vmatprep.subr.mxu0 0.0
    %1045 = vmatpush1.msra.mxu0 0.0
    %1046 = vmatprep.subr.mxu0 0.0
    %1047 = vmatpush1.msra.mxu0 %v420
    %1048 = vmatprep.subr.mxu0 0.0
    %1049 = vmatpush1.msra.mxu0 %v419
    %1050 = vmatprep.subr.mxu0 0.0
    %1051 = vmatpush1.msra.mxu0 %v418
    %1052 = vmatprep.subr.mxu0 0.0
    %1053 = vmatpush1.msra.mxu0 %v417
    %1054 = vmatprep.subr.mxu0 0.0
    %1055 = vmatpush2.msra.mxu0 0.0
    %1056 = vmatprep.subr.mxu0 0.0
    %1057 = vmatpush2.msra.mxu0 0.0
    %1058 = vmatprep.subr.mxu0 0.0
    %1059 = vmatpush2.msra.mxu0 0.0
    %1060 = vmatprep.subr.mxu0 0.0
    %1061 = vmatpush2.msra.mxu0 0.0
    %1062 = vmatprep.subr.mxu0 0.0
    %1063 = vmatpush2.msra.mxu0 0.0
    %1064 = vmatprep.subr.mxu0 0.0
    %1065 = vmatpush2.msra.mxu0 0.0
    %1066 = vmatprep.subr.mxu0 0.0
    %1067 = vmatpush2.msra.mxu0 0.0
    %1068 = vmatprep.subr.mxu0 0.0
    %1069 = vmatpush2.msra.mxu0 0.0
    %1070 = vmatprep.subr.mxu0 0.0
    %1071 = vmatpush2.msra.mxu0 0.0
    %1072 = vmatprep.subr.mxu0 0.0
    %1073 = vmatpush2.msra.mxu0 0.0
    %1074 = vmatprep.subr.mxu0 0.0
    %1075 = vmatpush2.msra.mxu0 0.0
    %1076 = vmatprep.subr.mxu0 0.0
    %1077 = vmatpush2.msra.mxu0 0.0
    %1078 = vmatprep.subr.mxu0 0.0
    %1079 = vmatpush2.msra.mxu0 0.0
    %1080 = vmatprep.subr.mxu0 0.0
    %1081 = vmatpush2.msra.mxu0 0.0
    %1082 = vmatprep.subr.mxu0 0.0
    %1083 = vmatpush2.msra.mxu0 0.0
    %1084 = vmatprep.subr.mxu0 0.0
    %1085 = vmatpush2.msra.mxu0 0.0
    %1086 = vmatprep.mubr.f32.mxu0 0.0
    %1087 = vmatmul.mubr.f32.gmra.mxu0 %v1020
    %v1088 = vpop.f32.mrf.mxu0
    %v1089 = vadd.f32 0.0, %v1088
    %v1090 = vpop.f32.mrf.mxu0
    %1091 = vdwg.mxu0
    %v1093 = vrot.slane %v1089, 1
    %v1094 = vrot.slane %v1089, 2
    %v1095 = vrot.slane %v1089, 3
    %v1096 = vrot.slane %v1089, 4
    %v1097 = vrot.slane %v1089, 5
    %v1098 = vrot.slane %v1089, 6
    %v1099 = vrot.slane %v1089, 7
    %v1108 = vadd.f32 %v997, %v1089
    %v1109 = vadd.f32 %v998, %v1093
    %v1110 = vadd.f32 %v999, %v1094
    %v1111 = vadd.f32 %v1000, %v1095
    %v1112 = vadd.f32 %v1001, %v1096
    %v1113 = vadd.f32 %v1002, %v1097
    %v1114 = vadd.f32 %v1003, %v1098
    %v1115 = vadd.f32 %v1004, %v1099
    %v1117 = vrot.slane %v494, 1
    %v1118 = vrot.slane %v496, 1
    %v1119 = vrot.slane %v494, 2
    %v1120 = vrot.slane %v496, 2
    %v1121 = vrot.slane %v494, 3
    %v1122 = vrot.slane %v496, 3
    %v1123 = vrot.slane %v494, 4
    %v1124 = vrot.slane %v496, 4
    %v1125 = vrot.slane %v494, 5
    %v1126 = vrot.slane %v496, 5
    %v1127 = vrot.slane %v494, 6
    %v1128 = vrot.slane %v496, 6
    %v1129 = vrot.slane %v494, 7
    %v1130 = vrot.slane %v496, 7
    %1131 = vrot.lane.b32.xlu0 %v494, 96
    %v1132 = vpop.permute.xlu0 %1131
    %1133 = vrot.lane.b32.xlu0 %v496, 96
    %v1134 = vpop.permute.xlu0 %1133
    %1135 = vrot.lane.b32.xlu0 %v1117, 96
    %v1136 = vpop.permute.xlu0 %1135
    %1137 = vrot.lane.b32.xlu0 %v1118, 96
    %v1138 = vpop.permute.xlu0 %1137
    %1139 = vrot.lane.b32.xlu0 %v1119, 96
    %v1140 = vpop.permute.xlu0 %1139
    %1141 = vrot.lane.b32.xlu0 %v1120, 96
    %v1142 = vpop.permute.xlu0 %1141
    %1143 = vrot.lane.b32.xlu0 %v1121, 96
    %v1144 = vpop.permute.xlu0 %1143
    %1145 = vrot.lane.b32.xlu0 %v1122, 96
    %v1146 = vpop.permute.xlu0 %1145
    %1147 = vrot.lane.b32.xlu0 %v1123, 96
    %v1148 = vpop.permute.xlu0 %1147
    %1149 = vrot.lane.b32.xlu0 %v1124, 96
    %v1150 = vpop.permute.xlu0 %1149
    %1151 = vrot.lane.b32.xlu0 %v1125, 96
    %v1152 = vpop.permute.xlu0 %1151
    %1153 = vrot.lane.b32.xlu0 %v1126, 96
    %v1154 = vpop.permute.xlu0 %1153
    %1155 = vrot.lane.b32.xlu0 %v1127, 96
    %v1156 = vpop.permute.xlu0 %1155
    %1157 = vrot.lane.b32.xlu0 %v1128, 96
    %v1158 = vpop.permute.xlu0 %1157
    %1159 = vrot.lane.b32.xlu0 %v1129, 96
    %v1160 = vpop.permute.xlu0 %1159
    %1161 = vrot.lane.b32.xlu0 %v1130, 96
    %v1162 = vpop.permute.xlu0 %1161
    %vm1163 = vcmask 785408
    %v1164 = vsel %vm1163, %v1132, %v1134
    %v1165 = vsel %vm1163, %v1136, %v1138
    %v1166 = vsel %vm1163, %v1140, %v1142
    %v1167 = vsel %vm1163, %v1144, %v1146
    %v1168 = vsel %vm1163, %v1148, %v1150
    %v1169 = vsel %vm1163, %v1152, %v1154
    %v1170 = vsel %vm1163, %v1156, %v1158
    %v1171 = vsel %vm1163, %v1160, %v1162
    %v1180 = vadd.f32 %v1108, %v1164
    %v1181 = vadd.f32 %v1109, %v1165
    %v1182 = vadd.f32 %v1110, %v1166
    %v1183 = vadd.f32 %v1111, %v1167
    %v1184 = vadd.f32 %v1112, %v1168
    %v1185 = vadd.f32 %v1113, %v1169
    %v1186 = vadd.f32 %v1114, %v1170
    %v1187 = vadd.f32 %v1115, %v1171
    %v1188 = vxor.u32 %v1180, 2147483648
    %v1189 = vxor.u32 %v1181, 2147483648
    %v1190 = vxor.u32 %v1182, 2147483648
    %v1191 = vxor.u32 %v1183, 2147483648
    %v1192 = vxor.u32 %v1184, 2147483648
    %v1193 = vxor.u32 %v1185, 2147483648
    %v1194 = vxor.u32 %v1186, 2147483648
    %v1195 = vxor.u32 %v1187, 2147483648
    %v1196 = vmul.f32 %v1188, 1.442695
    %v1197 = vpow.pop %v1196
    %v1198 = vmul.f32 %v1189, 1.442695
    %v1199 = vpow.pop %v1198
    %v1200 = vmul.f32 %v1190, 1.442695
    %v1201 = vpow.pop %v1200
    %v1202 = vmul.f32 %v1191, 1.442695
    %v1203 = vpow.pop %v1202
    %v1204 = vmul.f32 %v1192, 1.442695
    %v1205 = vpow.pop %v1204
    %v1206 = vmul.f32 %v1193, 1.442695
    %v1207 = vpow.pop %v1206
    %v1208 = vmul.f32 %v1194, 1.442695
    %v1209 = vpow.pop %v1208
    %v1210 = vmul.f32 %v1195, 1.442695
    %v1211 = vpow.pop %v1210
    %v1212 = vadd.f32 %v1197, 1.0
    %v1213 = vadd.f32 %v1199, 1.0
    %v1214 = vadd.f32 %v1201, 1.0
    %v1215 = vadd.f32 %v1203, 1.0
    %v1216 = vadd.f32 %v1205, 1.0
    %v1217 = vadd.f32 %v1207, 1.0
    %v1218 = vadd.f32 %v1209, 1.0
    %v1219 = vadd.f32 %v1211, 1.0
    %v1220 = vrcp.pop %v1212
    %v1221 = vmul.f32 1.0, %v1220
    %v1222 = vrcp.pop %v1213
    %v1223 = vmul.f32 1.0, %v1222
    %v1224 = vrcp.pop %v1214
    %v1225 = vmul.f32 1.0, %v1224
    %v1226 = vrcp.pop %v1215
    %v1227 = vmul.f32 1.0, %v1226
    %v1228 = vrcp.pop %v1216
    %v1229 = vmul.f32 1.0, %v1228
    %v1230 = vrcp.pop %v1217
    %v1231 = vmul.f32 1.0, %v1230
    %v1232 = vrcp.pop %v1218
    %v1233 = vmul.f32 1.0, %v1232
    %v1234 = vrcp.pop %v1219
    %v1235 = vmul.f32 1.0, %v1234
    %v1236 = vtanh.pop %v1180
    %v1237 = vtanh.pop %v1181
    %v1238 = vtanh.pop %v1182
    %v1239 = vtanh.pop %v1183
    %v1240 = vtanh.pop %v1184
    %v1241 = vtanh.pop %v1185
    %v1242 = vtanh.pop %v1186
    %v1243 = vtanh.pop %v1187
    %v1245 = vrot.slane %v422, 1
    %v1246 = vrot.slane %v422, 2
    %v1247 = vrot.slane %v422, 3
    %v1248 = vrot.slane %v422, 4
    %v1249 = vrot.slane %v422, 5
    %v1250 = vrot.slane %v422, 6
    %v1251 = vrot.slane %v422, 7
    %1252 = vrot.lane.b32.xlu0 %v422, 32
    %v1253 = vpop.permute.xlu0 %1252
    %1254 = vrot.lane.b32.xlu0 %v1245, 32
    %v1255 = vpop.permute.xlu0 %1254
    %1256 = vrot.lane.b32.xlu0 %v1246, 32
    %v1257 = vpop.permute.xlu0 %1256
    %1258 = vrot.lane.b32.xlu0 %v1247, 32
    %v1259 = vpop.permute.xlu0 %1258
    %1260 = vrot.lane.b32.xlu0 %v1248, 32
    %v1261 = vpop.permute.xlu0 %1260
    %1262 = vrot.lane.b32.xlu0 %v1249, 32
    %v1263 = vpop.permute.xlu0 %1262
    %1264 = vrot.lane.b32.xlu0 %v1250, 32
    %v1265 = vpop.permute.xlu0 %1264
    %1266 = vrot.lane.b32.xlu0 %v1251, 32
    %v1267 = vpop.permute.xlu0 %1266
    %v1276 = vmul.f32 %v1221, %v1253
    %v1277 = vmul.f32 %v1223, %v1255
    %v1278 = vmul.f32 %v1225, %v1257
    %v1279 = vmul.f32 %v1227, %v1259
    %v1280 = vmul.f32 %v1229, %v1261
    %v1281 = vmul.f32 %v1231, %v1263
    %v1282 = vmul.f32 %v1233, %v1265
    %v1283 = vmul.f32 %v1235, %v1267
    %1292 = vrot.lane.b32.xlu0 %v1236, 64
    %v1293 = vpop.permute.xlu0 %1292
    %1294 = vrot.lane.b32.xlu0 %v1237, 64
    %v1295 = vpop.permute.xlu0 %1294
    %1296 = vrot.lane.b32.xlu0 %v1238, 64
    %v1297 = vpop.permute.xlu0 %1296
    %1298 = vrot.lane.b32.xlu0 %v1239, 64
    %v1299 = vpop.permute.xlu0 %1298
    %1300 = vrot.lane.b32.xlu0 %v1240, 64
    %v1301 = vpop.permute.xlu0 %1300
    %1302 = vrot.lane.b32.xlu0 %v1241, 64
    %v1303 = vpop.permute.xlu0 %1302
    %1304 = vrot.lane.b32.xlu0 %v1242, 64
    %v1305 = vpop.permute.xlu0 %1304
    %1306 = vrot.lane.b32.xlu0 %v1243, 64
    %v1307 = vpop.permute.xlu0 %1306
    %v1316 = vmul.f32 %v1221, %v1293
    %v1317 = vmul.f32 %v1223, %v1295
    %v1318 = vmul.f32 %v1225, %v1297
    %v1319 = vmul.f32 %v1227, %v1299
    %v1320 = vmul.f32 %v1229, %v1301
    %v1321 = vmul.f32 %v1231, %v1303
    %v1322 = vmul.f32 %v1233, %v1305
    %v1323 = vmul.f32 %v1235, %v1307
    %1332 = vrot.lane.b32.xlu0 %v1316, 32
    %v1333 = vpop.permute.xlu0 %1332
    %1334 = vrot.lane.b32.xlu0 %v1317, 32
    %v1335 = vpop.permute.xlu0 %1334
    %1336 = vrot.lane.b32.xlu0 %v1318, 32
    %v1337 = vpop.permute.xlu0 %1336
    %1338 = vrot.lane.b32.xlu0 %v1319, 32
    %v1339 = vpop.permute.xlu0 %1338
    %1340 = vrot.lane.b32.xlu0 %v1320, 32
    %v1341 = vpop.permute.xlu0 %1340
    %1342 = vrot.lane.b32.xlu0 %v1321, 32
    %v1343 = vpop.permute.xlu0 %1342
    %1344 = vrot.lane.b32.xlu0 %v1322, 32
    %v1345 = vpop.permute.xlu0 %1344
    %1346 = vrot.lane.b32.xlu0 %v1323, 32
    %v1347 = vpop.permute.xlu0 %1346
    %v1356 = vadd.f32 %v1276, %v1333
    %v1357 = vadd.f32 %v1277, %v1335
    %v1358 = vadd.f32 %v1278, %v1337
    %v1359 = vadd.f32 %v1279, %v1339
    %v1360 = vadd.f32 %v1280, %v1341
    %v1361 = vadd.f32 %v1281, %v1343
    %v1362 = vadd.f32 %v1282, %v1345
    %v1363 = vadd.f32 %v1283, %v1347
    %v1364 = vtanh.pop %v1356
    %v1365 = vtanh.pop %v1357
    %v1366 = vtanh.pop %v1358
    %v1367 = vtanh.pop %v1359
    %v1368 = vtanh.pop %v1360
    %v1369 = vtanh.pop %v1361
    %v1370 = vtanh.pop %v1362
    %v1371 = vtanh.pop %v1363
    %1380 = vrot.lane.b32.xlu0 %v1364, 64
    %v1381 = vpop.permute.xlu0 %1380
    %1382 = vrot.lane.b32.xlu0 %v1365, 64
    %v1383 = vpop.permute.xlu0 %1382
    %1384 = vrot.lane.b32.xlu0 %v1366, 64
    %v1385 = vpop.permute.xlu0 %1384
    %1386 = vrot.lane.b32.xlu0 %v1367, 64
    %v1387 = vpop.permute.xlu0 %1386
    %1388 = vrot.lane.b32.xlu0 %v1368, 64
    %v1389 = vpop.permute.xlu0 %1388
    %1390 = vrot.lane.b32.xlu0 %v1369, 64
    %v1391 = vpop.permute.xlu0 %1390
    %1392 = vrot.lane.b32.xlu0 %v1370, 64
    %v1393 = vpop.permute.xlu0 %1392
    %1394 = vrot.lane.b32.xlu0 %v1371, 64
    %v1395 = vpop.permute.xlu0 %1394
    %v1404 = vmul.f32 %v1221, %v1381
    %v1405 = vmul.f32 %v1223, %v1383
    %v1406 = vmul.f32 %v1225, %v1385
    %v1407 = vmul.f32 %v1227, %v1387
    %v1408 = vmul.f32 %v1229, %v1389
    %v1409 = vmul.f32 %v1231, %v1391
    %v1410 = vmul.f32 %v1233, %v1393
    %v1411 = vmul.f32 %v1235, %v1395
    %v1420 = vrot.slane %v1405, 7
    %v1421 = vsel %vm684, %v1420, %v1404
    %v1422 = vrot.slane %v1406, 6
    %v1423 = vsel %vm686, %v1422, %v1421
    %v1424 = vrot.slane %v1407, 5
    %v1425 = vsel %vm688, %v1424, %v1423
    %v1426 = vrot.slane %v1408, 4
    %v1427 = vsel %vm690, %v1426, %v1425
    %v1428 = vrot.slane %v1409, 3
    %v1429 = vsel %vm692, %v1428, %v1427
    %v1430 = vrot.slane %v1410, 2
    %v1431 = vsel %vm694, %v1430, %v1429
    %v1432 = vrot.slane %v1411, 1
    %v1433 = vsel %vm696, %v1432, %v1431
    %1434 = vrot.lane.b32.xlu0 %v1433, 32
    %v1435 = vpop.permute.xlu0 %1434
    %v1436 = vsel %vm423, %v1435, 0
    %1438 = vmatprep.subr.mxu0 0.0
    %1439 = vmatpush1.msra.mxu0 0.0
    %1440 = vmatprep.subr.mxu0 0.0
    %1441 = vmatpush1.msra.mxu0 0.0
    %1442 = vmatprep.subr.mxu0 0.0
    %1443 = vmatpush1.msra.mxu0 0.0
    %1444 = vmatprep.subr.mxu0 0.0
    %1445 = vmatpush1.msra.mxu0 0.0
    %1446 = vmatprep.subr.mxu0 0.0
    %1447 = vmatpush1.msra.mxu0 0.0
    %1448 = vmatprep.subr.mxu0 0.0
    %1449 = vmatpush1.msra.mxu0 0.0
    %1450 = vmatprep.subr.mxu0 0.0
    %1451 = vmatpush1.msra.mxu0 0.0
    %1452 = vmatprep.subr.mxu0 0.0
    %1453 = vmatpush1.msra.mxu0 0.0
    %1454 = vmatprep.subr.mxu0 0.0
    %1455 = vmatpush1.msra.mxu0 0.0
    %1456 = vmatprep.subr.mxu0 0.0
    %1457 = vmatpush1.msra.mxu0 0.0
    %1458 = vmatprep.subr.mxu0 0.0
    %1459 = vmatpush1.msra.mxu0 0.0
    %1460 = vmatprep.subr.mxu0 0.0
    %1461 = vmatpush1.msra.mxu0 0.0
    %1462 = vmatprep.subr.mxu0 %v415
    %1463 = vmatpush1.msra.mxu0 %v414
    %1464 = vmatprep.subr.mxu0 %v413
    %1465 = vmatpush1.msra.mxu0 %v412
    %1466 = vmatprep.subr.mxu0 %v411
    %1467 = vmatpush1.msra.mxu0 %v410
    %1468 = vmatprep.subr.mxu0 %v409
    %1469 = vmatpush1.msra.mxu0 %v408
    %1470 = vmatprep.subr.mxu0 0.0
    %1471 = vmatpush2.msra.mxu0 0.0
    %1472 = vmatprep.subr.mxu0 0.0
    %1473 = vmatpush2.msra.mxu0 0.0
    %1474 = vmatprep.subr.mxu0 0.0
    %1475 = vmatpush2.msra.mxu0 0.0
    %1476 = vmatprep.subr.mxu0 0.0
    %1477 = vmatpush2.msra.mxu0 0.0
    %1478 = vmatprep.subr.mxu0 0.0
    %1479 = vmatpush2.msra.mxu0 0.0
    %1480 = vmatprep.subr.mxu0 0.0
    %1481 = vmatpush2.msra.mxu0 0.0
    %1482 = vmatprep.subr.mxu0 0.0
    %1483 = vmatpush2.msra.mxu0 0.0
    %1484 = vmatprep.subr.mxu0 0.0
    %1485 = vmatpush2.msra.mxu0 0.0
    %1486 = vmatprep.subr.mxu0 0.0
    %1487 = vmatpush2.msra.mxu0 0.0
    %1488 = vmatprep.subr.mxu0 0.0
    %1489 = vmatpush2.msra.mxu0 0.0
    %1490 = vmatprep.subr.mxu0 0.0
    %1491 = vmatpush2.msra.mxu0 0.0
    %1492 = vmatprep.subr.mxu0 0.0
    %1493 = vmatpush2.msra.mxu0 0.0
    %1494 = vmatprep.subr.mxu0 0.0
    %1495 = vmatpush2.msra.mxu0 0.0
    %1496 = vmatprep.subr.mxu0 0.0
    %1497 = vmatpush2.msra.mxu0 0.0
    %1498 = vmatprep.subr.mxu0 0.0
    %1499 = vmatpush2.msra.mxu0 0.0
    %1500 = vmatprep.subr.mxu0 0.0
    %1501 = vmatpush2.msra.mxu0 0.0
    %1502 = vmatprep.mubr.f32.mxu0 0.0
    %1503 = vmatmul.mubr.f32.gmra.mxu0 %v1436
    %v1504 = vpop.f32.mrf.mxu0
    %v1505 = vadd.f32 0.0, %v1504
    %v1506 = vpop.f32.mrf.mxu0
    %v1507 = vadd.f32 0.0, %v1506
    %1508 = vdwg.mxu0
    %v1510 = vcombine.high %v1505, %v1505
    %v1512 = vunpack.c.l.s4 1966171168
    %v1513 = vunpack.c.0.s8 %v1512
    %v1514 = vlaneseq
    %v1515 = vshrl.u32 %v1514, 7
    %v1516 = vsub.s32 %v1513, %v1515
    %v1517 = vrot.slane %v1505, %v1516
    %v1519 = vunpack.c.l.s4 1966171168
    %v1520 = vunpack.c.0.s8 %v1519
    %v1521 = vlaneseq
    %v1522 = vshrl.u32 %v1521, 7
    %v1523 = vsub.s32 %v1520, %v1522
    %v1524 = vrot.slane %v1510, %v1523
    %v1525 = vcombine.high %v1517, %v1517
    %v1526 = vcombine.high %v1524, %v1524
    %v1528 = vunpack.c.l.s4 1966171168
    %v1529 = vunpack.c.0.s8 %v1528
    %v1530 = vlaneseq
    %v1531 = vshrl.u32 %v1530, 7
    %v1532 = vsub.s32 %v1529, %v1531
    %v1533 = vrot.slane %v1517, %v1532
    %v1535 = vunpack.c.l.s4 1966171168
    %v1536 = vunpack.c.0.s8 %v1535
    %v1537 = vlaneseq
    %v1538 = vshrl.u32 %v1537, 7
    %v1539 = vsub.s32 %v1536, %v1538
    %v1540 = vrot.slane %v1524, %v1539
    %v1542 = vunpack.c.l.s4 1966171168
    %v1543 = vunpack.c.0.s8 %v1542
    %v1544 = vlaneseq
    %v1545 = vshrl.u32 %v1544, 7
    %v1546 = vsub.s32 %v1543, %v1545
    %v1547 = vrot.slane %v1525, %v1546
    %v1549 = vunpack.c.l.s4 1966171168
    %v1550 = vunpack.c.0.s8 %v1549
    %v1551 = vlaneseq
    %v1552 = vshrl.u32 %v1551, 7
    %v1553 = vsub.s32 %v1550, %v1552
    %v1554 = vrot.slane %v1526, %v1553
    %v1555 = vcombine.high %v1533, %v1533
    %v1556 = vcombine.high %v1540, %v1540
    %v1557 = vcombine.high %v1547, %v1547
    %v1558 = vcombine.high %v1554, %v1554
    %v1559 = vlaneseq
    %v1560 = vshrl.u32 %v1559, 7
    %v1561 = vsub.s32 0, %v1560
    %v1562 = vrot.slane %v1533, %v1561
    %v1563 = vlaneseq
    %v1564 = vshrl.u32 %v1563, 7
    %v1565 = vsub.s32 0, %v1564
    %v1566 = vrot.slane %v1547, %v1565
    %v1567 = vlaneseq
    %v1568 = vshrl.u32 %v1567, 7
    %v1569 = vsub.s32 0, %v1568
    %v1570 = vrot.slane %v1555, %v1569
    %v1571 = vlaneseq
    %v1572 = vshrl.u32 %v1571, 7
    %v1573 = vsub.s32 0, %v1572
    %v1574 = vrot.slane %v1557, %v1573
    %v1575 = vlaneseq
    %v1576 = vshrl.u32 %v1575, 7
    %v1577 = vsub.s32 0, %v1576
    %v1578 = vrot.slane %v1540, %v1577
    %v1579 = vlaneseq
    %v1580 = vshrl.u32 %v1579, 7
    %v1581 = vsub.s32 0, %v1580
    %v1582 = vrot.slane %v1554, %v1581
    %v1583 = vlaneseq
    %v1584 = vshrl.u32 %v1583, 7
    %v1585 = vsub.s32 0, %v1584
    %v1586 = vrot.slane %v1556, %v1585
    %v1587 = vlaneseq
    %v1588 = vshrl.u32 %v1587, 7
    %v1589 = vsub.s32 0, %v1588
    %v1590 = vrot.slane %v1558, %v1589
    %v1599 = vadd.f32 %v142, %v1562
    %v1600 = vadd.f32 %v143, %v1566
    %v1601 = vadd.f32 %v144, %v1570
    %v1602 = vadd.f32 %v145, %v1574
    %v1603 = vadd.f32 %v146, %v1578
    %v1604 = vadd.f32 %v147, %v1582
    %v1605 = vadd.f32 %v148, %v1586
    %v1606 = vadd.f32 %v149, %v1590
    %v1607 = vtanh.pop %v1599
    %v1608 = vtanh.pop %v1600
    %v1609 = vtanh.pop %v1601
    %v1610 = vtanh.pop %v1602
    %v1611 = vtanh.pop %v1603
    %v1612 = vtanh.pop %v1604
    %v1613 = vtanh.pop %v1605
    %v1614 = vtanh.pop %v1606
    %v1615 = vmul.f32 %v1607, %v608
    %v1616 = vmul.f32 %v1608, %v608
    %v1617 = vmul.f32 %v1609, %v608
    %v1618 = vmul.f32 %v1610, %v608
    %v1619 = vmul.f32 %v1611, %v608
    %v1620 = vmul.f32 %v1612, %v608
    %v1621 = vmul.f32 %v1613, %v608
    %v1622 = vmul.f32 %v1614, %v608
    %v1623 = vsel %vm423, %v1615, 0.0
    %1624 = vadd.xlane.f32.xlu0 %v1623
    %v1625 = vpop.xlane.xlu0 %1624
    %v1626 = vsel %vm423, %v1616, 0.0
    %1627 = vadd.xlane.f32.xlu0 %v1626
    %v1628 = vpop.xlane.xlu0 %1627
    %v1629 = vsel %vm423, %v1617, 0.0
    %1630 = vadd.xlane.f32.xlu0 %v1629
    %v1631 = vpop.xlane.xlu0 %1630
    %v1632 = vsel %vm423, %v1618, 0.0
    %1633 = vadd.xlane.f32.xlu0 %v1632
    %v1634 = vpop.xlane.xlu0 %1633
    %v1635 = vsel %vm423, %v1619, 0.0
    %1636 = vadd.xlane.f32.xlu0 %v1635
    %v1637 = vpop.xlane.xlu0 %1636
    %v1638 = vsel %vm423, %v1620, 0.0
    %1639 = vadd.xlane.f32.xlu0 %v1638
    %v1640 = vpop.xlane.xlu0 %1639
    %v1641 = vsel %vm423, %v1621, 0.0
    %1642 = vadd.xlane.f32.xlu0 %v1641
    %v1643 = vpop.xlane.xlu0 %1642
    %v1644 = vsel %vm423, %v1622, 0.0
    %1645 = vadd.xlane.f32.xlu0 %v1644
    %v1646 = vpop.xlane.xlu0 %1645
    %v1655 = vlaneseq
    %v1656 = vshrl.u32 %v1655, 7
    %v1657 = vsub.s32 %v651, %v1656
    %v1658 = vrot.slane %v1625, %v1657
    %v1659 = vlaneseq
    %v1660 = vshrl.u32 %v1659, 7
    %v1661 = vsub.s32 %v651, %v1660
    %v1662 = vrot.slane %v1628, %v1661
    %v1663 = vlaneseq
    %v1664 = vshrl.u32 %v1663, 7
    %v1665 = vsub.s32 %v651, %v1664
    %v1666 = vrot.slane %v1631, %v1665
    %v1667 = vlaneseq
    %v1668 = vshrl.u32 %v1667, 7
    %v1669 = vsub.s32 %v651, %v1668
    %v1670 = vrot.slane %v1634, %v1669
    %v1671 = vlaneseq
    %v1672 = vshrl.u32 %v1671, 7
    %v1673 = vsub.s32 %v651, %v1672
    %v1674 = vrot.slane %v1637, %v1673
    %v1675 = vlaneseq
    %v1676 = vshrl.u32 %v1675, 7
    %v1677 = vsub.s32 %v651, %v1676
    %v1678 = vrot.slane %v1640, %v1677
    %v1679 = vlaneseq
    %v1680 = vshrl.u32 %v1679, 7
    %v1681 = vsub.s32 %v651, %v1680
    %v1682 = vrot.slane %v1643, %v1681
    %v1683 = vlaneseq
    %v1684 = vshrl.u32 %v1683, 7
    %v1685 = vsub.s32 %v651, %v1684
    %v1686 = vrot.slane %v1646, %v1685
    %v1687 = vsel %vm684, %v1662, %v1658
    %v1688 = vsel %vm686, %v1666, %v1687
    %v1689 = vsel %vm688, %v1670, %v1688
    %v1690 = vsel %vm690, %v1674, %v1689
    %v1691 = vsel %vm692, %v1678, %v1690
    %v1692 = vsel %vm694, %v1682, %v1691
    %v1693 = vsel %vm696, %v1686, %v1692
    %v1695 = vsel %vm699, %v1693, -inf
    %1696 = vmax.xlane.f32.xlu0 %v1695
    %v1697 = vpop.xlane.xlu0 %1696
    %v1699 = vlaneseq
    %v1700 = vshrl.u32 %v1699, 7
    %v1701 = vsub.s32 0, %v1700
    %v1702 = vrot.slane %v1697, %v1701
    %v1703 = vlaneseq
    %v1704 = vshrl.u32 %v1703, 7
    %v1705 = vsub.s32 1, %v1704
    %v1706 = vrot.slane %v1697, %v1705
    %v1707 = vlaneseq
    %v1708 = vshrl.u32 %v1707, 7
    %v1709 = vsub.s32 2, %v1708
    %v1710 = vrot.slane %v1697, %v1709
    %v1711 = vlaneseq
    %v1712 = vshrl.u32 %v1711, 7
    %v1713 = vsub.s32 3, %v1712
    %v1714 = vrot.slane %v1697, %v1713
    %v1715 = vlaneseq
    %v1716 = vshrl.u32 %v1715, 7
    %v1717 = vsub.s32 4, %v1716
    %v1718 = vrot.slane %v1697, %v1717
    %v1719 = vlaneseq
    %v1720 = vshrl.u32 %v1719, 7
    %v1721 = vsub.s32 5, %v1720
    %v1722 = vrot.slane %v1697, %v1721
    %v1723 = vlaneseq
    %v1724 = vshrl.u32 %v1723, 7
    %v1725 = vsub.s32 6, %v1724
    %v1726 = vrot.slane %v1697, %v1725
    %v1727 = vlaneseq
    %v1728 = vshrl.u32 %v1727, 7
    %v1729 = vsub.s32 7, %v1728
    %v1730 = vrot.slane %v1697, %v1729
    %v1739 = vsub.f32 %v1625, %v1702
    %v1740 = vsub.f32 %v1628, %v1706
    %v1741 = vsub.f32 %v1631, %v1710
    %v1742 = vsub.f32 %v1634, %v1714
    %v1743 = vsub.f32 %v1637, %v1718
    %v1744 = vsub.f32 %v1640, %v1722
    %v1745 = vsub.f32 %v1643, %v1726
    %v1746 = vsub.f32 %v1646, %v1730
    %v1747 = vmul.f32 %v1739, 1.442695
    %v1748 = vpow.pop %v1747
    %v1749 = vmul.f32 %v1740, 1.442695
    %v1750 = vpow.pop %v1749
    %v1751 = vmul.f32 %v1741, 1.442695
    %v1752 = vpow.pop %v1751
    %v1753 = vmul.f32 %v1742, 1.442695
    %v1754 = vpow.pop %v1753
    %v1755 = vmul.f32 %v1743, 1.442695
    %v1756 = vpow.pop %v1755
    %v1757 = vmul.f32 %v1744, 1.442695
    %v1758 = vpow.pop %v1757
    %v1759 = vmul.f32 %v1745, 1.442695
    %v1760 = vpow.pop %v1759
    %v1761 = vmul.f32 %v1746, 1.442695
    %v1762 = vpow.pop %v1761
    %1771 = vset.pattern.permute.xlu0 0
    %1772 = vperm.xlu0 %1771, %v1748
    %v1773 = vpop.permute.xlu0 %1772
    %1774 = vset.pattern.permute.xlu0 0
    %1775 = vperm.xlu0 %1774, %v1750
    %v1776 = vpop.permute.xlu0 %1775
    %1777 = vset.pattern.permute.xlu0 0
    %1778 = vperm.xlu0 %1777, %v1752
    %v1779 = vpop.permute.xlu0 %1778
    %1780 = vset.pattern.permute.xlu0 0
    %1781 = vperm.xlu0 %1780, %v1754
    %v1782 = vpop.permute.xlu0 %1781
    %1783 = vset.pattern.permute.xlu0 0
    %1784 = vperm.xlu0 %1783, %v1756
    %v1785 = vpop.permute.xlu0 %1784
    %1786 = vset.pattern.permute.xlu0 0
    %1787 = vperm.xlu0 %1786, %v1758
    %v1788 = vpop.permute.xlu0 %1787
    %1789 = vset.pattern.permute.xlu0 0
    %1790 = vperm.xlu0 %1789, %v1760
    %v1791 = vpop.permute.xlu0 %1790
    %1792 = vset.pattern.permute.xlu0 0
    %1793 = vperm.xlu0 %1792, %v1762
    %v1794 = vpop.permute.xlu0 %1793
    %v1795 = vlaneseq
    %v1796 = vshrl.u32 %v1795, 7
    %v1797 = vsub.s32 %v651, %v1796
    %v1798 = vrot.slane %v1773, %v1797
    %v1799 = vlaneseq
    %v1800 = vshrl.u32 %v1799, 7
    %v1801 = vsub.s32 %v651, %v1800
    %v1802 = vrot.slane %v1776, %v1801
    %v1803 = vlaneseq
    %v1804 = vshrl.u32 %v1803, 7
    %v1805 = vsub.s32 %v651, %v1804
    %v1806 = vrot.slane %v1779, %v1805
    %v1807 = vlaneseq
    %v1808 = vshrl.u32 %v1807, 7
    %v1809 = vsub.s32 %v651, %v1808
    %v1810 = vrot.slane %v1782, %v1809
    %v1811 = vlaneseq
    %v1812 = vshrl.u32 %v1811, 7
    %v1813 = vsub.s32 %v651, %v1812
    %v1814 = vrot.slane %v1785, %v1813
    %v1815 = vlaneseq
    %v1816 = vshrl.u32 %v1815, 7
    %v1817 = vsub.s32 %v651, %v1816
    %v1818 = vrot.slane %v1788, %v1817
    %v1819 = vlaneseq
    %v1820 = vshrl.u32 %v1819, 7
    %v1821 = vsub.s32 %v651, %v1820
    %v1822 = vrot.slane %v1791, %v1821
    %v1823 = vlaneseq
    %v1824 = vshrl.u32 %v1823, 7
    %v1825 = vsub.s32 %v651, %v1824
    %v1826 = vrot.slane %v1794, %v1825
    %v1827 = vsel %vm684, %v1802, %v1798
    %v1828 = vsel %vm686, %v1806, %v1827
    %v1829 = vsel %vm688, %v1810, %v1828
    %v1830 = vsel %vm690, %v1814, %v1829
    %v1831 = vsel %vm692, %v1818, %v1830
    %v1832 = vsel %vm694, %v1822, %v1831
    %v1833 = vsel %vm696, %v1826, %v1832
    %v1835 = vsel %vm699, %v1833, 0.0
    %1836 = vadd.xlane.f32.xlu0 %v1835
    %v1837 = vpop.xlane.xlu0 %1836
    %v1838 = vrcp.pop %v1837
    %v1840 = vlaneseq
    %v1841 = vshrl.u32 %v1840, 7
    %v1842 = vsub.s32 0, %v1841
    %v1843 = vrot.slane %v1838, %v1842
    %v1844 = vlaneseq
    %v1845 = vshrl.u32 %v1844, 7
    %v1846 = vsub.s32 1, %v1845
    %v1847 = vrot.slane %v1838, %v1846
    %v1848 = vlaneseq
    %v1849 = vshrl.u32 %v1848, 7
    %v1850 = vsub.s32 2, %v1849
    %v1851 = vrot.slane %v1838, %v1850
    %v1852 = vlaneseq
    %v1853 = vshrl.u32 %v1852, 7
    %v1854 = vsub.s32 3, %v1853
    %v1855 = vrot.slane %v1838, %v1854
    %v1856 = vlaneseq
    %v1857 = vshrl.u32 %v1856, 7
    %v1858 = vsub.s32 4, %v1857
    %v1859 = vrot.slane %v1838, %v1858
    %v1860 = vlaneseq
    %v1861 = vshrl.u32 %v1860, 7
    %v1862 = vsub.s32 5, %v1861
    %v1863 = vrot.slane %v1838, %v1862
    %v1864 = vlaneseq
    %v1865 = vshrl.u32 %v1864, 7
    %v1866 = vsub.s32 6, %v1865
    %v1867 = vrot.slane %v1838, %v1866
    %v1868 = vlaneseq
    %v1869 = vshrl.u32 %v1868, 7
    %v1870 = vsub.s32 7, %v1869
    %v1871 = vrot.slane %v1838, %v1870
    %v1880 = vmul.f32 %v1748, %v1843
    %v1881 = vmul.f32 %v1750, %v1847
    %v1882 = vmul.f32 %v1752, %v1851
    %v1883 = vmul.f32 %v1754, %v1855
    %v1884 = vmul.f32 %v1756, %v1859
    %v1885 = vmul.f32 %v1758, %v1863
    %v1886 = vmul.f32 %v1760, %v1867
    %v1887 = vmul.f32 %v1762, %v1871
    %1889 = vset.pattern.permute.xlu0 0
    %1890 = vperm.xlu0 %1889, %v1880
    %v1891 = vpop.permute.xlu0 %1890
    %1894 = vset.pattern.permute.xlu0 0
    %1895 = vperm.xlu0 %1894, %v1881
    %v1896 = vpop.permute.xlu0 %1895
    %1899 = vset.pattern.permute.xlu0 0
    %1900 = vperm.xlu0 %1899, %v1882
    %v1901 = vpop.permute.xlu0 %1900
    %1904 = vset.pattern.permute.xlu0 0
    %1905 = vperm.xlu0 %1904, %v1883
    %v1906 = vpop.permute.xlu0 %1905
    %1909 = vset.pattern.permute.xlu0 0
    %1910 = vperm.xlu0 %1909, %v1884
    %v1911 = vpop.permute.xlu0 %1910
    %1914 = vset.pattern.permute.xlu0 0
    %1915 = vperm.xlu0 %1914, %v1885
    %v1916 = vpop.permute.xlu0 %1915
    %1919 = vset.pattern.permute.xlu0 0
    %1920 = vperm.xlu0 %1919, %v1886
    %v1921 = vpop.permute.xlu0 %1920
    %1924 = vset.pattern.permute.xlu0 0
    %1925 = vperm.xlu0 %1924, %v1887
    %v1926 = vpop.permute.xlu0 %1925
    %v1928 = vmul.f32 %v134, %v1891
    %v1929 = vmul.f32 %v135, %v1896
    %v1930 = vmul.f32 %v136, %v1901
    %v1931 = vmul.f32 %v137, %v1906
    %v1932 = vmul.f32 %v138, %v1911
    %v1933 = vmul.f32 %v139, %v1916
    %v1934 = vmul.f32 %v140, %v1921
    %v1935 = vmul.f32 %v141, %v1926
    %v1936 = vsel %vm423, %v1928, 0.0
    %v1937 = vrot.slane %v1936, 4
    %v1938 = vadd.f32 %v1936, %v1937
    %v1939 = vrot.slane %v1938, 2
    %v1940 = vadd.f32 %v1938, %v1939
    %v1941 = vrot.slane %v1940, 1
    %v1942 = vadd.f32 %v1940, %v1941
    %v1943 = vsel %vm423, %v1929, 0.0
    %v1944 = vrot.slane %v1943, 4
    %v1945 = vadd.f32 %v1943, %v1944
    %v1946 = vrot.slane %v1945, 2
    %v1947 = vadd.f32 %v1945, %v1946
    %v1948 = vrot.slane %v1947, 1
    %v1949 = vadd.f32 %v1947, %v1948
    %v1950 = vsel %vm423, %v1930, 0.0
    %v1951 = vrot.slane %v1950, 4
    %v1952 = vadd.f32 %v1950, %v1951
    %v1953 = vrot.slane %v1952, 2
    %v1954 = vadd.f32 %v1952, %v1953
    %v1955 = vrot.slane %v1954, 1
    %v1956 = vadd.f32 %v1954, %v1955
    %v1957 = vsel %vm423, %v1931, 0.0
    %v1958 = vrot.slane %v1957, 4
    %v1959 = vadd.f32 %v1957, %v1958
    %v1960 = vrot.slane %v1959, 2
    %v1961 = vadd.f32 %v1959, %v1960
    %v1962 = vrot.slane %v1961, 1
    %v1963 = vadd.f32 %v1961, %v1962
    %v1964 = vsel %vm423, %v1932, 0.0
    %v1965 = vrot.slane %v1964, 4
    %v1966 = vadd.f32 %v1964, %v1965
    %v1967 = vrot.slane %v1966, 2
    %v1968 = vadd.f32 %v1966, %v1967
    %v1969 = vrot.slane %v1968, 1
    %v1970 = vadd.f32 %v1968, %v1969
    %v1971 = vsel %vm423, %v1933, 0.0
    %v1972 = vrot.slane %v1971, 4
    %v1973 = vadd.f32 %v1971, %v1972
    %v1974 = vrot.slane %v1973, 2
    %v1975 = vadd.f32 %v1973, %v1974
    %v1976 = vrot.slane %v1975, 1
    %v1977 = vadd.f32 %v1975, %v1976
    %v1978 = vsel %vm423, %v1934, 0.0
    %v1979 = vrot.slane %v1978, 4
    %v1980 = vadd.f32 %v1978, %v1979
    %v1981 = vrot.slane %v1980, 2
    %v1982 = vadd.f32 %v1980, %v1981
    %v1983 = vrot.slane %v1982, 1
    %v1984 = vadd.f32 %v1982, %v1983
    %v1985 = vsel %vm423, %v1935, 0.0
    %v1986 = vrot.slane %v1985, 4
    %v1987 = vadd.f32 %v1985, %v1986
    %v1988 = vrot.slane %v1987, 2
    %v1989 = vadd.f32 %v1987, %v1988
    %v1990 = vrot.slane %v1989, 1
    %v1991 = vadd.f32 %v1989, %v1990
    %v1992 = vld [vmem:[#allocation9 + $0x1] sm:$0x1]
    %v1993 = vld [vmem:[#allocation9 + $0x9] sm:$0x1]
    %v1994 = vld [vmem:[#allocation9 + $0x11] sm:$0x1]
    %v1995 = vld [vmem:[#allocation9 + $0x19] sm:$0x1]
    %v1996 = vld [vmem:[#allocation9 + $0x21] sm:$0x1]
    %v1997 = vld [vmem:[#allocation9 + $0x29] sm:$0x1]
    %v1998 = vld [vmem:[#allocation9 + $0x31] sm:$0x1]
    %v1999 = vld [vmem:[#allocation9 + $0x39] sm:$0x1]
    %v2008 = vsel %vm684, %v1949, %v1942
    %v2009 = vsel %vm686, %v1956, %v2008
    %v2010 = vsel %vm688, %v1963, %v2009
    %v2011 = vsel %vm690, %v1970, %v2010
    %v2012 = vsel %vm692, %v1977, %v2011
    %v2013 = vsel %vm694, %v1984, %v2012
    %v2014 = vsel %vm696, %v1991, %v2013
    %v2015 = vsel %vm423, %v2014, 0
    %2017 = vmatprep.subr.mxu0 0.0
    %2018 = vmatpush1.msra.mxu0 0.0
    %2019 = vmatprep.subr.mxu0 0.0
    %2020 = vmatpush1.msra.mxu0 0.0
    %2021 = vmatprep.subr.mxu0 0.0
    %2022 = vmatpush1.msra.mxu0 0.0
    %2023 = vmatprep.subr.mxu0 0.0
    %2024 = vmatpush1.msra.mxu0 0.0
    %2025 = vmatprep.subr.mxu0 0.0
    %2026 = vmatpush1.msra.mxu0 0.0
    %2027 = vmatprep.subr.mxu0 0.0
    %2028 = vmatpush1.msra.mxu0 0.0
    %2029 = vmatprep.subr.mxu0 0.0
    %2030 = vmatpush1.msra.mxu0 0.0
    %2031 = vmatprep.subr.mxu0 0.0
    %2032 = vmatpush1.msra.mxu0 0.0
    %2033 = vmatprep.subr.mxu0 0.0
    %2034 = vmatpush1.msra.mxu0 0.0
    %2035 = vmatprep.subr.mxu0 0.0
    %2036 = vmatpush1.msra.mxu0 0.0
    %2037 = vmatprep.subr.mxu0 0.0
    %2038 = vmatpush1.msra.mxu0 0.0
    %2039 = vmatprep.subr.mxu0 0.0
    %2040 = vmatpush1.msra.mxu0 0.0
    %2041 = vmatprep.subr.mxu0 0.0
    %2042 = vmatpush1.msra.mxu0 %v420
    %2043 = vmatprep.subr.mxu0 0.0
    %2044 = vmatpush1.msra.mxu0 %v419
    %2045 = vmatprep.subr.mxu0 0.0
    %2046 = vmatpush1.msra.mxu0 %v418
    %2047 = vmatprep.subr.mxu0 0.0
    %2048 = vmatpush1.msra.mxu0 %v417
    %2049 = vmatprep.subr.mxu0 0.0
    %2050 = vmatpush2.msra.mxu0 0.0
    %2051 = vmatprep.subr.mxu0 0.0
    %2052 = vmatpush2.msra.mxu0 0.0
    %2053 = vmatprep.subr.mxu0 0.0
    %2054 = vmatpush2.msra.mxu0 0.0
    %2055 = vmatprep.subr.mxu0 0.0
    %2056 = vmatpush2.msra.mxu0 0.0
    %2057 = vmatprep.subr.mxu0 0.0
    %2058 = vmatpush2.msra.mxu0 0.0
    %2059 = vmatprep.subr.mxu0 0.0
    %2060 = vmatpush2.msra.mxu0 0.0
    %2061 = vmatprep.subr.mxu0 0.0
    %2062 = vmatpush2.msra.mxu0 0.0
    %2063 = vmatprep.subr.mxu0 0.0
    %2064 = vmatpush2.msra.mxu0 0.0
    %2065 = vmatprep.subr.mxu0 0.0
    %2066 = vmatpush2.msra.mxu0 0.0
    %2067 = vmatprep.subr.mxu0 0.0
    %2068 = vmatpush2.msra.mxu0 0.0
    %2069 = vmatprep.subr.mxu0 0.0
    %2070 = vmatpush2.msra.mxu0 0.0
    %2071 = vmatprep.subr.mxu0 0.0
    %2072 = vmatpush2.msra.mxu0 0.0
    %2073 = vmatprep.subr.mxu0 0.0
    %2074 = vmatpush2.msra.mxu0 0.0
    %2075 = vmatprep.subr.mxu0 0.0
    %2076 = vmatpush2.msra.mxu0 0.0
    %2077 = vmatprep.subr.mxu0 0.0
    %2078 = vmatpush2.msra.mxu0 0.0
    %2079 = vmatprep.subr.mxu0 0.0
    %2080 = vmatpush2.msra.mxu0 0.0
    %2081 = vmatprep.mubr.f32.mxu0 0.0
    %2082 = vmatmul.mubr.f32.gmra.mxu0 %v2015
    %v2083 = vpop.f32.mrf.mxu0
    %v2084 = vadd.f32 0.0, %v2083
    %v2085 = vpop.f32.mrf.mxu0
    %2086 = vdwg.mxu0
    %v2088 = vrot.slane %v2084, 1
    %v2089 = vrot.slane %v2084, 2
    %v2090 = vrot.slane %v2084, 3
    %v2091 = vrot.slane %v2084, 4
    %v2092 = vrot.slane %v2084, 5
    %v2093 = vrot.slane %v2084, 6
    %v2094 = vrot.slane %v2084, 7
    %v2103 = vadd.f32 %v1992, %v2084
    %v2104 = vadd.f32 %v1993, %v2088
    %v2105 = vadd.f32 %v1994, %v2089
    %v2106 = vadd.f32 %v1995, %v2090
    %v2107 = vadd.f32 %v1996, %v2091
    %v2108 = vadd.f32 %v1997, %v2092
    %v2109 = vadd.f32 %v1998, %v2093
    %v2110 = vadd.f32 %v1999, %v2094
    %v2112 = vrot.slane %v1505, 1
    %v2113 = vrot.slane %v1507, 1
    %v2114 = vrot.slane %v1505, 2
    %v2115 = vrot.slane %v1507, 2
    %v2116 = vrot.slane %v1505, 3
    %v2117 = vrot.slane %v1507, 3
    %v2118 = vrot.slane %v1505, 4
    %v2119 = vrot.slane %v1507, 4
    %v2120 = vrot.slane %v1505, 5
    %v2121 = vrot.slane %v1507, 5
    %v2122 = vrot.slane %v1505, 6
    %v2123 = vrot.slane %v1507, 6
    %v2124 = vrot.slane %v1505, 7
    %v2125 = vrot.slane %v1507, 7
    %2126 = vrot.lane.b32.xlu0 %v1505, 96
    %v2127 = vpop.permute.xlu0 %2126
    %2128 = vrot.lane.b32.xlu0 %v1507, 96
    %v2129 = vpop.permute.xlu0 %2128
    %2130 = vrot.lane.b32.xlu0 %v2112, 96
    %v2131 = vpop.permute.xlu0 %2130
    %2132 = vrot.lane.b32.xlu0 %v2113, 96
    %v2133 = vpop.permute.xlu0 %2132
    %2134 = vrot.lane.b32.xlu0 %v2114, 96
    %v2135 = vpop.permute.xlu0 %2134
    %2136 = vrot.lane.b32.xlu0 %v2115, 96
    %v2137 = vpop.permute.xlu0 %2136
    %2138 = vrot.lane.b32.xlu0 %v2116, 96
    %v2139 = vpop.permute.xlu0 %2138
    %2140 = vrot.lane.b32.xlu0 %v2117, 96
    %v2141 = vpop.permute.xlu0 %2140
    %2142 = vrot.lane.b32.xlu0 %v2118, 96
    %v2143 = vpop.permute.xlu0 %2142
    %2144 = vrot.lane.b32.xlu0 %v2119, 96
    %v2145 = vpop.permute.xlu0 %2144
    %2146 = vrot.lane.b32.xlu0 %v2120, 96
    %v2147 = vpop.permute.xlu0 %2146
    %2148 = vrot.lane.b32.xlu0 %v2121, 96
    %v2149 = vpop.permute.xlu0 %2148
    %2150 = vrot.lane.b32.xlu0 %v2122, 96
    %v2151 = vpop.permute.xlu0 %2150
    %2152 = vrot.lane.b32.xlu0 %v2123, 96
    %v2153 = vpop.permute.xlu0 %2152
    %2154 = vrot.lane.b32.xlu0 %v2124, 96
    %v2155 = vpop.permute.xlu0 %2154
    %2156 = vrot.lane.b32.xlu0 %v2125, 96
    %v2157 = vpop.permute.xlu0 %2156
    %v2158 = vsel %vm1163, %v2127, %v2129
    %v2159 = vsel %vm1163, %v2131, %v2133
    %v2160 = vsel %vm1163, %v2135, %v2137
    %v2161 = vsel %vm1163, %v2139, %v2141
    %v2162 = vsel %vm1163, %v2143, %v2145
    %v2163 = vsel %vm1163, %v2147, %v2149
    %v2164 = vsel %vm1163, %v2151, %v2153
    %v2165 = vsel %vm1163, %v2155, %v2157
    %v2174 = vadd.f32 %v2103, %v2158
    %v2175 = vadd.f32 %v2104, %v2159
    %v2176 = vadd.f32 %v2105, %v2160
    %v2177 = vadd.f32 %v2106, %v2161
    %v2178 = vadd.f32 %v2107, %v2162
    %v2179 = vadd.f32 %v2108, %v2163
    %v2180 = vadd.f32 %v2109, %v2164
    %v2181 = vadd.f32 %v2110, %v2165
    %v2182 = vxor.u32 %v2174, 2147483648
    %v2183 = vxor.u32 %v2175, 2147483648
    %v2184 = vxor.u32 %v2176, 2147483648
    %v2185 = vxor.u32 %v2177, 2147483648
    %v2186 = vxor.u32 %v2178, 2147483648
    %v2187 = vxor.u32 %v2179, 2147483648
    %v2188 = vxor.u32 %v2180, 2147483648
    %v2189 = vxor.u32 %v2181, 2147483648
    %v2190 = vmul.f32 %v2182, 1.442695
    %v2191 = vpow.pop %v2190
    %v2192 = vmul.f32 %v2183, 1.442695
    %v2193 = vpow.pop %v2192
    %v2194 = vmul.f32 %v2184, 1.442695
    %v2195 = vpow.pop %v2194
    %v2196 = vmul.f32 %v2185, 1.442695
    %v2197 = vpow.pop %v2196
    %v2198 = vmul.f32 %v2186, 1.442695
    %v2199 = vpow.pop %v2198
    %v2200 = vmul.f32 %v2187, 1.442695
    %v2201 = vpow.pop %v2200
    %v2202 = vmul.f32 %v2188, 1.442695
    %v2203 = vpow.pop %v2202
    %v2204 = vmul.f32 %v2189, 1.442695
    %v2205 = vpow.pop %v2204
    %v2206 = vadd.f32 %v2191, 1.0
    %v2207 = vadd.f32 %v2193, 1.0
    %v2208 = vadd.f32 %v2195, 1.0
    %v2209 = vadd.f32 %v2197, 1.0
    %v2210 = vadd.f32 %v2199, 1.0
    %v2211 = vadd.f32 %v2201, 1.0
    %v2212 = vadd.f32 %v2203, 1.0
    %v2213 = vadd.f32 %v2205, 1.0
    %v2214 = vrcp.pop %v2206
    %v2215 = vmul.f32 1.0, %v2214
    %v2216 = vrcp.pop %v2207
    %v2217 = vmul.f32 1.0, %v2216
    %v2218 = vrcp.pop %v2208
    %v2219 = vmul.f32 1.0, %v2218
    %v2220 = vrcp.pop %v2209
    %v2221 = vmul.f32 1.0, %v2220
    %v2222 = vrcp.pop %v2210
    %v2223 = vmul.f32 1.0, %v2222
    %v2224 = vrcp.pop %v2211
    %v2225 = vmul.f32 1.0, %v2224
    %v2226 = vrcp.pop %v2212
    %v2227 = vmul.f32 1.0, %v2226
    %v2228 = vrcp.pop %v2213
    %v2229 = vmul.f32 1.0, %v2228
    %v2230 = vtanh.pop %v2174
    %v2231 = vtanh.pop %v2175
    %v2232 = vtanh.pop %v2176
    %v2233 = vtanh.pop %v2177
    %v2234 = vtanh.pop %v2178
    %v2235 = vtanh.pop %v2179
    %v2236 = vtanh.pop %v2180
    %v2237 = vtanh.pop %v2181
    %v2238 = vmul.f32 %v2215, %v1356
    %v2239 = vmul.f32 %v2217, %v1357
    %v2240 = vmul.f32 %v2219, %v1358
    %v2241 = vmul.f32 %v2221, %v1359
    %v2242 = vmul.f32 %v2223, %v1360
    %v2243 = vmul.f32 %v2225, %v1361
    %v2244 = vmul.f32 %v2227, %v1362
    %v2245 = vmul.f32 %v2229, %v1363
    %2254 = vrot.lane.b32.xlu0 %v2230, 64
    %v2255 = vpop.permute.xlu0 %2254
    %2256 = vrot.lane.b32.xlu0 %v2231, 64
    %v2257 = vpop.permute.xlu0 %2256
    %2258 = vrot.lane.b32.xlu0 %v2232, 64
    %v2259 = vpop.permute.xlu0 %2258
    %2260 = vrot.lane.b32.xlu0 %v2233, 64
    %v2261 = vpop.permute.xlu0 %2260
    %2262 = vrot.lane.b32.xlu0 %v2234, 64
    %v2263 = vpop.permute.xlu0 %2262
    %2264 = vrot.lane.b32.xlu0 %v2235, 64
    %v2265 = vpop.permute.xlu0 %2264
    %2266 = vrot.lane.b32.xlu0 %v2236, 64
    %v2267 = vpop.permute.xlu0 %2266
    %2268 = vrot.lane.b32.xlu0 %v2237, 64
    %v2269 = vpop.permute.xlu0 %2268
    %v2278 = vmul.f32 %v2215, %v2255
    %v2279 = vmul.f32 %v2217, %v2257
    %v2280 = vmul.f32 %v2219, %v2259
    %v2281 = vmul.f32 %v2221, %v2261
    %v2282 = vmul.f32 %v2223, %v2263
    %v2283 = vmul.f32 %v2225, %v2265
    %v2284 = vmul.f32 %v2227, %v2267
    %v2285 = vmul.f32 %v2229, %v2269
    %2294 = vrot.lane.b32.xlu0 %v2278, 32
    %v2295 = vpop.permute.xlu0 %2294
    %2296 = vrot.lane.b32.xlu0 %v2279, 32
    %v2297 = vpop.permute.xlu0 %2296
    %2298 = vrot.lane.b32.xlu0 %v2280, 32
    %v2299 = vpop.permute.xlu0 %2298
    %2300 = vrot.lane.b32.xlu0 %v2281, 32
    %v2301 = vpop.permute.xlu0 %2300
    %2302 = vrot.lane.b32.xlu0 %v2282, 32
    %v2303 = vpop.permute.xlu0 %2302
    %2304 = vrot.lane.b32.xlu0 %v2283, 32
    %v2305 = vpop.permute.xlu0 %2304
    %2306 = vrot.lane.b32.xlu0 %v2284, 32
    %v2307 = vpop.permute.xlu0 %2306
    %2308 = vrot.lane.b32.xlu0 %v2285, 32
    %v2309 = vpop.permute.xlu0 %2308
    %v2318 = vadd.f32 %v2238, %v2295
    %v2319 = vadd.f32 %v2239, %v2297
    %v2320 = vadd.f32 %v2240, %v2299
    %v2321 = vadd.f32 %v2241, %v2301
    %v2322 = vadd.f32 %v2242, %v2303
    %v2323 = vadd.f32 %v2243, %v2305
    %v2324 = vadd.f32 %v2244, %v2307
    %v2325 = vadd.f32 %v2245, %v2309
    %v2326 = vtanh.pop %v2318
    %v2327 = vtanh.pop %v2319
    %v2328 = vtanh.pop %v2320
    %v2329 = vtanh.pop %v2321
    %v2330 = vtanh.pop %v2322
    %v2331 = vtanh.pop %v2323
    %v2332 = vtanh.pop %v2324
    %v2333 = vtanh.pop %v2325
    %2342 = vrot.lane.b32.xlu0 %v2326, 64
    %v2343 = vpop.permute.xlu0 %2342
    %2344 = vrot.lane.b32.xlu0 %v2327, 64
    %v2345 = vpop.permute.xlu0 %2344
    %2346 = vrot.lane.b32.xlu0 %v2328, 64
    %v2347 = vpop.permute.xlu0 %2346
    %2348 = vrot.lane.b32.xlu0 %v2329, 64
    %v2349 = vpop.permute.xlu0 %2348
    %2350 = vrot.lane.b32.xlu0 %v2330, 64
    %v2351 = vpop.permute.xlu0 %2350
    %2352 = vrot.lane.b32.xlu0 %v2331, 64
    %v2353 = vpop.permute.xlu0 %2352
    %2354 = vrot.lane.b32.xlu0 %v2332, 64
    %v2355 = vpop.permute.xlu0 %2354
    %2356 = vrot.lane.b32.xlu0 %v2333, 64
    %v2357 = vpop.permute.xlu0 %2356
    %v2366 = vmul.f32 %v2215, %v2343
    %v2367 = vmul.f32 %v2217, %v2345
    %v2368 = vmul.f32 %v2219, %v2347
    %v2369 = vmul.f32 %v2221, %v2349
    %v2370 = vmul.f32 %v2223, %v2351
    %v2371 = vmul.f32 %v2225, %v2353
    %v2372 = vmul.f32 %v2227, %v2355
    %v2373 = vmul.f32 %v2229, %v2357
    %v2382 = vrot.slane %v2367, 7
    %v2383 = vsel %vm684, %v2382, %v2366
    %v2384 = vrot.slane %v2368, 6
    %v2385 = vsel %vm686, %v2384, %v2383
    %v2386 = vrot.slane %v2369, 5
    %v2387 = vsel %vm688, %v2386, %v2385
    %v2388 = vrot.slane %v2370, 4
    %v2389 = vsel %vm690, %v2388, %v2387
    %v2390 = vrot.slane %v2371, 3
    %v2391 = vsel %vm692, %v2390, %v2389
    %v2392 = vrot.slane %v2372, 2
    %v2393 = vsel %vm694, %v2392, %v2391
    %v2394 = vrot.slane %v2373, 1
    %v2395 = vsel %vm696, %v2394, %v2393
    %2396 = vrot.lane.b32.xlu0 %v2395, 32
    %v2397 = vpop.permute.xlu0 %2396
    %v2398 = vsel %vm423, %v2397, 0
    %2400 = vmatprep.subr.mxu0 0.0
    %2401 = vmatpush1.msra.mxu0 0.0
    %2402 = vmatprep.subr.mxu0 0.0
    %2403 = vmatpush1.msra.mxu0 0.0
    %2404 = vmatprep.subr.mxu0 0.0
    %2405 = vmatpush1.msra.mxu0 0.0
    %2406 = vmatprep.subr.mxu0 0.0
    %2407 = vmatpush1.msra.mxu0 0.0
    %2408 = vmatprep.subr.mxu0 0.0
    %2409 = vmatpush1.msra.mxu0 0.0
    %2410 = vmatprep.subr.mxu0 0.0
    %2411 = vmatpush1.msra.mxu0 0.0
    %2412 = vmatprep.subr.mxu0 0.0
    %2413 = vmatpush1.msra.mxu0 0.0
    %2414 = vmatprep.subr.mxu0 0.0
    %2415 = vmatpush1.msra.mxu0 0.0
    %2416 = vmatprep.subr.mxu0 0.0
    %2417 = vmatpush1.msra.mxu0 0.0
    %2418 = vmatprep.subr.mxu0 0.0
    %2419 = vmatpush1.msra.mxu0 0.0
    %2420 = vmatprep.subr.mxu0 0.0
    %2421 = vmatpush1.msra.mxu0 0.0
    %2422 = vmatprep.subr.mxu0 0.0
    %2423 = vmatpush1.msra.mxu0 0.0
    %2424 = vmatprep.subr.mxu0 %v415
    %2425 = vmatpush1.msra.mxu0 %v414
    %2426 = vmatprep.subr.mxu0 %v413
    %2427 = vmatpush1.msra.mxu0 %v412
    %2428 = vmatprep.subr.mxu0 %v411
    %2429 = vmatpush1.msra.mxu0 %v410
    %2430 = vmatprep.subr.mxu0 %v409
    %2431 = vmatpush1.msra.mxu0 %v408
    %2432 = vmatprep.subr.mxu0 0.0
    %2433 = vmatpush2.msra.mxu0 0.0
    %2434 = vmatprep.subr.mxu0 0.0
    %2435 = vmatpush2.msra.mxu0 0.0
    %2436 = vmatprep.subr.mxu0 0.0
    %2437 = vmatpush2.msra.mxu0 0.0
    %2438 = vmatprep.subr.mxu0 0.0
    %2439 = vmatpush2.msra.mxu0 0.0
    %2440 = vmatprep.subr.mxu0 0.0
    %2441 = vmatpush2.msra.mxu0 0.0
    %2442 = vmatprep.subr.mxu0 0.0
    %2443 = vmatpush2.msra.mxu0 0.0
    %2444 = vmatprep.subr.mxu0 0.0
    %2445 = vmatpush2.msra.mxu0 0.0
    %2446 = vmatprep.subr.mxu0 0.0
    %2447 = vmatpush2.msra.mxu0 0.0
    %2448 = vmatprep.subr.mxu0 0.0
    %2449 = vmatpush2.msra.mxu0 0.0
    %2450 = vmatprep.subr.mxu0 0.0
    %2451 = vmatpush2.msra.mxu0 0.0
    %2452 = vmatprep.subr.mxu0 0.0
    %2453 = vmatpush2.msra.mxu0 0.0
    %2454 = vmatprep.subr.mxu0 0.0
    %2455 = vmatpush2.msra.mxu0 0.0
    %2456 = vmatprep.subr.mxu0 0.0
    %2457 = vmatpush2.msra.mxu0 0.0
    %2458 = vmatprep.subr.mxu0 0.0
    %2459 = vmatpush2.msra.mxu0 0.0
    %2460 = vmatprep.subr.mxu0 0.0
    %2461 = vmatpush2.msra.mxu0 0.0
    %2462 = vmatprep.subr.mxu0 0.0
    %2463 = vmatpush2.msra.mxu0 0.0
    %2464 = vmatprep.mubr.f32.mxu0 0.0
    %2465 = vmatmul.mubr.f32.gmra.mxu0 %v2398
    %v2466 = vpop.f32.mrf.mxu0
    %v2467 = vadd.f32 0.0, %v2466
    %v2468 = vpop.f32.mrf.mxu0
    %v2469 = vadd.f32 0.0, %v2468
    %2470 = vdwg.mxu0
    %v2472 = vcombine.high %v2467, %v2467
    %v2474 = vunpack.c.l.s4 1966171168
    %v2475 = vunpack.c.0.s8 %v2474
    %v2476 = vlaneseq
    %v2477 = vshrl.u32 %v2476, 7
    %v2478 = vsub.s32 %v2475, %v2477
    %v2479 = vrot.slane %v2467, %v2478
    %v2481 = vunpack.c.l.s4 1966171168
    %v2482 = vunpack.c.0.s8 %v2481
    %v2483 = vlaneseq
    %v2484 = vshrl.u32 %v2483, 7
    %v2485 = vsub.s32 %v2482, %v2484
    %v2486 = vrot.slane %v2472, %v2485
    %v2487 = vcombine.high %v2479, %v2479
    %v2488 = vcombine.high %v2486, %v2486
    %v2490 = vunpack.c.l.s4 1966171168
    %v2491 = vunpack.c.0.s8 %v2490
    %v2492 = vlaneseq
    %v2493 = vshrl.u32 %v2492, 7
    %v2494 = vsub.s32 %v2491, %v2493
    %v2495 = vrot.slane %v2479, %v2494
    %v2497 = vunpack.c.l.s4 1966171168
    %v2498 = vunpack.c.0.s8 %v2497
    %v2499 = vlaneseq
    %v2500 = vshrl.u32 %v2499, 7
    %v2501 = vsub.s32 %v2498, %v2500
    %v2502 = vrot.slane %v2486, %v2501
    %v2504 = vunpack.c.l.s4 1966171168
    %v2505 = vunpack.c.0.s8 %v2504
    %v2506 = vlaneseq
    %v2507 = vshrl.u32 %v2506, 7
    %v2508 = vsub.s32 %v2505, %v2507
    %v2509 = vrot.slane %v2487, %v2508
    %v2511 = vunpack.c.l.s4 1966171168
    %v2512 = vunpack.c.0.s8 %v2511
    %v2513 = vlaneseq
    %v2514 = vshrl.u32 %v2513, 7
    %v2515 = vsub.s32 %v2512, %v2514
    %v2516 = vrot.slane %v2488, %v2515
    %v2517 = vcombine.high %v2495, %v2495
    %v2518 = vcombine.high %v2502, %v2502
    %v2519 = vcombine.high %v2509, %v2509
    %v2520 = vcombine.high %v2516, %v2516
    %v2521 = vlaneseq
    %v2522 = vshrl.u32 %v2521, 7
    %v2523 = vsub.s32 0, %v2522
    %v2524 = vrot.slane %v2495, %v2523
    %v2525 = vlaneseq
    %v2526 = vshrl.u32 %v2525, 7
    %v2527 = vsub.s32 0, %v2526
    %v2528 = vrot.slane %v2509, %v2527
    %v2529 = vlaneseq
    %v2530 = vshrl.u32 %v2529, 7
    %v2531 = vsub.s32 0, %v2530
    %v2532 = vrot.slane %v2517, %v2531
    %v2533 = vlaneseq
    %v2534 = vshrl.u32 %v2533, 7
    %v2535 = vsub.s32 0, %v2534
    %v2536 = vrot.slane %v2519, %v2535
    %v2537 = vlaneseq
    %v2538 = vshrl.u32 %v2537, 7
    %v2539 = vsub.s32 0, %v2538
    %v2540 = vrot.slane %v2502, %v2539
    %v2541 = vlaneseq
    %v2542 = vshrl.u32 %v2541, 7
    %v2543 = vsub.s32 0, %v2542
    %v2544 = vrot.slane %v2516, %v2543
    %v2545 = vlaneseq
    %v2546 = vshrl.u32 %v2545, 7
    %v2547 = vsub.s32 0, %v2546
    %v2548 = vrot.slane %v2518, %v2547
    %v2549 = vlaneseq
    %v2550 = vshrl.u32 %v2549, 7
    %v2551 = vsub.s32 0, %v2550
    %v2552 = vrot.slane %v2520, %v2551
    %v2561 = vadd.f32 %v142, %v2524
    %v2562 = vadd.f32 %v143, %v2528
    %v2563 = vadd.f32 %v144, %v2532
    %v2564 = vadd.f32 %v145, %v2536
    %v2565 = vadd.f32 %v146, %v2540
    %v2566 = vadd.f32 %v147, %v2544
    %v2567 = vadd.f32 %v148, %v2548
    %v2568 = vadd.f32 %v149, %v2552
    %v2569 = vtanh.pop %v2561
    %v2570 = vtanh.pop %v2562
    %v2571 = vtanh.pop %v2563
    %v2572 = vtanh.pop %v2564
    %v2573 = vtanh.pop %v2565
    %v2574 = vtanh.pop %v2566
    %v2575 = vtanh.pop %v2567
    %v2576 = vtanh.pop %v2568
    %v2577 = vmul.f32 %v2569, %v608
    %v2578 = vmul.f32 %v2570, %v608
    %v2579 = vmul.f32 %v2571, %v608
    %v2580 = vmul.f32 %v2572, %v608
    %v2581 = vmul.f32 %v2573, %v608
    %v2582 = vmul.f32 %v2574, %v608
    %v2583 = vmul.f32 %v2575, %v608
    %v2584 = vmul.f32 %v2576, %v608
    %v2585 = vsel %vm423, %v2577, 0.0
    %2586 = vadd.xlane.f32.xlu0 %v2585
    %v2587 = vpop.xlane.xlu0 %2586
    %v2588 = vsel %vm423, %v2578, 0.0
    %2589 = vadd.xlane.f32.xlu0 %v2588
    %v2590 = vpop.xlane.xlu0 %2589
    %v2591 = vsel %vm423, %v2579, 0.0
    %2592 = vadd.xlane.f32.xlu0 %v2591
    %v2593 = vpop.xlane.xlu0 %2592
    %v2594 = vsel %vm423, %v2580, 0.0
    %2595 = vadd.xlane.f32.xlu0 %v2594
    %v2596 = vpop.xlane.xlu0 %2595
    %v2597 = vsel %vm423, %v2581, 0.0
    %2598 = vadd.xlane.f32.xlu0 %v2597
    %v2599 = vpop.xlane.xlu0 %2598
    %v2600 = vsel %vm423, %v2582, 0.0
    %2601 = vadd.xlane.f32.xlu0 %v2600
    %v2602 = vpop.xlane.xlu0 %2601
    %v2603 = vsel %vm423, %v2583, 0.0
    %2604 = vadd.xlane.f32.xlu0 %v2603
    %v2605 = vpop.xlane.xlu0 %2604
    %v2606 = vsel %vm423, %v2584, 0.0
    %2607 = vadd.xlane.f32.xlu0 %v2606
    %v2608 = vpop.xlane.xlu0 %2607
    %v2617 = vlaneseq
    %v2618 = vshrl.u32 %v2617, 7
    %v2619 = vsub.s32 %v651, %v2618
    %v2620 = vrot.slane %v2587, %v2619
    %v2621 = vlaneseq
    %v2622 = vshrl.u32 %v2621, 7
    %v2623 = vsub.s32 %v651, %v2622
    %v2624 = vrot.slane %v2590, %v2623
    %v2625 = vlaneseq
    %v2626 = vshrl.u32 %v2625, 7
    %v2627 = vsub.s32 %v651, %v2626
    %v2628 = vrot.slane %v2593, %v2627
    %v2629 = vlaneseq
    %v2630 = vshrl.u32 %v2629, 7
    %v2631 = vsub.s32 %v651, %v2630
    %v2632 = vrot.slane %v2596, %v2631
    %v2633 = vlaneseq
    %v2634 = vshrl.u32 %v2633, 7
    %v2635 = vsub.s32 %v651, %v2634
    %v2636 = vrot.slane %v2599, %v2635
    %v2637 = vlaneseq
    %v2638 = vshrl.u32 %v2637, 7
    %v2639 = vsub.s32 %v651, %v2638
    %v2640 = vrot.slane %v2602, %v2639
    %v2641 = vlaneseq
    %v2642 = vshrl.u32 %v2641, 7
    %v2643 = vsub.s32 %v651, %v2642
    %v2644 = vrot.slane %v2605, %v2643
    %v2645 = vlaneseq
    %v2646 = vshrl.u32 %v2645, 7
    %v2647 = vsub.s32 %v651, %v2646
    %v2648 = vrot.slane %v2608, %v2647
    %v2649 = vsel %vm684, %v2624, %v2620
    %v2650 = vsel %vm686, %v2628, %v2649
    %v2651 = vsel %vm688, %v2632, %v2650
    %v2652 = vsel %vm690, %v2636, %v2651
    %v2653 = vsel %vm692, %v2640, %v2652
    %v2654 = vsel %vm694, %v2644, %v2653
    %v2655 = vsel %vm696, %v2648, %v2654
    %v2657 = vsel %vm699, %v2655, -inf
    %2658 = vmax.xlane.f32.xlu0 %v2657
    %v2659 = vpop.xlane.xlu0 %2658
    %v2661 = vlaneseq
    %v2662 = vshrl.u32 %v2661, 7
    %v2663 = vsub.s32 0, %v2662
    %v2664 = vrot.slane %v2659, %v2663
    %v2665 = vlaneseq
    %v2666 = vshrl.u32 %v2665, 7
    %v2667 = vsub.s32 1, %v2666
    %v2668 = vrot.slane %v2659, %v2667
    %v2669 = vlaneseq
    %v2670 = vshrl.u32 %v2669, 7
    %v2671 = vsub.s32 2, %v2670
    %v2672 = vrot.slane %v2659, %v2671
    %v2673 = vlaneseq
    %v2674 = vshrl.u32 %v2673, 7
    %v2675 = vsub.s32 3, %v2674
    %v2676 = vrot.slane %v2659, %v2675
    %v2677 = vlaneseq
    %v2678 = vshrl.u32 %v2677, 7
    %v2679 = vsub.s32 4, %v2678
    %v2680 = vrot.slane %v2659, %v2679
    %v2681 = vlaneseq
    %v2682 = vshrl.u32 %v2681, 7
    %v2683 = vsub.s32 5, %v2682
    %v2684 = vrot.slane %v2659, %v2683
    %v2685 = vlaneseq
    %v2686 = vshrl.u32 %v2685, 7
    %v2687 = vsub.s32 6, %v2686
    %v2688 = vrot.slane %v2659, %v2687
    %v2689 = vlaneseq
    %v2690 = vshrl.u32 %v2689, 7
    %v2691 = vsub.s32 7, %v2690
    %v2692 = vrot.slane %v2659, %v2691
    %v2701 = vsub.f32 %v2587, %v2664
    %v2702 = vsub.f32 %v2590, %v2668
    %v2703 = vsub.f32 %v2593, %v2672
    %v2704 = vsub.f32 %v2596, %v2676
    %v2705 = vsub.f32 %v2599, %v2680
    %v2706 = vsub.f32 %v2602, %v2684
    %v2707 = vsub.f32 %v2605, %v2688
    %v2708 = vsub.f32 %v2608, %v2692
    %v2709 = vmul.f32 %v2701, 1.442695
    %v2710 = vpow.pop %v2709
    %v2711 = vmul.f32 %v2702, 1.442695
    %v2712 = vpow.pop %v2711
    %v2713 = vmul.f32 %v2703, 1.442695
    %v2714 = vpow.pop %v2713
    %v2715 = vmul.f32 %v2704, 1.442695
    %v2716 = vpow.pop %v2715
    %v2717 = vmul.f32 %v2705, 1.442695
    %v2718 = vpow.pop %v2717
    %v2719 = vmul.f32 %v2706, 1.442695
    %v2720 = vpow.pop %v2719
    %v2721 = vmul.f32 %v2707, 1.442695
    %v2722 = vpow.pop %v2721
    %v2723 = vmul.f32 %v2708, 1.442695
    %v2724 = vpow.pop %v2723
    %2733 = vset.pattern.permute.xlu0 0
    %2734 = vperm.xlu0 %2733, %v2710
    %v2735 = vpop.permute.xlu0 %2734
    %2736 = vset.pattern.permute.xlu0 0
    %2737 = vperm.xlu0 %2736, %v2712
    %v2738 = vpop.permute.xlu0 %2737
    %2739 = vset.pattern.permute.xlu0 0
    %2740 = vperm.xlu0 %2739, %v2714
    %v2741 = vpop.permute.xlu0 %2740
    %2742 = vset.pattern.permute.xlu0 0
    %2743 = vperm.xlu0 %2742, %v2716
    %v2744 = vpop.permute.xlu0 %2743
    %2745 = vset.pattern.permute.xlu0 0
    %2746 = vperm.xlu0 %2745, %v2718
    %v2747 = vpop.permute.xlu0 %2746
    %2748 = vset.pattern.permute.xlu0 0
    %2749 = vperm.xlu0 %2748, %v2720
    %v2750 = vpop.permute.xlu0 %2749
    %2751 = vset.pattern.permute.xlu0 0
    %2752 = vperm.xlu0 %2751, %v2722
    %v2753 = vpop.permute.xlu0 %2752
    %2754 = vset.pattern.permute.xlu0 0
    %2755 = vperm.xlu0 %2754, %v2724
    %v2756 = vpop.permute.xlu0 %2755
    %v2757 = vlaneseq
    %v2758 = vshrl.u32 %v2757, 7
    %v2759 = vsub.s32 %v651, %v2758
    %v2760 = vrot.slane %v2735, %v2759
    %v2761 = vlaneseq
    %v2762 = vshrl.u32 %v2761, 7
    %v2763 = vsub.s32 %v651, %v2762
    %v2764 = vrot.slane %v2738, %v2763
    %v2765 = vlaneseq
    %v2766 = vshrl.u32 %v2765, 7
    %v2767 = vsub.s32 %v651, %v2766
    %v2768 = vrot.slane %v2741, %v2767
    %v2769 = vlaneseq
    %v2770 = vshrl.u32 %v2769, 7
    %v2771 = vsub.s32 %v651, %v2770
    %v2772 = vrot.slane %v2744, %v2771
    %v2773 = vlaneseq
    %v2774 = vshrl.u32 %v2773, 7
    %v2775 = vsub.s32 %v651, %v2774
    %v2776 = vrot.slane %v2747, %v2775
    %v2777 = vlaneseq
    %v2778 = vshrl.u32 %v2777, 7
    %v2779 = vsub.s32 %v651, %v2778
    %v2780 = vrot.slane %v2750, %v2779
    %v2781 = vlaneseq
    %v2782 = vshrl.u32 %v2781, 7
    %v2783 = vsub.s32 %v651, %v2782
    %v2784 = vrot.slane %v2753, %v2783
    %v2785 = vlaneseq
    %v2786 = vshrl.u32 %v2785, 7
    %v2787 = vsub.s32 %v651, %v2786
    %v2788 = vrot.slane %v2756, %v2787
    %v2789 = vsel %vm684, %v2764, %v2760
    %v2790 = vsel %vm686, %v2768, %v2789
    %v2791 = vsel %vm688, %v2772, %v2790
    %v2792 = vsel %vm690, %v2776, %v2791
    %v2793 = vsel %vm692, %v2780, %v2792
    %v2794 = vsel %vm694, %v2784, %v2793
    %v2795 = vsel %vm696, %v2788, %v2794
    %v2797 = vsel %vm699, %v2795, 0.0
    %2798 = vadd.xlane.f32.xlu0 %v2797
    %v2799 = vpop.xlane.xlu0 %2798
    %v2800 = vrcp.pop %v2799
    %v2802 = vlaneseq
    %v2803 = vshrl.u32 %v2802, 7
    %v2804 = vsub.s32 0, %v2803
    %v2805 = vrot.slane %v2800, %v2804
    %v2806 = vlaneseq
    %v2807 = vshrl.u32 %v2806, 7
    %v2808 = vsub.s32 1, %v2807
    %v2809 = vrot.slane %v2800, %v2808
    %v2810 = vlaneseq
    %v2811 = vshrl.u32 %v2810, 7
    %v2812 = vsub.s32 2, %v2811
    %v2813 = vrot.slane %v2800, %v2812
    %v2814 = vlaneseq
    %v2815 = vshrl.u32 %v2814, 7
    %v2816 = vsub.s32 3, %v2815
    %v2817 = vrot.slane %v2800, %v2816
    %v2818 = vlaneseq
    %v2819 = vshrl.u32 %v2818, 7
    %v2820 = vsub.s32 4, %v2819
    %v2821 = vrot.slane %v2800, %v2820
    %v2822 = vlaneseq
    %v2823 = vshrl.u32 %v2822, 7
    %v2824 = vsub.s32 5, %v2823
    %v2825 = vrot.slane %v2800, %v2824
    %v2826 = vlaneseq
    %v2827 = vshrl.u32 %v2826, 7
    %v2828 = vsub.s32 6, %v2827
    %v2829 = vrot.slane %v2800, %v2828
    %v2830 = vlaneseq
    %v2831 = vshrl.u32 %v2830, 7
    %v2832 = vsub.s32 7, %v2831
    %v2833 = vrot.slane %v2800, %v2832
    %v2842 = vmul.f32 %v2710, %v2805
    %v2843 = vmul.f32 %v2712, %v2809
    %v2844 = vmul.f32 %v2714, %v2813
    %v2845 = vmul.f32 %v2716, %v2817
    %v2846 = vmul.f32 %v2718, %v2821
    %v2847 = vmul.f32 %v2720, %v2825
    %v2848 = vmul.f32 %v2722, %v2829
    %v2849 = vmul.f32 %v2724, %v2833
    %2851 = vset.pattern.permute.xlu0 0
    %2852 = vperm.xlu0 %2851, %v2842
    %v2853 = vpop.permute.xlu0 %2852
    %2856 = vset.pattern.permute.xlu0 0
    %2857 = vperm.xlu0 %2856, %v2843
    %v2858 = vpop.permute.xlu0 %2857
    %2861 = vset.pattern.permute.xlu0 0
    %2862 = vperm.xlu0 %2861, %v2844
    %v2863 = vpop.permute.xlu0 %2862
    %2866 = vset.pattern.permute.xlu0 0
    %2867 = vperm.xlu0 %2866, %v2845
    %v2868 = vpop.permute.xlu0 %2867
    %2871 = vset.pattern.permute.xlu0 0
    %2872 = vperm.xlu0 %2871, %v2846
    %v2873 = vpop.permute.xlu0 %2872
    %2876 = vset.pattern.permute.xlu0 0
    %2877 = vperm.xlu0 %2876, %v2847
    %v2878 = vpop.permute.xlu0 %2877
    %2881 = vset.pattern.permute.xlu0 0
    %2882 = vperm.xlu0 %2881, %v2848
    %v2883 = vpop.permute.xlu0 %2882
    %2886 = vset.pattern.permute.xlu0 0
    %2887 = vperm.xlu0 %2886, %v2849
    %v2888 = vpop.permute.xlu0 %2887
    %v2890 = vmul.f32 %v134, %v2853
    %v2891 = vmul.f32 %v135, %v2858
    %v2892 = vmul.f32 %v136, %v2863
    %v2893 = vmul.f32 %v137, %v2868
    %v2894 = vmul.f32 %v138, %v2873
    %v2895 = vmul.f32 %v139, %v2878
    %v2896 = vmul.f32 %v140, %v2883
    %v2897 = vmul.f32 %v141, %v2888
    %v2898 = vsel %vm423, %v2890, 0.0
    %v2899 = vrot.slane %v2898, 4
    %v2900 = vadd.f32 %v2898, %v2899
    %v2901 = vrot.slane %v2900, 2
    %v2902 = vadd.f32 %v2900, %v2901
    %v2903 = vrot.slane %v2902, 1
    %v2904 = vadd.f32 %v2902, %v2903
    %v2905 = vsel %vm423, %v2891, 0.0
    %v2906 = vrot.slane %v2905, 4
    %v2907 = vadd.f32 %v2905, %v2906
    %v2908 = vrot.slane %v2907, 2
    %v2909 = vadd.f32 %v2907, %v2908
    %v2910 = vrot.slane %v2909, 1
    %v2911 = vadd.f32 %v2909, %v2910
    %v2912 = vsel %vm423, %v2892, 0.0
    %v2913 = vrot.slane %v2912, 4
    %v2914 = vadd.f32 %v2912, %v2913
    %v2915 = vrot.slane %v2914, 2
    %v2916 = vadd.f32 %v2914, %v2915
    %v2917 = vrot.slane %v2916, 1
    %v2918 = vadd.f32 %v2916, %v2917
    %v2919 = vsel %vm423, %v2893, 0.0
    %v2920 = vrot.slane %v2919, 4
    %v2921 = vadd.f32 %v2919, %v2920
    %v2922 = vrot.slane %v2921, 2
    %v2923 = vadd.f32 %v2921, %v2922
    %v2924 = vrot.slane %v2923, 1
    %v2925 = vadd.f32 %v2923, %v2924
    %v2926 = vsel %vm423, %v2894, 0.0
    %v2927 = vrot.slane %v2926, 4
    %v2928 = vadd.f32 %v2926, %v2927
    %v2929 = vrot.slane %v2928, 2
    %v2930 = vadd.f32 %v2928, %v2929
    %v2931 = vrot.slane %v2930, 1
    %v2932 = vadd.f32 %v2930, %v2931
    %v2933 = vsel %vm423, %v2895, 0.0
    %v2934 = vrot.slane %v2933, 4
    %v2935 = vadd.f32 %v2933, %v2934
    %v2936 = vrot.slane %v2935, 2
    %v2937 = vadd.f32 %v2935, %v2936
    %v2938 = vrot.slane %v2937, 1
    %v2939 = vadd.f32 %v2937, %v2938
    %v2940 = vsel %vm423, %v2896, 0.0
    %v2941 = vrot.slane %v2940, 4
    %v2942 = vadd.f32 %v2940, %v2941
    %v2943 = vrot.slane %v2942, 2
    %v2944 = vadd.f32 %v2942, %v2943
    %v2945 = vrot.slane %v2944, 1
    %v2946 = vadd.f32 %v2944, %v2945
    %v2947 = vsel %vm423, %v2897, 0.0
    %v2948 = vrot.slane %v2947, 4
    %v2949 = vadd.f32 %v2947, %v2948
    %v2950 = vrot.slane %v2949, 2
    %v2951 = vadd.f32 %v2949, %v2950
    %v2952 = vrot.slane %v2951, 1
    %v2953 = vadd.f32 %v2951, %v2952
    %v2954 = vld [vmem:[#allocation9 + $0x2] sm:$0x1]
    %v2955 = vld [vmem:[#allocation9 + $0xa] sm:$0x1]
    %v2956 = vld [vmem:[#allocation9 + $0x12] sm:$0x1]
    %v2957 = vld [vmem:[#allocation9 + $0x1a] sm:$0x1]
    %v2958 = vld [vmem:[#allocation9 + $0x22] sm:$0x1]
    %v2959 = vld [vmem:[#allocation9 + $0x2a] sm:$0x1]
    %v2960 = vld [vmem:[#allocation9 + $0x32] sm:$0x1]
    %v2961 = vld [vmem:[#allocation9 + $0x3a] sm:$0x1]
    %v2970 = vsel %vm684, %v2911, %v2904
    %v2971 = vsel %vm686, %v2918, %v2970
    %v2972 = vsel %vm688, %v2925, %v2971
    %v2973 = vsel %vm690, %v2932, %v2972
    %v2974 = vsel %vm692, %v2939, %v2973
    %v2975 = vsel %vm694, %v2946, %v2974
    %v2976 = vsel %vm696, %v2953, %v2975
    %v2977 = vsel %vm423, %v2976, 0
    %2979 = vmatprep.subr.mxu0 0.0
    %2980 = vmatpush1.msra.mxu0 0.0
    %2981 = vmatprep.subr.mxu0 0.0
    %2982 = vmatpush1.msra.mxu0 0.0
    %2983 = vmatprep.subr.mxu0 0.0
    %2984 = vmatpush1.msra.mxu0 0.0
    %2985 = vmatprep.subr.mxu0 0.0
    %2986 = vmatpush1.msra.mxu0 0.0
    %2987 = vmatprep.subr.mxu0 0.0
    %2988 = vmatpush1.msra.mxu0 0.0
    %2989 = vmatprep.subr.mxu0 0.0
    %2990 = vmatpush1.msra.mxu0 0.0
    %2991 = vmatprep.subr.mxu0 0.0
    %2992 = vmatpush1.msra.mxu0 0.0
    %2993 = vmatprep.subr.mxu0 0.0
    %2994 = vmatpush1.msra.mxu0 0.0
    %2995 = vmatprep.subr.mxu0 0.0
    %2996 = vmatpush1.msra.mxu0 0.0
    %2997 = vmatprep.subr.mxu0 0.0
    %2998 = vmatpush1.msra.mxu0 0.0
    %2999 = vmatprep.subr.mxu0 0.0
    %3000 = vmatpush1.msra.mxu0 0.0
    %3001 = vmatprep.subr.mxu0 0.0
    %3002 = vmatpush1.msra.mxu0 0.0
    %3003 = vmatprep.subr.mxu0 0.0
    %3004 = vmatpush1.msra.mxu0 %v420
    %3005 = vmatprep.subr.mxu0 0.0
    %3006 = vmatpush1.msra.mxu0 %v419
    %3007 = vmatprep.subr.mxu0 0.0
    %3008 = vmatpush1.msra.mxu0 %v418
    %3009 = vmatprep.subr.mxu0 0.0
    %3010 = vmatpush1.msra.mxu0 %v417
    %3011 = vmatprep.subr.mxu0 0.0
    %3012 = vmatpush2.msra.mxu0 0.0
    %3013 = vmatprep.subr.mxu0 0.0
    %3014 = vmatpush2.msra.mxu0 0.0
    %3015 = vmatprep.subr.mxu0 0.0
    %3016 = vmatpush2.msra.mxu0 0.0
    %3017 = vmatprep.subr.mxu0 0.0
    %3018 = vmatpush2.msra.mxu0 0.0
    %3019 = vmatprep.subr.mxu0 0.0
    %3020 = vmatpush2.msra.mxu0 0.0
    %3021 = vmatprep.subr.mxu0 0.0
    %3022 = vmatpush2.msra.mxu0 0.0
    %3023 = vmatprep.subr.mxu0 0.0
    %3024 = vmatpush2.msra.mxu0 0.0
    %3025 = vmatprep.subr.mxu0 0.0
    %3026 = vmatpush2.msra.mxu0 0.0
    %3027 = vmatprep.subr.mxu0 0.0
    %3028 = vmatpush2.msra.mxu0 0.0
    %3029 = vmatprep.subr.mxu0 0.0
    %3030 = vmatpush2.msra.mxu0 0.0
    %3031 = vmatprep.subr.mxu0 0.0
    %3032 = vmatpush2.msra.mxu0 0.0
    %3033 = vmatprep.subr.mxu0 0.0
    %3034 = vmatpush2.msra.mxu0 0.0
    %3035 = vmatprep.subr.mxu0 0.0
    %3036 = vmatpush2.msra.mxu0 0.0
    %3037 = vmatprep.subr.mxu0 0.0
    %3038 = vmatpush2.msra.mxu0 0.0
    %3039 = vmatprep.subr.mxu0 0.0
    %3040 = vmatpush2.msra.mxu0 0.0
    %3041 = vmatprep.subr.mxu0 0.0
    %3042 = vmatpush2.msra.mxu0 0.0
    %3043 = vmatprep.mubr.f32.mxu0 0.0
    %3044 = vmatmul.mubr.f32.gmra.mxu0 %v2977
    %v3045 = vpop.f32.mrf.mxu0
    %v3046 = vadd.f32 0.0, %v3045
    %v3047 = vpop.f32.mrf.mxu0
    %3048 = vdwg.mxu0
    %v3050 = vrot.slane %v3046, 1
    %v3051 = vrot.slane %v3046, 2
    %v3052 = vrot.slane %v3046, 3
    %v3053 = vrot.slane %v3046, 4
    %v3054 = vrot.slane %v3046, 5
    %v3055 = vrot.slane %v3046, 6
    %v3056 = vrot.slane %v3046, 7
    %v3065 = vadd.f32 %v2954, %v3046
    %v3066 = vadd.f32 %v2955, %v3050
    %v3067 = vadd.f32 %v2956, %v3051
    %v3068 = vadd.f32 %v2957, %v3052
    %v3069 = vadd.f32 %v2958, %v3053
    %v3070 = vadd.f32 %v2959, %v3054
    %v3071 = vadd.f32 %v2960, %v3055
    %v3072 = vadd.f32 %v2961, %v3056
    %v3074 = vrot.slane %v2467, 1
    %v3075 = vrot.slane %v2469, 1
    %v3076 = vrot.slane %v2467, 2
    %v3077 = vrot.slane %v2469, 2
    %v3078 = vrot.slane %v2467, 3
    %v3079 = vrot.slane %v2469, 3
    %v3080 = vrot.slane %v2467, 4
    %v3081 = vrot.slane %v2469, 4
    %v3082 = vrot.slane %v2467, 5
    %v3083 = vrot.slane %v2469, 5
    %v3084 = vrot.slane %v2467, 6
    %v3085 = vrot.slane %v2469, 6
    %v3086 = vrot.slane %v2467, 7
    %v3087 = vrot.slane %v2469, 7
    %3088 = vrot.lane.b32.xlu0 %v2467, 96
    %v3089 = vpop.permute.xlu0 %3088
    %3090 = vrot.lane.b32.xlu0 %v2469, 96
    %v3091 = vpop.permute.xlu0 %3090
    %3092 = vrot.lane.b32.xlu0 %v3074, 96
    %v3093 = vpop.permute.xlu0 %3092
    %3094 = vrot.lane.b32.xlu0 %v3075, 96
    %v3095 = vpop.permute.xlu0 %3094
    %3096 = vrot.lane.b32.xlu0 %v3076, 96
    %v3097 = vpop.permute.xlu0 %3096
    %3098 = vrot.lane.b32.xlu0 %v3077, 96
    %v3099 = vpop.permute.xlu0 %3098
    %3100 = vrot.lane.b32.xlu0 %v3078, 96
    %v3101 = vpop.permute.xlu0 %3100
    %3102 = vrot.lane.b32.xlu0 %v3079, 96
    %v3103 = vpop.permute.xlu0 %3102
    %3104 = vrot.lane.b32.xlu0 %v3080, 96
    %v3105 = vpop.permute.xlu0 %3104
    %3106 = vrot.lane.b32.xlu0 %v3081, 96
    %v3107 = vpop.permute.xlu0 %3106
    %3108 = vrot.lane.b32.xlu0 %v3082, 96
    %v3109 = vpop.permute.xlu0 %3108
    %3110 = vrot.lane.b32.xlu0 %v3083, 96
    %v3111 = vpop.permute.xlu0 %3110
    %3112 = vrot.lane.b32.xlu0 %v3084, 96
    %v3113 = vpop.permute.xlu0 %3112
    %3114 = vrot.lane.b32.xlu0 %v3085, 96
    %v3115 = vpop.permute.xlu0 %3114
    %3116 = vrot.lane.b32.xlu0 %v3086, 96
    %v3117 = vpop.permute.xlu0 %3116
    %3118 = vrot.lane.b32.xlu0 %v3087, 96
    %v3119 = vpop.permute.xlu0 %3118
    %v3120 = vsel %vm1163, %v3089, %v3091
    %v3121 = vsel %vm1163, %v3093, %v3095
    %v3122 = vsel %vm1163, %v3097, %v3099
    %v3123 = vsel %vm1163, %v3101, %v3103
    %v3124 = vsel %vm1163, %v3105, %v3107
    %v3125 = vsel %vm1163, %v3109, %v3111
    %v3126 = vsel %vm1163, %v3113, %v3115
    %v3127 = vsel %vm1163, %v3117, %v3119
    %v3136 = vadd.f32 %v3065, %v3120
    %v3137 = vadd.f32 %v3066, %v3121
    %v3138 = vadd.f32 %v3067, %v3122
    %v3139 = vadd.f32 %v3068, %v3123
    %v3140 = vadd.f32 %v3069, %v3124
    %v3141 = vadd.f32 %v3070, %v3125
    %v3142 = vadd.f32 %v3071, %v3126
    %v3143 = vadd.f32 %v3072, %v3127
    %v3144 = vxor.u32 %v3136, 2147483648
    %v3145 = vxor.u32 %v3137, 2147483648
    %v3146 = vxor.u32 %v3138, 2147483648
    %v3147 = vxor.u32 %v3139, 2147483648
    %v3148 = vxor.u32 %v3140, 2147483648
    %v3149 = vxor.u32 %v3141, 2147483648
    %v3150 = vxor.u32 %v3142, 2147483648
    %v3151 = vxor.u32 %v3143, 2147483648
    %v3152 = vmul.f32 %v3144, 1.442695
    %v3153 = vpow.pop %v3152
    %v3154 = vmul.f32 %v3145, 1.442695
    %v3155 = vpow.pop %v3154
    %v3156 = vmul.f32 %v3146, 1.442695
    %v3157 = vpow.pop %v3156
    %v3158 = vmul.f32 %v3147, 1.442695
    %v3159 = vpow.pop %v3158
    %v3160 = vmul.f32 %v3148, 1.442695
    %v3161 = vpow.pop %v3160
    %v3162 = vmul.f32 %v3149, 1.442695
    %v3163 = vpow.pop %v3162
    %v3164 = vmul.f32 %v3150, 1.442695
    %v3165 = vpow.pop %v3164
    %v3166 = vmul.f32 %v3151, 1.442695
    %v3167 = vpow.pop %v3166
    %v3168 = vadd.f32 %v3153, 1.0
    %v3169 = vadd.f32 %v3155, 1.0
    %v3170 = vadd.f32 %v3157, 1.0
    %v3171 = vadd.f32 %v3159, 1.0
    %v3172 = vadd.f32 %v3161, 1.0
    %v3173 = vadd.f32 %v3163, 1.0
    %v3174 = vadd.f32 %v3165, 1.0
    %v3175 = vadd.f32 %v3167, 1.0
    %v3176 = vrcp.pop %v3168
    %v3177 = vmul.f32 1.0, %v3176
    %v3178 = vrcp.pop %v3169
    %v3179 = vmul.f32 1.0, %v3178
    %v3180 = vrcp.pop %v3170
    %v3181 = vmul.f32 1.0, %v3180
    %v3182 = vrcp.pop %v3171
    %v3183 = vmul.f32 1.0, %v3182
    %v3184 = vrcp.pop %v3172
    %v3185 = vmul.f32 1.0, %v3184
    %v3186 = vrcp.pop %v3173
    %v3187 = vmul.f32 1.0, %v3186
    %v3188 = vrcp.pop %v3174
    %v3189 = vmul.f32 1.0, %v3188
    %v3190 = vrcp.pop %v3175
    %v3191 = vmul.f32 1.0, %v3190
    %v3192 = vtanh.pop %v3136
    %v3193 = vtanh.pop %v3137
    %v3194 = vtanh.pop %v3138
    %v3195 = vtanh.pop %v3139
    %v3196 = vtanh.pop %v3140
    %v3197 = vtanh.pop %v3141
    %v3198 = vtanh.pop %v3142
    %v3199 = vtanh.pop %v3143
    %v3200 = vmul.f32 %v3177, %v2318
    %v3201 = vmul.f32 %v3179, %v2319
    %v3202 = vmul.f32 %v3181, %v2320
    %v3203 = vmul.f32 %v3183, %v2321
    %v3204 = vmul.f32 %v3185, %v2322
    %v3205 = vmul.f32 %v3187, %v2323
    %v3206 = vmul.f32 %v3189, %v2324
    %v3207 = vmul.f32 %v3191, %v2325
    %3216 = vrot.lane.b32.xlu0 %v3192, 64
    %v3217 = vpop.permute.xlu0 %3216
    %3218 = vrot.lane.b32.xlu0 %v3193, 64
    %v3219 = vpop.permute.xlu0 %3218
    %3220 = vrot.lane.b32.xlu0 %v3194, 64
    %v3221 = vpop.permute.xlu0 %3220
    %3222 = vrot.lane.b32.xlu0 %v3195, 64
    %v3223 = vpop.permute.xlu0 %3222
    %3224 = vrot.lane.b32.xlu0 %v3196, 64
    %v3225 = vpop.permute.xlu0 %3224
    %3226 = vrot.lane.b32.xlu0 %v3197, 64
    %v3227 = vpop.permute.xlu0 %3226
    %3228 = vrot.lane.b32.xlu0 %v3198, 64
    %v3229 = vpop.permute.xlu0 %3228
    %3230 = vrot.lane.b32.xlu0 %v3199, 64
    %v3231 = vpop.permute.xlu0 %3230
    %v3240 = vmul.f32 %v3177, %v3217
    %v3241 = vmul.f32 %v3179, %v3219
    %v3242 = vmul.f32 %v3181, %v3221
    %v3243 = vmul.f32 %v3183, %v3223
    %v3244 = vmul.f32 %v3185, %v3225
    %v3245 = vmul.f32 %v3187, %v3227
    %v3246 = vmul.f32 %v3189, %v3229
    %v3247 = vmul.f32 %v3191, %v3231
    %3256 = vrot.lane.b32.xlu0 %v3240, 32
    %v3257 = vpop.permute.xlu0 %3256
    %3258 = vrot.lane.b32.xlu0 %v3241, 32
    %v3259 = vpop.permute.xlu0 %3258
    %3260 = vrot.lane.b32.xlu0 %v3242, 32
    %v3261 = vpop.permute.xlu0 %3260
    %3262 = vrot.lane.b32.xlu0 %v3243, 32
    %v3263 = vpop.permute.xlu0 %3262
    %3264 = vrot.lane.b32.xlu0 %v3244, 32
    %v3265 = vpop.permute.xlu0 %3264
    %3266 = vrot.lane.b32.xlu0 %v3245, 32
    %v3267 = vpop.permute.xlu0 %3266
    %3268 = vrot.lane.b32.xlu0 %v3246, 32
    %v3269 = vpop.permute.xlu0 %3268
    %3270 = vrot.lane.b32.xlu0 %v3247, 32
    %v3271 = vpop.permute.xlu0 %3270
    %v3280 = vadd.f32 %v3200, %v3257
    %v3281 = vadd.f32 %v3201, %v3259
    %v3282 = vadd.f32 %v3202, %v3261
    %v3283 = vadd.f32 %v3203, %v3263
    %v3284 = vadd.f32 %v3204, %v3265
    %v3285 = vadd.f32 %v3205, %v3267
    %v3286 = vadd.f32 %v3206, %v3269
    %v3287 = vadd.f32 %v3207, %v3271
    %v3288 = vtanh.pop %v3280
    %v3289 = vtanh.pop %v3281
    %v3290 = vtanh.pop %v3282
    %v3291 = vtanh.pop %v3283
    %v3292 = vtanh.pop %v3284
    %v3293 = vtanh.pop %v3285
    %v3294 = vtanh.pop %v3286
    %v3295 = vtanh.pop %v3287
    %3304 = vrot.lane.b32.xlu0 %v3288, 64
    %v3305 = vpop.permute.xlu0 %3304
    %3306 = vrot.lane.b32.xlu0 %v3289, 64
    %v3307 = vpop.permute.xlu0 %3306
    %3308 = vrot.lane.b32.xlu0 %v3290, 64
    %v3309 = vpop.permute.xlu0 %3308
    %3310 = vrot.lane.b32.xlu0 %v3291, 64
    %v3311 = vpop.permute.xlu0 %3310
    %3312 = vrot.lane.b32.xlu0 %v3292, 64
    %v3313 = vpop.permute.xlu0 %3312
    %3314 = vrot.lane.b32.xlu0 %v3293, 64
    %v3315 = vpop.permute.xlu0 %3314
    %3316 = vrot.lane.b32.xlu0 %v3294, 64
    %v3317 = vpop.permute.xlu0 %3316
    %3318 = vrot.lane.b32.xlu0 %v3295, 64
    %v3319 = vpop.permute.xlu0 %3318
    %v3328 = vmul.f32 %v3177, %v3305
    %v3329 = vmul.f32 %v3179, %v3307
    %v3330 = vmul.f32 %v3181, %v3309
    %v3331 = vmul.f32 %v3183, %v3311
    %v3332 = vmul.f32 %v3185, %v3313
    %v3333 = vmul.f32 %v3187, %v3315
    %v3334 = vmul.f32 %v3189, %v3317
    %v3335 = vmul.f32 %v3191, %v3319
    %v3344 = vrot.slane %v3329, 7
    %v3345 = vsel %vm684, %v3344, %v3328
    %v3346 = vrot.slane %v3330, 6
    %v3347 = vsel %vm686, %v3346, %v3345
    %v3348 = vrot.slane %v3331, 5
    %v3349 = vsel %vm688, %v3348, %v3347
    %v3350 = vrot.slane %v3332, 4
    %v3351 = vsel %vm690, %v3350, %v3349
    %v3352 = vrot.slane %v3333, 3
    %v3353 = vsel %vm692, %v3352, %v3351
    %v3354 = vrot.slane %v3334, 2
    %v3355 = vsel %vm694, %v3354, %v3353
    %v3356 = vrot.slane %v3335, 1
    %v3357 = vsel %vm696, %v3356, %v3355
    %3358 = vrot.lane.b32.xlu0 %v3357, 32
    %v3359 = vpop.permute.xlu0 %3358
    %v3360 = vsel %vm423, %v3359, 0
    %3362 = vmatprep.subr.mxu0 0.0
    %3363 = vmatpush1.msra.mxu0 0.0
    %3364 = vmatprep.subr.mxu0 0.0
    %3365 = vmatpush1.msra.mxu0 0.0
    %3366 = vmatprep.subr.mxu0 0.0
    %3367 = vmatpush1.msra.mxu0 0.0
    %3368 = vmatprep.subr.mxu0 0.0
    %3369 = vmatpush1.msra.mxu0 0.0
    %3370 = vmatprep.subr.mxu0 0.0
    %3371 = vmatpush1.msra.mxu0 0.0
    %3372 = vmatprep.subr.mxu0 0.0
    %3373 = vmatpush1.msra.mxu0 0.0
    %3374 = vmatprep.subr.mxu0 0.0
    %3375 = vmatpush1.msra.mxu0 0.0
    %3376 = vmatprep.subr.mxu0 0.0
    %3377 = vmatpush1.msra.mxu0 0.0
    %3378 = vmatprep.subr.mxu0 0.0
    %3379 = vmatpush1.msra.mxu0 0.0
    %3380 = vmatprep.subr.mxu0 0.0
    %3381 = vmatpush1.msra.mxu0 0.0
    %3382 = vmatprep.subr.mxu0 0.0
    %3383 = vmatpush1.msra.mxu0 0.0
    %3384 = vmatprep.subr.mxu0 0.0
    %3385 = vmatpush1.msra.mxu0 0.0
    %3386 = vmatprep.subr.mxu0 %v415
    %3387 = vmatpush1.msra.mxu0 %v414
    %3388 = vmatprep.subr.mxu0 %v413
    %3389 = vmatpush1.msra.mxu0 %v412
    %3390 = vmatprep.subr.mxu0 %v411
    %3391 = vmatpush1.msra.mxu0 %v410
    %3392 = vmatprep.subr.mxu0 %v409
    %3393 = vmatpush1.msra.mxu0 %v408
    %3394 = vmatprep.subr.mxu0 0.0
    %3395 = vmatpush2.msra.mxu0 0.0
    %3396 = vmatprep.subr.mxu0 0.0
    %3397 = vmatpush2.msra.mxu0 0.0
    %3398 = vmatprep.subr.mxu0 0.0
    %3399 = vmatpush2.msra.mxu0 0.0
    %3400 = vmatprep.subr.mxu0 0.0
    %3401 = vmatpush2.msra.mxu0 0.0
    %3402 = vmatprep.subr.mxu0 0.0
    %3403 = vmatpush2.msra.mxu0 0.0
    %3404 = vmatprep.subr.mxu0 0.0
    %3405 = vmatpush2.msra.mxu0 0.0
    %3406 = vmatprep.subr.mxu0 0.0
    %3407 = vmatpush2.msra.mxu0 0.0
    %3408 = vmatprep.subr.mxu0 0.0
    %3409 = vmatpush2.msra.mxu0 0.0
    %3410 = vmatprep.subr.mxu0 0.0
    %3411 = vmatpush2.msra.mxu0 0.0
    %3412 = vmatprep.subr.mxu0 0.0
    %3413 = vmatpush2.msra.mxu0 0.0
    %3414 = vmatprep.subr.mxu0 0.0
    %3415 = vmatpush2.msra.mxu0 0.0
    %3416 = vmatprep.subr.mxu0 0.0
    %3417 = vmatpush2.msra.mxu0 0.0
    %3418 = vmatprep.subr.mxu0 0.0
    %3419 = vmatpush2.msra.mxu0 0.0
    %3420 = vmatprep.subr.mxu0 0.0
    %3421 = vmatpush2.msra.mxu0 0.0
    %3422 = vmatprep.subr.mxu0 0.0
    %3423 = vmatpush2.msra.mxu0 0.0
    %3424 = vmatprep.subr.mxu0 0.0
    %3425 = vmatpush2.msra.mxu0 0.0
    %3426 = vmatprep.mubr.f32.mxu0 0.0
    %3427 = vmatmul.mubr.f32.gmra.mxu0 %v3360
    %v3428 = vpop.f32.mrf.mxu0
    %v3429 = vadd.f32 0.0, %v3428
    %v3430 = vpop.f32.mrf.mxu0
    %v3431 = vadd.f32 0.0, %v3430
    %3432 = vdwg.mxu0
    %v3434 = vcombine.high %v3429, %v3429
    %v3436 = vunpack.c.l.s4 1966171168
    %v3437 = vunpack.c.0.s8 %v3436
    %v3438 = vlaneseq
    %v3439 = vshrl.u32 %v3438, 7
    %v3440 = vsub.s32 %v3437, %v3439
    %v3441 = vrot.slane %v3429, %v3440
    %v3443 = vunpack.c.l.s4 1966171168
    %v3444 = vunpack.c.0.s8 %v3443
    %v3445 = vlaneseq
    %v3446 = vshrl.u32 %v3445, 7
    %v3447 = vsub.s32 %v3444, %v3446
    %v3448 = vrot.slane %v3434, %v3447
    %v3449 = vcombine.high %v3441, %v3441
    %v3450 = vcombine.high %v3448, %v3448
    %v3452 = vunpack.c.l.s4 1966171168
    %v3453 = vunpack.c.0.s8 %v3452
    %v3454 = vlaneseq
    %v3455 = vshrl.u32 %v3454, 7
    %v3456 = vsub.s32 %v3453, %v3455
    %v3457 = vrot.slane %v3441, %v3456
    %v3459 = vunpack.c.l.s4 1966171168
    %v3460 = vunpack.c.0.s8 %v3459
    %v3461 = vlaneseq
    %v3462 = vshrl.u32 %v3461, 7
    %v3463 = vsub.s32 %v3460, %v3462
    %v3464 = vrot.slane %v3448, %v3463
    %v3466 = vunpack.c.l.s4 1966171168
    %v3467 = vunpack.c.0.s8 %v3466
    %v3468 = vlaneseq
    %v3469 = vshrl.u32 %v3468, 7
    %v3470 = vsub.s32 %v3467, %v3469
    %v3471 = vrot.slane %v3449, %v3470
    %v3473 = vunpack.c.l.s4 1966171168
    %v3474 = vunpack.c.0.s8 %v3473
    %v3475 = vlaneseq
    %v3476 = vshrl.u32 %v3475, 7
    %v3477 = vsub.s32 %v3474, %v3476
    %v3478 = vrot.slane %v3450, %v3477
    %v3479 = vcombine.high %v3457, %v3457
    %v3480 = vcombine.high %v3464, %v3464
    %v3481 = vcombine.high %v3471, %v3471
    %v3482 = vcombine.high %v3478, %v3478
    %v3483 = vlaneseq
    %v3484 = vshrl.u32 %v3483, 7
    %v3485 = vsub.s32 0, %v3484
    %v3486 = vrot.slane %v3457, %v3485
    %v3487 = vlaneseq
    %v3488 = vshrl.u32 %v3487, 7
    %v3489 = vsub.s32 0, %v3488
    %v3490 = vrot.slane %v3471, %v3489
    %v3491 = vlaneseq
    %v3492 = vshrl.u32 %v3491, 7
    %v3493 = vsub.s32 0, %v3492
    %v3494 = vrot.slane %v3479, %v3493
    %v3495 = vlaneseq
    %v3496 = vshrl.u32 %v3495, 7
    %v3497 = vsub.s32 0, %v3496
    %v3498 = vrot.slane %v3481, %v3497
    %v3499 = vlaneseq
    %v3500 = vshrl.u32 %v3499, 7
    %v3501 = vsub.s32 0, %v3500
    %v3502 = vrot.slane %v3464, %v3501
    %v3503 = vlaneseq
    %v3504 = vshrl.u32 %v3503, 7
    %v3505 = vsub.s32 0, %v3504
    %v3506 = vrot.slane %v3478, %v3505
    %v3507 = vlaneseq
    %v3508 = vshrl.u32 %v3507, 7
    %v3509 = vsub.s32 0, %v3508
    %v3510 = vrot.slane %v3480, %v3509
    %v3511 = vlaneseq
    %v3512 = vshrl.u32 %v3511, 7
    %v3513 = vsub.s32 0, %v3512
    %v3514 = vrot.slane %v3482, %v3513
    %v3523 = vadd.f32 %v142, %v3486
    %v3524 = vadd.f32 %v143, %v3490
    %v3525 = vadd.f32 %v144, %v3494
    %v3526 = vadd.f32 %v145, %v3498
    %v3527 = vadd.f32 %v146, %v3502
    %v3528 = vadd.f32 %v147, %v3506
    %v3529 = vadd.f32 %v148, %v3510
    %v3530 = vadd.f32 %v149, %v3514
    %v3531 = vtanh.pop %v3523
    %v3532 = vtanh.pop %v3524
    %v3533 = vtanh.pop %v3525
    %v3534 = vtanh.pop %v3526
    %v3535 = vtanh.pop %v3527
    %v3536 = vtanh.pop %v3528
    %v3537 = vtanh.pop %v3529
    %v3538 = vtanh.pop %v3530
    %v3539 = vmul.f32 %v3531, %v608
    %v3540 = vmul.f32 %v3532, %v608
    %v3541 = vmul.f32 %v3533, %v608
    %v3542 = vmul.f32 %v3534, %v608
    %v3543 = vmul.f32 %v3535, %v608
    %v3544 = vmul.f32 %v3536, %v608
    %v3545 = vmul.f32 %v3537, %v608
    %v3546 = vmul.f32 %v3538, %v608
    %v3547 = vsel %vm423, %v3539, 0.0
    %3548 = vadd.xlane.f32.xlu0 %v3547
    %v3549 = vpop.xlane.xlu0 %3548
    %v3550 = vsel %vm423, %v3540, 0.0
    %3551 = vadd.xlane.f32.xlu0 %v3550
    %v3552 = vpop.xlane.xlu0 %3551
    %v3553 = vsel %vm423, %v3541, 0.0
    %3554 = vadd.xlane.f32.xlu0 %v3553
    %v3555 = vpop.xlane.xlu0 %3554
    %v3556 = vsel %vm423, %v3542, 0.0
    %3557 = vadd.xlane.f32.xlu0 %v3556
    %v3558 = vpop.xlane.xlu0 %3557
    %v3559 = vsel %vm423, %v3543, 0.0
    %3560 = vadd.xlane.f32.xlu0 %v3559
    %v3561 = vpop.xlane.xlu0 %3560
    %v3562 = vsel %vm423, %v3544, 0.0
    %3563 = vadd.xlane.f32.xlu0 %v3562
    %v3564 = vpop.xlane.xlu0 %3563
    %v3565 = vsel %vm423, %v3545, 0.0
    %3566 = vadd.xlane.f32.xlu0 %v3565
    %v3567 = vpop.xlane.xlu0 %3566
    %v3568 = vsel %vm423, %v3546, 0.0
    %3569 = vadd.xlane.f32.xlu0 %v3568
    %v3570 = vpop.xlane.xlu0 %3569
    %v3579 = vlaneseq
    %v3580 = vshrl.u32 %v3579, 7
    %v3581 = vsub.s32 %v651, %v3580
    %v3582 = vrot.slane %v3549, %v3581
    %v3583 = vlaneseq
    %v3584 = vshrl.u32 %v3583, 7
    %v3585 = vsub.s32 %v651, %v3584
    %v3586 = vrot.slane %v3552, %v3585
    %v3587 = vlaneseq
    %v3588 = vshrl.u32 %v3587, 7
    %v3589 = vsub.s32 %v651, %v3588
    %v3590 = vrot.slane %v3555, %v3589
    %v3591 = vlaneseq
    %v3592 = vshrl.u32 %v3591, 7
    %v3593 = vsub.s32 %v651, %v3592
    %v3594 = vrot.slane %v3558, %v3593
    %v3595 = vlaneseq
    %v3596 = vshrl.u32 %v3595, 7
    %v3597 = vsub.s32 %v651, %v3596
    %v3598 = vrot.slane %v3561, %v3597
    %v3599 = vlaneseq
    %v3600 = vshrl.u32 %v3599, 7
    %v3601 = vsub.s32 %v651, %v3600
    %v3602 = vrot.slane %v3564, %v3601
    %v3603 = vlaneseq
    %v3604 = vshrl.u32 %v3603, 7
    %v3605 = vsub.s32 %v651, %v3604
    %v3606 = vrot.slane %v3567, %v3605
    %v3607 = vlaneseq
    %v3608 = vshrl.u32 %v3607, 7
    %v3609 = vsub.s32 %v651, %v3608
    %v3610 = vrot.slane %v3570, %v3609
    %v3611 = vsel %vm684, %v3586, %v3582
    %v3612 = vsel %vm686, %v3590, %v3611
    %v3613 = vsel %vm688, %v3594, %v3612
    %v3614 = vsel %vm690, %v3598, %v3613
    %v3615 = vsel %vm692, %v3602, %v3614
    %v3616 = vsel %vm694, %v3606, %v3615
    %v3617 = vsel %vm696, %v3610, %v3616
    %v3619 = vsel %vm699, %v3617, -inf
    %3620 = vmax.xlane.f32.xlu0 %v3619
    %v3621 = vpop.xlane.xlu0 %3620
    %v3623 = vlaneseq
    %v3624 = vshrl.u32 %v3623, 7
    %v3625 = vsub.s32 0, %v3624
    %v3626 = vrot.slane %v3621, %v3625
    %v3627 = vlaneseq
    %v3628 = vshrl.u32 %v3627, 7
    %v3629 = vsub.s32 1, %v3628
    %v3630 = vrot.slane %v3621, %v3629
    %v3631 = vlaneseq
    %v3632 = vshrl.u32 %v3631, 7
    %v3633 = vsub.s32 2, %v3632
    %v3634 = vrot.slane %v3621, %v3633
    %v3635 = vlaneseq
    %v3636 = vshrl.u32 %v3635, 7
    %v3637 = vsub.s32 3, %v3636
    %v3638 = vrot.slane %v3621, %v3637
    %v3639 = vlaneseq
    %v3640 = vshrl.u32 %v3639, 7
    %v3641 = vsub.s32 4, %v3640
    %v3642 = vrot.slane %v3621, %v3641
    %v3643 = vlaneseq
    %v3644 = vshrl.u32 %v3643, 7
    %v3645 = vsub.s32 5, %v3644
    %v3646 = vrot.slane %v3621, %v3645
    %v3647 = vlaneseq
    %v3648 = vshrl.u32 %v3647, 7
    %v3649 = vsub.s32 6, %v3648
    %v3650 = vrot.slane %v3621, %v3649
    %v3651 = vlaneseq
    %v3652 = vshrl.u32 %v3651, 7
    %v3653 = vsub.s32 7, %v3652
    %v3654 = vrot.slane %v3621, %v3653
    %v3663 = vsub.f32 %v3549, %v3626
    %v3664 = vsub.f32 %v3552, %v3630
    %v3665 = vsub.f32 %v3555, %v3634
    %v3666 = vsub.f32 %v3558, %v3638
    %v3667 = vsub.f32 %v3561, %v3642
    %v3668 = vsub.f32 %v3564, %v3646
    %v3669 = vsub.f32 %v3567, %v3650
    %v3670 = vsub.f32 %v3570, %v3654
    %v3671 = vmul.f32 %v3663, 1.442695
    %v3672 = vpow.pop %v3671
    %v3673 = vmul.f32 %v3664, 1.442695
    %v3674 = vpow.pop %v3673
    %v3675 = vmul.f32 %v3665, 1.442695
    %v3676 = vpow.pop %v3675
    %v3677 = vmul.f32 %v3666, 1.442695
    %v3678 = vpow.pop %v3677
    %v3679 = vmul.f32 %v3667, 1.442695
    %v3680 = vpow.pop %v3679
    %v3681 = vmul.f32 %v3668, 1.442695
    %v3682 = vpow.pop %v3681
    %v3683 = vmul.f32 %v3669, 1.442695
    %v3684 = vpow.pop %v3683
    %v3685 = vmul.f32 %v3670, 1.442695
    %v3686 = vpow.pop %v3685
    %3695 = vset.pattern.permute.xlu0 0
    %3696 = vperm.xlu0 %3695, %v3672
    %v3697 = vpop.permute.xlu0 %3696
    %3698 = vset.pattern.permute.xlu0 0
    %3699 = vperm.xlu0 %3698, %v3674
    %v3700 = vpop.permute.xlu0 %3699
    %3701 = vset.pattern.permute.xlu0 0
    %3702 = vperm.xlu0 %3701, %v3676
    %v3703 = vpop.permute.xlu0 %3702
    %3704 = vset.pattern.permute.xlu0 0
    %3705 = vperm.xlu0 %3704, %v3678
    %v3706 = vpop.permute.xlu0 %3705
    %3707 = vset.pattern.permute.xlu0 0
    %3708 = vperm.xlu0 %3707, %v3680
    %v3709 = vpop.permute.xlu0 %3708
    %3710 = vset.pattern.permute.xlu0 0
    %3711 = vperm.xlu0 %3710, %v3682
    %v3712 = vpop.permute.xlu0 %3711
    %3713 = vset.pattern.permute.xlu0 0
    %3714 = vperm.xlu0 %3713, %v3684
    %v3715 = vpop.permute.xlu0 %3714
    %3716 = vset.pattern.permute.xlu0 0
    %3717 = vperm.xlu0 %3716, %v3686
    %v3718 = vpop.permute.xlu0 %3717
    %v3719 = vlaneseq
    %v3720 = vshrl.u32 %v3719, 7
    %v3721 = vsub.s32 %v651, %v3720
    %v3722 = vrot.slane %v3697, %v3721
    %v3723 = vlaneseq
    %v3724 = vshrl.u32 %v3723, 7
    %v3725 = vsub.s32 %v651, %v3724
    %v3726 = vrot.slane %v3700, %v3725
    %v3727 = vlaneseq
    %v3728 = vshrl.u32 %v3727, 7
    %v3729 = vsub.s32 %v651, %v3728
    %v3730 = vrot.slane %v3703, %v3729
    %v3731 = vlaneseq
    %v3732 = vshrl.u32 %v3731, 7
    %v3733 = vsub.s32 %v651, %v3732
    %v3734 = vrot.slane %v3706, %v3733
    %v3735 = vlaneseq
    %v3736 = vshrl.u32 %v3735, 7
    %v3737 = vsub.s32 %v651, %v3736
    %v3738 = vrot.slane %v3709, %v3737
    %v3739 = vlaneseq
    %v3740 = vshrl.u32 %v3739, 7
    %v3741 = vsub.s32 %v651, %v3740
    %v3742 = vrot.slane %v3712, %v3741
    %v3743 = vlaneseq
    %v3744 = vshrl.u32 %v3743, 7
    %v3745 = vsub.s32 %v651, %v3744
    %v3746 = vrot.slane %v3715, %v3745
    %v3747 = vlaneseq
    %v3748 = vshrl.u32 %v3747, 7
    %v3749 = vsub.s32 %v651, %v3748
    %v3750 = vrot.slane %v3718, %v3749
    %v3751 = vsel %vm684, %v3726, %v3722
    %v3752 = vsel %vm686, %v3730, %v3751
    %v3753 = vsel %vm688, %v3734, %v3752
    %v3754 = vsel %vm690, %v3738, %v3753
    %v3755 = vsel %vm692, %v3742, %v3754
    %v3756 = vsel %vm694, %v3746, %v3755
    %v3757 = vsel %vm696, %v3750, %v3756
    %v3759 = vsel %vm699, %v3757, 0.0
    %3760 = vadd.xlane.f32.xlu0 %v3759
    %v3761 = vpop.xlane.xlu0 %3760
    %v3762 = vrcp.pop %v3761
    %v3764 = vlaneseq
    %v3765 = vshrl.u32 %v3764, 7
    %v3766 = vsub.s32 0, %v3765
    %v3767 = vrot.slane %v3762, %v3766
    %v3768 = vlaneseq
    %v3769 = vshrl.u32 %v3768, 7
    %v3770 = vsub.s32 1, %v3769
    %v3771 = vrot.slane %v3762, %v3770
    %v3772 = vlaneseq
    %v3773 = vshrl.u32 %v3772, 7
    %v3774 = vsub.s32 2, %v3773
    %v3775 = vrot.slane %v3762, %v3774
    %v3776 = vlaneseq
    %v3777 = vshrl.u32 %v3776, 7
    %v3778 = vsub.s32 3, %v3777
    %v3779 = vrot.slane %v3762, %v3778
    %v3780 = vlaneseq
    %v3781 = vshrl.u32 %v3780, 7
    %v3782 = vsub.s32 4, %v3781
    %v3783 = vrot.slane %v3762, %v3782
    %v3784 = vlaneseq
    %v3785 = vshrl.u32 %v3784, 7
    %v3786 = vsub.s32 5, %v3785
    %v3787 = vrot.slane %v3762, %v3786
    %v3788 = vlaneseq
    %v3789 = vshrl.u32 %v3788, 7
    %v3790 = vsub.s32 6, %v3789
    %v3791 = vrot.slane %v3762, %v3790
    %v3792 = vlaneseq
    %v3793 = vshrl.u32 %v3792, 7
    %v3794 = vsub.s32 7, %v3793
    %v3795 = vrot.slane %v3762, %v3794
    %v3804 = vmul.f32 %v3672, %v3767
    %v3805 = vmul.f32 %v3674, %v3771
    %v3806 = vmul.f32 %v3676, %v3775
    %v3807 = vmul.f32 %v3678, %v3779
    %v3808 = vmul.f32 %v3680, %v3783
    %v3809 = vmul.f32 %v3682, %v3787
    %v3810 = vmul.f32 %v3684, %v3791
    %v3811 = vmul.f32 %v3686, %v3795
    %3813 = vset.pattern.permute.xlu0 0
    %3814 = vperm.xlu0 %3813, %v3804
    %v3815 = vpop.permute.xlu0 %3814
    %3818 = vset.pattern.permute.xlu0 0
    %3819 = vperm.xlu0 %3818, %v3805
    %v3820 = vpop.permute.xlu0 %3819
    %3823 = vset.pattern.permute.xlu0 0
    %3824 = vperm.xlu0 %3823, %v3806
    %v3825 = vpop.permute.xlu0 %3824
    %3828 = vset.pattern.permute.xlu0 0
    %3829 = vperm.xlu0 %3828, %v3807
    %v3830 = vpop.permute.xlu0 %3829
    %3833 = vset.pattern.permute.xlu0 0
    %3834 = vperm.xlu0 %3833, %v3808
    %v3835 = vpop.permute.xlu0 %3834
    %3838 = vset.pattern.permute.xlu0 0
    %3839 = vperm.xlu0 %3838, %v3809
    %v3840 = vpop.permute.xlu0 %3839
    %3843 = vset.pattern.permute.xlu0 0
    %3844 = vperm.xlu0 %3843, %v3810
    %v3845 = vpop.permute.xlu0 %3844
    %3848 = vset.pattern.permute.xlu0 0
    %3849 = vperm.xlu0 %3848, %v3811
    %v3850 = vpop.permute.xlu0 %3849
    %v3852 = vmul.f32 %v134, %v3815
    %v3853 = vmul.f32 %v135, %v3820
    %v3854 = vmul.f32 %v136, %v3825
    %v3855 = vmul.f32 %v137, %v3830
    %v3856 = vmul.f32 %v138, %v3835
    %v3857 = vmul.f32 %v139, %v3840
    %v3858 = vmul.f32 %v140, %v3845
    %v3859 = vmul.f32 %v141, %v3850
    %v3860 = vsel %vm423, %v3852, 0.0
    %v3861 = vrot.slane %v3860, 4
    %v3862 = vadd.f32 %v3860, %v3861
    %v3863 = vrot.slane %v3862, 2
    %v3864 = vadd.f32 %v3862, %v3863
    %v3865 = vrot.slane %v3864, 1
    %v3866 = vadd.f32 %v3864, %v3865
    %v3867 = vsel %vm423, %v3853, 0.0
    %v3868 = vrot.slane %v3867, 4
    %v3869 = vadd.f32 %v3867, %v3868
    %v3870 = vrot.slane %v3869, 2
    %v3871 = vadd.f32 %v3869, %v3870
    %v3872 = vrot.slane %v3871, 1
    %v3873 = vadd.f32 %v3871, %v3872
    %v3874 = vsel %vm423, %v3854, 0.0
    %v3875 = vrot.slane %v3874, 4
    %v3876 = vadd.f32 %v3874, %v3875
    %v3877 = vrot.slane %v3876, 2
    %v3878 = vadd.f32 %v3876, %v3877
    %v3879 = vrot.slane %v3878, 1
    %v3880 = vadd.f32 %v3878, %v3879
    %v3881 = vsel %vm423, %v3855, 0.0
    %v3882 = vrot.slane %v3881, 4
    %v3883 = vadd.f32 %v3881, %v3882
    %v3884 = vrot.slane %v3883, 2
    %v3885 = vadd.f32 %v3883, %v3884
    %v3886 = vrot.slane %v3885, 1
    %v3887 = vadd.f32 %v3885, %v3886
    %v3888 = vsel %vm423, %v3856, 0.0
    %v3889 = vrot.slane %v3888, 4
    %v3890 = vadd.f32 %v3888, %v3889
    %v3891 = vrot.slane %v3890, 2
    %v3892 = vadd.f32 %v3890, %v3891
    %v3893 = vrot.slane %v3892, 1
    %v3894 = vadd.f32 %v3892, %v3893
    %v3895 = vsel %vm423, %v3857, 0.0
    %v3896 = vrot.slane %v3895, 4
    %v3897 = vadd.f32 %v3895, %v3896
    %v3898 = vrot.slane %v3897, 2
    %v3899 = vadd.f32 %v3897, %v3898
    %v3900 = vrot.slane %v3899, 1
    %v3901 = vadd.f32 %v3899, %v3900
    %v3902 = vsel %vm423, %v3858, 0.0
    %v3903 = vrot.slane %v3902, 4
    %v3904 = vadd.f32 %v3902, %v3903
    %v3905 = vrot.slane %v3904, 2
    %v3906 = vadd.f32 %v3904, %v3905
    %v3907 = vrot.slane %v3906, 1
    %v3908 = vadd.f32 %v3906, %v3907
    %v3909 = vsel %vm423, %v3859, 0.0
    %v3910 = vrot.slane %v3909, 4
    %v3911 = vadd.f32 %v3909, %v3910
    %v3912 = vrot.slane %v3911, 2
    %v3913 = vadd.f32 %v3911, %v3912
    %v3914 = vrot.slane %v3913, 1
    %v3915 = vadd.f32 %v3913, %v3914
    %v3916 = vld [vmem:[#allocation9 + $0x3] sm:$0x1]
    %v3917 = vld [vmem:[#allocation9 + $0xb] sm:$0x1]
    %v3918 = vld [vmem:[#allocation9 + $0x13] sm:$0x1]
    %v3919 = vld [vmem:[#allocation9 + $0x1b] sm:$0x1]
    %v3920 = vld [vmem:[#allocation9 + $0x23] sm:$0x1]
    %v3921 = vld [vmem:[#allocation9 + $0x2b] sm:$0x1]
    %v3922 = vld [vmem:[#allocation9 + $0x33] sm:$0x1]
    %v3923 = vld [vmem:[#allocation9 + $0x3b] sm:$0x1]
    %v3932 = vsel %vm684, %v3873, %v3866
    %v3933 = vsel %vm686, %v3880, %v3932
    %v3934 = vsel %vm688, %v3887, %v3933
    %v3935 = vsel %vm690, %v3894, %v3934
    %v3936 = vsel %vm692, %v3901, %v3935
    %v3937 = vsel %vm694, %v3908, %v3936
    %v3938 = vsel %vm696, %v3915, %v3937
    %v3939 = vsel %vm423, %v3938, 0
    %3941 = vmatprep.subr.mxu0 0.0
    %3942 = vmatpush1.msra.mxu0 0.0
    %3943 = vmatprep.subr.mxu0 0.0
    %3944 = vmatpush1.msra.mxu0 0.0
    %3945 = vmatprep.subr.mxu0 0.0
    %3946 = vmatpush1.msra.mxu0 0.0
    %3947 = vmatprep.subr.mxu0 0.0
    %3948 = vmatpush1.msra.mxu0 0.0
    %3949 = vmatprep.subr.mxu0 0.0
    %3950 = vmatpush1.msra.mxu0 0.0
    %3951 = vmatprep.subr.mxu0 0.0
    %3952 = vmatpush1.msra.mxu0 0.0
    %3953 = vmatprep.subr.mxu0 0.0
    %3954 = vmatpush1.msra.mxu0 0.0
    %3955 = vmatprep.subr.mxu0 0.0
    %3956 = vmatpush1.msra.mxu0 0.0
    %3957 = vmatprep.subr.mxu0 0.0
    %3958 = vmatpush1.msra.mxu0 0.0
    %3959 = vmatprep.subr.mxu0 0.0
    %3960 = vmatpush1.msra.mxu0 0.0
    %3961 = vmatprep.subr.mxu0 0.0
    %3962 = vmatpush1.msra.mxu0 0.0
    %3963 = vmatprep.subr.mxu0 0.0
    %3964 = vmatpush1.msra.mxu0 0.0
    %3965 = vmatprep.subr.mxu0 0.0
    %3966 = vmatpush1.msra.mxu0 %v420
    %3967 = vmatprep.subr.mxu0 0.0
    %3968 = vmatpush1.msra.mxu0 %v419
    %3969 = vmatprep.subr.mxu0 0.0
    %3970 = vmatpush1.msra.mxu0 %v418
    %3971 = vmatprep.subr.mxu0 0.0
    %3972 = vmatpush1.msra.mxu0 %v417
    %3973 = vmatprep.subr.mxu0 0.0
    %3974 = vmatpush2.msra.mxu0 0.0
    %3975 = vmatprep.subr.mxu0 0.0
    %3976 = vmatpush2.msra.mxu0 0.0
    %3977 = vmatprep.subr.mxu0 0.0
    %3978 = vmatpush2.msra.mxu0 0.0
    %3979 = vmatprep.subr.mxu0 0.0
    %3980 = vmatpush2.msra.mxu0 0.0
    %3981 = vmatprep.subr.mxu0 0.0
    %3982 = vmatpush2.msra.mxu0 0.0
    %3983 = vmatprep.subr.mxu0 0.0
    %3984 = vmatpush2.msra.mxu0 0.0
    %3985 = vmatprep.subr.mxu0 0.0
    %3986 = vmatpush2.msra.mxu0 0.0
    %3987 = vmatprep.subr.mxu0 0.0
    %3988 = vmatpush2.msra.mxu0 0.0
    %3989 = vmatprep.subr.mxu0 0.0
    %3990 = vmatpush2.msra.mxu0 0.0
    %3991 = vmatprep.subr.mxu0 0.0
    %3992 = vmatpush2.msra.mxu0 0.0
    %3993 = vmatprep.subr.mxu0 0.0
    %3994 = vmatpush2.msra.mxu0 0.0
    %3995 = vmatprep.subr.mxu0 0.0
    %3996 = vmatpush2.msra.mxu0 0.0
    %3997 = vmatprep.subr.mxu0 0.0
    %3998 = vmatpush2.msra.mxu0 0.0
    %3999 = vmatprep.subr.mxu0 0.0
    %4000 = vmatpush2.msra.mxu0 0.0
    %4001 = vmatprep.subr.mxu0 0.0
    %4002 = vmatpush2.msra.mxu0 0.0
    %4003 = vmatprep.subr.mxu0 0.0
    %4004 = vmatpush2.msra.mxu0 0.0
    %4005 = vmatprep.mubr.f32.mxu0 0.0
    %4006 = vmatmul.mubr.f32.gmra.mxu0 %v3939
    %v4007 = vpop.f32.mrf.mxu0
    %v4008 = vadd.f32 0.0, %v4007
    %v4009 = vpop.f32.mrf.mxu0
    %4010 = vdwg.mxu0
    %v4012 = vrot.slane %v4008, 1
    %v4013 = vrot.slane %v4008, 2
    %v4014 = vrot.slane %v4008, 3
    %v4015 = vrot.slane %v4008, 4
    %v4016 = vrot.slane %v4008, 5
    %v4017 = vrot.slane %v4008, 6
    %v4018 = vrot.slane %v4008, 7
    %v4027 = vadd.f32 %v3916, %v4008
    %v4028 = vadd.f32 %v3917, %v4012
    %v4029 = vadd.f32 %v3918, %v4013
    %v4030 = vadd.f32 %v3919, %v4014
    %v4031 = vadd.f32 %v3920, %v4015
    %v4032 = vadd.f32 %v3921, %v4016
    %v4033 = vadd.f32 %v3922, %v4017
    %v4034 = vadd.f32 %v3923, %v4018
    %v4036 = vrot.slane %v3429, 1
    %v4037 = vrot.slane %v3431, 1
    %v4038 = vrot.slane %v3429, 2
    %v4039 = vrot.slane %v3431, 2
    %v4040 = vrot.slane %v3429, 3
    %v4041 = vrot.slane %v3431, 3
    %v4042 = vrot.slane %v3429, 4
    %v4043 = vrot.slane %v3431, 4
    %v4044 = vrot.slane %v3429, 5
    %v4045 = vrot.slane %v3431, 5
    %v4046 = vrot.slane %v3429, 6
    %v4047 = vrot.slane %v3431, 6
    %v4048 = vrot.slane %v3429, 7
    %v4049 = vrot.slane %v3431, 7
    %4050 = vrot.lane.b32.xlu0 %v3429, 96
    %v4051 = vpop.permute.xlu0 %4050
    %4052 = vrot.lane.b32.xlu0 %v3431, 96
    %v4053 = vpop.permute.xlu0 %4052
    %4054 = vrot.lane.b32.xlu0 %v4036, 96
    %v4055 = vpop.permute.xlu0 %4054
    %4056 = vrot.lane.b32.xlu0 %v4037, 96
    %v4057 = vpop.permute.xlu0 %4056
    %4058 = vrot.lane.b32.xlu0 %v4038, 96
    %v4059 = vpop.permute.xlu0 %4058
    %4060 = vrot.lane.b32.xlu0 %v4039, 96
    %v4061 = vpop.permute.xlu0 %4060
    %4062 = vrot.lane.b32.xlu0 %v4040, 96
    %v4063 = vpop.permute.xlu0 %4062
    %4064 = vrot.lane.b32.xlu0 %v4041, 96
    %v4065 = vpop.permute.xlu0 %4064
    %4066 = vrot.lane.b32.xlu0 %v4042, 96
    %v4067 = vpop.permute.xlu0 %4066
    %4068 = vrot.lane.b32.xlu0 %v4043, 96
    %v4069 = vpop.permute.xlu0 %4068
    %4070 = vrot.lane.b32.xlu0 %v4044, 96
    %v4071 = vpop.permute.xlu0 %4070
    %4072 = vrot.lane.b32.xlu0 %v4045, 96
    %v4073 = vpop.permute.xlu0 %4072
    %4074 = vrot.lane.b32.xlu0 %v4046, 96
    %v4075 = vpop.permute.xlu0 %4074
    %4076 = vrot.lane.b32.xlu0 %v4047, 96
    %v4077 = vpop.permute.xlu0 %4076
    %4078 = vrot.lane.b32.xlu0 %v4048, 96
    %v4079 = vpop.permute.xlu0 %4078
    %4080 = vrot.lane.b32.xlu0 %v4049, 96
    %v4081 = vpop.permute.xlu0 %4080
    %v4082 = vsel %vm1163, %v4051, %v4053
    %v4083 = vsel %vm1163, %v4055, %v4057
    %v4084 = vsel %vm1163, %v4059, %v4061
    %v4085 = vsel %vm1163, %v4063, %v4065
    %v4086 = vsel %vm1163, %v4067, %v4069
    %v4087 = vsel %vm1163, %v4071, %v4073
    %v4088 = vsel %vm1163, %v4075, %v4077
    %v4089 = vsel %vm1163, %v4079, %v4081
    %v4098 = vadd.f32 %v4027, %v4082
    %v4099 = vadd.f32 %v4028, %v4083
    %v4100 = vadd.f32 %v4029, %v4084
    %v4101 = vadd.f32 %v4030, %v4085
    %v4102 = vadd.f32 %v4031, %v4086
    %v4103 = vadd.f32 %v4032, %v4087
    %v4104 = vadd.f32 %v4033, %v4088
    %v4105 = vadd.f32 %v4034, %v4089
    %v4106 = vxor.u32 %v4098, 2147483648
    %v4107 = vxor.u32 %v4099, 2147483648
    %v4108 = vxor.u32 %v4100, 2147483648
    %v4109 = vxor.u32 %v4101, 2147483648
    %v4110 = vxor.u32 %v4102, 2147483648
    %v4111 = vxor.u32 %v4103, 2147483648
    %v4112 = vxor.u32 %v4104, 2147483648
    %v4113 = vxor.u32 %v4105, 2147483648
    %v4114 = vmul.f32 %v4106, 1.442695
    %v4115 = vpow.pop %v4114
    %v4116 = vmul.f32 %v4107, 1.442695
    %v4117 = vpow.pop %v4116
    %v4118 = vmul.f32 %v4108, 1.442695
    %v4119 = vpow.pop %v4118
    %v4120 = vmul.f32 %v4109, 1.442695
    %v4121 = vpow.pop %v4120
    %v4122 = vmul.f32 %v4110, 1.442695
    %v4123 = vpow.pop %v4122
    %v4124 = vmul.f32 %v4111, 1.442695
    %v4125 = vpow.pop %v4124
    %v4126 = vmul.f32 %v4112, 1.442695
    %v4127 = vpow.pop %v4126
    %v4128 = vmul.f32 %v4113, 1.442695
    %v4129 = vpow.pop %v4128
    %v4130 = vadd.f32 %v4115, 1.0
    %v4131 = vadd.f32 %v4117, 1.0
    %v4132 = vadd.f32 %v4119, 1.0
    %v4133 = vadd.f32 %v4121, 1.0
    %v4134 = vadd.f32 %v4123, 1.0
    %v4135 = vadd.f32 %v4125, 1.0
    %v4136 = vadd.f32 %v4127, 1.0
    %v4137 = vadd.f32 %v4129, 1.0
    %v4138 = vrcp.pop %v4130
    %v4139 = vmul.f32 1.0, %v4138
    %v4140 = vrcp.pop %v4131
    %v4141 = vmul.f32 1.0, %v4140
    %v4142 = vrcp.pop %v4132
    %v4143 = vmul.f32 1.0, %v4142
    %v4144 = vrcp.pop %v4133
    %v4145 = vmul.f32 1.0, %v4144
    %v4146 = vrcp.pop %v4134
    %v4147 = vmul.f32 1.0, %v4146
    %v4148 = vrcp.pop %v4135
    %v4149 = vmul.f32 1.0, %v4148
    %v4150 = vrcp.pop %v4136
    %v4151 = vmul.f32 1.0, %v4150
    %v4152 = vrcp.pop %v4137
    %v4153 = vmul.f32 1.0, %v4152
    %v4154 = vtanh.pop %v4098
    %v4155 = vtanh.pop %v4099
    %v4156 = vtanh.pop %v4100
    %v4157 = vtanh.pop %v4101
    %v4158 = vtanh.pop %v4102
    %v4159 = vtanh.pop %v4103
    %v4160 = vtanh.pop %v4104
    %v4161 = vtanh.pop %v4105
    %v4162 = vmul.f32 %v4139, %v3280
    %v4163 = vmul.f32 %v4141, %v3281
    %v4164 = vmul.f32 %v4143, %v3282
    %v4165 = vmul.f32 %v4145, %v3283
    %v4166 = vmul.f32 %v4147, %v3284
    %v4167 = vmul.f32 %v4149, %v3285
    %v4168 = vmul.f32 %v4151, %v3286
    %v4169 = vmul.f32 %v4153, %v3287
    %4178 = vrot.lane.b32.xlu0 %v4154, 64
    %v4179 = vpop.permute.xlu0 %4178
    %4180 = vrot.lane.b32.xlu0 %v4155, 64
    %v4181 = vpop.permute.xlu0 %4180
    %4182 = vrot.lane.b32.xlu0 %v4156, 64
    %v4183 = vpop.permute.xlu0 %4182
    %4184 = vrot.lane.b32.xlu0 %v4157, 64
    %v4185 = vpop.permute.xlu0 %4184
    %4186 = vrot.lane.b32.xlu0 %v4158, 64
    %v4187 = vpop.permute.xlu0 %4186
    %4188 = vrot.lane.b32.xlu0 %v4159, 64
    %v4189 = vpop.permute.xlu0 %4188
    %4190 = vrot.lane.b32.xlu0 %v4160, 64
    %v4191 = vpop.permute.xlu0 %4190
    %4192 = vrot.lane.b32.xlu0 %v4161, 64
    %v4193 = vpop.permute.xlu0 %4192
    %v4202 = vmul.f32 %v4139, %v4179
    %v4203 = vmul.f32 %v4141, %v4181
    %v4204 = vmul.f32 %v4143, %v4183
    %v4205 = vmul.f32 %v4145, %v4185
    %v4206 = vmul.f32 %v4147, %v4187
    %v4207 = vmul.f32 %v4149, %v4189
    %v4208 = vmul.f32 %v4151, %v4191
    %v4209 = vmul.f32 %v4153, %v4193
    %4218 = vrot.lane.b32.xlu0 %v4202, 32
    %v4219 = vpop.permute.xlu0 %4218
    %4220 = vrot.lane.b32.xlu0 %v4203, 32
    %v4221 = vpop.permute.xlu0 %4220
    %4222 = vrot.lane.b32.xlu0 %v4204, 32
    %v4223 = vpop.permute.xlu0 %4222
    %4224 = vrot.lane.b32.xlu0 %v4205, 32
    %v4225 = vpop.permute.xlu0 %4224
    %4226 = vrot.lane.b32.xlu0 %v4206, 32
    %v4227 = vpop.permute.xlu0 %4226
    %4228 = vrot.lane.b32.xlu0 %v4207, 32
    %v4229 = vpop.permute.xlu0 %4228
    %4230 = vrot.lane.b32.xlu0 %v4208, 32
    %v4231 = vpop.permute.xlu0 %4230
    %4232 = vrot.lane.b32.xlu0 %v4209, 32
    %v4233 = vpop.permute.xlu0 %4232
    %v4242 = vadd.f32 %v4162, %v4219
    %v4243 = vadd.f32 %v4163, %v4221
    %v4244 = vadd.f32 %v4164, %v4223
    %v4245 = vadd.f32 %v4165, %v4225
    %v4246 = vadd.f32 %v4166, %v4227
    %v4247 = vadd.f32 %v4167, %v4229
    %v4248 = vadd.f32 %v4168, %v4231
    %v4249 = vadd.f32 %v4169, %v4233
    %v4250 = vtanh.pop %v4242
    %v4251 = vtanh.pop %v4243
    %v4252 = vtanh.pop %v4244
    %v4253 = vtanh.pop %v4245
    %v4254 = vtanh.pop %v4246
    %v4255 = vtanh.pop %v4247
    %v4256 = vtanh.pop %v4248
    %v4257 = vtanh.pop %v4249
    %4266 = vrot.lane.b32.xlu0 %v4250, 64
    %v4267 = vpop.permute.xlu0 %4266
    %4268 = vrot.lane.b32.xlu0 %v4251, 64
    %v4269 = vpop.permute.xlu0 %4268
    %4270 = vrot.lane.b32.xlu0 %v4252, 64
    %v4271 = vpop.permute.xlu0 %4270
    %4272 = vrot.lane.b32.xlu0 %v4253, 64
    %v4273 = vpop.permute.xlu0 %4272
    %4274 = vrot.lane.b32.xlu0 %v4254, 64
    %v4275 = vpop.permute.xlu0 %4274
    %4276 = vrot.lane.b32.xlu0 %v4255, 64
    %v4277 = vpop.permute.xlu0 %4276
    %4278 = vrot.lane.b32.xlu0 %v4256, 64
    %v4279 = vpop.permute.xlu0 %4278
    %4280 = vrot.lane.b32.xlu0 %v4257, 64
    %v4281 = vpop.permute.xlu0 %4280
    %v4290 = vmul.f32 %v4139, %v4267
    %v4291 = vmul.f32 %v4141, %v4269
    %v4292 = vmul.f32 %v4143, %v4271
    %v4293 = vmul.f32 %v4145, %v4273
    %v4294 = vmul.f32 %v4147, %v4275
    %v4295 = vmul.f32 %v4149, %v4277
    %v4296 = vmul.f32 %v4151, %v4279
    %v4297 = vmul.f32 %v4153, %v4281
    %v4306 = vrot.slane %v4291, 7
    %v4307 = vsel %vm684, %v4306, %v4290
    %v4308 = vrot.slane %v4292, 6
    %v4309 = vsel %vm686, %v4308, %v4307
    %v4310 = vrot.slane %v4293, 5
    %v4311 = vsel %vm688, %v4310, %v4309
    %v4312 = vrot.slane %v4294, 4
    %v4313 = vsel %vm690, %v4312, %v4311
    %v4314 = vrot.slane %v4295, 3
    %v4315 = vsel %vm692, %v4314, %v4313
    %v4316 = vrot.slane %v4296, 2
    %v4317 = vsel %vm694, %v4316, %v4315
    %v4318 = vrot.slane %v4297, 1
    %v4319 = vsel %vm696, %v4318, %v4317
    %4320 = vrot.lane.b32.xlu0 %v4319, 32
    %v4321 = vpop.permute.xlu0 %4320
    %v4322 = vsel %vm423, %v4321, 0
    %4324 = vmatprep.subr.mxu0 0.0
    %4325 = vmatpush1.msra.mxu0 0.0
    %4326 = vmatprep.subr.mxu0 0.0
    %4327 = vmatpush1.msra.mxu0 0.0
    %4328 = vmatprep.subr.mxu0 0.0
    %4329 = vmatpush1.msra.mxu0 0.0
    %4330 = vmatprep.subr.mxu0 0.0
    %4331 = vmatpush1.msra.mxu0 0.0
    %4332 = vmatprep.subr.mxu0 0.0
    %4333 = vmatpush1.msra.mxu0 0.0
    %4334 = vmatprep.subr.mxu0 0.0
    %4335 = vmatpush1.msra.mxu0 0.0
    %4336 = vmatprep.subr.mxu0 0.0
    %4337 = vmatpush1.msra.mxu0 0.0
    %4338 = vmatprep.subr.mxu0 0.0
    %4339 = vmatpush1.msra.mxu0 0.0
    %4340 = vmatprep.subr.mxu0 0.0
    %4341 = vmatpush1.msra.mxu0 0.0
    %4342 = vmatprep.subr.mxu0 0.0
    %4343 = vmatpush1.msra.mxu0 0.0
    %4344 = vmatprep.subr.mxu0 0.0
    %4345 = vmatpush1.msra.mxu0 0.0
    %4346 = vmatprep.subr.mxu0 0.0
    %4347 = vmatpush1.msra.mxu0 0.0
    %4348 = vmatprep.subr.mxu0 %v415
    %4349 = vmatpush1.msra.mxu0 %v414
    %4350 = vmatprep.subr.mxu0 %v413
    %4351 = vmatpush1.msra.mxu0 %v412
    %4352 = vmatprep.subr.mxu0 %v411
    %4353 = vmatpush1.msra.mxu0 %v410
    %4354 = vmatprep.subr.mxu0 %v409
    %4355 = vmatpush1.msra.mxu0 %v408
    %4356 = vmatprep.subr.mxu0 0.0
    %4357 = vmatpush2.msra.mxu0 0.0
    %4358 = vmatprep.subr.mxu0 0.0
    %4359 = vmatpush2.msra.mxu0 0.0
    %4360 = vmatprep.subr.mxu0 0.0
    %4361 = vmatpush2.msra.mxu0 0.0
    %4362 = vmatprep.subr.mxu0 0.0
    %4363 = vmatpush2.msra.mxu0 0.0
    %4364 = vmatprep.subr.mxu0 0.0
    %4365 = vmatpush2.msra.mxu0 0.0
    %4366 = vmatprep.subr.mxu0 0.0
    %4367 = vmatpush2.msra.mxu0 0.0
    %4368 = vmatprep.subr.mxu0 0.0
    %4369 = vmatpush2.msra.mxu0 0.0
    %4370 = vmatprep.subr.mxu0 0.0
    %4371 = vmatpush2.msra.mxu0 0.0
    %4372 = vmatprep.subr.mxu0 0.0
    %4373 = vmatpush2.msra.mxu0 0.0
    %4374 = vmatprep.subr.mxu0 0.0
    %4375 = vmatpush2.msra.mxu0 0.0
    %4376 = vmatprep.subr.mxu0 0.0
    %4377 = vmatpush2.msra.mxu0 0.0
    %4378 = vmatprep.subr.mxu0 0.0
    %4379 = vmatpush2.msra.mxu0 0.0
    %4380 = vmatprep.subr.mxu0 0.0
    %4381 = vmatpush2.msra.mxu0 0.0
    %4382 = vmatprep.subr.mxu0 0.0
    %4383 = vmatpush2.msra.mxu0 0.0
    %4384 = vmatprep.subr.mxu0 0.0
    %4385 = vmatpush2.msra.mxu0 0.0
    %4386 = vmatprep.subr.mxu0 0.0
    %4387 = vmatpush2.msra.mxu0 0.0
    %4388 = vmatprep.mubr.f32.mxu0 0.0
    %4389 = vmatmul.mubr.f32.gmra.mxu0 %v4322
    %v4390 = vpop.f32.mrf.mxu0
    %v4391 = vadd.f32 0.0, %v4390
    %v4392 = vpop.f32.mrf.mxu0
    %v4393 = vadd.f32 0.0, %v4392
    %4394 = vdwg.mxu0
    %v4396 = vcombine.high %v4391, %v4391
    %v4398 = vunpack.c.l.s4 1966171168
    %v4399 = vunpack.c.0.s8 %v4398
    %v4400 = vlaneseq
    %v4401 = vshrl.u32 %v4400, 7
    %v4402 = vsub.s32 %v4399, %v4401
    %v4403 = vrot.slane %v4391, %v4402
    %v4405 = vunpack.c.l.s4 1966171168
    %v4406 = vunpack.c.0.s8 %v4405
    %v4407 = vlaneseq
    %v4408 = vshrl.u32 %v4407, 7
    %v4409 = vsub.s32 %v4406, %v4408
    %v4410 = vrot.slane %v4396, %v4409
    %v4411 = vcombine.high %v4403, %v4403
    %v4412 = vcombine.high %v4410, %v4410
    %v4414 = vunpack.c.l.s4 1966171168
    %v4415 = vunpack.c.0.s8 %v4414
    %v4416 = vlaneseq
    %v4417 = vshrl.u32 %v4416, 7
    %v4418 = vsub.s32 %v4415, %v4417
    %v4419 = vrot.slane %v4403, %v4418
    %v4421 = vunpack.c.l.s4 1966171168
    %v4422 = vunpack.c.0.s8 %v4421
    %v4423 = vlaneseq
    %v4424 = vshrl.u32 %v4423, 7
    %v4425 = vsub.s32 %v4422, %v4424
    %v4426 = vrot.slane %v4410, %v4425
    %v4428 = vunpack.c.l.s4 1966171168
    %v4429 = vunpack.c.0.s8 %v4428
    %v4430 = vlaneseq
    %v4431 = vshrl.u32 %v4430, 7
    %v4432 = vsub.s32 %v4429, %v4431
    %v4433 = vrot.slane %v4411, %v4432
    %v4435 = vunpack.c.l.s4 1966171168
    %v4436 = vunpack.c.0.s8 %v4435
    %v4437 = vlaneseq
    %v4438 = vshrl.u32 %v4437, 7
    %v4439 = vsub.s32 %v4436, %v4438
    %v4440 = vrot.slane %v4412, %v4439
    %v4441 = vcombine.high %v4419, %v4419
    %v4442 = vcombine.high %v4426, %v4426
    %v4443 = vcombine.high %v4433, %v4433
    %v4444 = vcombine.high %v4440, %v4440
    %v4445 = vlaneseq
    %v4446 = vshrl.u32 %v4445, 7
    %v4447 = vsub.s32 0, %v4446
    %v4448 = vrot.slane %v4419, %v4447
    %v4449 = vlaneseq
    %v4450 = vshrl.u32 %v4449, 7
    %v4451 = vsub.s32 0, %v4450
    %v4452 = vrot.slane %v4433, %v4451
    %v4453 = vlaneseq
    %v4454 = vshrl.u32 %v4453, 7
    %v4455 = vsub.s32 0, %v4454
    %v4456 = vrot.slane %v4441, %v4455
    %v4457 = vlaneseq
    %v4458 = vshrl.u32 %v4457, 7
    %v4459 = vsub.s32 0, %v4458
    %v4460 = vrot.slane %v4443, %v4459
    %v4461 = vlaneseq
    %v4462 = vshrl.u32 %v4461, 7
    %v4463 = vsub.s32 0, %v4462
    %v4464 = vrot.slane %v4426, %v4463
    %v4465 = vlaneseq
    %v4466 = vshrl.u32 %v4465, 7
    %v4467 = vsub.s32 0, %v4466
    %v4468 = vrot.slane %v4440, %v4467
    %v4469 = vlaneseq
    %v4470 = vshrl.u32 %v4469, 7
    %v4471 = vsub.s32 0, %v4470
    %v4472 = vrot.slane %v4442, %v4471
    %v4473 = vlaneseq
    %v4474 = vshrl.u32 %v4473, 7
    %v4475 = vsub.s32 0, %v4474
    %v4476 = vrot.slane %v4444, %v4475
    %v4485 = vadd.f32 %v142, %v4448
    %v4486 = vadd.f32 %v143, %v4452
    %v4487 = vadd.f32 %v144, %v4456
    %v4488 = vadd.f32 %v145, %v4460
    %v4489 = vadd.f32 %v146, %v4464
    %v4490 = vadd.f32 %v147, %v4468
    %v4491 = vadd.f32 %v148, %v4472
    %v4492 = vadd.f32 %v149, %v4476
    %v4493 = vtanh.pop %v4485
    %v4494 = vtanh.pop %v4486
    %v4495 = vtanh.pop %v4487
    %v4496 = vtanh.pop %v4488
    %v4497 = vtanh.pop %v4489
    %v4498 = vtanh.pop %v4490
    %v4499 = vtanh.pop %v4491
    %v4500 = vtanh.pop %v4492
    %v4501 = vmul.f32 %v4493, %v608
    %v4502 = vmul.f32 %v4494, %v608
    %v4503 = vmul.f32 %v4495, %v608
    %v4504 = vmul.f32 %v4496, %v608
    %v4505 = vmul.f32 %v4497, %v608
    %v4506 = vmul.f32 %v4498, %v608
    %v4507 = vmul.f32 %v4499, %v608
    %v4508 = vmul.f32 %v4500, %v608
    %v4509 = vsel %vm423, %v4501, 0.0
    %4510 = vadd.xlane.f32.xlu0 %v4509
    %v4511 = vpop.xlane.xlu0 %4510
    %v4512 = vsel %vm423, %v4502, 0.0
    %4513 = vadd.xlane.f32.xlu0 %v4512
    %v4514 = vpop.xlane.xlu0 %4513
    %v4515 = vsel %vm423, %v4503, 0.0
    %4516 = vadd.xlane.f32.xlu0 %v4515
    %v4517 = vpop.xlane.xlu0 %4516
    %v4518 = vsel %vm423, %v4504, 0.0
    %4519 = vadd.xlane.f32.xlu0 %v4518
    %v4520 = vpop.xlane.xlu0 %4519
    %v4521 = vsel %vm423, %v4505, 0.0
    %4522 = vadd.xlane.f32.xlu0 %v4521
    %v4523 = vpop.xlane.xlu0 %4522
    %v4524 = vsel %vm423, %v4506, 0.0
    %4525 = vadd.xlane.f32.xlu0 %v4524
    %v4526 = vpop.xlane.xlu0 %4525
    %v4527 = vsel %vm423, %v4507, 0.0
    %4528 = vadd.xlane.f32.xlu0 %v4527
    %v4529 = vpop.xlane.xlu0 %4528
    %v4530 = vsel %vm423, %v4508, 0.0
    %4531 = vadd.xlane.f32.xlu0 %v4530
    %v4532 = vpop.xlane.xlu0 %4531
    %v4541 = vlaneseq
    %v4542 = vshrl.u32 %v4541, 7
    %v4543 = vsub.s32 %v651, %v4542
    %v4544 = vrot.slane %v4511, %v4543
    %v4545 = vlaneseq
    %v4546 = vshrl.u32 %v4545, 7
    %v4547 = vsub.s32 %v651, %v4546
    %v4548 = vrot.slane %v4514, %v4547
    %v4549 = vlaneseq
    %v4550 = vshrl.u32 %v4549, 7
    %v4551 = vsub.s32 %v651, %v4550
    %v4552 = vrot.slane %v4517, %v4551
    %v4553 = vlaneseq
    %v4554 = vshrl.u32 %v4553, 7
    %v4555 = vsub.s32 %v651, %v4554
    %v4556 = vrot.slane %v4520, %v4555
    %v4557 = vlaneseq
    %v4558 = vshrl.u32 %v4557, 7
    %v4559 = vsub.s32 %v651, %v4558
    %v4560 = vrot.slane %v4523, %v4559
    %v4561 = vlaneseq
    %v4562 = vshrl.u32 %v4561, 7
    %v4563 = vsub.s32 %v651, %v4562
    %v4564 = vrot.slane %v4526, %v4563
    %v4565 = vlaneseq
    %v4566 = vshrl.u32 %v4565, 7
    %v4567 = vsub.s32 %v651, %v4566
    %v4568 = vrot.slane %v4529, %v4567
    %v4569 = vlaneseq
    %v4570 = vshrl.u32 %v4569, 7
    %v4571 = vsub.s32 %v651, %v4570
    %v4572 = vrot.slane %v4532, %v4571
    %v4573 = vsel %vm684, %v4548, %v4544
    %v4574 = vsel %vm686, %v4552, %v4573
    %v4575 = vsel %vm688, %v4556, %v4574
    %v4576 = vsel %vm690, %v4560, %v4575
    %v4577 = vsel %vm692, %v4564, %v4576
    %v4578 = vsel %vm694, %v4568, %v4577
    %v4579 = vsel %vm696, %v4572, %v4578
    %v4581 = vsel %vm699, %v4579, -inf
    %4582 = vmax.xlane.f32.xlu0 %v4581
    %v4583 = vpop.xlane.xlu0 %4582
    %v4585 = vlaneseq
    %v4586 = vshrl.u32 %v4585, 7
    %v4587 = vsub.s32 0, %v4586
    %v4588 = vrot.slane %v4583, %v4587
    %v4589 = vlaneseq
    %v4590 = vshrl.u32 %v4589, 7
    %v4591 = vsub.s32 1, %v4590
    %v4592 = vrot.slane %v4583, %v4591
    %v4593 = vlaneseq
    %v4594 = vshrl.u32 %v4593, 7
    %v4595 = vsub.s32 2, %v4594
    %v4596 = vrot.slane %v4583, %v4595
    %v4597 = vlaneseq
    %v4598 = vshrl.u32 %v4597, 7
    %v4599 = vsub.s32 3, %v4598
    %v4600 = vrot.slane %v4583, %v4599
    %v4601 = vlaneseq
    %v4602 = vshrl.u32 %v4601, 7
    %v4603 = vsub.s32 4, %v4602
    %v4604 = vrot.slane %v4583, %v4603
    %v4605 = vlaneseq
    %v4606 = vshrl.u32 %v4605, 7
    %v4607 = vsub.s32 5, %v4606
    %v4608 = vrot.slane %v4583, %v4607
    %v4609 = vlaneseq
    %v4610 = vshrl.u32 %v4609, 7
    %v4611 = vsub.s32 6, %v4610
    %v4612 = vrot.slane %v4583, %v4611
    %v4613 = vlaneseq
    %v4614 = vshrl.u32 %v4613, 7
    %v4615 = vsub.s32 7, %v4614
    %v4616 = vrot.slane %v4583, %v4615
    %v4625 = vsub.f32 %v4511, %v4588
    %v4626 = vsub.f32 %v4514, %v4592
    %v4627 = vsub.f32 %v4517, %v4596
    %v4628 = vsub.f32 %v4520, %v4600
    %v4629 = vsub.f32 %v4523, %v4604
    %v4630 = vsub.f32 %v4526, %v4608
    %v4631 = vsub.f32 %v4529, %v4612
    %v4632 = vsub.f32 %v4532, %v4616
    %v4633 = vmul.f32 %v4625, 1.442695
    %v4634 = vpow.pop %v4633
    %v4635 = vmul.f32 %v4626, 1.442695
    %v4636 = vpow.pop %v4635
    %v4637 = vmul.f32 %v4627, 1.442695
    %v4638 = vpow.pop %v4637
    %v4639 = vmul.f32 %v4628, 1.442695
    %v4640 = vpow.pop %v4639
    %v4641 = vmul.f32 %v4629, 1.442695
    %v4642 = vpow.pop %v4641
    %v4643 = vmul.f32 %v4630, 1.442695
    %v4644 = vpow.pop %v4643
    %v4645 = vmul.f32 %v4631, 1.442695
    %v4646 = vpow.pop %v4645
    %v4647 = vmul.f32 %v4632, 1.442695
    %v4648 = vpow.pop %v4647
    %4657 = vset.pattern.permute.xlu0 0
    %4658 = vperm.xlu0 %4657, %v4634
    %v4659 = vpop.permute.xlu0 %4658
    %4660 = vset.pattern.permute.xlu0 0
    %4661 = vperm.xlu0 %4660, %v4636
    %v4662 = vpop.permute.xlu0 %4661
    %4663 = vset.pattern.permute.xlu0 0
    %4664 = vperm.xlu0 %4663, %v4638
    %v4665 = vpop.permute.xlu0 %4664
    %4666 = vset.pattern.permute.xlu0 0
    %4667 = vperm.xlu0 %4666, %v4640
    %v4668 = vpop.permute.xlu0 %4667
    %4669 = vset.pattern.permute.xlu0 0
    %4670 = vperm.xlu0 %4669, %v4642
    %v4671 = vpop.permute.xlu0 %4670
    %4672 = vset.pattern.permute.xlu0 0
    %4673 = vperm.xlu0 %4672, %v4644
    %v4674 = vpop.permute.xlu0 %4673
    %4675 = vset.pattern.permute.xlu0 0
    %4676 = vperm.xlu0 %4675, %v4646
    %v4677 = vpop.permute.xlu0 %4676
    %4678 = vset.pattern.permute.xlu0 0
    %4679 = vperm.xlu0 %4678, %v4648
    %v4680 = vpop.permute.xlu0 %4679
    %v4681 = vlaneseq
    %v4682 = vshrl.u32 %v4681, 7
    %v4683 = vsub.s32 %v651, %v4682
    %v4684 = vrot.slane %v4659, %v4683
    %v4685 = vlaneseq
    %v4686 = vshrl.u32 %v4685, 7
    %v4687 = vsub.s32 %v651, %v4686
    %v4688 = vrot.slane %v4662, %v4687
    %v4689 = vlaneseq
    %v4690 = vshrl.u32 %v4689, 7
    %v4691 = vsub.s32 %v651, %v4690
    %v4692 = vrot.slane %v4665, %v4691
    %v4693 = vlaneseq
    %v4694 = vshrl.u32 %v4693, 7
    %v4695 = vsub.s32 %v651, %v4694
    %v4696 = vrot.slane %v4668, %v4695
    %v4697 = vlaneseq
    %v4698 = vshrl.u32 %v4697, 7
    %v4699 = vsub.s32 %v651, %v4698
    %v4700 = vrot.slane %v4671, %v4699
    %v4701 = vlaneseq
    %v4702 = vshrl.u32 %v4701, 7
    %v4703 = vsub.s32 %v651, %v4702
    %v4704 = vrot.slane %v4674, %v4703
    %v4705 = vlaneseq
    %v4706 = vshrl.u32 %v4705, 7
    %v4707 = vsub.s32 %v651, %v4706
    %v4708 = vrot.slane %v4677, %v4707
    %v4709 = vlaneseq
    %v4710 = vshrl.u32 %v4709, 7
    %v4711 = vsub.s32 %v651, %v4710
    %v4712 = vrot.slane %v4680, %v4711
    %v4713 = vsel %vm684, %v4688, %v4684
    %v4714 = vsel %vm686, %v4692, %v4713
    %v4715 = vsel %vm688, %v4696, %v4714
    %v4716 = vsel %vm690, %v4700, %v4715
    %v4717 = vsel %vm692, %v4704, %v4716
    %v4718 = vsel %vm694, %v4708, %v4717
    %v4719 = vsel %vm696, %v4712, %v4718
    %v4721 = vsel %vm699, %v4719, 0.0
    %4722 = vadd.xlane.f32.xlu0 %v4721
    %v4723 = vpop.xlane.xlu0 %4722
    %v4724 = vrcp.pop %v4723
    %v4726 = vlaneseq
    %v4727 = vshrl.u32 %v4726, 7
    %v4728 = vsub.s32 0, %v4727
    %v4729 = vrot.slane %v4724, %v4728
    %v4730 = vlaneseq
    %v4731 = vshrl.u32 %v4730, 7
    %v4732 = vsub.s32 1, %v4731
    %v4733 = vrot.slane %v4724, %v4732
    %v4734 = vlaneseq
    %v4735 = vshrl.u32 %v4734, 7
    %v4736 = vsub.s32 2, %v4735
    %v4737 = vrot.slane %v4724, %v4736
    %v4738 = vlaneseq
    %v4739 = vshrl.u32 %v4738, 7
    %v4740 = vsub.s32 3, %v4739
    %v4741 = vrot.slane %v4724, %v4740
    %v4742 = vlaneseq
    %v4743 = vshrl.u32 %v4742, 7
    %v4744 = vsub.s32 4, %v4743
    %v4745 = vrot.slane %v4724, %v4744
    %v4746 = vlaneseq
    %v4747 = vshrl.u32 %v4746, 7
    %v4748 = vsub.s32 5, %v4747
    %v4749 = vrot.slane %v4724, %v4748
    %v4750 = vlaneseq
    %v4751 = vshrl.u32 %v4750, 7
    %v4752 = vsub.s32 6, %v4751
    %v4753 = vrot.slane %v4724, %v4752
    %v4754 = vlaneseq
    %v4755 = vshrl.u32 %v4754, 7
    %v4756 = vsub.s32 7, %v4755
    %v4757 = vrot.slane %v4724, %v4756
    %v4766 = vmul.f32 %v4634, %v4729
    %v4767 = vmul.f32 %v4636, %v4733
    %v4768 = vmul.f32 %v4638, %v4737
    %v4769 = vmul.f32 %v4640, %v4741
    %v4770 = vmul.f32 %v4642, %v4745
    %v4771 = vmul.f32 %v4644, %v4749
    %v4772 = vmul.f32 %v4646, %v4753
    %v4773 = vmul.f32 %v4648, %v4757
    %4775 = vset.pattern.permute.xlu0 0
    %4776 = vperm.xlu0 %4775, %v4766
    %v4777 = vpop.permute.xlu0 %4776
    %4780 = vset.pattern.permute.xlu0 0
    %4781 = vperm.xlu0 %4780, %v4767
    %v4782 = vpop.permute.xlu0 %4781
    %4785 = vset.pattern.permute.xlu0 0
    %4786 = vperm.xlu0 %4785, %v4768
    %v4787 = vpop.permute.xlu0 %4786
    %4790 = vset.pattern.permute.xlu0 0
    %4791 = vperm.xlu0 %4790, %v4769
    %v4792 = vpop.permute.xlu0 %4791
    %4795 = vset.pattern.permute.xlu0 0
    %4796 = vperm.xlu0 %4795, %v4770
    %v4797 = vpop.permute.xlu0 %4796
    %4800 = vset.pattern.permute.xlu0 0
    %4801 = vperm.xlu0 %4800, %v4771
    %v4802 = vpop.permute.xlu0 %4801
    %4805 = vset.pattern.permute.xlu0 0
    %4806 = vperm.xlu0 %4805, %v4772
    %v4807 = vpop.permute.xlu0 %4806
    %4810 = vset.pattern.permute.xlu0 0
    %4811 = vperm.xlu0 %4810, %v4773
    %v4812 = vpop.permute.xlu0 %4811
    %v4814 = vmul.f32 %v134, %v4777
    %v4815 = vmul.f32 %v135, %v4782
    %v4816 = vmul.f32 %v136, %v4787
    %v4817 = vmul.f32 %v137, %v4792
    %v4818 = vmul.f32 %v138, %v4797
    %v4819 = vmul.f32 %v139, %v4802
    %v4820 = vmul.f32 %v140, %v4807
    %v4821 = vmul.f32 %v141, %v4812
    %v4822 = vsel %vm423, %v4814, 0.0
    %v4823 = vrot.slane %v4822, 4
    %v4824 = vadd.f32 %v4822, %v4823
    %v4825 = vrot.slane %v4824, 2
    %v4826 = vadd.f32 %v4824, %v4825
    %v4827 = vrot.slane %v4826, 1
    %v4828 = vadd.f32 %v4826, %v4827
    %v4829 = vsel %vm423, %v4815, 0.0
    %v4830 = vrot.slane %v4829, 4
    %v4831 = vadd.f32 %v4829, %v4830
    %v4832 = vrot.slane %v4831, 2
    %v4833 = vadd.f32 %v4831, %v4832
    %v4834 = vrot.slane %v4833, 1
    %v4835 = vadd.f32 %v4833, %v4834
    %v4836 = vsel %vm423, %v4816, 0.0
    %v4837 = vrot.slane %v4836, 4
    %v4838 = vadd.f32 %v4836, %v4837
    %v4839 = vrot.slane %v4838, 2
    %v4840 = vadd.f32 %v4838, %v4839
    %v4841 = vrot.slane %v4840, 1
    %v4842 = vadd.f32 %v4840, %v4841
    %v4843 = vsel %vm423, %v4817, 0.0
    %v4844 = vrot.slane %v4843, 4
    %v4845 = vadd.f32 %v4843, %v4844
    %v4846 = vrot.slane %v4845, 2
    %v4847 = vadd.f32 %v4845, %v4846
    %v4848 = vrot.slane %v4847, 1
    %v4849 = vadd.f32 %v4847, %v4848
    %v4850 = vsel %vm423, %v4818, 0.0
    %v4851 = vrot.slane %v4850, 4
    %v4852 = vadd.f32 %v4850, %v4851
    %v4853 = vrot.slane %v4852, 2
    %v4854 = vadd.f32 %v4852, %v4853
    %v4855 = vrot.slane %v4854, 1
    %v4856 = vadd.f32 %v4854, %v4855
    %v4857 = vsel %vm423, %v4819, 0.0
    %v4858 = vrot.slane %v4857, 4
    %v4859 = vadd.f32 %v4857, %v4858
    %v4860 = vrot.slane %v4859, 2
    %v4861 = vadd.f32 %v4859, %v4860
    %v4862 = vrot.slane %v4861, 1
    %v4863 = vadd.f32 %v4861, %v4862
    %v4864 = vsel %vm423, %v4820, 0.0
    %v4865 = vrot.slane %v4864, 4
    %v4866 = vadd.f32 %v4864, %v4865
    %v4867 = vrot.slane %v4866, 2
    %v4868 = vadd.f32 %v4866, %v4867
    %v4869 = vrot.slane %v4868, 1
    %v4870 = vadd.f32 %v4868, %v4869
    %v4871 = vsel %vm423, %v4821, 0.0
    %v4872 = vrot.slane %v4871, 4
    %v4873 = vadd.f32 %v4871, %v4872
    %v4874 = vrot.slane %v4873, 2
    %v4875 = vadd.f32 %v4873, %v4874
    %v4876 = vrot.slane %v4875, 1
    %v4877 = vadd.f32 %v4875, %v4876
    %v4878 = vld [vmem:[#allocation9 + $0x4] sm:$0x1]
    %v4879 = vld [vmem:[#allocation9 + $0xc] sm:$0x1]
    %v4880 = vld [vmem:[#allocation9 + $0x14] sm:$0x1]
    %v4881 = vld [vmem:[#allocation9 + $0x1c] sm:$0x1]
    %v4882 = vld [vmem:[#allocation9 + $0x24] sm:$0x1]
    %v4883 = vld [vmem:[#allocation9 + $0x2c] sm:$0x1]
    %v4884 = vld [vmem:[#allocation9 + $0x34] sm:$0x1]
    %v4885 = vld [vmem:[#allocation9 + $0x3c] sm:$0x1]
    %v4894 = vsel %vm684, %v4835, %v4828
    %v4895 = vsel %vm686, %v4842, %v4894
    %v4896 = vsel %vm688, %v4849, %v4895
    %v4897 = vsel %vm690, %v4856, %v4896
    %v4898 = vsel %vm692, %v4863, %v4897
    %v4899 = vsel %vm694, %v4870, %v4898
    %v4900 = vsel %vm696, %v4877, %v4899
    %v4901 = vsel %vm423, %v4900, 0
    %4903 = vmatprep.subr.mxu0 0.0
    %4904 = vmatpush1.msra.mxu0 0.0
    %4905 = vmatprep.subr.mxu0 0.0
    %4906 = vmatpush1.msra.mxu0 0.0
    %4907 = vmatprep.subr.mxu0 0.0
    %4908 = vmatpush1.msra.mxu0 0.0
    %4909 = vmatprep.subr.mxu0 0.0
    %4910 = vmatpush1.msra.mxu0 0.0
    %4911 = vmatprep.subr.mxu0 0.0
    %4912 = vmatpush1.msra.mxu0 0.0
    %4913 = vmatprep.subr.mxu0 0.0
    %4914 = vmatpush1.msra.mxu0 0.0
    %4915 = vmatprep.subr.mxu0 0.0
    %4916 = vmatpush1.msra.mxu0 0.0
    %4917 = vmatprep.subr.mxu0 0.0
    %4918 = vmatpush1.msra.mxu0 0.0
    %4919 = vmatprep.subr.mxu0 0.0
    %4920 = vmatpush1.msra.mxu0 0.0
    %4921 = vmatprep.subr.mxu0 0.0
    %4922 = vmatpush1.msra.mxu0 0.0
    %4923 = vmatprep.subr.mxu0 0.0
    %4924 = vmatpush1.msra.mxu0 0.0
    %4925 = vmatprep.subr.mxu0 0.0
    %4926 = vmatpush1.msra.mxu0 0.0
    %4927 = vmatprep.subr.mxu0 0.0
    %4928 = vmatpush1.msra.mxu0 %v420
    %4929 = vmatprep.subr.mxu0 0.0
    %4930 = vmatpush1.msra.mxu0 %v419
    %4931 = vmatprep.subr.mxu0 0.0
    %4932 = vmatpush1.msra.mxu0 %v418
    %4933 = vmatprep.subr.mxu0 0.0
    %4934 = vmatpush1.msra.mxu0 %v417
    %4935 = vmatprep.subr.mxu0 0.0
    %4936 = vmatpush2.msra.mxu0 0.0
    %4937 = vmatprep.subr.mxu0 0.0
    %4938 = vmatpush2.msra.mxu0 0.0
    %4939 = vmatprep.subr.mxu0 0.0
    %4940 = vmatpush2.msra.mxu0 0.0
    %4941 = vmatprep.subr.mxu0 0.0
    %4942 = vmatpush2.msra.mxu0 0.0
    %4943 = vmatprep.subr.mxu0 0.0
    %4944 = vmatpush2.msra.mxu0 0.0
    %4945 = vmatprep.subr.mxu0 0.0
    %4946 = vmatpush2.msra.mxu0 0.0
    %4947 = vmatprep.subr.mxu0 0.0
    %4948 = vmatpush2.msra.mxu0 0.0
    %4949 = vmatprep.subr.mxu0 0.0
    %4950 = vmatpush2.msra.mxu0 0.0
    %4951 = vmatprep.subr.mxu0 0.0
    %4952 = vmatpush2.msra.mxu0 0.0
    %4953 = vmatprep.subr.mxu0 0.0
    %4954 = vmatpush2.msra.mxu0 0.0
    %4955 = vmatprep.subr.mxu0 0.0
    %4956 = vmatpush2.msra.mxu0 0.0
    %4957 = vmatprep.subr.mxu0 0.0
    %4958 = vmatpush2.msra.mxu0 0.0
    %4959 = vmatprep.subr.mxu0 0.0
    %4960 = vmatpush2.msra.mxu0 0.0
    %4961 = vmatprep.subr.mxu0 0.0
    %4962 = vmatpush2.msra.mxu0 0.0
    %4963 = vmatprep.subr.mxu0 0.0
    %4964 = vmatpush2.msra.mxu0 0.0
    %4965 = vmatprep.subr.mxu0 0.0
    %4966 = vmatpush2.msra.mxu0 0.0
    %4967 = vmatprep.mubr.f32.mxu0 0.0
    %4968 = vmatmul.mubr.f32.gmra.mxu0 %v4901
    %v4969 = vpop.f32.mrf.mxu0
    %v4970 = vadd.f32 0.0, %v4969
    %v4971 = vpop.f32.mrf.mxu0
    %4972 = vdwg.mxu0
    %v4974 = vrot.slane %v4970, 1
    %v4975 = vrot.slane %v4970, 2
    %v4976 = vrot.slane %v4970, 3
    %v4977 = vrot.slane %v4970, 4
    %v4978 = vrot.slane %v4970, 5
    %v4979 = vrot.slane %v4970, 6
    %v4980 = vrot.slane %v4970, 7
    %v4989 = vadd.f32 %v4878, %v4970
    %v4990 = vadd.f32 %v4879, %v4974
    %v4991 = vadd.f32 %v4880, %v4975
    %v4992 = vadd.f32 %v4881, %v4976
    %v4993 = vadd.f32 %v4882, %v4977
    %v4994 = vadd.f32 %v4883, %v4978
    %v4995 = vadd.f32 %v4884, %v4979
    %v4996 = vadd.f32 %v4885, %v4980
    %v4998 = vrot.slane %v4391, 1
    %v4999 = vrot.slane %v4393, 1
    %v5000 = vrot.slane %v4391, 2
    %v5001 = vrot.slane %v4393, 2
    %v5002 = vrot.slane %v4391, 3
    %v5003 = vrot.slane %v4393, 3
    %v5004 = vrot.slane %v4391, 4
    %v5005 = vrot.slane %v4393, 4
    %v5006 = vrot.slane %v4391, 5
    %v5007 = vrot.slane %v4393, 5
    %v5008 = vrot.slane %v4391, 6
    %v5009 = vrot.slane %v4393, 6
    %v5010 = vrot.slane %v4391, 7
    %v5011 = vrot.slane %v4393, 7
    %5012 = vrot.lane.b32.xlu0 %v4391, 96
    %v5013 = vpop.permute.xlu0 %5012
    %5014 = vrot.lane.b32.xlu0 %v4393, 96
    %v5015 = vpop.permute.xlu0 %5014
    %5016 = vrot.lane.b32.xlu0 %v4998, 96
    %v5017 = vpop.permute.xlu0 %5016
    %5018 = vrot.lane.b32.xlu0 %v4999, 96
    %v5019 = vpop.permute.xlu0 %5018
    %5020 = vrot.lane.b32.xlu0 %v5000, 96
    %v5021 = vpop.permute.xlu0 %5020
    %5022 = vrot.lane.b32.xlu0 %v5001, 96
    %v5023 = vpop.permute.xlu0 %5022
    %5024 = vrot.lane.b32.xlu0 %v5002, 96
    %v5025 = vpop.permute.xlu0 %5024
    %5026 = vrot.lane.b32.xlu0 %v5003, 96
    %v5027 = vpop.permute.xlu0 %5026
    %5028 = vrot.lane.b32.xlu0 %v5004, 96
    %v5029 = vpop.permute.xlu0 %5028
    %5030 = vrot.lane.b32.xlu0 %v5005, 96
    %v5031 = vpop.permute.xlu0 %5030
    %5032 = vrot.lane.b32.xlu0 %v5006, 96
    %v5033 = vpop.permute.xlu0 %5032
    %5034 = vrot.lane.b32.xlu0 %v5007, 96
    %v5035 = vpop.permute.xlu0 %5034
    %5036 = vrot.lane.b32.xlu0 %v5008, 96
    %v5037 = vpop.permute.xlu0 %5036
    %5038 = vrot.lane.b32.xlu0 %v5009, 96
    %v5039 = vpop.permute.xlu0 %5038
    %5040 = vrot.lane.b32.xlu0 %v5010, 96
    %v5041 = vpop.permute.xlu0 %5040
    %5042 = vrot.lane.b32.xlu0 %v5011, 96
    %v5043 = vpop.permute.xlu0 %5042
    %v5044 = vsel %vm1163, %v5013, %v5015
    %v5045 = vsel %vm1163, %v5017, %v5019
    %v5046 = vsel %vm1163, %v5021, %v5023
    %v5047 = vsel %vm1163, %v5025, %v5027
    %v5048 = vsel %vm1163, %v5029, %v5031
    %v5049 = vsel %vm1163, %v5033, %v5035
    %v5050 = vsel %vm1163, %v5037, %v5039
    %v5051 = vsel %vm1163, %v5041, %v5043
    %v5060 = vadd.f32 %v4989, %v5044
    %v5061 = vadd.f32 %v4990, %v5045
    %v5062 = vadd.f32 %v4991, %v5046
    %v5063 = vadd.f32 %v4992, %v5047
    %v5064 = vadd.f32 %v4993, %v5048
    %v5065 = vadd.f32 %v4994, %v5049
    %v5066 = vadd.f32 %v4995, %v5050
    %v5067 = vadd.f32 %v4996, %v5051
    %v5068 = vxor.u32 %v5060, 2147483648
    %v5069 = vxor.u32 %v5061, 2147483648
    %v5070 = vxor.u32 %v5062, 2147483648
    %v5071 = vxor.u32 %v5063, 2147483648
    %v5072 = vxor.u32 %v5064, 2147483648
    %v5073 = vxor.u32 %v5065, 2147483648
    %v5074 = vxor.u32 %v5066, 2147483648
    %v5075 = vxor.u32 %v5067, 2147483648
    %v5076 = vmul.f32 %v5068, 1.442695
    %v5077 = vpow.pop %v5076
    %v5078 = vmul.f32 %v5069, 1.442695
    %v5079 = vpow.pop %v5078
    %v5080 = vmul.f32 %v5070, 1.442695
    %v5081 = vpow.pop %v5080
    %v5082 = vmul.f32 %v5071, 1.442695
    %v5083 = vpow.pop %v5082
    %v5084 = vmul.f32 %v5072, 1.442695
    %v5085 = vpow.pop %v5084
    %v5086 = vmul.f32 %v5073, 1.442695
    %v5087 = vpow.pop %v5086
    %v5088 = vmul.f32 %v5074, 1.442695
    %v5089 = vpow.pop %v5088
    %v5090 = vmul.f32 %v5075, 1.442695
    %v5091 = vpow.pop %v5090
    %v5092 = vadd.f32 %v5077, 1.0
    %v5093 = vadd.f32 %v5079, 1.0
    %v5094 = vadd.f32 %v5081, 1.0
    %v5095 = vadd.f32 %v5083, 1.0
    %v5096 = vadd.f32 %v5085, 1.0
    %v5097 = vadd.f32 %v5087, 1.0
    %v5098 = vadd.f32 %v5089, 1.0
    %v5099 = vadd.f32 %v5091, 1.0
    %v5100 = vrcp.pop %v5092
    %v5101 = vmul.f32 1.0, %v5100
    %v5102 = vrcp.pop %v5093
    %v5103 = vmul.f32 1.0, %v5102
    %v5104 = vrcp.pop %v5094
    %v5105 = vmul.f32 1.0, %v5104
    %v5106 = vrcp.pop %v5095
    %v5107 = vmul.f32 1.0, %v5106
    %v5108 = vrcp.pop %v5096
    %v5109 = vmul.f32 1.0, %v5108
    %v5110 = vrcp.pop %v5097
    %v5111 = vmul.f32 1.0, %v5110
    %v5112 = vrcp.pop %v5098
    %v5113 = vmul.f32 1.0, %v5112
    %v5114 = vrcp.pop %v5099
    %v5115 = vmul.f32 1.0, %v5114
    %v5116 = vtanh.pop %v5060
    %v5117 = vtanh.pop %v5061
    %v5118 = vtanh.pop %v5062
    %v5119 = vtanh.pop %v5063
    %v5120 = vtanh.pop %v5064
    %v5121 = vtanh.pop %v5065
    %v5122 = vtanh.pop %v5066
    %v5123 = vtanh.pop %v5067
    %v5124 = vmul.f32 %v5101, %v4242
    %v5125 = vmul.f32 %v5103, %v4243
    %v5126 = vmul.f32 %v5105, %v4244
    %v5127 = vmul.f32 %v5107, %v4245
    %v5128 = vmul.f32 %v5109, %v4246
    %v5129 = vmul.f32 %v5111, %v4247
    %v5130 = vmul.f32 %v5113, %v4248
    %v5131 = vmul.f32 %v5115, %v4249
    %5140 = vrot.lane.b32.xlu0 %v5116, 64
    %v5141 = vpop.permute.xlu0 %5140
    %5142 = vrot.lane.b32.xlu0 %v5117, 64
    %v5143 = vpop.permute.xlu0 %5142
    %5144 = vrot.lane.b32.xlu0 %v5118, 64
    %v5145 = vpop.permute.xlu0 %5144
    %5146 = vrot.lane.b32.xlu0 %v5119, 64
    %v5147 = vpop.permute.xlu0 %5146
    %5148 = vrot.lane.b32.xlu0 %v5120, 64
    %v5149 = vpop.permute.xlu0 %5148
    %5150 = vrot.lane.b32.xlu0 %v5121, 64
    %v5151 = vpop.permute.xlu0 %5150
    %5152 = vrot.lane.b32.xlu0 %v5122, 64
    %v5153 = vpop.permute.xlu0 %5152
    %5154 = vrot.lane.b32.xlu0 %v5123, 64
    %v5155 = vpop.permute.xlu0 %5154
    %v5164 = vmul.f32 %v5101, %v5141
    %v5165 = vmul.f32 %v5103, %v5143
    %v5166 = vmul.f32 %v5105, %v5145
    %v5167 = vmul.f32 %v5107, %v5147
    %v5168 = vmul.f32 %v5109, %v5149
    %v5169 = vmul.f32 %v5111, %v5151
    %v5170 = vmul.f32 %v5113, %v5153
    %v5171 = vmul.f32 %v5115, %v5155
    %5180 = vrot.lane.b32.xlu0 %v5164, 32
    %v5181 = vpop.permute.xlu0 %5180
    %5182 = vrot.lane.b32.xlu0 %v5165, 32
    %v5183 = vpop.permute.xlu0 %5182
    %5184 = vrot.lane.b32.xlu0 %v5166, 32
    %v5185 = vpop.permute.xlu0 %5184
    %5186 = vrot.lane.b32.xlu0 %v5167, 32
    %v5187 = vpop.permute.xlu0 %5186
    %5188 = vrot.lane.b32.xlu0 %v5168, 32
    %v5189 = vpop.permute.xlu0 %5188
    %5190 = vrot.lane.b32.xlu0 %v5169, 32
    %v5191 = vpop.permute.xlu0 %5190
    %5192 = vrot.lane.b32.xlu0 %v5170, 32
    %v5193 = vpop.permute.xlu0 %5192
    %5194 = vrot.lane.b32.xlu0 %v5171, 32
    %v5195 = vpop.permute.xlu0 %5194
    %v5204 = vadd.f32 %v5124, %v5181
    %v5205 = vadd.f32 %v5125, %v5183
    %v5206 = vadd.f32 %v5126, %v5185
    %v5207 = vadd.f32 %v5127, %v5187
    %v5208 = vadd.f32 %v5128, %v5189
    %v5209 = vadd.f32 %v5129, %v5191
    %v5210 = vadd.f32 %v5130, %v5193
    %v5211 = vadd.f32 %v5131, %v5195
    %v5212 = vtanh.pop %v5204
    %v5213 = vtanh.pop %v5205
    %v5214 = vtanh.pop %v5206
    %v5215 = vtanh.pop %v5207
    %v5216 = vtanh.pop %v5208
    %v5217 = vtanh.pop %v5209
    %v5218 = vtanh.pop %v5210
    %v5219 = vtanh.pop %v5211
    %5228 = vrot.lane.b32.xlu0 %v5212, 64
    %v5229 = vpop.permute.xlu0 %5228
    %5230 = vrot.lane.b32.xlu0 %v5213, 64
    %v5231 = vpop.permute.xlu0 %5230
    %5232 = vrot.lane.b32.xlu0 %v5214, 64
    %v5233 = vpop.permute.xlu0 %5232
    %5234 = vrot.lane.b32.xlu0 %v5215, 64
    %v5235 = vpop.permute.xlu0 %5234
    %5236 = vrot.lane.b32.xlu0 %v5216, 64
    %v5237 = vpop.permute.xlu0 %5236
    %5238 = vrot.lane.b32.xlu0 %v5217, 64
    %v5239 = vpop.permute.xlu0 %5238
    %5240 = vrot.lane.b32.xlu0 %v5218, 64
    %v5241 = vpop.permute.xlu0 %5240
    %5242 = vrot.lane.b32.xlu0 %v5219, 64
    %v5243 = vpop.permute.xlu0 %5242
    %v5252 = vmul.f32 %v5101, %v5229
    %v5253 = vmul.f32 %v5103, %v5231
    %v5254 = vmul.f32 %v5105, %v5233
    %v5255 = vmul.f32 %v5107, %v5235
    %v5256 = vmul.f32 %v5109, %v5237
    %v5257 = vmul.f32 %v5111, %v5239
    %v5258 = vmul.f32 %v5113, %v5241
    %v5259 = vmul.f32 %v5115, %v5243
    %v5268 = vrot.slane %v5253, 7
    %v5269 = vsel %vm684, %v5268, %v5252
    %v5270 = vrot.slane %v5254, 6
    %v5271 = vsel %vm686, %v5270, %v5269
    %v5272 = vrot.slane %v5255, 5
    %v5273 = vsel %vm688, %v5272, %v5271
    %v5274 = vrot.slane %v5256, 4
    %v5275 = vsel %vm690, %v5274, %v5273
    %v5276 = vrot.slane %v5257, 3
    %v5277 = vsel %vm692, %v5276, %v5275
    %v5278 = vrot.slane %v5258, 2
    %v5279 = vsel %vm694, %v5278, %v5277
    %v5280 = vrot.slane %v5259, 1
    %v5281 = vsel %vm696, %v5280, %v5279
    %5282 = vrot.lane.b32.xlu0 %v5281, 32
    %v5283 = vpop.permute.xlu0 %5282
    %v5284 = vsel %vm423, %v5283, 0
    %5286 = vmatprep.subr.mxu0 0.0
    %5287 = vmatpush1.msra.mxu0 0.0
    %5288 = vmatprep.subr.mxu0 0.0
    %5289 = vmatpush1.msra.mxu0 0.0
    %5290 = vmatprep.subr.mxu0 0.0
    %5291 = vmatpush1.msra.mxu0 0.0
    %5292 = vmatprep.subr.mxu0 0.0
    %5293 = vmatpush1.msra.mxu0 0.0
    %5294 = vmatprep.subr.mxu0 0.0
    %5295 = vmatpush1.msra.mxu0 0.0
    %5296 = vmatprep.subr.mxu0 0.0
    %5297 = vmatpush1.msra.mxu0 0.0
    %5298 = vmatprep.subr.mxu0 0.0
    %5299 = vmatpush1.msra.mxu0 0.0
    %5300 = vmatprep.subr.mxu0 0.0
    %5301 = vmatpush1.msra.mxu0 0.0
    %5302 = vmatprep.subr.mxu0 0.0
    %5303 = vmatpush1.msra.mxu0 0.0
    %5304 = vmatprep.subr.mxu0 0.0
    %5305 = vmatpush1.msra.mxu0 0.0
    %5306 = vmatprep.subr.mxu0 0.0
    %5307 = vmatpush1.msra.mxu0 0.0
    %5308 = vmatprep.subr.mxu0 0.0
    %5309 = vmatpush1.msra.mxu0 0.0
    %5310 = vmatprep.subr.mxu0 %v415
    %5311 = vmatpush1.msra.mxu0 %v414
    %5312 = vmatprep.subr.mxu0 %v413
    %5313 = vmatpush1.msra.mxu0 %v412
    %5314 = vmatprep.subr.mxu0 %v411
    %5315 = vmatpush1.msra.mxu0 %v410
    %5316 = vmatprep.subr.mxu0 %v409
    %5317 = vmatpush1.msra.mxu0 %v408
    %5318 = vmatprep.subr.mxu0 0.0
    %5319 = vmatpush2.msra.mxu0 0.0
    %5320 = vmatprep.subr.mxu0 0.0
    %5321 = vmatpush2.msra.mxu0 0.0
    %5322 = vmatprep.subr.mxu0 0.0
    %5323 = vmatpush2.msra.mxu0 0.0
    %5324 = vmatprep.subr.mxu0 0.0
    %5325 = vmatpush2.msra.mxu0 0.0
    %5326 = vmatprep.subr.mxu0 0.0
    %5327 = vmatpush2.msra.mxu0 0.0
    %5328 = vmatprep.subr.mxu0 0.0
    %5329 = vmatpush2.msra.mxu0 0.0
    %5330 = vmatprep.subr.mxu0 0.0
    %5331 = vmatpush2.msra.mxu0 0.0
    %5332 = vmatprep.subr.mxu0 0.0
    %5333 = vmatpush2.msra.mxu0 0.0
    %5334 = vmatprep.subr.mxu0 0.0
    %5335 = vmatpush2.msra.mxu0 0.0
    %5336 = vmatprep.subr.mxu0 0.0
    %5337 = vmatpush2.msra.mxu0 0.0
    %5338 = vmatprep.subr.mxu0 0.0
    %5339 = vmatpush2.msra.mxu0 0.0
    %5340 = vmatprep.subr.mxu0 0.0
    %5341 = vmatpush2.msra.mxu0 0.0
    %5342 = vmatprep.subr.mxu0 0.0
    %5343 = vmatpush2.msra.mxu0 0.0
    %5344 = vmatprep.subr.mxu0 0.0
    %5345 = vmatpush2.msra.mxu0 0.0
    %5346 = vmatprep.subr.mxu0 0.0
    %5347 = vmatpush2.msra.mxu0 0.0
    %5348 = vmatprep.subr.mxu0 0.0
    %5349 = vmatpush2.msra.mxu0 0.0
    %5350 = vmatprep.mubr.f32.mxu0 0.0
    %5351 = vmatmul.mubr.f32.gmra.mxu0 %v5284
    %v5352 = vpop.f32.mrf.mxu0
    %v5353 = vadd.f32 0.0, %v5352
    %v5354 = vpop.f32.mrf.mxu0
    %v5355 = vadd.f32 0.0, %v5354
    %5356 = vdwg.mxu0
    %v5358 = vcombine.high %v5353, %v5353
    %v5360 = vunpack.c.l.s4 1966171168
    %v5361 = vunpack.c.0.s8 %v5360
    %v5362 = vlaneseq
    %v5363 = vshrl.u32 %v5362, 7
    %v5364 = vsub.s32 %v5361, %v5363
    %v5365 = vrot.slane %v5353, %v5364
    %v5367 = vunpack.c.l.s4 1966171168
    %v5368 = vunpack.c.0.s8 %v5367
    %v5369 = vlaneseq
    %v5370 = vshrl.u32 %v5369, 7
    %v5371 = vsub.s32 %v5368, %v5370
    %v5372 = vrot.slane %v5358, %v5371
    %v5373 = vcombine.high %v5365, %v5365
    %v5374 = vcombine.high %v5372, %v5372
    %v5376 = vunpack.c.l.s4 1966171168
    %v5377 = vunpack.c.0.s8 %v5376
    %v5378 = vlaneseq
    %v5379 = vshrl.u32 %v5378, 7
    %v5380 = vsub.s32 %v5377, %v5379
    %v5381 = vrot.slane %v5365, %v5380
    %v5383 = vunpack.c.l.s4 1966171168
    %v5384 = vunpack.c.0.s8 %v5383
    %v5385 = vlaneseq
    %v5386 = vshrl.u32 %v5385, 7
    %v5387 = vsub.s32 %v5384, %v5386
    %v5388 = vrot.slane %v5372, %v5387
    %v5390 = vunpack.c.l.s4 1966171168
    %v5391 = vunpack.c.0.s8 %v5390
    %v5392 = vlaneseq
    %v5393 = vshrl.u32 %v5392, 7
    %v5394 = vsub.s32 %v5391, %v5393
    %v5395 = vrot.slane %v5373, %v5394
    %v5397 = vunpack.c.l.s4 1966171168
    %v5398 = vunpack.c.0.s8 %v5397
    %v5399 = vlaneseq
    %v5400 = vshrl.u32 %v5399, 7
    %v5401 = vsub.s32 %v5398, %v5400
    %v5402 = vrot.slane %v5374, %v5401
    %v5403 = vcombine.high %v5381, %v5381
    %v5404 = vcombine.high %v5388, %v5388
    %v5405 = vcombine.high %v5395, %v5395
    %v5406 = vcombine.high %v5402, %v5402
    %v5407 = vlaneseq
    %v5408 = vshrl.u32 %v5407, 7
    %v5409 = vsub.s32 0, %v5408
    %v5410 = vrot.slane %v5381, %v5409
    %v5411 = vlaneseq
    %v5412 = vshrl.u32 %v5411, 7
    %v5413 = vsub.s32 0, %v5412
    %v5414 = vrot.slane %v5395, %v5413
    %v5415 = vlaneseq
    %v5416 = vshrl.u32 %v5415, 7
    %v5417 = vsub.s32 0, %v5416
    %v5418 = vrot.slane %v5403, %v5417
    %v5419 = vlaneseq
    %v5420 = vshrl.u32 %v5419, 7
    %v5421 = vsub.s32 0, %v5420
    %v5422 = vrot.slane %v5405, %v5421
    %v5423 = vlaneseq
    %v5424 = vshrl.u32 %v5423, 7
    %v5425 = vsub.s32 0, %v5424
    %v5426 = vrot.slane %v5388, %v5425
    %v5427 = vlaneseq
    %v5428 = vshrl.u32 %v5427, 7
    %v5429 = vsub.s32 0, %v5428
    %v5430 = vrot.slane %v5402, %v5429
    %v5431 = vlaneseq
    %v5432 = vshrl.u32 %v5431, 7
    %v5433 = vsub.s32 0, %v5432
    %v5434 = vrot.slane %v5404, %v5433
    %v5435 = vlaneseq
    %v5436 = vshrl.u32 %v5435, 7
    %v5437 = vsub.s32 0, %v5436
    %v5438 = vrot.slane %v5406, %v5437
    %v5447 = vadd.f32 %v142, %v5410
    %v5448 = vadd.f32 %v143, %v5414
    %v5449 = vadd.f32 %v144, %v5418
    %v5450 = vadd.f32 %v145, %v5422
    %v5451 = vadd.f32 %v146, %v5426
    %v5452 = vadd.f32 %v147, %v5430
    %v5453 = vadd.f32 %v148, %v5434
    %v5454 = vadd.f32 %v149, %v5438
    %v5455 = vtanh.pop %v5447
    %v5456 = vtanh.pop %v5448
    %v5457 = vtanh.pop %v5449
    %v5458 = vtanh.pop %v5450
    %v5459 = vtanh.pop %v5451
    %v5460 = vtanh.pop %v5452
    %v5461 = vtanh.pop %v5453
    %v5462 = vtanh.pop %v5454
    %v5463 = vmul.f32 %v5455, %v608
    %v5464 = vmul.f32 %v5456, %v608
    %v5465 = vmul.f32 %v5457, %v608
    %v5466 = vmul.f32 %v5458, %v608
    %v5467 = vmul.f32 %v5459, %v608
    %v5468 = vmul.f32 %v5460, %v608
    %v5469 = vmul.f32 %v5461, %v608
    %v5470 = vmul.f32 %v5462, %v608
    %v5471 = vsel %vm423, %v5463, 0.0
    %5472 = vadd.xlane.f32.xlu0 %v5471
    %v5473 = vpop.xlane.xlu0 %5472
    %v5474 = vsel %vm423, %v5464, 0.0
    %5475 = vadd.xlane.f32.xlu0 %v5474
    %v5476 = vpop.xlane.xlu0 %5475
    %v5477 = vsel %vm423, %v5465, 0.0
    %5478 = vadd.xlane.f32.xlu0 %v5477
    %v5479 = vpop.xlane.xlu0 %5478
    %v5480 = vsel %vm423, %v5466, 0.0
    %5481 = vadd.xlane.f32.xlu0 %v5480
    %v5482 = vpop.xlane.xlu0 %5481
    %v5483 = vsel %vm423, %v5467, 0.0
    %5484 = vadd.xlane.f32.xlu0 %v5483
    %v5485 = vpop.xlane.xlu0 %5484
    %v5486 = vsel %vm423, %v5468, 0.0
    %5487 = vadd.xlane.f32.xlu0 %v5486
    %v5488 = vpop.xlane.xlu0 %5487
    %v5489 = vsel %vm423, %v5469, 0.0
    %5490 = vadd.xlane.f32.xlu0 %v5489
    %v5491 = vpop.xlane.xlu0 %5490
    %v5492 = vsel %vm423, %v5470, 0.0
    %5493 = vadd.xlane.f32.xlu0 %v5492
    %v5494 = vpop.xlane.xlu0 %5493
    %v5503 = vlaneseq
    %v5504 = vshrl.u32 %v5503, 7
    %v5505 = vsub.s32 %v651, %v5504
    %v5506 = vrot.slane %v5473, %v5505
    %v5507 = vlaneseq
    %v5508 = vshrl.u32 %v5507, 7
    %v5509 = vsub.s32 %v651, %v5508
    %v5510 = vrot.slane %v5476, %v5509
    %v5511 = vlaneseq
    %v5512 = vshrl.u32 %v5511, 7
    %v5513 = vsub.s32 %v651, %v5512
    %v5514 = vrot.slane %v5479, %v5513
    %v5515 = vlaneseq
    %v5516 = vshrl.u32 %v5515, 7
    %v5517 = vsub.s32 %v651, %v5516
    %v5518 = vrot.slane %v5482, %v5517
    %v5519 = vlaneseq
    %v5520 = vshrl.u32 %v5519, 7
    %v5521 = vsub.s32 %v651, %v5520
    %v5522 = vrot.slane %v5485, %v5521
    %v5523 = vlaneseq
    %v5524 = vshrl.u32 %v5523, 7
    %v5525 = vsub.s32 %v651, %v5524
    %v5526 = vrot.slane %v5488, %v5525
    %v5527 = vlaneseq
    %v5528 = vshrl.u32 %v5527, 7
    %v5529 = vsub.s32 %v651, %v5528
    %v5530 = vrot.slane %v5491, %v5529
    %v5531 = vlaneseq
    %v5532 = vshrl.u32 %v5531, 7
    %v5533 = vsub.s32 %v651, %v5532
    %v5534 = vrot.slane %v5494, %v5533
    %v5535 = vsel %vm684, %v5510, %v5506
    %v5536 = vsel %vm686, %v5514, %v5535
    %v5537 = vsel %vm688, %v5518, %v5536
    %v5538 = vsel %vm690, %v5522, %v5537
    %v5539 = vsel %vm692, %v5526, %v5538
    %v5540 = vsel %vm694, %v5530, %v5539
    %v5541 = vsel %vm696, %v5534, %v5540
    %v5543 = vsel %vm699, %v5541, -inf
    %5544 = vmax.xlane.f32.xlu0 %v5543
    %v5545 = vpop.xlane.xlu0 %5544
    %v5547 = vlaneseq
    %v5548 = vshrl.u32 %v5547, 7
    %v5549 = vsub.s32 0, %v5548
    %v5550 = vrot.slane %v5545, %v5549
    %v5551 = vlaneseq
    %v5552 = vshrl.u32 %v5551, 7
    %v5553 = vsub.s32 1, %v5552
    %v5554 = vrot.slane %v5545, %v5553
    %v5555 = vlaneseq
    %v5556 = vshrl.u32 %v5555, 7
    %v5557 = vsub.s32 2, %v5556
    %v5558 = vrot.slane %v5545, %v5557
    %v5559 = vlaneseq
    %v5560 = vshrl.u32 %v5559, 7
    %v5561 = vsub.s32 3, %v5560
    %v5562 = vrot.slane %v5545, %v5561
    %v5563 = vlaneseq
    %v5564 = vshrl.u32 %v5563, 7
    %v5565 = vsub.s32 4, %v5564
    %v5566 = vrot.slane %v5545, %v5565
    %v5567 = vlaneseq
    %v5568 = vshrl.u32 %v5567, 7
    %v5569 = vsub.s32 5, %v5568
    %v5570 = vrot.slane %v5545, %v5569
    %v5571 = vlaneseq
    %v5572 = vshrl.u32 %v5571, 7
    %v5573 = vsub.s32 6, %v5572
    %v5574 = vrot.slane %v5545, %v5573
    %v5575 = vlaneseq
    %v5576 = vshrl.u32 %v5575, 7
    %v5577 = vsub.s32 7, %v5576
    %v5578 = vrot.slane %v5545, %v5577
    %v5587 = vsub.f32 %v5473, %v5550
    %v5588 = vsub.f32 %v5476, %v5554
    %v5589 = vsub.f32 %v5479, %v5558
    %v5590 = vsub.f32 %v5482, %v5562
    %v5591 = vsub.f32 %v5485, %v5566
    %v5592 = vsub.f32 %v5488, %v5570
    %v5593 = vsub.f32 %v5491, %v5574
    %v5594 = vsub.f32 %v5494, %v5578
    %v5595 = vmul.f32 %v5587, 1.442695
    %v5596 = vpow.pop %v5595
    %v5597 = vmul.f32 %v5588, 1.442695
    %v5598 = vpow.pop %v5597
    %v5599 = vmul.f32 %v5589, 1.442695
    %v5600 = vpow.pop %v5599
    %v5601 = vmul.f32 %v5590, 1.442695
    %v5602 = vpow.pop %v5601
    %v5603 = vmul.f32 %v5591, 1.442695
    %v5604 = vpow.pop %v5603
    %v5605 = vmul.f32 %v5592, 1.442695
    %v5606 = vpow.pop %v5605
    %v5607 = vmul.f32 %v5593, 1.442695
    %v5608 = vpow.pop %v5607
    %v5609 = vmul.f32 %v5594, 1.442695
    %v5610 = vpow.pop %v5609
    %5619 = vset.pattern.permute.xlu0 0
    %5620 = vperm.xlu0 %5619, %v5596
    %v5621 = vpop.permute.xlu0 %5620
    %5622 = vset.pattern.permute.xlu0 0
    %5623 = vperm.xlu0 %5622, %v5598
    %v5624 = vpop.permute.xlu0 %5623
    %5625 = vset.pattern.permute.xlu0 0
    %5626 = vperm.xlu0 %5625, %v5600
    %v5627 = vpop.permute.xlu0 %5626
    %5628 = vset.pattern.permute.xlu0 0
    %5629 = vperm.xlu0 %5628, %v5602
    %v5630 = vpop.permute.xlu0 %5629
    %5631 = vset.pattern.permute.xlu0 0
    %5632 = vperm.xlu0 %5631, %v5604
    %v5633 = vpop.permute.xlu0 %5632
    %5634 = vset.pattern.permute.xlu0 0
    %5635 = vperm.xlu0 %5634, %v5606
    %v5636 = vpop.permute.xlu0 %5635
    %5637 = vset.pattern.permute.xlu0 0
    %5638 = vperm.xlu0 %5637, %v5608
    %v5639 = vpop.permute.xlu0 %5638
    %5640 = vset.pattern.permute.xlu0 0
    %5641 = vperm.xlu0 %5640, %v5610
    %v5642 = vpop.permute.xlu0 %5641
    %v5643 = vlaneseq
    %v5644 = vshrl.u32 %v5643, 7
    %v5645 = vsub.s32 %v651, %v5644
    %v5646 = vrot.slane %v5621, %v5645
    %v5647 = vlaneseq
    %v5648 = vshrl.u32 %v5647, 7
    %v5649 = vsub.s32 %v651, %v5648
    %v5650 = vrot.slane %v5624, %v5649
    %v5651 = vlaneseq
    %v5652 = vshrl.u32 %v5651, 7
    %v5653 = vsub.s32 %v651, %v5652
    %v5654 = vrot.slane %v5627, %v5653
    %v5655 = vlaneseq
    %v5656 = vshrl.u32 %v5655, 7
    %v5657 = vsub.s32 %v651, %v5656
    %v5658 = vrot.slane %v5630, %v5657
    %v5659 = vlaneseq
    %v5660 = vshrl.u32 %v5659, 7
    %v5661 = vsub.s32 %v651, %v5660
    %v5662 = vrot.slane %v5633, %v5661
    %v5663 = vlaneseq
    %v5664 = vshrl.u32 %v5663, 7
    %v5665 = vsub.s32 %v651, %v5664
    %v5666 = vrot.slane %v5636, %v5665
    %v5667 = vlaneseq
    %v5668 = vshrl.u32 %v5667, 7
    %v5669 = vsub.s32 %v651, %v5668
    %v5670 = vrot.slane %v5639, %v5669
    %v5671 = vlaneseq
    %v5672 = vshrl.u32 %v5671, 7
    %v5673 = vsub.s32 %v651, %v5672
    %v5674 = vrot.slane %v5642, %v5673
    %v5675 = vsel %vm684, %v5650, %v5646
    %v5676 = vsel %vm686, %v5654, %v5675
    %v5677 = vsel %vm688, %v5658, %v5676
    %v5678 = vsel %vm690, %v5662, %v5677
    %v5679 = vsel %vm692, %v5666, %v5678
    %v5680 = vsel %vm694, %v5670, %v5679
    %v5681 = vsel %vm696, %v5674, %v5680
    %v5683 = vsel %vm699, %v5681, 0.0
    %5684 = vadd.xlane.f32.xlu0 %v5683
    %v5685 = vpop.xlane.xlu0 %5684
    %v5686 = vrcp.pop %v5685
    %v5688 = vlaneseq
    %v5689 = vshrl.u32 %v5688, 7
    %v5690 = vsub.s32 0, %v5689
    %v5691 = vrot.slane %v5686, %v5690
    %v5692 = vlaneseq
    %v5693 = vshrl.u32 %v5692, 7
    %v5694 = vsub.s32 1, %v5693
    %v5695 = vrot.slane %v5686, %v5694
    %v5696 = vlaneseq
    %v5697 = vshrl.u32 %v5696, 7
    %v5698 = vsub.s32 2, %v5697
    %v5699 = vrot.slane %v5686, %v5698
    %v5700 = vlaneseq
    %v5701 = vshrl.u32 %v5700, 7
    %v5702 = vsub.s32 3, %v5701
    %v5703 = vrot.slane %v5686, %v5702
    %v5704 = vlaneseq
    %v5705 = vshrl.u32 %v5704, 7
    %v5706 = vsub.s32 4, %v5705
    %v5707 = vrot.slane %v5686, %v5706
    %v5708 = vlaneseq
    %v5709 = vshrl.u32 %v5708, 7
    %v5710 = vsub.s32 5, %v5709
    %v5711 = vrot.slane %v5686, %v5710
    %v5712 = vlaneseq
    %v5713 = vshrl.u32 %v5712, 7
    %v5714 = vsub.s32 6, %v5713
    %v5715 = vrot.slane %v5686, %v5714
    %v5716 = vlaneseq
    %v5717 = vshrl.u32 %v5716, 7
    %v5718 = vsub.s32 7, %v5717
    %v5719 = vrot.slane %v5686, %v5718
    %v5728 = vmul.f32 %v5596, %v5691
    %v5729 = vmul.f32 %v5598, %v5695
    %v5730 = vmul.f32 %v5600, %v5699
    %v5731 = vmul.f32 %v5602, %v5703
    %v5732 = vmul.f32 %v5604, %v5707
    %v5733 = vmul.f32 %v5606, %v5711
    %v5734 = vmul.f32 %v5608, %v5715
    %v5735 = vmul.f32 %v5610, %v5719
    %5737 = vset.pattern.permute.xlu0 0
    %5738 = vperm.xlu0 %5737, %v5728
    %v5739 = vpop.permute.xlu0 %5738
    %5742 = vset.pattern.permute.xlu0 0
    %5743 = vperm.xlu0 %5742, %v5729
    %v5744 = vpop.permute.xlu0 %5743
    %5747 = vset.pattern.permute.xlu0 0
    %5748 = vperm.xlu0 %5747, %v5730
    %v5749 = vpop.permute.xlu0 %5748
    %5752 = vset.pattern.permute.xlu0 0
    %5753 = vperm.xlu0 %5752, %v5731
    %v5754 = vpop.permute.xlu0 %5753
    %5757 = vset.pattern.permute.xlu0 0
    %5758 = vperm.xlu0 %5757, %v5732
    %v5759 = vpop.permute.xlu0 %5758
    %5762 = vset.pattern.permute.xlu0 0
    %5763 = vperm.xlu0 %5762, %v5733
    %v5764 = vpop.permute.xlu0 %5763
    %5767 = vset.pattern.permute.xlu0 0
    %5768 = vperm.xlu0 %5767, %v5734
    %v5769 = vpop.permute.xlu0 %5768
    %5772 = vset.pattern.permute.xlu0 0
    %5773 = vperm.xlu0 %5772, %v5735
    %v5774 = vpop.permute.xlu0 %5773
    %v5776 = vmul.f32 %v134, %v5739
    %v5777 = vmul.f32 %v135, %v5744
    %v5778 = vmul.f32 %v136, %v5749
    %v5779 = vmul.f32 %v137, %v5754
    %v5780 = vmul.f32 %v138, %v5759
    %v5781 = vmul.f32 %v139, %v5764
    %v5782 = vmul.f32 %v140, %v5769
    %v5783 = vmul.f32 %v141, %v5774
    %v5784 = vsel %vm423, %v5776, 0.0
    %v5785 = vrot.slane %v5784, 4
    %v5786 = vadd.f32 %v5784, %v5785
    %v5787 = vrot.slane %v5786, 2
    %v5788 = vadd.f32 %v5786, %v5787
    %v5789 = vrot.slane %v5788, 1
    %v5790 = vadd.f32 %v5788, %v5789
    %v5791 = vsel %vm423, %v5777, 0.0
    %v5792 = vrot.slane %v5791, 4
    %v5793 = vadd.f32 %v5791, %v5792
    %v5794 = vrot.slane %v5793, 2
    %v5795 = vadd.f32 %v5793, %v5794
    %v5796 = vrot.slane %v5795, 1
    %v5797 = vadd.f32 %v5795, %v5796
    %v5798 = vsel %vm423, %v5778, 0.0
    %v5799 = vrot.slane %v5798, 4
    %v5800 = vadd.f32 %v5798, %v5799
    %v5801 = vrot.slane %v5800, 2
    %v5802 = vadd.f32 %v5800, %v5801
    %v5803 = vrot.slane %v5802, 1
    %v5804 = vadd.f32 %v5802, %v5803
    %v5805 = vsel %vm423, %v5779, 0.0
    %v5806 = vrot.slane %v5805, 4
    %v5807 = vadd.f32 %v5805, %v5806
    %v5808 = vrot.slane %v5807, 2
    %v5809 = vadd.f32 %v5807, %v5808
    %v5810 = vrot.slane %v5809, 1
    %v5811 = vadd.f32 %v5809, %v5810
    %v5812 = vsel %vm423, %v5780, 0.0
    %v5813 = vrot.slane %v5812, 4
    %v5814 = vadd.f32 %v5812, %v5813
    %v5815 = vrot.slane %v5814, 2
    %v5816 = vadd.f32 %v5814, %v5815
    %v5817 = vrot.slane %v5816, 1
    %v5818 = vadd.f32 %v5816, %v5817
    %v5819 = vsel %vm423, %v5781, 0.0
    %v5820 = vrot.slane %v5819, 4
    %v5821 = vadd.f32 %v5819, %v5820
    %v5822 = vrot.slane %v5821, 2
    %v5823 = vadd.f32 %v5821, %v5822
    %v5824 = vrot.slane %v5823, 1
    %v5825 = vadd.f32 %v5823, %v5824
    %v5826 = vsel %vm423, %v5782, 0.0
    %v5827 = vrot.slane %v5826, 4
    %v5828 = vadd.f32 %v5826, %v5827
    %v5829 = vrot.slane %v5828, 2
    %v5830 = vadd.f32 %v5828, %v5829
    %v5831 = vrot.slane %v5830, 1
    %v5832 = vadd.f32 %v5830, %v5831
    %v5833 = vsel %vm423, %v5783, 0.0
    %v5834 = vrot.slane %v5833, 4
    %v5835 = vadd.f32 %v5833, %v5834
    %v5836 = vrot.slane %v5835, 2
    %v5837 = vadd.f32 %v5835, %v5836
    %v5838 = vrot.slane %v5837, 1
    %v5839 = vadd.f32 %v5837, %v5838
    %v5840 = vld [vmem:[#allocation9 + $0x5] sm:$0x1]
    %v5841 = vld [vmem:[#allocation9 + $0xd] sm:$0x1]
    %v5842 = vld [vmem:[#allocation9 + $0x15] sm:$0x1]
    %v5843 = vld [vmem:[#allocation9 + $0x1d] sm:$0x1]
    %v5844 = vld [vmem:[#allocation9 + $0x25] sm:$0x1]
    %v5845 = vld [vmem:[#allocation9 + $0x2d] sm:$0x1]
    %v5846 = vld [vmem:[#allocation9 + $0x35] sm:$0x1]
    %v5847 = vld [vmem:[#allocation9 + $0x3d] sm:$0x1]
    %v5856 = vsel %vm684, %v5797, %v5790
    %v5857 = vsel %vm686, %v5804, %v5856
    %v5858 = vsel %vm688, %v5811, %v5857
    %v5859 = vsel %vm690, %v5818, %v5858
    %v5860 = vsel %vm692, %v5825, %v5859
    %v5861 = vsel %vm694, %v5832, %v5860
    %v5862 = vsel %vm696, %v5839, %v5861
    %v5863 = vsel %vm423, %v5862, 0
    %5865 = vmatprep.subr.mxu0 0.0
    %5866 = vmatpush1.msra.mxu0 0.0
    %5867 = vmatprep.subr.mxu0 0.0
    %5868 = vmatpush1.msra.mxu0 0.0
    %5869 = vmatprep.subr.mxu0 0.0
    %5870 = vmatpush1.msra.mxu0 0.0
    %5871 = vmatprep.subr.mxu0 0.0
    %5872 = vmatpush1.msra.mxu0 0.0
    %5873 = vmatprep.subr.mxu0 0.0
    %5874 = vmatpush1.msra.mxu0 0.0
    %5875 = vmatprep.subr.mxu0 0.0
    %5876 = vmatpush1.msra.mxu0 0.0
    %5877 = vmatprep.subr.mxu0 0.0
    %5878 = vmatpush1.msra.mxu0 0.0
    %5879 = vmatprep.subr.mxu0 0.0
    %5880 = vmatpush1.msra.mxu0 0.0
    %5881 = vmatprep.subr.mxu0 0.0
    %5882 = vmatpush1.msra.mxu0 0.0
    %5883 = vmatprep.subr.mxu0 0.0
    %5884 = vmatpush1.msra.mxu0 0.0
    %5885 = vmatprep.subr.mxu0 0.0
    %5886 = vmatpush1.msra.mxu0 0.0
    %5887 = vmatprep.subr.mxu0 0.0
    %5888 = vmatpush1.msra.mxu0 0.0
    %5889 = vmatprep.subr.mxu0 0.0
    %5890 = vmatpush1.msra.mxu0 %v420
    %5891 = vmatprep.subr.mxu0 0.0
    %5892 = vmatpush1.msra.mxu0 %v419
    %5893 = vmatprep.subr.mxu0 0.0
    %5894 = vmatpush1.msra.mxu0 %v418
    %5895 = vmatprep.subr.mxu0 0.0
    %5896 = vmatpush1.msra.mxu0 %v417
    %5897 = vmatprep.subr.mxu0 0.0
    %5898 = vmatpush2.msra.mxu0 0.0
    %5899 = vmatprep.subr.mxu0 0.0
    %5900 = vmatpush2.msra.mxu0 0.0
    %5901 = vmatprep.subr.mxu0 0.0
    %5902 = vmatpush2.msra.mxu0 0.0
    %5903 = vmatprep.subr.mxu0 0.0
    %5904 = vmatpush2.msra.mxu0 0.0
    %5905 = vmatprep.subr.mxu0 0.0
    %5906 = vmatpush2.msra.mxu0 0.0
    %5907 = vmatprep.subr.mxu0 0.0
    %5908 = vmatpush2.msra.mxu0 0.0
    %5909 = vmatprep.subr.mxu0 0.0
    %5910 = vmatpush2.msra.mxu0 0.0
    %5911 = vmatprep.subr.mxu0 0.0
    %5912 = vmatpush2.msra.mxu0 0.0
    %5913 = vmatprep.subr.mxu0 0.0
    %5914 = vmatpush2.msra.mxu0 0.0
    %5915 = vmatprep.subr.mxu0 0.0
    %5916 = vmatpush2.msra.mxu0 0.0
    %5917 = vmatprep.subr.mxu0 0.0
    %5918 = vmatpush2.msra.mxu0 0.0
    %5919 = vmatprep.subr.mxu0 0.0
    %5920 = vmatpush2.msra.mxu0 0.0
    %5921 = vmatprep.subr.mxu0 0.0
    %5922 = vmatpush2.msra.mxu0 0.0
    %5923 = vmatprep.subr.mxu0 0.0
    %5924 = vmatpush2.msra.mxu0 0.0
    %5925 = vmatprep.subr.mxu0 0.0
    %5926 = vmatpush2.msra.mxu0 0.0
    %5927 = vmatprep.subr.mxu0 0.0
    %5928 = vmatpush2.msra.mxu0 0.0
    %5929 = vmatprep.mubr.f32.mxu0 0.0
    %5930 = vmatmul.mubr.f32.gmra.mxu0 %v5863
    %v5931 = vpop.f32.mrf.mxu0
    %v5932 = vadd.f32 0.0, %v5931
    %v5933 = vpop.f32.mrf.mxu0
    %5934 = vdwg.mxu0
    %v5936 = vrot.slane %v5932, 1
    %v5937 = vrot.slane %v5932, 2
    %v5938 = vrot.slane %v5932, 3
    %v5939 = vrot.slane %v5932, 4
    %v5940 = vrot.slane %v5932, 5
    %v5941 = vrot.slane %v5932, 6
    %v5942 = vrot.slane %v5932, 7
    %v5951 = vadd.f32 %v5840, %v5932
    %v5952 = vadd.f32 %v5841, %v5936
    %v5953 = vadd.f32 %v5842, %v5937
    %v5954 = vadd.f32 %v5843, %v5938
    %v5955 = vadd.f32 %v5844, %v5939
    %v5956 = vadd.f32 %v5845, %v5940
    %v5957 = vadd.f32 %v5846, %v5941
    %v5958 = vadd.f32 %v5847, %v5942
    %v5960 = vrot.slane %v5353, 1
    %v5961 = vrot.slane %v5355, 1
    %v5962 = vrot.slane %v5353, 2
    %v5963 = vrot.slane %v5355, 2
    %v5964 = vrot.slane %v5353, 3
    %v5965 = vrot.slane %v5355, 3
    %v5966 = vrot.slane %v5353, 4
    %v5967 = vrot.slane %v5355, 4
    %v5968 = vrot.slane %v5353, 5
    %v5969 = vrot.slane %v5355, 5
    %v5970 = vrot.slane %v5353, 6
    %v5971 = vrot.slane %v5355, 6
    %v5972 = vrot.slane %v5353, 7
    %v5973 = vrot.slane %v5355, 7
    %5974 = vrot.lane.b32.xlu0 %v5353, 96
    %v5975 = vpop.permute.xlu0 %5974
    %5976 = vrot.lane.b32.xlu0 %v5355, 96
    %v5977 = vpop.permute.xlu0 %5976
    %5978 = vrot.lane.b32.xlu0 %v5960, 96
    %v5979 = vpop.permute.xlu0 %5978
    %5980 = vrot.lane.b32.xlu0 %v5961, 96
    %v5981 = vpop.permute.xlu0 %5980
    %5982 = vrot.lane.b32.xlu0 %v5962, 96
    %v5983 = vpop.permute.xlu0 %5982
    %5984 = vrot.lane.b32.xlu0 %v5963, 96
    %v5985 = vpop.permute.xlu0 %5984
    %5986 = vrot.lane.b32.xlu0 %v5964, 96
    %v5987 = vpop.permute.xlu0 %5986
    %5988 = vrot.lane.b32.xlu0 %v5965, 96
    %v5989 = vpop.permute.xlu0 %5988
    %5990 = vrot.lane.b32.xlu0 %v5966, 96
    %v5991 = vpop.permute.xlu0 %5990
    %5992 = vrot.lane.b32.xlu0 %v5967, 96
    %v5993 = vpop.permute.xlu0 %5992
    %5994 = vrot.lane.b32.xlu0 %v5968, 96
    %v5995 = vpop.permute.xlu0 %5994
    %5996 = vrot.lane.b32.xlu0 %v5969, 96
    %v5997 = vpop.permute.xlu0 %5996
    %5998 = vrot.lane.b32.xlu0 %v5970, 96
    %v5999 = vpop.permute.xlu0 %5998
    %6000 = vrot.lane.b32.xlu0 %v5971, 96
    %v6001 = vpop.permute.xlu0 %6000
    %6002 = vrot.lane.b32.xlu0 %v5972, 96
    %v6003 = vpop.permute.xlu0 %6002
    %6004 = vrot.lane.b32.xlu0 %v5973, 96
    %v6005 = vpop.permute.xlu0 %6004
    %v6006 = vsel %vm1163, %v5975, %v5977
    %v6007 = vsel %vm1163, %v5979, %v5981
    %v6008 = vsel %vm1163, %v5983, %v5985
    %v6009 = vsel %vm1163, %v5987, %v5989
    %v6010 = vsel %vm1163, %v5991, %v5993
    %v6011 = vsel %vm1163, %v5995, %v5997
    %v6012 = vsel %vm1163, %v5999, %v6001
    %v6013 = vsel %vm1163, %v6003, %v6005
    %v6022 = vadd.f32 %v5951, %v6006
    %v6023 = vadd.f32 %v5952, %v6007
    %v6024 = vadd.f32 %v5953, %v6008
    %v6025 = vadd.f32 %v5954, %v6009
    %v6026 = vadd.f32 %v5955, %v6010
    %v6027 = vadd.f32 %v5956, %v6011
    %v6028 = vadd.f32 %v5957, %v6012
    %v6029 = vadd.f32 %v5958, %v6013
    %v6030 = vxor.u32 %v6022, 2147483648
    %v6031 = vxor.u32 %v6023, 2147483648
    %v6032 = vxor.u32 %v6024, 2147483648
    %v6033 = vxor.u32 %v6025, 2147483648
    %v6034 = vxor.u32 %v6026, 2147483648
    %v6035 = vxor.u32 %v6027, 2147483648
    %v6036 = vxor.u32 %v6028, 2147483648
    %v6037 = vxor.u32 %v6029, 2147483648
    %v6038 = vmul.f32 %v6030, 1.442695
    %v6039 = vpow.pop %v6038
    %v6040 = vmul.f32 %v6031, 1.442695
    %v6041 = vpow.pop %v6040
    %v6042 = vmul.f32 %v6032, 1.442695
    %v6043 = vpow.pop %v6042
    %v6044 = vmul.f32 %v6033, 1.442695
    %v6045 = vpow.pop %v6044
    %v6046 = vmul.f32 %v6034, 1.442695
    %v6047 = vpow.pop %v6046
    %v6048 = vmul.f32 %v6035, 1.442695
    %v6049 = vpow.pop %v6048
    %v6050 = vmul.f32 %v6036, 1.442695
    %v6051 = vpow.pop %v6050
    %v6052 = vmul.f32 %v6037, 1.442695
    %v6053 = vpow.pop %v6052
    %v6054 = vadd.f32 %v6039, 1.0
    %v6055 = vadd.f32 %v6041, 1.0
    %v6056 = vadd.f32 %v6043, 1.0
    %v6057 = vadd.f32 %v6045, 1.0
    %v6058 = vadd.f32 %v6047, 1.0
    %v6059 = vadd.f32 %v6049, 1.0
    %v6060 = vadd.f32 %v6051, 1.0
    %v6061 = vadd.f32 %v6053, 1.0
    %v6062 = vrcp.pop %v6054
    %v6063 = vmul.f32 1.0, %v6062
    %v6064 = vrcp.pop %v6055
    %v6065 = vmul.f32 1.0, %v6064
    %v6066 = vrcp.pop %v6056
    %v6067 = vmul.f32 1.0, %v6066
    %v6068 = vrcp.pop %v6057
    %v6069 = vmul.f32 1.0, %v6068
    %v6070 = vrcp.pop %v6058
    %v6071 = vmul.f32 1.0, %v6070
    %v6072 = vrcp.pop %v6059
    %v6073 = vmul.f32 1.0, %v6072
    %v6074 = vrcp.pop %v6060
    %v6075 = vmul.f32 1.0, %v6074
    %v6076 = vrcp.pop %v6061
    %v6077 = vmul.f32 1.0, %v6076
    %v6078 = vtanh.pop %v6022
    %v6079 = vtanh.pop %v6023
    %v6080 = vtanh.pop %v6024
    %v6081 = vtanh.pop %v6025
    %v6082 = vtanh.pop %v6026
    %v6083 = vtanh.pop %v6027
    %v6084 = vtanh.pop %v6028
    %v6085 = vtanh.pop %v6029
    %v6086 = vmul.f32 %v6063, %v5204
    %v6087 = vmul.f32 %v6065, %v5205
    %v6088 = vmul.f32 %v6067, %v5206
    %v6089 = vmul.f32 %v6069, %v5207
    %v6090 = vmul.f32 %v6071, %v5208
    %v6091 = vmul.f32 %v6073, %v5209
    %v6092 = vmul.f32 %v6075, %v5210
    %v6093 = vmul.f32 %v6077, %v5211
    %6102 = vrot.lane.b32.xlu0 %v6078, 64
    %v6103 = vpop.permute.xlu0 %6102
    %6104 = vrot.lane.b32.xlu0 %v6079, 64
    %v6105 = vpop.permute.xlu0 %6104
    %6106 = vrot.lane.b32.xlu0 %v6080, 64
    %v6107 = vpop.permute.xlu0 %6106
    %6108 = vrot.lane.b32.xlu0 %v6081, 64
    %v6109 = vpop.permute.xlu0 %6108
    %6110 = vrot.lane.b32.xlu0 %v6082, 64
    %v6111 = vpop.permute.xlu0 %6110
    %6112 = vrot.lane.b32.xlu0 %v6083, 64
    %v6113 = vpop.permute.xlu0 %6112
    %6114 = vrot.lane.b32.xlu0 %v6084, 64
    %v6115 = vpop.permute.xlu0 %6114
    %6116 = vrot.lane.b32.xlu0 %v6085, 64
    %v6117 = vpop.permute.xlu0 %6116
    %v6126 = vmul.f32 %v6063, %v6103
    %v6127 = vmul.f32 %v6065, %v6105
    %v6128 = vmul.f32 %v6067, %v6107
    %v6129 = vmul.f32 %v6069, %v6109
    %v6130 = vmul.f32 %v6071, %v6111
    %v6131 = vmul.f32 %v6073, %v6113
    %v6132 = vmul.f32 %v6075, %v6115
    %v6133 = vmul.f32 %v6077, %v6117
    %6142 = vrot.lane.b32.xlu0 %v6126, 32
    %v6143 = vpop.permute.xlu0 %6142
    %6144 = vrot.lane.b32.xlu0 %v6127, 32
    %v6145 = vpop.permute.xlu0 %6144
    %6146 = vrot.lane.b32.xlu0 %v6128, 32
    %v6147 = vpop.permute.xlu0 %6146
    %6148 = vrot.lane.b32.xlu0 %v6129, 32
    %v6149 = vpop.permute.xlu0 %6148
    %6150 = vrot.lane.b32.xlu0 %v6130, 32
    %v6151 = vpop.permute.xlu0 %6150
    %6152 = vrot.lane.b32.xlu0 %v6131, 32
    %v6153 = vpop.permute.xlu0 %6152
    %6154 = vrot.lane.b32.xlu0 %v6132, 32
    %v6155 = vpop.permute.xlu0 %6154
    %6156 = vrot.lane.b32.xlu0 %v6133, 32
    %v6157 = vpop.permute.xlu0 %6156
    %v6166 = vadd.f32 %v6086, %v6143
    %v6167 = vadd.f32 %v6087, %v6145
    %v6168 = vadd.f32 %v6088, %v6147
    %v6169 = vadd.f32 %v6089, %v6149
    %v6170 = vadd.f32 %v6090, %v6151
    %v6171 = vadd.f32 %v6091, %v6153
    %v6172 = vadd.f32 %v6092, %v6155
    %v6173 = vadd.f32 %v6093, %v6157
    %v6174 = vtanh.pop %v6166
    %v6175 = vtanh.pop %v6167
    %v6176 = vtanh.pop %v6168
    %v6177 = vtanh.pop %v6169
    %v6178 = vtanh.pop %v6170
    %v6179 = vtanh.pop %v6171
    %v6180 = vtanh.pop %v6172
    %v6181 = vtanh.pop %v6173
    %6190 = vrot.lane.b32.xlu0 %v6174, 64
    %v6191 = vpop.permute.xlu0 %6190
    %6192 = vrot.lane.b32.xlu0 %v6175, 64
    %v6193 = vpop.permute.xlu0 %6192
    %6194 = vrot.lane.b32.xlu0 %v6176, 64
    %v6195 = vpop.permute.xlu0 %6194
    %6196 = vrot.lane.b32.xlu0 %v6177, 64
    %v6197 = vpop.permute.xlu0 %6196
    %6198 = vrot.lane.b32.xlu0 %v6178, 64
    %v6199 = vpop.permute.xlu0 %6198
    %6200 = vrot.lane.b32.xlu0 %v6179, 64
    %v6201 = vpop.permute.xlu0 %6200
    %6202 = vrot.lane.b32.xlu0 %v6180, 64
    %v6203 = vpop.permute.xlu0 %6202
    %6204 = vrot.lane.b32.xlu0 %v6181, 64
    %v6205 = vpop.permute.xlu0 %6204
    %v6214 = vmul.f32 %v6063, %v6191
    %v6215 = vmul.f32 %v6065, %v6193
    %v6216 = vmul.f32 %v6067, %v6195
    %v6217 = vmul.f32 %v6069, %v6197
    %v6218 = vmul.f32 %v6071, %v6199
    %v6219 = vmul.f32 %v6073, %v6201
    %v6220 = vmul.f32 %v6075, %v6203
    %v6221 = vmul.f32 %v6077, %v6205
    %v6230 = vrot.slane %v6215, 7
    %v6231 = vsel %vm684, %v6230, %v6214
    %v6232 = vrot.slane %v6216, 6
    %v6233 = vsel %vm686, %v6232, %v6231
    %v6234 = vrot.slane %v6217, 5
    %v6235 = vsel %vm688, %v6234, %v6233
    %v6236 = vrot.slane %v6218, 4
    %v6237 = vsel %vm690, %v6236, %v6235
    %v6238 = vrot.slane %v6219, 3
    %v6239 = vsel %vm692, %v6238, %v6237
    %v6240 = vrot.slane %v6220, 2
    %v6241 = vsel %vm694, %v6240, %v6239
    %v6242 = vrot.slane %v6221, 1
    %v6243 = vsel %vm696, %v6242, %v6241
    %6244 = vrot.lane.b32.xlu0 %v6243, 32
    %v6245 = vpop.permute.xlu0 %6244
    %v6246 = vsel %vm423, %v6245, 0
    %6248 = vmatprep.subr.mxu0 0.0
    %6249 = vmatpush1.msra.mxu0 0.0
    %6250 = vmatprep.subr.mxu0 0.0
    %6251 = vmatpush1.msra.mxu0 0.0
    %6252 = vmatprep.subr.mxu0 0.0
    %6253 = vmatpush1.msra.mxu0 0.0
    %6254 = vmatprep.subr.mxu0 0.0
    %6255 = vmatpush1.msra.mxu0 0.0
    %6256 = vmatprep.subr.mxu0 0.0
    %6257 = vmatpush1.msra.mxu0 0.0
    %6258 = vmatprep.subr.mxu0 0.0
    %6259 = vmatpush1.msra.mxu0 0.0
    %6260 = vmatprep.subr.mxu0 0.0
    %6261 = vmatpush1.msra.mxu0 0.0
    %6262 = vmatprep.subr.mxu0 0.0
    %6263 = vmatpush1.msra.mxu0 0.0
    %6264 = vmatprep.subr.mxu0 0.0
    %6265 = vmatpush1.msra.mxu0 0.0
    %6266 = vmatprep.subr.mxu0 0.0
    %6267 = vmatpush1.msra.mxu0 0.0
    %6268 = vmatprep.subr.mxu0 0.0
    %6269 = vmatpush1.msra.mxu0 0.0
    %6270 = vmatprep.subr.mxu0 0.0
    %6271 = vmatpush1.msra.mxu0 0.0
    %6272 = vmatprep.subr.mxu0 %v415
    %6273 = vmatpush1.msra.mxu0 %v414
    %6274 = vmatprep.subr.mxu0 %v413
    %6275 = vmatpush1.msra.mxu0 %v412
    %6276 = vmatprep.subr.mxu0 %v411
    %6277 = vmatpush1.msra.mxu0 %v410
    %6278 = vmatprep.subr.mxu0 %v409
    %6279 = vmatpush1.msra.mxu0 %v408
    %6280 = vmatprep.subr.mxu0 0.0
    %6281 = vmatpush2.msra.mxu0 0.0
    %6282 = vmatprep.subr.mxu0 0.0
    %6283 = vmatpush2.msra.mxu0 0.0
    %6284 = vmatprep.subr.mxu0 0.0
    %6285 = vmatpush2.msra.mxu0 0.0
    %6286 = vmatprep.subr.mxu0 0.0
    %6287 = vmatpush2.msra.mxu0 0.0
    %6288 = vmatprep.subr.mxu0 0.0
    %6289 = vmatpush2.msra.mxu0 0.0
    %6290 = vmatprep.subr.mxu0 0.0
    %6291 = vmatpush2.msra.mxu0 0.0
    %6292 = vmatprep.subr.mxu0 0.0
    %6293 = vmatpush2.msra.mxu0 0.0
    %6294 = vmatprep.subr.mxu0 0.0
    %6295 = vmatpush2.msra.mxu0 0.0
    %6296 = vmatprep.subr.mxu0 0.0
    %6297 = vmatpush2.msra.mxu0 0.0
    %6298 = vmatprep.subr.mxu0 0.0
    %6299 = vmatpush2.msra.mxu0 0.0
    %6300 = vmatprep.subr.mxu0 0.0
    %6301 = vmatpush2.msra.mxu0 0.0
    %6302 = vmatprep.subr.mxu0 0.0
    %6303 = vmatpush2.msra.mxu0 0.0
    %6304 = vmatprep.subr.mxu0 0.0
    %6305 = vmatpush2.msra.mxu0 0.0
    %6306 = vmatprep.subr.mxu0 0.0
    %6307 = vmatpush2.msra.mxu0 0.0
    %6308 = vmatprep.subr.mxu0 0.0
    %6309 = vmatpush2.msra.mxu0 0.0
    %6310 = vmatprep.subr.mxu0 0.0
    %6311 = vmatpush2.msra.mxu0 0.0
    %6312 = vmatprep.mubr.f32.mxu0 0.0
    %6313 = vmatmul.mubr.f32.gmra.mxu0 %v6246
    %v6314 = vpop.f32.mrf.mxu0
    %v6315 = vadd.f32 0.0, %v6314
    %v6316 = vpop.f32.mrf.mxu0
    %v6317 = vadd.f32 0.0, %v6316
    %6318 = vdwg.mxu0
    %v6320 = vcombine.high %v6315, %v6315
    %v6322 = vunpack.c.l.s4 1966171168
    %v6323 = vunpack.c.0.s8 %v6322
    %v6324 = vlaneseq
    %v6325 = vshrl.u32 %v6324, 7
    %v6326 = vsub.s32 %v6323, %v6325
    %v6327 = vrot.slane %v6315, %v6326
    %v6329 = vunpack.c.l.s4 1966171168
    %v6330 = vunpack.c.0.s8 %v6329
    %v6331 = vlaneseq
    %v6332 = vshrl.u32 %v6331, 7
    %v6333 = vsub.s32 %v6330, %v6332
    %v6334 = vrot.slane %v6320, %v6333
    %v6335 = vcombine.high %v6327, %v6327
    %v6336 = vcombine.high %v6334, %v6334
    %v6338 = vunpack.c.l.s4 1966171168
    %v6339 = vunpack.c.0.s8 %v6338
    %v6340 = vlaneseq
    %v6341 = vshrl.u32 %v6340, 7
    %v6342 = vsub.s32 %v6339, %v6341
    %v6343 = vrot.slane %v6327, %v6342
    %v6345 = vunpack.c.l.s4 1966171168
    %v6346 = vunpack.c.0.s8 %v6345
    %v6347 = vlaneseq
    %v6348 = vshrl.u32 %v6347, 7
    %v6349 = vsub.s32 %v6346, %v6348
    %v6350 = vrot.slane %v6334, %v6349
    %v6352 = vunpack.c.l.s4 1966171168
    %v6353 = vunpack.c.0.s8 %v6352
    %v6354 = vlaneseq
    %v6355 = vshrl.u32 %v6354, 7
    %v6356 = vsub.s32 %v6353, %v6355
    %v6357 = vrot.slane %v6335, %v6356
    %v6359 = vunpack.c.l.s4 1966171168
    %v6360 = vunpack.c.0.s8 %v6359
    %v6361 = vlaneseq
    %v6362 = vshrl.u32 %v6361, 7
    %v6363 = vsub.s32 %v6360, %v6362
    %v6364 = vrot.slane %v6336, %v6363
    %v6365 = vcombine.high %v6343, %v6343
    %v6366 = vcombine.high %v6350, %v6350
    %v6367 = vcombine.high %v6357, %v6357
    %v6368 = vcombine.high %v6364, %v6364
    %v6369 = vlaneseq
    %v6370 = vshrl.u32 %v6369, 7
    %v6371 = vsub.s32 0, %v6370
    %v6372 = vrot.slane %v6343, %v6371
    %v6373 = vlaneseq
    %v6374 = vshrl.u32 %v6373, 7
    %v6375 = vsub.s32 0, %v6374
    %v6376 = vrot.slane %v6357, %v6375
    %v6377 = vlaneseq
    %v6378 = vshrl.u32 %v6377, 7
    %v6379 = vsub.s32 0, %v6378
    %v6380 = vrot.slane %v6365, %v6379
    %v6381 = vlaneseq
    %v6382 = vshrl.u32 %v6381, 7
    %v6383 = vsub.s32 0, %v6382
    %v6384 = vrot.slane %v6367, %v6383
    %v6385 = vlaneseq
    %v6386 = vshrl.u32 %v6385, 7
    %v6387 = vsub.s32 0, %v6386
    %v6388 = vrot.slane %v6350, %v6387
    %v6389 = vlaneseq
    %v6390 = vshrl.u32 %v6389, 7
    %v6391 = vsub.s32 0, %v6390
    %v6392 = vrot.slane %v6364, %v6391
    %v6393 = vlaneseq
    %v6394 = vshrl.u32 %v6393, 7
    %v6395 = vsub.s32 0, %v6394
    %v6396 = vrot.slane %v6366, %v6395
    %v6397 = vlaneseq
    %v6398 = vshrl.u32 %v6397, 7
    %v6399 = vsub.s32 0, %v6398
    %v6400 = vrot.slane %v6368, %v6399
    %v6409 = vadd.f32 %v142, %v6372
    %v6410 = vadd.f32 %v143, %v6376
    %v6411 = vadd.f32 %v144, %v6380
    %v6412 = vadd.f32 %v145, %v6384
    %v6413 = vadd.f32 %v146, %v6388
    %v6414 = vadd.f32 %v147, %v6392
    %v6415 = vadd.f32 %v148, %v6396
    %v6416 = vadd.f32 %v149, %v6400
    %v6417 = vtanh.pop %v6409
    %v6418 = vtanh.pop %v6410
    %v6419 = vtanh.pop %v6411
    %v6420 = vtanh.pop %v6412
    %v6421 = vtanh.pop %v6413
    %v6422 = vtanh.pop %v6414
    %v6423 = vtanh.pop %v6415
    %v6424 = vtanh.pop %v6416
    %v6425 = vmul.f32 %v6417, %v608
    %v6426 = vmul.f32 %v6418, %v608
    %v6427 = vmul.f32 %v6419, %v608
    %v6428 = vmul.f32 %v6420, %v608
    %v6429 = vmul.f32 %v6421, %v608
    %v6430 = vmul.f32 %v6422, %v608
    %v6431 = vmul.f32 %v6423, %v608
    %v6432 = vmul.f32 %v6424, %v608
    %v6433 = vsel %vm423, %v6425, 0.0
    %6434 = vadd.xlane.f32.xlu0 %v6433
    %v6435 = vpop.xlane.xlu0 %6434
    %v6436 = vsel %vm423, %v6426, 0.0
    %6437 = vadd.xlane.f32.xlu0 %v6436
    %v6438 = vpop.xlane.xlu0 %6437
    %v6439 = vsel %vm423, %v6427, 0.0
    %6440 = vadd.xlane.f32.xlu0 %v6439
    %v6441 = vpop.xlane.xlu0 %6440
    %v6442 = vsel %vm423, %v6428, 0.0
    %6443 = vadd.xlane.f32.xlu0 %v6442
    %v6444 = vpop.xlane.xlu0 %6443
    %v6445 = vsel %vm423, %v6429, 0.0
    %6446 = vadd.xlane.f32.xlu0 %v6445
    %v6447 = vpop.xlane.xlu0 %6446
    %v6448 = vsel %vm423, %v6430, 0.0
    %6449 = vadd.xlane.f32.xlu0 %v6448
    %v6450 = vpop.xlane.xlu0 %6449
    %v6451 = vsel %vm423, %v6431, 0.0
    %6452 = vadd.xlane.f32.xlu0 %v6451
    %v6453 = vpop.xlane.xlu0 %6452
    %v6454 = vsel %vm423, %v6432, 0.0
    %6455 = vadd.xlane.f32.xlu0 %v6454
    %v6456 = vpop.xlane.xlu0 %6455
    %v6465 = vlaneseq
    %v6466 = vshrl.u32 %v6465, 7
    %v6467 = vsub.s32 %v651, %v6466
    %v6468 = vrot.slane %v6435, %v6467
    %v6469 = vlaneseq
    %v6470 = vshrl.u32 %v6469, 7
    %v6471 = vsub.s32 %v651, %v6470
    %v6472 = vrot.slane %v6438, %v6471
    %v6473 = vlaneseq
    %v6474 = vshrl.u32 %v6473, 7
    %v6475 = vsub.s32 %v651, %v6474
    %v6476 = vrot.slane %v6441, %v6475
    %v6477 = vlaneseq
    %v6478 = vshrl.u32 %v6477, 7
    %v6479 = vsub.s32 %v651, %v6478
    %v6480 = vrot.slane %v6444, %v6479
    %v6481 = vlaneseq
    %v6482 = vshrl.u32 %v6481, 7
    %v6483 = vsub.s32 %v651, %v6482
    %v6484 = vrot.slane %v6447, %v6483
    %v6485 = vlaneseq
    %v6486 = vshrl.u32 %v6485, 7
    %v6487 = vsub.s32 %v651, %v6486
    %v6488 = vrot.slane %v6450, %v6487
    %v6489 = vlaneseq
    %v6490 = vshrl.u32 %v6489, 7
    %v6491 = vsub.s32 %v651, %v6490
    %v6492 = vrot.slane %v6453, %v6491
    %v6493 = vlaneseq
    %v6494 = vshrl.u32 %v6493, 7
    %v6495 = vsub.s32 %v651, %v6494
    %v6496 = vrot.slane %v6456, %v6495
    %v6497 = vsel %vm684, %v6472, %v6468
    %v6498 = vsel %vm686, %v6476, %v6497
    %v6499 = vsel %vm688, %v6480, %v6498
    %v6500 = vsel %vm690, %v6484, %v6499
    %v6501 = vsel %vm692, %v6488, %v6500
    %v6502 = vsel %vm694, %v6492, %v6501
    %v6503 = vsel %vm696, %v6496, %v6502
    %v6505 = vsel %vm699, %v6503, -inf
    %6506 = vmax.xlane.f32.xlu0 %v6505
    %v6507 = vpop.xlane.xlu0 %6506
    %v6509 = vlaneseq
    %v6510 = vshrl.u32 %v6509, 7
    %v6511 = vsub.s32 0, %v6510
    %v6512 = vrot.slane %v6507, %v6511
    %v6513 = vlaneseq
    %v6514 = vshrl.u32 %v6513, 7
    %v6515 = vsub.s32 1, %v6514
    %v6516 = vrot.slane %v6507, %v6515
    %v6517 = vlaneseq
    %v6518 = vshrl.u32 %v6517, 7
    %v6519 = vsub.s32 2, %v6518
    %v6520 = vrot.slane %v6507, %v6519
    %v6521 = vlaneseq
    %v6522 = vshrl.u32 %v6521, 7
    %v6523 = vsub.s32 3, %v6522
    %v6524 = vrot.slane %v6507, %v6523
    %v6525 = vlaneseq
    %v6526 = vshrl.u32 %v6525, 7
    %v6527 = vsub.s32 4, %v6526
    %v6528 = vrot.slane %v6507, %v6527
    %v6529 = vlaneseq
    %v6530 = vshrl.u32 %v6529, 7
    %v6531 = vsub.s32 5, %v6530
    %v6532 = vrot.slane %v6507, %v6531
    %v6533 = vlaneseq
    %v6534 = vshrl.u32 %v6533, 7
    %v6535 = vsub.s32 6, %v6534
    %v6536 = vrot.slane %v6507, %v6535
    %v6537 = vlaneseq
    %v6538 = vshrl.u32 %v6537, 7
    %v6539 = vsub.s32 7, %v6538
    %v6540 = vrot.slane %v6507, %v6539
    %v6549 = vsub.f32 %v6435, %v6512
    %v6550 = vsub.f32 %v6438, %v6516
    %v6551 = vsub.f32 %v6441, %v6520
    %v6552 = vsub.f32 %v6444, %v6524
    %v6553 = vsub.f32 %v6447, %v6528
    %v6554 = vsub.f32 %v6450, %v6532
    %v6555 = vsub.f32 %v6453, %v6536
    %v6556 = vsub.f32 %v6456, %v6540
    %v6557 = vmul.f32 %v6549, 1.442695
    %v6558 = vpow.pop %v6557
    %v6559 = vmul.f32 %v6550, 1.442695
    %v6560 = vpow.pop %v6559
    %v6561 = vmul.f32 %v6551, 1.442695
    %v6562 = vpow.pop %v6561
    %v6563 = vmul.f32 %v6552, 1.442695
    %v6564 = vpow.pop %v6563
    %v6565 = vmul.f32 %v6553, 1.442695
    %v6566 = vpow.pop %v6565
    %v6567 = vmul.f32 %v6554, 1.442695
    %v6568 = vpow.pop %v6567
    %v6569 = vmul.f32 %v6555, 1.442695
    %v6570 = vpow.pop %v6569
    %v6571 = vmul.f32 %v6556, 1.442695
    %v6572 = vpow.pop %v6571
    %6581 = vset.pattern.permute.xlu0 0
    %6582 = vperm.xlu0 %6581, %v6558
    %v6583 = vpop.permute.xlu0 %6582
    %6584 = vset.pattern.permute.xlu0 0
    %6585 = vperm.xlu0 %6584, %v6560
    %v6586 = vpop.permute.xlu0 %6585
    %6587 = vset.pattern.permute.xlu0 0
    %6588 = vperm.xlu0 %6587, %v6562
    %v6589 = vpop.permute.xlu0 %6588
    %6590 = vset.pattern.permute.xlu0 0
    %6591 = vperm.xlu0 %6590, %v6564
    %v6592 = vpop.permute.xlu0 %6591
    %6593 = vset.pattern.permute.xlu0 0
    %6594 = vperm.xlu0 %6593, %v6566
    %v6595 = vpop.permute.xlu0 %6594
    %6596 = vset.pattern.permute.xlu0 0
    %6597 = vperm.xlu0 %6596, %v6568
    %v6598 = vpop.permute.xlu0 %6597
    %6599 = vset.pattern.permute.xlu0 0
    %6600 = vperm.xlu0 %6599, %v6570
    %v6601 = vpop.permute.xlu0 %6600
    %6602 = vset.pattern.permute.xlu0 0
    %6603 = vperm.xlu0 %6602, %v6572
    %v6604 = vpop.permute.xlu0 %6603
    %v6605 = vlaneseq
    %v6606 = vshrl.u32 %v6605, 7
    %v6607 = vsub.s32 %v651, %v6606
    %v6608 = vrot.slane %v6583, %v6607
    %v6609 = vlaneseq
    %v6610 = vshrl.u32 %v6609, 7
    %v6611 = vsub.s32 %v651, %v6610
    %v6612 = vrot.slane %v6586, %v6611
    %v6613 = vlaneseq
    %v6614 = vshrl.u32 %v6613, 7
    %v6615 = vsub.s32 %v651, %v6614
    %v6616 = vrot.slane %v6589, %v6615
    %v6617 = vlaneseq
    %v6618 = vshrl.u32 %v6617, 7
    %v6619 = vsub.s32 %v651, %v6618
    %v6620 = vrot.slane %v6592, %v6619
    %v6621 = vlaneseq
    %v6622 = vshrl.u32 %v6621, 7
    %v6623 = vsub.s32 %v651, %v6622
    %v6624 = vrot.slane %v6595, %v6623
    %v6625 = vlaneseq
    %v6626 = vshrl.u32 %v6625, 7
    %v6627 = vsub.s32 %v651, %v6626
    %v6628 = vrot.slane %v6598, %v6627
    %v6629 = vlaneseq
    %v6630 = vshrl.u32 %v6629, 7
    %v6631 = vsub.s32 %v651, %v6630
    %v6632 = vrot.slane %v6601, %v6631
    %v6633 = vlaneseq
    %v6634 = vshrl.u32 %v6633, 7
    %v6635 = vsub.s32 %v651, %v6634
    %v6636 = vrot.slane %v6604, %v6635
    %v6637 = vsel %vm684, %v6612, %v6608
    %v6638 = vsel %vm686, %v6616, %v6637
    %v6639 = vsel %vm688, %v6620, %v6638
    %v6640 = vsel %vm690, %v6624, %v6639
    %v6641 = vsel %vm692, %v6628, %v6640
    %v6642 = vsel %vm694, %v6632, %v6641
    %v6643 = vsel %vm696, %v6636, %v6642
    %v6645 = vsel %vm699, %v6643, 0.0
    %6646 = vadd.xlane.f32.xlu0 %v6645
    %v6647 = vpop.xlane.xlu0 %6646
    %v6648 = vrcp.pop %v6647
    %v6650 = vlaneseq
    %v6651 = vshrl.u32 %v6650, 7
    %v6652 = vsub.s32 0, %v6651
    %v6653 = vrot.slane %v6648, %v6652
    %v6654 = vlaneseq
    %v6655 = vshrl.u32 %v6654, 7
    %v6656 = vsub.s32 1, %v6655
    %v6657 = vrot.slane %v6648, %v6656
    %v6658 = vlaneseq
    %v6659 = vshrl.u32 %v6658, 7
    %v6660 = vsub.s32 2, %v6659
    %v6661 = vrot.slane %v6648, %v6660
    %v6662 = vlaneseq
    %v6663 = vshrl.u32 %v6662, 7
    %v6664 = vsub.s32 3, %v6663
    %v6665 = vrot.slane %v6648, %v6664
    %v6666 = vlaneseq
    %v6667 = vshrl.u32 %v6666, 7
    %v6668 = vsub.s32 4, %v6667
    %v6669 = vrot.slane %v6648, %v6668
    %v6670 = vlaneseq
    %v6671 = vshrl.u32 %v6670, 7
    %v6672 = vsub.s32 5, %v6671
    %v6673 = vrot.slane %v6648, %v6672
    %v6674 = vlaneseq
    %v6675 = vshrl.u32 %v6674, 7
    %v6676 = vsub.s32 6, %v6675
    %v6677 = vrot.slane %v6648, %v6676
    %v6678 = vlaneseq
    %v6679 = vshrl.u32 %v6678, 7
    %v6680 = vsub.s32 7, %v6679
    %v6681 = vrot.slane %v6648, %v6680
    %v6690 = vmul.f32 %v6558, %v6653
    %v6691 = vmul.f32 %v6560, %v6657
    %v6692 = vmul.f32 %v6562, %v6661
    %v6693 = vmul.f32 %v6564, %v6665
    %v6694 = vmul.f32 %v6566, %v6669
    %v6695 = vmul.f32 %v6568, %v6673
    %v6696 = vmul.f32 %v6570, %v6677
    %v6697 = vmul.f32 %v6572, %v6681
    %6699 = vset.pattern.permute.xlu0 0
    %6700 = vperm.xlu0 %6699, %v6690
    %v6701 = vpop.permute.xlu0 %6700
    %6704 = vset.pattern.permute.xlu0 0
    %6705 = vperm.xlu0 %6704, %v6691
    %v6706 = vpop.permute.xlu0 %6705
    %6709 = vset.pattern.permute.xlu0 0
    %6710 = vperm.xlu0 %6709, %v6692
    %v6711 = vpop.permute.xlu0 %6710
    %6714 = vset.pattern.permute.xlu0 0
    %6715 = vperm.xlu0 %6714, %v6693
    %v6716 = vpop.permute.xlu0 %6715
    %6719 = vset.pattern.permute.xlu0 0
    %6720 = vperm.xlu0 %6719, %v6694
    %v6721 = vpop.permute.xlu0 %6720
    %6724 = vset.pattern.permute.xlu0 0
    %6725 = vperm.xlu0 %6724, %v6695
    %v6726 = vpop.permute.xlu0 %6725
    %6729 = vset.pattern.permute.xlu0 0
    %6730 = vperm.xlu0 %6729, %v6696
    %v6731 = vpop.permute.xlu0 %6730
    %6734 = vset.pattern.permute.xlu0 0
    %6735 = vperm.xlu0 %6734, %v6697
    %v6736 = vpop.permute.xlu0 %6735
    %v6738 = vmul.f32 %v134, %v6701
    %v6739 = vmul.f32 %v135, %v6706
    %v6740 = vmul.f32 %v136, %v6711
    %v6741 = vmul.f32 %v137, %v6716
    %v6742 = vmul.f32 %v138, %v6721
    %v6743 = vmul.f32 %v139, %v6726
    %v6744 = vmul.f32 %v140, %v6731
    %v6745 = vmul.f32 %v141, %v6736
    %v6746 = vsel %vm423, %v6738, 0.0
    %v6747 = vrot.slane %v6746, 4
    %v6748 = vadd.f32 %v6746, %v6747
    %v6749 = vrot.slane %v6748, 2
    %v6750 = vadd.f32 %v6748, %v6749
    %v6751 = vrot.slane %v6750, 1
    %v6752 = vadd.f32 %v6750, %v6751
    %v6753 = vsel %vm423, %v6739, 0.0
    %v6754 = vrot.slane %v6753, 4
    %v6755 = vadd.f32 %v6753, %v6754
    %v6756 = vrot.slane %v6755, 2
    %v6757 = vadd.f32 %v6755, %v6756
    %v6758 = vrot.slane %v6757, 1
    %v6759 = vadd.f32 %v6757, %v6758
    %v6760 = vsel %vm423, %v6740, 0.0
    %v6761 = vrot.slane %v6760, 4
    %v6762 = vadd.f32 %v6760, %v6761
    %v6763 = vrot.slane %v6762, 2
    %v6764 = vadd.f32 %v6762, %v6763
    %v6765 = vrot.slane %v6764, 1
    %v6766 = vadd.f32 %v6764, %v6765
    %v6767 = vsel %vm423, %v6741, 0.0
    %v6768 = vrot.slane %v6767, 4
    %v6769 = vadd.f32 %v6767, %v6768
    %v6770 = vrot.slane %v6769, 2
    %v6771 = vadd.f32 %v6769, %v6770
    %v6772 = vrot.slane %v6771, 1
    %v6773 = vadd.f32 %v6771, %v6772
    %v6774 = vsel %vm423, %v6742, 0.0
    %v6775 = vrot.slane %v6774, 4
    %v6776 = vadd.f32 %v6774, %v6775
    %v6777 = vrot.slane %v6776, 2
    %v6778 = vadd.f32 %v6776, %v6777
    %v6779 = vrot.slane %v6778, 1
    %v6780 = vadd.f32 %v6778, %v6779
    %v6781 = vsel %vm423, %v6743, 0.0
    %v6782 = vrot.slane %v6781, 4
    %v6783 = vadd.f32 %v6781, %v6782
    %v6784 = vrot.slane %v6783, 2
    %v6785 = vadd.f32 %v6783, %v6784
    %v6786 = vrot.slane %v6785, 1
    %v6787 = vadd.f32 %v6785, %v6786
    %v6788 = vsel %vm423, %v6744, 0.0
    %v6789 = vrot.slane %v6788, 4
    %v6790 = vadd.f32 %v6788, %v6789
    %v6791 = vrot.slane %v6790, 2
    %v6792 = vadd.f32 %v6790, %v6791
    %v6793 = vrot.slane %v6792, 1
    %v6794 = vadd.f32 %v6792, %v6793
    %v6795 = vsel %vm423, %v6745, 0.0
    %v6796 = vrot.slane %v6795, 4
    %v6797 = vadd.f32 %v6795, %v6796
    %v6798 = vrot.slane %v6797, 2
    %v6799 = vadd.f32 %v6797, %v6798
    %v6800 = vrot.slane %v6799, 1
    %v6801 = vadd.f32 %v6799, %v6800
    %v6802 = vld [vmem:[#allocation9 + $0x6] sm:$0x1]
    %v6803 = vld [vmem:[#allocation9 + $0xe] sm:$0x1]
    %v6804 = vld [vmem:[#allocation9 + $0x16] sm:$0x1]
    %v6805 = vld [vmem:[#allocation9 + $0x1e] sm:$0x1]
    %v6806 = vld [vmem:[#allocation9 + $0x26] sm:$0x1]
    %v6807 = vld [vmem:[#allocation9 + $0x2e] sm:$0x1]
    %v6808 = vld [vmem:[#allocation9 + $0x36] sm:$0x1]
    %v6809 = vld [vmem:[#allocation9 + $0x3e] sm:$0x1]
    %v6818 = vsel %vm684, %v6759, %v6752
    %v6819 = vsel %vm686, %v6766, %v6818
    %v6820 = vsel %vm688, %v6773, %v6819
    %v6821 = vsel %vm690, %v6780, %v6820
    %v6822 = vsel %vm692, %v6787, %v6821
    %v6823 = vsel %vm694, %v6794, %v6822
    %v6824 = vsel %vm696, %v6801, %v6823
    %v6825 = vsel %vm423, %v6824, 0
    %6827 = vmatprep.subr.mxu0 0.0
    %6828 = vmatpush1.msra.mxu0 0.0
    %6829 = vmatprep.subr.mxu0 0.0
    %6830 = vmatpush1.msra.mxu0 0.0
    %6831 = vmatprep.subr.mxu0 0.0
    %6832 = vmatpush1.msra.mxu0 0.0
    %6833 = vmatprep.subr.mxu0 0.0
    %6834 = vmatpush1.msra.mxu0 0.0
    %6835 = vmatprep.subr.mxu0 0.0
    %6836 = vmatpush1.msra.mxu0 0.0
    %6837 = vmatprep.subr.mxu0 0.0
    %6838 = vmatpush1.msra.mxu0 0.0
    %6839 = vmatprep.subr.mxu0 0.0
    %6840 = vmatpush1.msra.mxu0 0.0
    %6841 = vmatprep.subr.mxu0 0.0
    %6842 = vmatpush1.msra.mxu0 0.0
    %6843 = vmatprep.subr.mxu0 0.0
    %6844 = vmatpush1.msra.mxu0 0.0
    %6845 = vmatprep.subr.mxu0 0.0
    %6846 = vmatpush1.msra.mxu0 0.0
    %6847 = vmatprep.subr.mxu0 0.0
    %6848 = vmatpush1.msra.mxu0 0.0
    %6849 = vmatprep.subr.mxu0 0.0
    %6850 = vmatpush1.msra.mxu0 0.0
    %6851 = vmatprep.subr.mxu0 0.0
    %6852 = vmatpush1.msra.mxu0 %v420
    %6853 = vmatprep.subr.mxu0 0.0
    %6854 = vmatpush1.msra.mxu0 %v419
    %6855 = vmatprep.subr.mxu0 0.0
    %6856 = vmatpush1.msra.mxu0 %v418
    %6857 = vmatprep.subr.mxu0 0.0
    %6858 = vmatpush1.msra.mxu0 %v417
    %6859 = vmatprep.subr.mxu0 0.0
    %6860 = vmatpush2.msra.mxu0 0.0
    %6861 = vmatprep.subr.mxu0 0.0
    %6862 = vmatpush2.msra.mxu0 0.0
    %6863 = vmatprep.subr.mxu0 0.0
    %6864 = vmatpush2.msra.mxu0 0.0
    %6865 = vmatprep.subr.mxu0 0.0
    %6866 = vmatpush2.msra.mxu0 0.0
    %6867 = vmatprep.subr.mxu0 0.0
    %6868 = vmatpush2.msra.mxu0 0.0
    %6869 = vmatprep.subr.mxu0 0.0
    %6870 = vmatpush2.msra.mxu0 0.0
    %6871 = vmatprep.subr.mxu0 0.0
    %6872 = vmatpush2.msra.mxu0 0.0
    %6873 = vmatprep.subr.mxu0 0.0
    %6874 = vmatpush2.msra.mxu0 0.0
    %6875 = vmatprep.subr.mxu0 0.0
    %6876 = vmatpush2.msra.mxu0 0.0
    %6877 = vmatprep.subr.mxu0 0.0
    %6878 = vmatpush2.msra.mxu0 0.0
    %6879 = vmatprep.subr.mxu0 0.0
    %6880 = vmatpush2.msra.mxu0 0.0
    %6881 = vmatprep.subr.mxu0 0.0
    %6882 = vmatpush2.msra.mxu0 0.0
    %6883 = vmatprep.subr.mxu0 0.0
    %6884 = vmatpush2.msra.mxu0 0.0
    %6885 = vmatprep.subr.mxu0 0.0
    %6886 = vmatpush2.msra.mxu0 0.0
    %6887 = vmatprep.subr.mxu0 0.0
    %6888 = vmatpush2.msra.mxu0 0.0
    %6889 = vmatprep.subr.mxu0 0.0
    %6890 = vmatpush2.msra.mxu0 0.0
    %6891 = vmatprep.mubr.f32.mxu0 0.0
    %6892 = vmatmul.mubr.f32.gmra.mxu0 %v6825
    %v6893 = vpop.f32.mrf.mxu0
    %v6894 = vadd.f32 0.0, %v6893
    %v6895 = vpop.f32.mrf.mxu0
    %6896 = vdwg.mxu0
    %v6898 = vrot.slane %v6894, 1
    %v6899 = vrot.slane %v6894, 2
    %v6900 = vrot.slane %v6894, 3
    %v6901 = vrot.slane %v6894, 4
    %v6902 = vrot.slane %v6894, 5
    %v6903 = vrot.slane %v6894, 6
    %v6904 = vrot.slane %v6894, 7
    %v6913 = vadd.f32 %v6802, %v6894
    %v6914 = vadd.f32 %v6803, %v6898
    %v6915 = vadd.f32 %v6804, %v6899
    %v6916 = vadd.f32 %v6805, %v6900
    %v6917 = vadd.f32 %v6806, %v6901
    %v6918 = vadd.f32 %v6807, %v6902
    %v6919 = vadd.f32 %v6808, %v6903
    %v6920 = vadd.f32 %v6809, %v6904
    %v6922 = vrot.slane %v6315, 1
    %v6923 = vrot.slane %v6317, 1
    %v6924 = vrot.slane %v6315, 2
    %v6925 = vrot.slane %v6317, 2
    %v6926 = vrot.slane %v6315, 3
    %v6927 = vrot.slane %v6317, 3
    %v6928 = vrot.slane %v6315, 4
    %v6929 = vrot.slane %v6317, 4
    %v6930 = vrot.slane %v6315, 5
    %v6931 = vrot.slane %v6317, 5
    %v6932 = vrot.slane %v6315, 6
    %v6933 = vrot.slane %v6317, 6
    %v6934 = vrot.slane %v6315, 7
    %v6935 = vrot.slane %v6317, 7
    %6936 = vrot.lane.b32.xlu0 %v6315, 96
    %v6937 = vpop.permute.xlu0 %6936
    %6938 = vrot.lane.b32.xlu0 %v6317, 96
    %v6939 = vpop.permute.xlu0 %6938
    %6940 = vrot.lane.b32.xlu0 %v6922, 96
    %v6941 = vpop.permute.xlu0 %6940
    %6942 = vrot.lane.b32.xlu0 %v6923, 96
    %v6943 = vpop.permute.xlu0 %6942
    %6944 = vrot.lane.b32.xlu0 %v6924, 96
    %v6945 = vpop.permute.xlu0 %6944
    %6946 = vrot.lane.b32.xlu0 %v6925, 96
    %v6947 = vpop.permute.xlu0 %6946
    %6948 = vrot.lane.b32.xlu0 %v6926, 96
    %v6949 = vpop.permute.xlu0 %6948
    %6950 = vrot.lane.b32.xlu0 %v6927, 96
    %v6951 = vpop.permute.xlu0 %6950
    %6952 = vrot.lane.b32.xlu0 %v6928, 96
    %v6953 = vpop.permute.xlu0 %6952
    %6954 = vrot.lane.b32.xlu0 %v6929, 96
    %v6955 = vpop.permute.xlu0 %6954
    %6956 = vrot.lane.b32.xlu0 %v6930, 96
    %v6957 = vpop.permute.xlu0 %6956
    %6958 = vrot.lane.b32.xlu0 %v6931, 96
    %v6959 = vpop.permute.xlu0 %6958
    %6960 = vrot.lane.b32.xlu0 %v6932, 96
    %v6961 = vpop.permute.xlu0 %6960
    %6962 = vrot.lane.b32.xlu0 %v6933, 96
    %v6963 = vpop.permute.xlu0 %6962
    %6964 = vrot.lane.b32.xlu0 %v6934, 96
    %v6965 = vpop.permute.xlu0 %6964
    %6966 = vrot.lane.b32.xlu0 %v6935, 96
    %v6967 = vpop.permute.xlu0 %6966
    %v6968 = vsel %vm1163, %v6937, %v6939
    %v6969 = vsel %vm1163, %v6941, %v6943
    %v6970 = vsel %vm1163, %v6945, %v6947
    %v6971 = vsel %vm1163, %v6949, %v6951
    %v6972 = vsel %vm1163, %v6953, %v6955
    %v6973 = vsel %vm1163, %v6957, %v6959
    %v6974 = vsel %vm1163, %v6961, %v6963
    %v6975 = vsel %vm1163, %v6965, %v6967
    %v6984 = vadd.f32 %v6913, %v6968
    %v6985 = vadd.f32 %v6914, %v6969
    %v6986 = vadd.f32 %v6915, %v6970
    %v6987 = vadd.f32 %v6916, %v6971
    %v6988 = vadd.f32 %v6917, %v6972
    %v6989 = vadd.f32 %v6918, %v6973
    %v6990 = vadd.f32 %v6919, %v6974
    %v6991 = vadd.f32 %v6920, %v6975
    %v6992 = vxor.u32 %v6984, 2147483648
    %v6993 = vxor.u32 %v6985, 2147483648
    %v6994 = vxor.u32 %v6986, 2147483648
    %v6995 = vxor.u32 %v6987, 2147483648
    %v6996 = vxor.u32 %v6988, 2147483648
    %v6997 = vxor.u32 %v6989, 2147483648
    %v6998 = vxor.u32 %v6990, 2147483648
    %v6999 = vxor.u32 %v6991, 2147483648
    %v7000 = vmul.f32 %v6992, 1.442695
    %v7001 = vpow.pop %v7000
    %v7002 = vmul.f32 %v6993, 1.442695
    %v7003 = vpow.pop %v7002
    %v7004 = vmul.f32 %v6994, 1.442695
    %v7005 = vpow.pop %v7004
    %v7006 = vmul.f32 %v6995, 1.442695
    %v7007 = vpow.pop %v7006
    %v7008 = vmul.f32 %v6996, 1.442695
    %v7009 = vpow.pop %v7008
    %v7010 = vmul.f32 %v6997, 1.442695
    %v7011 = vpow.pop %v7010
    %v7012 = vmul.f32 %v6998, 1.442695
    %v7013 = vpow.pop %v7012
    %v7014 = vmul.f32 %v6999, 1.442695
    %v7015 = vpow.pop %v7014
    %v7016 = vadd.f32 %v7001, 1.0
    %v7017 = vadd.f32 %v7003, 1.0
    %v7018 = vadd.f32 %v7005, 1.0
    %v7019 = vadd.f32 %v7007, 1.0
    %v7020 = vadd.f32 %v7009, 1.0
    %v7021 = vadd.f32 %v7011, 1.0
    %v7022 = vadd.f32 %v7013, 1.0
    %v7023 = vadd.f32 %v7015, 1.0
    %v7024 = vrcp.pop %v7016
    %v7025 = vmul.f32 1.0, %v7024
    %v7026 = vrcp.pop %v7017
    %v7027 = vmul.f32 1.0, %v7026
    %v7028 = vrcp.pop %v7018
    %v7029 = vmul.f32 1.0, %v7028
    %v7030 = vrcp.pop %v7019
    %v7031 = vmul.f32 1.0, %v7030
    %v7032 = vrcp.pop %v7020
    %v7033 = vmul.f32 1.0, %v7032
    %v7034 = vrcp.pop %v7021
    %v7035 = vmul.f32 1.0, %v7034
    %v7036 = vrcp.pop %v7022
    %v7037 = vmul.f32 1.0, %v7036
    %v7038 = vrcp.pop %v7023
    %v7039 = vmul.f32 1.0, %v7038
    %v7040 = vtanh.pop %v6984
    %v7041 = vtanh.pop %v6985
    %v7042 = vtanh.pop %v6986
    %v7043 = vtanh.pop %v6987
    %v7044 = vtanh.pop %v6988
    %v7045 = vtanh.pop %v6989
    %v7046 = vtanh.pop %v6990
    %v7047 = vtanh.pop %v6991
    %v7048 = vmul.f32 %v7025, %v6166
    %v7049 = vmul.f32 %v7027, %v6167
    %v7050 = vmul.f32 %v7029, %v6168
    %v7051 = vmul.f32 %v7031, %v6169
    %v7052 = vmul.f32 %v7033, %v6170
    %v7053 = vmul.f32 %v7035, %v6171
    %v7054 = vmul.f32 %v7037, %v6172
    %v7055 = vmul.f32 %v7039, %v6173
    %7064 = vrot.lane.b32.xlu0 %v7040, 64
    %v7065 = vpop.permute.xlu0 %7064
    %7066 = vrot.lane.b32.xlu0 %v7041, 64
    %v7067 = vpop.permute.xlu0 %7066
    %7068 = vrot.lane.b32.xlu0 %v7042, 64
    %v7069 = vpop.permute.xlu0 %7068
    %7070 = vrot.lane.b32.xlu0 %v7043, 64
    %v7071 = vpop.permute.xlu0 %7070
    %7072 = vrot.lane.b32.xlu0 %v7044, 64
    %v7073 = vpop.permute.xlu0 %7072
    %7074 = vrot.lane.b32.xlu0 %v7045, 64
    %v7075 = vpop.permute.xlu0 %7074
    %7076 = vrot.lane.b32.xlu0 %v7046, 64
    %v7077 = vpop.permute.xlu0 %7076
    %7078 = vrot.lane.b32.xlu0 %v7047, 64
    %v7079 = vpop.permute.xlu0 %7078
    %v7088 = vmul.f32 %v7025, %v7065
    %v7089 = vmul.f32 %v7027, %v7067
    %v7090 = vmul.f32 %v7029, %v7069
    %v7091 = vmul.f32 %v7031, %v7071
    %v7092 = vmul.f32 %v7033, %v7073
    %v7093 = vmul.f32 %v7035, %v7075
    %v7094 = vmul.f32 %v7037, %v7077
    %v7095 = vmul.f32 %v7039, %v7079
    %7104 = vrot.lane.b32.xlu0 %v7088, 32
    %v7105 = vpop.permute.xlu0 %7104
    %7106 = vrot.lane.b32.xlu0 %v7089, 32
    %v7107 = vpop.permute.xlu0 %7106
    %7108 = vrot.lane.b32.xlu0 %v7090, 32
    %v7109 = vpop.permute.xlu0 %7108
    %7110 = vrot.lane.b32.xlu0 %v7091, 32
    %v7111 = vpop.permute.xlu0 %7110
    %7112 = vrot.lane.b32.xlu0 %v7092, 32
    %v7113 = vpop.permute.xlu0 %7112
    %7114 = vrot.lane.b32.xlu0 %v7093, 32
    %v7115 = vpop.permute.xlu0 %7114
    %7116 = vrot.lane.b32.xlu0 %v7094, 32
    %v7117 = vpop.permute.xlu0 %7116
    %7118 = vrot.lane.b32.xlu0 %v7095, 32
    %v7119 = vpop.permute.xlu0 %7118
    %v7128 = vadd.f32 %v7048, %v7105
    %v7129 = vadd.f32 %v7049, %v7107
    %v7130 = vadd.f32 %v7050, %v7109
    %v7131 = vadd.f32 %v7051, %v7111
    %v7132 = vadd.f32 %v7052, %v7113
    %v7133 = vadd.f32 %v7053, %v7115
    %v7134 = vadd.f32 %v7054, %v7117
    %v7135 = vadd.f32 %v7055, %v7119
    %v7136 = vtanh.pop %v7128
    %v7137 = vtanh.pop %v7129
    %v7138 = vtanh.pop %v7130
    %v7139 = vtanh.pop %v7131
    %v7140 = vtanh.pop %v7132
    %v7141 = vtanh.pop %v7133
    %v7142 = vtanh.pop %v7134
    %v7143 = vtanh.pop %v7135
    %7152 = vrot.lane.b32.xlu0 %v7136, 64
    %v7153 = vpop.permute.xlu0 %7152
    %7154 = vrot.lane.b32.xlu0 %v7137, 64
    %v7155 = vpop.permute.xlu0 %7154
    %7156 = vrot.lane.b32.xlu0 %v7138, 64
    %v7157 = vpop.permute.xlu0 %7156
    %7158 = vrot.lane.b32.xlu0 %v7139, 64
    %v7159 = vpop.permute.xlu0 %7158
    %7160 = vrot.lane.b32.xlu0 %v7140, 64
    %v7161 = vpop.permute.xlu0 %7160
    %7162 = vrot.lane.b32.xlu0 %v7141, 64
    %v7163 = vpop.permute.xlu0 %7162
    %7164 = vrot.lane.b32.xlu0 %v7142, 64
    %v7165 = vpop.permute.xlu0 %7164
    %7166 = vrot.lane.b32.xlu0 %v7143, 64
    %v7167 = vpop.permute.xlu0 %7166
    %v7176 = vmul.f32 %v7025, %v7153
    %v7177 = vmul.f32 %v7027, %v7155
    %v7178 = vmul.f32 %v7029, %v7157
    %v7179 = vmul.f32 %v7031, %v7159
    %v7180 = vmul.f32 %v7033, %v7161
    %v7181 = vmul.f32 %v7035, %v7163
    %v7182 = vmul.f32 %v7037, %v7165
    %v7183 = vmul.f32 %v7039, %v7167
    %v7192 = vrot.slane %v7177, 7
    %v7193 = vsel %vm684, %v7192, %v7176
    %v7194 = vrot.slane %v7178, 6
    %v7195 = vsel %vm686, %v7194, %v7193
    %v7196 = vrot.slane %v7179, 5
    %v7197 = vsel %vm688, %v7196, %v7195
    %v7198 = vrot.slane %v7180, 4
    %v7199 = vsel %vm690, %v7198, %v7197
    %v7200 = vrot.slane %v7181, 3
    %v7201 = vsel %vm692, %v7200, %v7199
    %v7202 = vrot.slane %v7182, 2
    %v7203 = vsel %vm694, %v7202, %v7201
    %v7204 = vrot.slane %v7183, 1
    %v7205 = vsel %vm696, %v7204, %v7203
    %7206 = vrot.lane.b32.xlu0 %v7205, 32
    %v7207 = vpop.permute.xlu0 %7206
    %v7208 = vsel %vm423, %v7207, 0
    %7210 = vmatprep.subr.mxu0 0.0
    %7211 = vmatpush1.msra.mxu0 0.0
    %7212 = vmatprep.subr.mxu0 0.0
    %7213 = vmatpush1.msra.mxu0 0.0
    %7214 = vmatprep.subr.mxu0 0.0
    %7215 = vmatpush1.msra.mxu0 0.0
    %7216 = vmatprep.subr.mxu0 0.0
    %7217 = vmatpush1.msra.mxu0 0.0
    %7218 = vmatprep.subr.mxu0 0.0
    %7219 = vmatpush1.msra.mxu0 0.0
    %7220 = vmatprep.subr.mxu0 0.0
    %7221 = vmatpush1.msra.mxu0 0.0
    %7222 = vmatprep.subr.mxu0 0.0
    %7223 = vmatpush1.msra.mxu0 0.0
    %7224 = vmatprep.subr.mxu0 0.0
    %7225 = vmatpush1.msra.mxu0 0.0
    %7226 = vmatprep.subr.mxu0 0.0
    %7227 = vmatpush1.msra.mxu0 0.0
    %7228 = vmatprep.subr.mxu0 0.0
    %7229 = vmatpush1.msra.mxu0 0.0
    %7230 = vmatprep.subr.mxu0 0.0
    %7231 = vmatpush1.msra.mxu0 0.0
    %7232 = vmatprep.subr.mxu0 0.0
    %7233 = vmatpush1.msra.mxu0 0.0
    %7234 = vmatprep.subr.mxu0 %v415
    %7235 = vmatpush1.msra.mxu0 %v414
    %7236 = vmatprep.subr.mxu0 %v413
    %7237 = vmatpush1.msra.mxu0 %v412
    %7238 = vmatprep.subr.mxu0 %v411
    %7239 = vmatpush1.msra.mxu0 %v410
    %7240 = vmatprep.subr.mxu0 %v409
    %7241 = vmatpush1.msra.mxu0 %v408
    %7242 = vmatprep.subr.mxu0 0.0
    %7243 = vmatpush2.msra.mxu0 0.0
    %7244 = vmatprep.subr.mxu0 0.0
    %7245 = vmatpush2.msra.mxu0 0.0
    %7246 = vmatprep.subr.mxu0 0.0
    %7247 = vmatpush2.msra.mxu0 0.0
    %7248 = vmatprep.subr.mxu0 0.0
    %7249 = vmatpush2.msra.mxu0 0.0
    %7250 = vmatprep.subr.mxu0 0.0
    %7251 = vmatpush2.msra.mxu0 0.0
    %7252 = vmatprep.subr.mxu0 0.0
    %7253 = vmatpush2.msra.mxu0 0.0
    %7254 = vmatprep.subr.mxu0 0.0
    %7255 = vmatpush2.msra.mxu0 0.0
    %7256 = vmatprep.subr.mxu0 0.0
    %7257 = vmatpush2.msra.mxu0 0.0
    %7258 = vmatprep.subr.mxu0 0.0
    %7259 = vmatpush2.msra.mxu0 0.0
    %7260 = vmatprep.subr.mxu0 0.0
    %7261 = vmatpush2.msra.mxu0 0.0
    %7262 = vmatprep.subr.mxu0 0.0
    %7263 = vmatpush2.msra.mxu0 0.0
    %7264 = vmatprep.subr.mxu0 0.0
    %7265 = vmatpush2.msra.mxu0 0.0
    %7266 = vmatprep.subr.mxu0 0.0
    %7267 = vmatpush2.msra.mxu0 0.0
    %7268 = vmatprep.subr.mxu0 0.0
    %7269 = vmatpush2.msra.mxu0 0.0
    %7270 = vmatprep.subr.mxu0 0.0
    %7271 = vmatpush2.msra.mxu0 0.0
    %7272 = vmatprep.subr.mxu0 0.0
    %7273 = vmatpush2.msra.mxu0 0.0
    %7274 = vmatprep.mubr.f32.mxu0 0.0
    %7275 = vmatmul.mubr.f32.gmra.mxu0 %v7208
    %v7276 = vpop.f32.mrf.mxu0
    %v7277 = vadd.f32 0.0, %v7276
    %v7278 = vpop.f32.mrf.mxu0
    %v7279 = vadd.f32 0.0, %v7278
    %7280 = vdwg.mxu0
    %v7282 = vcombine.high %v7277, %v7277
    %v7284 = vunpack.c.l.s4 1966171168
    %v7285 = vunpack.c.0.s8 %v7284
    %v7286 = vlaneseq
    %v7287 = vshrl.u32 %v7286, 7
    %v7288 = vsub.s32 %v7285, %v7287
    %v7289 = vrot.slane %v7277, %v7288
    %v7291 = vunpack.c.l.s4 1966171168
    %v7292 = vunpack.c.0.s8 %v7291
    %v7293 = vlaneseq
    %v7294 = vshrl.u32 %v7293, 7
    %v7295 = vsub.s32 %v7292, %v7294
    %v7296 = vrot.slane %v7282, %v7295
    %v7297 = vcombine.high %v7289, %v7289
    %v7298 = vcombine.high %v7296, %v7296
    %v7300 = vunpack.c.l.s4 1966171168
    %v7301 = vunpack.c.0.s8 %v7300
    %v7302 = vlaneseq
    %v7303 = vshrl.u32 %v7302, 7
    %v7304 = vsub.s32 %v7301, %v7303
    %v7305 = vrot.slane %v7289, %v7304
    %v7307 = vunpack.c.l.s4 1966171168
    %v7308 = vunpack.c.0.s8 %v7307
    %v7309 = vlaneseq
    %v7310 = vshrl.u32 %v7309, 7
    %v7311 = vsub.s32 %v7308, %v7310
    %v7312 = vrot.slane %v7296, %v7311
    %v7314 = vunpack.c.l.s4 1966171168
    %v7315 = vunpack.c.0.s8 %v7314
    %v7316 = vlaneseq
    %v7317 = vshrl.u32 %v7316, 7
    %v7318 = vsub.s32 %v7315, %v7317
    %v7319 = vrot.slane %v7297, %v7318
    %v7321 = vunpack.c.l.s4 1966171168
    %v7322 = vunpack.c.0.s8 %v7321
    %v7323 = vlaneseq
    %v7324 = vshrl.u32 %v7323, 7
    %v7325 = vsub.s32 %v7322, %v7324
    %v7326 = vrot.slane %v7298, %v7325
    %v7327 = vcombine.high %v7305, %v7305
    %v7328 = vcombine.high %v7312, %v7312
    %v7329 = vcombine.high %v7319, %v7319
    %v7330 = vcombine.high %v7326, %v7326
    %v7331 = vlaneseq
    %v7332 = vshrl.u32 %v7331, 7
    %v7333 = vsub.s32 0, %v7332
    %v7334 = vrot.slane %v7305, %v7333
    %v7335 = vlaneseq
    %v7336 = vshrl.u32 %v7335, 7
    %v7337 = vsub.s32 0, %v7336
    %v7338 = vrot.slane %v7319, %v7337
    %v7339 = vlaneseq
    %v7340 = vshrl.u32 %v7339, 7
    %v7341 = vsub.s32 0, %v7340
    %v7342 = vrot.slane %v7327, %v7341
    %v7343 = vlaneseq
    %v7344 = vshrl.u32 %v7343, 7
    %v7345 = vsub.s32 0, %v7344
    %v7346 = vrot.slane %v7329, %v7345
    %v7347 = vlaneseq
    %v7348 = vshrl.u32 %v7347, 7
    %v7349 = vsub.s32 0, %v7348
    %v7350 = vrot.slane %v7312, %v7349
    %v7351 = vlaneseq
    %v7352 = vshrl.u32 %v7351, 7
    %v7353 = vsub.s32 0, %v7352
    %v7354 = vrot.slane %v7326, %v7353
    %v7355 = vlaneseq
    %v7356 = vshrl.u32 %v7355, 7
    %v7357 = vsub.s32 0, %v7356
    %v7358 = vrot.slane %v7328, %v7357
    %v7359 = vlaneseq
    %v7360 = vshrl.u32 %v7359, 7
    %v7361 = vsub.s32 0, %v7360
    %v7362 = vrot.slane %v7330, %v7361
    %v7371 = vadd.f32 %v142, %v7334
    %v7372 = vadd.f32 %v143, %v7338
    %v7373 = vadd.f32 %v144, %v7342
    %v7374 = vadd.f32 %v145, %v7346
    %v7375 = vadd.f32 %v146, %v7350
    %v7376 = vadd.f32 %v147, %v7354
    %v7377 = vadd.f32 %v148, %v7358
    %v7378 = vadd.f32 %v149, %v7362
    %v7379 = vtanh.pop %v7371
    %v7380 = vtanh.pop %v7372
    %v7381 = vtanh.pop %v7373
    %v7382 = vtanh.pop %v7374
    %v7383 = vtanh.pop %v7375
    %v7384 = vtanh.pop %v7376
    %v7385 = vtanh.pop %v7377
    %v7386 = vtanh.pop %v7378
    %v7387 = vmul.f32 %v7379, %v608
    %v7388 = vmul.f32 %v7380, %v608
    %v7389 = vmul.f32 %v7381, %v608
    %v7390 = vmul.f32 %v7382, %v608
    %v7391 = vmul.f32 %v7383, %v608
    %v7392 = vmul.f32 %v7384, %v608
    %v7393 = vmul.f32 %v7385, %v608
    %v7394 = vmul.f32 %v7386, %v608
    %v7395 = vsel %vm423, %v7387, 0.0
    %7396 = vadd.xlane.f32.xlu0 %v7395
    %v7397 = vpop.xlane.xlu0 %7396
    %v7398 = vsel %vm423, %v7388, 0.0
    %7399 = vadd.xlane.f32.xlu0 %v7398
    %v7400 = vpop.xlane.xlu0 %7399
    %v7401 = vsel %vm423, %v7389, 0.0
    %7402 = vadd.xlane.f32.xlu0 %v7401
    %v7403 = vpop.xlane.xlu0 %7402
    %v7404 = vsel %vm423, %v7390, 0.0
    %7405 = vadd.xlane.f32.xlu0 %v7404
    %v7406 = vpop.xlane.xlu0 %7405
    %v7407 = vsel %vm423, %v7391, 0.0
    %7408 = vadd.xlane.f32.xlu0 %v7407
    %v7409 = vpop.xlane.xlu0 %7408
    %v7410 = vsel %vm423, %v7392, 0.0
    %7411 = vadd.xlane.f32.xlu0 %v7410
    %v7412 = vpop.xlane.xlu0 %7411
    %v7413 = vsel %vm423, %v7393, 0.0
    %7414 = vadd.xlane.f32.xlu0 %v7413
    %v7415 = vpop.xlane.xlu0 %7414
    %v7416 = vsel %vm423, %v7394, 0.0
    %7417 = vadd.xlane.f32.xlu0 %v7416
    %v7418 = vpop.xlane.xlu0 %7417
    %v7427 = vlaneseq
    %v7428 = vshrl.u32 %v7427, 7
    %v7429 = vsub.s32 %v651, %v7428
    %v7430 = vrot.slane %v7397, %v7429
    %v7431 = vlaneseq
    %v7432 = vshrl.u32 %v7431, 7
    %v7433 = vsub.s32 %v651, %v7432
    %v7434 = vrot.slane %v7400, %v7433
    %v7435 = vlaneseq
    %v7436 = vshrl.u32 %v7435, 7
    %v7437 = vsub.s32 %v651, %v7436
    %v7438 = vrot.slane %v7403, %v7437
    %v7439 = vlaneseq
    %v7440 = vshrl.u32 %v7439, 7
    %v7441 = vsub.s32 %v651, %v7440
    %v7442 = vrot.slane %v7406, %v7441
    %v7443 = vlaneseq
    %v7444 = vshrl.u32 %v7443, 7
    %v7445 = vsub.s32 %v651, %v7444
    %v7446 = vrot.slane %v7409, %v7445
    %v7447 = vlaneseq
    %v7448 = vshrl.u32 %v7447, 7
    %v7449 = vsub.s32 %v651, %v7448
    %v7450 = vrot.slane %v7412, %v7449
    %v7451 = vlaneseq
    %v7452 = vshrl.u32 %v7451, 7
    %v7453 = vsub.s32 %v651, %v7452
    %v7454 = vrot.slane %v7415, %v7453
    %v7455 = vlaneseq
    %v7456 = vshrl.u32 %v7455, 7
    %v7457 = vsub.s32 %v651, %v7456
    %v7458 = vrot.slane %v7418, %v7457
    %v7459 = vsel %vm684, %v7434, %v7430
    %v7460 = vsel %vm686, %v7438, %v7459
    %v7461 = vsel %vm688, %v7442, %v7460
    %v7462 = vsel %vm690, %v7446, %v7461
    %v7463 = vsel %vm692, %v7450, %v7462
    %v7464 = vsel %vm694, %v7454, %v7463
    %v7465 = vsel %vm696, %v7458, %v7464
    %v7467 = vsel %vm699, %v7465, -inf
    %7468 = vmax.xlane.f32.xlu0 %v7467
    %v7469 = vpop.xlane.xlu0 %7468
    %v7471 = vlaneseq
    %v7472 = vshrl.u32 %v7471, 7
    %v7473 = vsub.s32 0, %v7472
    %v7474 = vrot.slane %v7469, %v7473
    %v7475 = vlaneseq
    %v7476 = vshrl.u32 %v7475, 7
    %v7477 = vsub.s32 1, %v7476
    %v7478 = vrot.slane %v7469, %v7477
    %v7479 = vlaneseq
    %v7480 = vshrl.u32 %v7479, 7
    %v7481 = vsub.s32 2, %v7480
    %v7482 = vrot.slane %v7469, %v7481
    %v7483 = vlaneseq
    %v7484 = vshrl.u32 %v7483, 7
    %v7485 = vsub.s32 3, %v7484
    %v7486 = vrot.slane %v7469, %v7485
    %v7487 = vlaneseq
    %v7488 = vshrl.u32 %v7487, 7
    %v7489 = vsub.s32 4, %v7488
    %v7490 = vrot.slane %v7469, %v7489
    %v7491 = vlaneseq
    %v7492 = vshrl.u32 %v7491, 7
    %v7493 = vsub.s32 5, %v7492
    %v7494 = vrot.slane %v7469, %v7493
    %v7495 = vlaneseq
    %v7496 = vshrl.u32 %v7495, 7
    %v7497 = vsub.s32 6, %v7496
    %v7498 = vrot.slane %v7469, %v7497
    %v7499 = vlaneseq
    %v7500 = vshrl.u32 %v7499, 7
    %v7501 = vsub.s32 7, %v7500
    %v7502 = vrot.slane %v7469, %v7501
    %v7511 = vsub.f32 %v7397, %v7474
    %v7512 = vsub.f32 %v7400, %v7478
    %v7513 = vsub.f32 %v7403, %v7482
    %v7514 = vsub.f32 %v7406, %v7486
    %v7515 = vsub.f32 %v7409, %v7490
    %v7516 = vsub.f32 %v7412, %v7494
    %v7517 = vsub.f32 %v7415, %v7498
    %v7518 = vsub.f32 %v7418, %v7502
    %v7519 = vmul.f32 %v7511, 1.442695
    %v7520 = vpow.pop %v7519
    %v7521 = vmul.f32 %v7512, 1.442695
    %v7522 = vpow.pop %v7521
    %v7523 = vmul.f32 %v7513, 1.442695
    %v7524 = vpow.pop %v7523
    %v7525 = vmul.f32 %v7514, 1.442695
    %v7526 = vpow.pop %v7525
    %v7527 = vmul.f32 %v7515, 1.442695
    %v7528 = vpow.pop %v7527
    %v7529 = vmul.f32 %v7516, 1.442695
    %v7530 = vpow.pop %v7529
    %v7531 = vmul.f32 %v7517, 1.442695
    %v7532 = vpow.pop %v7531
    %v7533 = vmul.f32 %v7518, 1.442695
    %v7534 = vpow.pop %v7533
    %7543 = vset.pattern.permute.xlu0 0
    %7544 = vperm.xlu0 %7543, %v7520
    %v7545 = vpop.permute.xlu0 %7544
    %7546 = vset.pattern.permute.xlu0 0
    %7547 = vperm.xlu0 %7546, %v7522
    %v7548 = vpop.permute.xlu0 %7547
    %7549 = vset.pattern.permute.xlu0 0
    %7550 = vperm.xlu0 %7549, %v7524
    %v7551 = vpop.permute.xlu0 %7550
    %7552 = vset.pattern.permute.xlu0 0
    %7553 = vperm.xlu0 %7552, %v7526
    %v7554 = vpop.permute.xlu0 %7553
    %7555 = vset.pattern.permute.xlu0 0
    %7556 = vperm.xlu0 %7555, %v7528
    %v7557 = vpop.permute.xlu0 %7556
    %7558 = vset.pattern.permute.xlu0 0
    %7559 = vperm.xlu0 %7558, %v7530
    %v7560 = vpop.permute.xlu0 %7559
    %7561 = vset.pattern.permute.xlu0 0
    %7562 = vperm.xlu0 %7561, %v7532
    %v7563 = vpop.permute.xlu0 %7562
    %7564 = vset.pattern.permute.xlu0 0
    %7565 = vperm.xlu0 %7564, %v7534
    %v7566 = vpop.permute.xlu0 %7565
    %v7567 = vlaneseq
    %v7568 = vshrl.u32 %v7567, 7
    %v7569 = vsub.s32 %v651, %v7568
    %v7570 = vrot.slane %v7545, %v7569
    %v7571 = vlaneseq
    %v7572 = vshrl.u32 %v7571, 7
    %v7573 = vsub.s32 %v651, %v7572
    %v7574 = vrot.slane %v7548, %v7573
    %v7575 = vlaneseq
    %v7576 = vshrl.u32 %v7575, 7
    %v7577 = vsub.s32 %v651, %v7576
    %v7578 = vrot.slane %v7551, %v7577
    %v7579 = vlaneseq
    %v7580 = vshrl.u32 %v7579, 7
    %v7581 = vsub.s32 %v651, %v7580
    %v7582 = vrot.slane %v7554, %v7581
    %v7583 = vlaneseq
    %v7584 = vshrl.u32 %v7583, 7
    %v7585 = vsub.s32 %v651, %v7584
    %v7586 = vrot.slane %v7557, %v7585
    %v7587 = vlaneseq
    %v7588 = vshrl.u32 %v7587, 7
    %v7589 = vsub.s32 %v651, %v7588
    %v7590 = vrot.slane %v7560, %v7589
    %v7591 = vlaneseq
    %v7592 = vshrl.u32 %v7591, 7
    %v7593 = vsub.s32 %v651, %v7592
    %v7594 = vrot.slane %v7563, %v7593
    %v7595 = vlaneseq
    %v7596 = vshrl.u32 %v7595, 7
    %v7597 = vsub.s32 %v651, %v7596
    %v7598 = vrot.slane %v7566, %v7597
    %v7599 = vsel %vm684, %v7574, %v7570
    %v7600 = vsel %vm686, %v7578, %v7599
    %v7601 = vsel %vm688, %v7582, %v7600
    %v7602 = vsel %vm690, %v7586, %v7601
    %v7603 = vsel %vm692, %v7590, %v7602
    %v7604 = vsel %vm694, %v7594, %v7603
    %v7605 = vsel %vm696, %v7598, %v7604
    %v7607 = vsel %vm699, %v7605, 0.0
    %7608 = vadd.xlane.f32.xlu0 %v7607
    %v7609 = vpop.xlane.xlu0 %7608
    %v7610 = vrcp.pop %v7609
    %v7612 = vlaneseq
    %v7613 = vshrl.u32 %v7612, 7
    %v7614 = vsub.s32 0, %v7613
    %v7615 = vrot.slane %v7610, %v7614
    %v7616 = vlaneseq
    %v7617 = vshrl.u32 %v7616, 7
    %v7618 = vsub.s32 1, %v7617
    %v7619 = vrot.slane %v7610, %v7618
    %v7620 = vlaneseq
    %v7621 = vshrl.u32 %v7620, 7
    %v7622 = vsub.s32 2, %v7621
    %v7623 = vrot.slane %v7610, %v7622
    %v7624 = vlaneseq
    %v7625 = vshrl.u32 %v7624, 7
    %v7626 = vsub.s32 3, %v7625
    %v7627 = vrot.slane %v7610, %v7626
    %v7628 = vlaneseq
    %v7629 = vshrl.u32 %v7628, 7
    %v7630 = vsub.s32 4, %v7629
    %v7631 = vrot.slane %v7610, %v7630
    %v7632 = vlaneseq
    %v7633 = vshrl.u32 %v7632, 7
    %v7634 = vsub.s32 5, %v7633
    %v7635 = vrot.slane %v7610, %v7634
    %v7636 = vlaneseq
    %v7637 = vshrl.u32 %v7636, 7
    %v7638 = vsub.s32 6, %v7637
    %v7639 = vrot.slane %v7610, %v7638
    %v7640 = vlaneseq
    %v7641 = vshrl.u32 %v7640, 7
    %v7642 = vsub.s32 7, %v7641
    %v7643 = vrot.slane %v7610, %v7642
    %v7652 = vmul.f32 %v7520, %v7615
    %v7653 = vmul.f32 %v7522, %v7619
    %v7654 = vmul.f32 %v7524, %v7623
    %v7655 = vmul.f32 %v7526, %v7627
    %v7656 = vmul.f32 %v7528, %v7631
    %v7657 = vmul.f32 %v7530, %v7635
    %v7658 = vmul.f32 %v7532, %v7639
    %v7659 = vmul.f32 %v7534, %v7643
    %7661 = vset.pattern.permute.xlu0 0
    %7662 = vperm.xlu0 %7661, %v7652
    %v7663 = vpop.permute.xlu0 %7662
    %7666 = vset.pattern.permute.xlu0 0
    %7667 = vperm.xlu0 %7666, %v7653
    %v7668 = vpop.permute.xlu0 %7667
    %7671 = vset.pattern.permute.xlu0 0
    %7672 = vperm.xlu0 %7671, %v7654
    %v7673 = vpop.permute.xlu0 %7672
    %7676 = vset.pattern.permute.xlu0 0
    %7677 = vperm.xlu0 %7676, %v7655
    %v7678 = vpop.permute.xlu0 %7677
    %7681 = vset.pattern.permute.xlu0 0
    %7682 = vperm.xlu0 %7681, %v7656
    %v7683 = vpop.permute.xlu0 %7682
    %7686 = vset.pattern.permute.xlu0 0
    %7687 = vperm.xlu0 %7686, %v7657
    %v7688 = vpop.permute.xlu0 %7687
    %7691 = vset.pattern.permute.xlu0 0
    %7692 = vperm.xlu0 %7691, %v7658
    %v7693 = vpop.permute.xlu0 %7692
    %7696 = vset.pattern.permute.xlu0 0
    %7697 = vperm.xlu0 %7696, %v7659
    %v7698 = vpop.permute.xlu0 %7697
    %v7700 = vmul.f32 %v134, %v7663
    %v7701 = vmul.f32 %v135, %v7668
    %v7702 = vmul.f32 %v136, %v7673
    %v7703 = vmul.f32 %v137, %v7678
    %v7704 = vmul.f32 %v138, %v7683
    %v7705 = vmul.f32 %v139, %v7688
    %v7706 = vmul.f32 %v140, %v7693
    %v7707 = vmul.f32 %v141, %v7698
    %v7708 = vsel %vm423, %v7700, 0.0
    %v7709 = vrot.slane %v7708, 4
    %v7710 = vadd.f32 %v7708, %v7709
    %v7711 = vrot.slane %v7710, 2
    %v7712 = vadd.f32 %v7710, %v7711
    %v7713 = vrot.slane %v7712, 1
    %v7714 = vadd.f32 %v7712, %v7713
    %v7715 = vsel %vm423, %v7701, 0.0
    %v7716 = vrot.slane %v7715, 4
    %v7717 = vadd.f32 %v7715, %v7716
    %v7718 = vrot.slane %v7717, 2
    %v7719 = vadd.f32 %v7717, %v7718
    %v7720 = vrot.slane %v7719, 1
    %v7721 = vadd.f32 %v7719, %v7720
    %v7722 = vsel %vm423, %v7702, 0.0
    %v7723 = vrot.slane %v7722, 4
    %v7724 = vadd.f32 %v7722, %v7723
    %v7725 = vrot.slane %v7724, 2
    %v7726 = vadd.f32 %v7724, %v7725
    %v7727 = vrot.slane %v7726, 1
    %v7728 = vadd.f32 %v7726, %v7727
    %v7729 = vsel %vm423, %v7703, 0.0
    %v7730 = vrot.slane %v7729, 4
    %v7731 = vadd.f32 %v7729, %v7730
    %v7732 = vrot.slane %v7731, 2
    %v7733 = vadd.f32 %v7731, %v7732
    %v7734 = vrot.slane %v7733, 1
    %v7735 = vadd.f32 %v7733, %v7734
    %v7736 = vsel %vm423, %v7704, 0.0
    %v7737 = vrot.slane %v7736, 4
    %v7738 = vadd.f32 %v7736, %v7737
    %v7739 = vrot.slane %v7738, 2
    %v7740 = vadd.f32 %v7738, %v7739
    %v7741 = vrot.slane %v7740, 1
    %v7742 = vadd.f32 %v7740, %v7741
    %v7743 = vsel %vm423, %v7705, 0.0
    %v7744 = vrot.slane %v7743, 4
    %v7745 = vadd.f32 %v7743, %v7744
    %v7746 = vrot.slane %v7745, 2
    %v7747 = vadd.f32 %v7745, %v7746
    %v7748 = vrot.slane %v7747, 1
    %v7749 = vadd.f32 %v7747, %v7748
    %v7750 = vsel %vm423, %v7706, 0.0
    %v7751 = vrot.slane %v7750, 4
    %v7752 = vadd.f32 %v7750, %v7751
    %v7753 = vrot.slane %v7752, 2
    %v7754 = vadd.f32 %v7752, %v7753
    %v7755 = vrot.slane %v7754, 1
    %v7756 = vadd.f32 %v7754, %v7755
    %v7757 = vsel %vm423, %v7707, 0.0
    %v7758 = vrot.slane %v7757, 4
    %v7759 = vadd.f32 %v7757, %v7758
    %v7760 = vrot.slane %v7759, 2
    %v7761 = vadd.f32 %v7759, %v7760
    %v7762 = vrot.slane %v7761, 1
    %v7763 = vadd.f32 %v7761, %v7762
    %v7764 = vld [vmem:[#allocation9 + $0x7] sm:$0x1]
    %v7765 = vld [vmem:[#allocation9 + $0xf] sm:$0x1]
    %v7766 = vld [vmem:[#allocation9 + $0x17] sm:$0x1]
    %v7767 = vld [vmem:[#allocation9 + $0x1f] sm:$0x1]
    %v7768 = vld [vmem:[#allocation9 + $0x27] sm:$0x1]
    %v7769 = vld [vmem:[#allocation9 + $0x2f] sm:$0x1]
    %v7770 = vld [vmem:[#allocation9 + $0x37] sm:$0x1]
    %v7771 = vld [vmem:[#allocation9 + $0x3f] sm:$0x1]
    %v7780 = vsel %vm684, %v7721, %v7714
    %v7781 = vsel %vm686, %v7728, %v7780
    %v7782 = vsel %vm688, %v7735, %v7781
    %v7783 = vsel %vm690, %v7742, %v7782
    %v7784 = vsel %vm692, %v7749, %v7783
    %v7785 = vsel %vm694, %v7756, %v7784
    %v7786 = vsel %vm696, %v7763, %v7785
    %v7787 = vsel %vm423, %v7786, 0
    %7789 = vmatprep.subr.mxu0 0.0
    %7790 = vmatpush1.msra.mxu0 0.0
    %7791 = vmatprep.subr.mxu0 0.0
    %7792 = vmatpush1.msra.mxu0 0.0
    %7793 = vmatprep.subr.mxu0 0.0
    %7794 = vmatpush1.msra.mxu0 0.0
    %7795 = vmatprep.subr.mxu0 0.0
    %7796 = vmatpush1.msra.mxu0 0.0
    %7797 = vmatprep.subr.mxu0 0.0
    %7798 = vmatpush1.msra.mxu0 0.0
    %7799 = vmatprep.subr.mxu0 0.0
    %7800 = vmatpush1.msra.mxu0 0.0
    %7801 = vmatprep.subr.mxu0 0.0
    %7802 = vmatpush1.msra.mxu0 0.0
    %7803 = vmatprep.subr.mxu0 0.0
    %7804 = vmatpush1.msra.mxu0 0.0
    %7805 = vmatprep.subr.mxu0 0.0
    %7806 = vmatpush1.msra.mxu0 0.0
    %7807 = vmatprep.subr.mxu0 0.0
    %7808 = vmatpush1.msra.mxu0 0.0
    %7809 = vmatprep.subr.mxu0 0.0
    %7810 = vmatpush1.msra.mxu0 0.0
    %7811 = vmatprep.subr.mxu0 0.0
    %7812 = vmatpush1.msra.mxu0 0.0
    %7813 = vmatprep.subr.mxu0 0.0
    %7814 = vmatpush1.msra.mxu0 %v420
    %7815 = vmatprep.subr.mxu0 0.0
    %7816 = vmatpush1.msra.mxu0 %v419
    %7817 = vmatprep.subr.mxu0 0.0
    %7818 = vmatpush1.msra.mxu0 %v418
    %7819 = vmatprep.subr.mxu0 0.0
    %7820 = vmatpush1.msra.mxu0 %v417
    %7821 = vmatprep.subr.mxu0 0.0
    %7822 = vmatpush2.msra.mxu0 0.0
    %7823 = vmatprep.subr.mxu0 0.0
    %7824 = vmatpush2.msra.mxu0 0.0
    %7825 = vmatprep.subr.mxu0 0.0
    %7826 = vmatpush2.msra.mxu0 0.0
    %7827 = vmatprep.subr.mxu0 0.0
    %7828 = vmatpush2.msra.mxu0 0.0
    %7829 = vmatprep.subr.mxu0 0.0
    %7830 = vmatpush2.msra.mxu0 0.0
    %7831 = vmatprep.subr.mxu0 0.0
    %7832 = vmatpush2.msra.mxu0 0.0
    %7833 = vmatprep.subr.mxu0 0.0
    %7834 = vmatpush2.msra.mxu0 0.0
    %7835 = vmatprep.subr.mxu0 0.0
    %7836 = vmatpush2.msra.mxu0 0.0
    %7837 = vmatprep.subr.mxu0 0.0
    %7838 = vmatpush2.msra.mxu0 0.0
    %7839 = vmatprep.subr.mxu0 0.0
    %7840 = vmatpush2.msra.mxu0 0.0
    %7841 = vmatprep.subr.mxu0 0.0
    %7842 = vmatpush2.msra.mxu0 0.0
    %7843 = vmatprep.subr.mxu0 0.0
    %7844 = vmatpush2.msra.mxu0 0.0
    %7845 = vmatprep.subr.mxu0 0.0
    %7846 = vmatpush2.msra.mxu0 0.0
    %7847 = vmatprep.subr.mxu0 0.0
    %7848 = vmatpush2.msra.mxu0 0.0
    %7849 = vmatprep.subr.mxu0 0.0
    %7850 = vmatpush2.msra.mxu0 0.0
    %7851 = vmatprep.subr.mxu0 0.0
    %7852 = vmatpush2.msra.mxu0 0.0
    %7853 = vmatprep.mubr.f32.mxu0 0.0
    %7854 = vmatmul.mubr.f32.gmra.mxu0 %v7787
    %v7855 = vpop.f32.mrf.mxu0
    %v7856 = vadd.f32 0.0, %v7855
    %v7857 = vpop.f32.mrf.mxu0
    %7858 = vdwg.mxu0
    %v7860 = vrot.slane %v7856, 1
    %v7861 = vrot.slane %v7856, 2
    %v7862 = vrot.slane %v7856, 3
    %v7863 = vrot.slane %v7856, 4
    %v7864 = vrot.slane %v7856, 5
    %v7865 = vrot.slane %v7856, 6
    %v7866 = vrot.slane %v7856, 7
    %v7875 = vadd.f32 %v7764, %v7856
    %v7876 = vadd.f32 %v7765, %v7860
    %v7877 = vadd.f32 %v7766, %v7861
    %v7878 = vadd.f32 %v7767, %v7862
    %v7879 = vadd.f32 %v7768, %v7863
    %v7880 = vadd.f32 %v7769, %v7864
    %v7881 = vadd.f32 %v7770, %v7865
    %v7882 = vadd.f32 %v7771, %v7866
    %v7884 = vrot.slane %v7277, 1
    %v7885 = vrot.slane %v7279, 1
    %v7886 = vrot.slane %v7277, 2
    %v7887 = vrot.slane %v7279, 2
    %v7888 = vrot.slane %v7277, 3
    %v7889 = vrot.slane %v7279, 3
    %v7890 = vrot.slane %v7277, 4
    %v7891 = vrot.slane %v7279, 4
    %v7892 = vrot.slane %v7277, 5
    %v7893 = vrot.slane %v7279, 5
    %v7894 = vrot.slane %v7277, 6
    %v7895 = vrot.slane %v7279, 6
    %v7896 = vrot.slane %v7277, 7
    %v7897 = vrot.slane %v7279, 7
    %7898 = vrot.lane.b32.xlu0 %v7277, 96
    %v7899 = vpop.permute.xlu0 %7898
    %7900 = vrot.lane.b32.xlu0 %v7279, 96
    %v7901 = vpop.permute.xlu0 %7900
    %7902 = vrot.lane.b32.xlu0 %v7884, 96
    %v7903 = vpop.permute.xlu0 %7902
    %7904 = vrot.lane.b32.xlu0 %v7885, 96
    %v7905 = vpop.permute.xlu0 %7904
    %7906 = vrot.lane.b32.xlu0 %v7886, 96
    %v7907 = vpop.permute.xlu0 %7906
    %7908 = vrot.lane.b32.xlu0 %v7887, 96
    %v7909 = vpop.permute.xlu0 %7908
    %7910 = vrot.lane.b32.xlu0 %v7888, 96
    %v7911 = vpop.permute.xlu0 %7910
    %7912 = vrot.lane.b32.xlu0 %v7889, 96
    %v7913 = vpop.permute.xlu0 %7912
    %7914 = vrot.lane.b32.xlu0 %v7890, 96
    %v7915 = vpop.permute.xlu0 %7914
    %7916 = vrot.lane.b32.xlu0 %v7891, 96
    %v7917 = vpop.permute.xlu0 %7916
    %7918 = vrot.lane.b32.xlu0 %v7892, 96
    %v7919 = vpop.permute.xlu0 %7918
    %7920 = vrot.lane.b32.xlu0 %v7893, 96
    %v7921 = vpop.permute.xlu0 %7920
    %7922 = vrot.lane.b32.xlu0 %v7894, 96
    %v7923 = vpop.permute.xlu0 %7922
    %7924 = vrot.lane.b32.xlu0 %v7895, 96
    %v7925 = vpop.permute.xlu0 %7924
    %7926 = vrot.lane.b32.xlu0 %v7896, 96
    %v7927 = vpop.permute.xlu0 %7926
    %7928 = vrot.lane.b32.xlu0 %v7897, 96
    %v7929 = vpop.permute.xlu0 %7928
    %v7930 = vsel %vm1163, %v7899, %v7901
    %v7931 = vsel %vm1163, %v7903, %v7905
    %v7932 = vsel %vm1163, %v7907, %v7909
    %v7933 = vsel %vm1163, %v7911, %v7913
    %v7934 = vsel %vm1163, %v7915, %v7917
    %v7935 = vsel %vm1163, %v7919, %v7921
    %v7936 = vsel %vm1163, %v7923, %v7925
    %v7937 = vsel %vm1163, %v7927, %v7929
    %v7946 = vadd.f32 %v7875, %v7930
    %v7947 = vadd.f32 %v7876, %v7931
    %v7948 = vadd.f32 %v7877, %v7932
    %v7949 = vadd.f32 %v7878, %v7933
    %v7950 = vadd.f32 %v7879, %v7934
    %v7951 = vadd.f32 %v7880, %v7935
    %v7952 = vadd.f32 %v7881, %v7936
    %v7953 = vadd.f32 %v7882, %v7937
    %v7954 = vxor.u32 %v7946, 2147483648
    %v7955 = vxor.u32 %v7947, 2147483648
    %v7956 = vxor.u32 %v7948, 2147483648
    %v7957 = vxor.u32 %v7949, 2147483648
    %v7958 = vxor.u32 %v7950, 2147483648
    %v7959 = vxor.u32 %v7951, 2147483648
    %v7960 = vxor.u32 %v7952, 2147483648
    %v7961 = vxor.u32 %v7953, 2147483648
    %v7962 = vmul.f32 %v7954, 1.442695
    %v7963 = vpow.pop %v7962
    %v7964 = vmul.f32 %v7955, 1.442695
    %v7965 = vpow.pop %v7964
    %v7966 = vmul.f32 %v7956, 1.442695
    %v7967 = vpow.pop %v7966
    %v7968 = vmul.f32 %v7957, 1.442695
    %v7969 = vpow.pop %v7968
    %v7970 = vmul.f32 %v7958, 1.442695
    %v7971 = vpow.pop %v7970
    %v7972 = vmul.f32 %v7959, 1.442695
    %v7973 = vpow.pop %v7972
    %v7974 = vmul.f32 %v7960, 1.442695
    %v7975 = vpow.pop %v7974
    %v7976 = vmul.f32 %v7961, 1.442695
    %v7977 = vpow.pop %v7976
    %v7978 = vadd.f32 %v7963, 1.0
    %v7979 = vadd.f32 %v7965, 1.0
    %v7980 = vadd.f32 %v7967, 1.0
    %v7981 = vadd.f32 %v7969, 1.0
    %v7982 = vadd.f32 %v7971, 1.0
    %v7983 = vadd.f32 %v7973, 1.0
    %v7984 = vadd.f32 %v7975, 1.0
    %v7985 = vadd.f32 %v7977, 1.0
    %v7986 = vrcp.pop %v7978
    %v7987 = vmul.f32 1.0, %v7986
    %v7988 = vrcp.pop %v7979
    %v7989 = vmul.f32 1.0, %v7988
    %v7990 = vrcp.pop %v7980
    %v7991 = vmul.f32 1.0, %v7990
    %v7992 = vrcp.pop %v7981
    %v7993 = vmul.f32 1.0, %v7992
    %v7994 = vrcp.pop %v7982
    %v7995 = vmul.f32 1.0, %v7994
    %v7996 = vrcp.pop %v7983
    %v7997 = vmul.f32 1.0, %v7996
    %v7998 = vrcp.pop %v7984
    %v7999 = vmul.f32 1.0, %v7998
    %v8000 = vrcp.pop %v7985
    %v8001 = vmul.f32 1.0, %v8000
    %v8002 = vtanh.pop %v7946
    %v8003 = vtanh.pop %v7947
    %v8004 = vtanh.pop %v7948
    %v8005 = vtanh.pop %v7949
    %v8006 = vtanh.pop %v7950
    %v8007 = vtanh.pop %v7951
    %v8008 = vtanh.pop %v7952
    %v8009 = vtanh.pop %v7953
    %v8010 = vmul.f32 %v7987, %v7128
    %v8011 = vmul.f32 %v7989, %v7129
    %v8012 = vmul.f32 %v7991, %v7130
    %v8013 = vmul.f32 %v7993, %v7131
    %v8014 = vmul.f32 %v7995, %v7132
    %v8015 = vmul.f32 %v7997, %v7133
    %v8016 = vmul.f32 %v7999, %v7134
    %v8017 = vmul.f32 %v8001, %v7135
    %8026 = vrot.lane.b32.xlu0 %v8002, 64
    %v8027 = vpop.permute.xlu0 %8026
    %8028 = vrot.lane.b32.xlu0 %v8003, 64
    %v8029 = vpop.permute.xlu0 %8028
    %8030 = vrot.lane.b32.xlu0 %v8004, 64
    %v8031 = vpop.permute.xlu0 %8030
    %8032 = vrot.lane.b32.xlu0 %v8005, 64
    %v8033 = vpop.permute.xlu0 %8032
    %8034 = vrot.lane.b32.xlu0 %v8006, 64
    %v8035 = vpop.permute.xlu0 %8034
    %8036 = vrot.lane.b32.xlu0 %v8007, 64
    %v8037 = vpop.permute.xlu0 %8036
    %8038 = vrot.lane.b32.xlu0 %v8008, 64
    %v8039 = vpop.permute.xlu0 %8038
    %8040 = vrot.lane.b32.xlu0 %v8009, 64
    %v8041 = vpop.permute.xlu0 %8040
    %v8050 = vmul.f32 %v7987, %v8027
    %v8051 = vmul.f32 %v7989, %v8029
    %v8052 = vmul.f32 %v7991, %v8031
    %v8053 = vmul.f32 %v7993, %v8033
    %v8054 = vmul.f32 %v7995, %v8035
    %v8055 = vmul.f32 %v7997, %v8037
    %v8056 = vmul.f32 %v7999, %v8039
    %v8057 = vmul.f32 %v8001, %v8041
    %8066 = vrot.lane.b32.xlu0 %v8050, 32
    %v8067 = vpop.permute.xlu0 %8066
    %8068 = vrot.lane.b32.xlu0 %v8051, 32
    %v8069 = vpop.permute.xlu0 %8068
    %8070 = vrot.lane.b32.xlu0 %v8052, 32
    %v8071 = vpop.permute.xlu0 %8070
    %8072 = vrot.lane.b32.xlu0 %v8053, 32
    %v8073 = vpop.permute.xlu0 %8072
    %8074 = vrot.lane.b32.xlu0 %v8054, 32
    %v8075 = vpop.permute.xlu0 %8074
    %8076 = vrot.lane.b32.xlu0 %v8055, 32
    %v8077 = vpop.permute.xlu0 %8076
    %8078 = vrot.lane.b32.xlu0 %v8056, 32
    %v8079 = vpop.permute.xlu0 %8078
    %8080 = vrot.lane.b32.xlu0 %v8057, 32
    %v8081 = vpop.permute.xlu0 %8080
    %v8090 = vadd.f32 %v8010, %v8067
    %v8091 = vadd.f32 %v8011, %v8069
    %v8092 = vadd.f32 %v8012, %v8071
    %v8093 = vadd.f32 %v8013, %v8073
    %v8094 = vadd.f32 %v8014, %v8075
    %v8095 = vadd.f32 %v8015, %v8077
    %v8096 = vadd.f32 %v8016, %v8079
    %v8097 = vadd.f32 %v8017, %v8081
    %v8098 = vtanh.pop %v8090
    %v8099 = vtanh.pop %v8091
    %v8100 = vtanh.pop %v8092
    %v8101 = vtanh.pop %v8093
    %v8102 = vtanh.pop %v8094
    %v8103 = vtanh.pop %v8095
    %v8104 = vtanh.pop %v8096
    %v8105 = vtanh.pop %v8097
    %8114 = vrot.lane.b32.xlu0 %v8098, 64
    %v8115 = vpop.permute.xlu0 %8114
    %8116 = vrot.lane.b32.xlu0 %v8099, 64
    %v8117 = vpop.permute.xlu0 %8116
    %8118 = vrot.lane.b32.xlu0 %v8100, 64
    %v8119 = vpop.permute.xlu0 %8118
    %8120 = vrot.lane.b32.xlu0 %v8101, 64
    %v8121 = vpop.permute.xlu0 %8120
    %8122 = vrot.lane.b32.xlu0 %v8102, 64
    %v8123 = vpop.permute.xlu0 %8122
    %8124 = vrot.lane.b32.xlu0 %v8103, 64
    %v8125 = vpop.permute.xlu0 %8124
    %8126 = vrot.lane.b32.xlu0 %v8104, 64
    %v8127 = vpop.permute.xlu0 %8126
    %8128 = vrot.lane.b32.xlu0 %v8105, 64
    %v8129 = vpop.permute.xlu0 %8128
    %v8138 = vmul.f32 %v7987, %v8115
    %v8139 = vmul.f32 %v7989, %v8117
    %v8140 = vmul.f32 %v7991, %v8119
    %v8141 = vmul.f32 %v7993, %v8121
    %v8142 = vmul.f32 %v7995, %v8123
    %v8143 = vmul.f32 %v7997, %v8125
    %v8144 = vmul.f32 %v7999, %v8127
    %v8145 = vmul.f32 %v8001, %v8129
    %v8154 = vrot.slane %v8139, 7
    %v8155 = vsel %vm684, %v8154, %v8138
    %v8156 = vrot.slane %v8140, 6
    %v8157 = vsel %vm686, %v8156, %v8155
    %v8158 = vrot.slane %v8141, 5
    %v8159 = vsel %vm688, %v8158, %v8157
    %v8160 = vrot.slane %v8142, 4
    %v8161 = vsel %vm690, %v8160, %v8159
    %v8162 = vrot.slane %v8143, 3
    %v8163 = vsel %vm692, %v8162, %v8161
    %v8164 = vrot.slane %v8144, 2
    %v8165 = vsel %vm694, %v8164, %v8163
    %v8166 = vrot.slane %v8145, 1
    %v8167 = vsel %vm696, %v8166, %v8165
    %8168 = vrot.lane.b32.xlu0 %v8167, 32
    %v8169 = vpop.permute.xlu0 %8168
    %8171 = vst.msk [vmem:[#allocation2] sm:$0xff] %vm423, %v8169
    %v8180 = vrot.slane %v8091, 7
    %v8181 = vsel %vm684, %v8180, %v8090
    %v8182 = vrot.slane %v8092, 6
    %v8183 = vsel %vm686, %v8182, %v8181
    %v8184 = vrot.slane %v8093, 5
    %v8185 = vsel %vm688, %v8184, %v8183
    %v8186 = vrot.slane %v8094, 4
    %v8187 = vsel %vm690, %v8186, %v8185
    %v8188 = vrot.slane %v8095, 3
    %v8189 = vsel %vm692, %v8188, %v8187
    %v8190 = vrot.slane %v8096, 2
    %v8191 = vsel %vm694, %v8190, %v8189
    %v8192 = vrot.slane %v8097, 1
    %v8193 = vsel %vm696, %v8192, %v8191
    %8194 = vrot.lane.b32.xlu0 %v8193, 96
    %v8195 = vpop.permute.xlu0 %8194
    %8197 = vst.msk [vmem:[#allocation3] sm:$0xff] %vm423, %v8195
    %v8198 = vrot.slane %v2366, 7
    %v8199 = vrot.slane %v2368, 7
    %v8200 = vrot.slane %v2369, 7
    %v8201 = vrot.slane %v2370, 7
    %v8202 = vrot.slane %v2371, 7
    %v8203 = vrot.slane %v2372, 7
    %v8204 = vrot.slane %v2373, 7
    %v8213 = vrot.slane %v3328, 6
    %v8214 = vrot.slane %v3329, 6
    %v8215 = vrot.slane %v3331, 6
    %v8216 = vrot.slane %v3332, 6
    %v8217 = vrot.slane %v3333, 6
    %v8218 = vrot.slane %v3334, 6
    %v8219 = vrot.slane %v3335, 6
    %v8228 = vrot.slane %v4290, 5
    %v8229 = vrot.slane %v4291, 5
    %v8230 = vrot.slane %v4292, 5
    %v8231 = vrot.slane %v4294, 5
    %v8232 = vrot.slane %v4295, 5
    %v8233 = vrot.slane %v4296, 5
    %v8234 = vrot.slane %v4297, 5
    %v8243 = vrot.slane %v5252, 4
    %v8244 = vrot.slane %v5253, 4
    %v8245 = vrot.slane %v5254, 4
    %v8246 = vrot.slane %v5255, 4
    %v8247 = vrot.slane %v5257, 4
    %v8248 = vrot.slane %v5258, 4
    %v8249 = vrot.slane %v5259, 4
    %v8258 = vrot.slane %v6214, 3
    %v8259 = vrot.slane %v6215, 3
    %v8260 = vrot.slane %v6216, 3
    %v8261 = vrot.slane %v6217, 3
    %v8262 = vrot.slane %v6218, 3
    %v8263 = vrot.slane %v6220, 3
    %v8264 = vrot.slane %v6221, 3
    %v8273 = vrot.slane %v7176, 2
    %v8274 = vrot.slane %v7177, 2
    %v8275 = vrot.slane %v7178, 2
    %v8276 = vrot.slane %v7179, 2
    %v8277 = vrot.slane %v7180, 2
    %v8278 = vrot.slane %v7181, 2
    %v8279 = vrot.slane %v7183, 2
    %v8288 = vrot.slane %v8138, 1
    %v8289 = vrot.slane %v8139, 1
    %v8290 = vrot.slane %v8140, 1
    %v8291 = vrot.slane %v8141, 1
    %v8292 = vrot.slane %v8142, 1
    %v8293 = vrot.slane %v8143, 1
    %v8294 = vrot.slane %v8144, 1
    %vm8303 = vcmask 1040384
    %v8304 = vsel %vm8303, %v1404, %v8198
    %v8305 = vsel %vm8303, %v1405, %v2382
    %v8306 = vsel %vm8303, %v1406, %v8199
    %v8307 = vsel %vm8303, %v1407, %v8200
    %v8308 = vsel %vm8303, %v1408, %v8201
    %v8309 = vsel %vm8303, %v1409, %v8202
    %v8310 = vsel %vm8303, %v1410, %v8203
    %v8311 = vsel %vm8303, %v1411, %v8204
    %vm8312 = vcmask 1041408
    %v8313 = vsel %vm8312, %v8304, %v8213
    %v8314 = vsel %vm8312, %v8305, %v8214
    %v8315 = vsel %vm8312, %v8306, %v3346
    %v8316 = vsel %vm8312, %v8307, %v8215
    %v8317 = vsel %vm8312, %v8308, %v8216
    %v8318 = vsel %vm8312, %v8309, %v8217
    %v8319 = vsel %vm8312, %v8310, %v8218
    %v8320 = vsel %vm8312, %v8311, %v8219
    %vm8321 = vcmask 1042432
    %v8322 = vsel %vm8321, %v8313, %v8228
    %v8323 = vsel %vm8321, %v8314, %v8229
    %v8324 = vsel %vm8321, %v8315, %v8230
    %v8325 = vsel %vm8321, %v8316, %v4310
    %v8326 = vsel %vm8321, %v8317, %v8231
    %v8327 = vsel %vm8321, %v8318, %v8232
    %v8328 = vsel %vm8321, %v8319, %v8233
    %v8329 = vsel %vm8321, %v8320, %v8234
    %vm8330 = vcmask 1043456
    %v8331 = vsel %vm8330, %v8322, %v8243
    %v8332 = vsel %vm8330, %v8323, %v8244
    %v8333 = vsel %vm8330, %v8324, %v8245
    %v8334 = vsel %vm8330, %v8325, %v8246
    %v8335 = vsel %vm8330, %v8326, %v5274
    %v8336 = vsel %vm8330, %v8327, %v8247
    %v8337 = vsel %vm8330, %v8328, %v8248
    %v8338 = vsel %vm8330, %v8329, %v8249
    %vm8339 = vcmask 1044480
    %v8340 = vsel %vm8339, %v8331, %v8258
    %v8341 = vsel %vm8339, %v8332, %v8259
    %v8342 = vsel %vm8339, %v8333, %v8260
    %v8343 = vsel %vm8339, %v8334, %v8261
    %v8344 = vsel %vm8339, %v8335, %v8262
    %v8345 = vsel %vm8339, %v8336, %v6238
    %v8346 = vsel %vm8339, %v8337, %v8263
    %v8347 = vsel %vm8339, %v8338, %v8264
    %vm8348 = vcmask 1045504
    %v8349 = vsel %vm8348, %v8340, %v8273
    %v8350 = vsel %vm8348, %v8341, %v8274
    %v8351 = vsel %vm8348, %v8342, %v8275
    %v8352 = vsel %vm8348, %v8343, %v8276
    %v8353 = vsel %vm8348, %v8344, %v8277
    %v8354 = vsel %vm8348, %v8345, %v8278
    %v8355 = vsel %vm8348, %v8346, %v7202
    %v8356 = vsel %vm8348, %v8347, %v8279
    %vm8357 = vcmask 1046528
    %v8358 = vsel %vm8357, %v8349, %v8288
    %v8359 = vsel %vm8357, %v8350, %v8289
    %v8360 = vsel %vm8357, %v8351, %v8290
    %v8361 = vsel %vm8357, %v8352, %v8291
    %v8362 = vsel %vm8357, %v8353, %v8292
    %v8363 = vsel %vm8357, %v8354, %v8293
    %v8364 = vsel %vm8357, %v8355, %v8294
    %v8365 = vsel %vm8357, %v8356, %v8166
    %8374 = vrot.lane.b32.xlu0 %v8358, 32
    %v8375 = vpop.permute.xlu0 %8374
    %8376 = vrot.lane.b32.xlu0 %v8359, 32
    %v8377 = vpop.permute.xlu0 %8376
    %8378 = vrot.lane.b32.xlu0 %v8360, 32
    %v8379 = vpop.permute.xlu0 %8378
    %8380 = vrot.lane.b32.xlu0 %v8361, 32
    %v8381 = vpop.permute.xlu0 %8380
    %8382 = vrot.lane.b32.xlu0 %v8362, 32
    %v8383 = vpop.permute.xlu0 %8382
    %8384 = vrot.lane.b32.xlu0 %v8363, 32
    %v8385 = vpop.permute.xlu0 %8384
    %8386 = vrot.lane.b32.xlu0 %v8364, 32
    %v8387 = vpop.permute.xlu0 %8386
    %8388 = vrot.lane.b32.xlu0 %v8365, 32
    %v8389 = vpop.permute.xlu0 %8388
    %8398 = vst.msk [vmem:[#allocation16] sm:$0xff] %vm423, %v8375
    %8399 = vst.msk [vmem:[#allocation16 + $0x8] sm:$0xff] %vm423, %v8377
    %8400 = vst.msk [vmem:[#allocation16 + $0x10] sm:$0xff] %vm423, %v8379
    %8401 = vst.msk [vmem:[#allocation16 + $0x18] sm:$0xff] %vm423, %v8381
    %8402 = vst.msk [vmem:[#allocation16 + $0x20] sm:$0xff] %vm423, %v8383
    %8403 = vst.msk [vmem:[#allocation16 + $0x28] sm:$0xff] %vm423, %v8385
    %8404 = vst.msk [vmem:[#allocation16 + $0x30] sm:$0xff] %vm423, %v8387
    %8405 = vst.msk [vmem:[#allocation16 + $0x38] sm:$0xff] %vm423, %v8389
    %v8406 = vlaneseq
    %v8407 = vshrl.u32 %v8406, 7
    %v8408 = vsub.s32 %v651, %v8407
    %v8409 = vrot.slane %v896, %v8408
    %v8410 = vlaneseq
    %v8411 = vshrl.u32 %v8410, 7
    %v8412 = vsub.s32 %v651, %v8411
    %v8413 = vrot.slane %v901, %v8412
    %v8414 = vlaneseq
    %v8415 = vshrl.u32 %v8414, 7
    %v8416 = vsub.s32 %v651, %v8415
    %v8417 = vrot.slane %v906, %v8416
    %v8418 = vlaneseq
    %v8419 = vshrl.u32 %v8418, 7
    %v8420 = vsub.s32 %v651, %v8419
    %v8421 = vrot.slane %v911, %v8420
    %v8422 = vlaneseq
    %v8423 = vshrl.u32 %v8422, 7
    %v8424 = vsub.s32 %v651, %v8423
    %v8425 = vrot.slane %v916, %v8424
    %v8426 = vlaneseq
    %v8427 = vshrl.u32 %v8426, 7
    %v8428 = vsub.s32 %v651, %v8427
    %v8429 = vrot.slane %v921, %v8428
    %v8430 = vlaneseq
    %v8431 = vshrl.u32 %v8430, 7
    %v8432 = vsub.s32 %v651, %v8431
    %v8433 = vrot.slane %v926, %v8432
    %v8434 = vlaneseq
    %v8435 = vshrl.u32 %v8434, 7
    %v8436 = vsub.s32 %v651, %v8435
    %v8437 = vrot.slane %v931, %v8436
    %v8446 = vlaneseq
    %v8447 = vshrl.u32 %v8446, 7
    %v8448 = vsub.s32 %v651, %v8447
    %v8449 = vrot.slane %v1891, %v8448
    %v8450 = vlaneseq
    %v8451 = vshrl.u32 %v8450, 7
    %v8452 = vsub.s32 %v651, %v8451
    %v8453 = vrot.slane %v1896, %v8452
    %v8454 = vlaneseq
    %v8455 = vshrl.u32 %v8454, 7
    %v8456 = vsub.s32 %v651, %v8455
    %v8457 = vrot.slane %v1901, %v8456
    %v8458 = vlaneseq
    %v8459 = vshrl.u32 %v8458, 7
    %v8460 = vsub.s32 %v651, %v8459
    %v8461 = vrot.slane %v1906, %v8460
    %v8462 = vlaneseq
    %v8463 = vshrl.u32 %v8462, 7
    %v8464 = vsub.s32 %v651, %v8463
    %v8465 = vrot.slane %v1911, %v8464
    %v8466 = vlaneseq
    %v8467 = vshrl.u32 %v8466, 7
    %v8468 = vsub.s32 %v651, %v8467
    %v8469 = vrot.slane %v1916, %v8468
    %v8470 = vlaneseq
    %v8471 = vshrl.u32 %v8470, 7
    %v8472 = vsub.s32 %v651, %v8471
    %v8473 = vrot.slane %v1921, %v8472
    %v8474 = vlaneseq
    %v8475 = vshrl.u32 %v8474, 7
    %v8476 = vsub.s32 %v651, %v8475
    %v8477 = vrot.slane %v1926, %v8476
    %v8486 = vlaneseq
    %v8487 = vshrl.u32 %v8486, 7
    %v8488 = vsub.s32 %v651, %v8487
    %v8489 = vrot.slane %v2853, %v8488
    %v8490 = vlaneseq
    %v8491 = vshrl.u32 %v8490, 7
    %v8492 = vsub.s32 %v651, %v8491
    %v8493 = vrot.slane %v2858, %v8492
    %v8494 = vlaneseq
    %v8495 = vshrl.u32 %v8494, 7
    %v8496 = vsub.s32 %v651, %v8495
    %v8497 = vrot.slane %v2863, %v8496
    %v8498 = vlaneseq
    %v8499 = vshrl.u32 %v8498, 7
    %v8500 = vsub.s32 %v651, %v8499
    %v8501 = vrot.slane %v2868, %v8500
    %v8502 = vlaneseq
    %v8503 = vshrl.u32 %v8502, 7
    %v8504 = vsub.s32 %v651, %v8503
    %v8505 = vrot.slane %v2873, %v8504
    %v8506 = vlaneseq
    %v8507 = vshrl.u32 %v8506, 7
    %v8508 = vsub.s32 %v651, %v8507
    %v8509 = vrot.slane %v2878, %v8508
    %v8510 = vlaneseq
    %v8511 = vshrl.u32 %v8510, 7
    %v8512 = vsub.s32 %v651, %v8511
    %v8513 = vrot.slane %v2883, %v8512
    %v8514 = vlaneseq
    %v8515 = vshrl.u32 %v8514, 7
    %v8516 = vsub.s32 %v651, %v8515
    %v8517 = vrot.slane %v2888, %v8516
    %v8526 = vlaneseq
    %v8527 = vshrl.u32 %v8526, 7
    %v8528 = vsub.s32 %v651, %v8527
    %v8529 = vrot.slane %v3815, %v8528
    %v8530 = vlaneseq
    %v8531 = vshrl.u32 %v8530, 7
    %v8532 = vsub.s32 %v651, %v8531
    %v8533 = vrot.slane %v3820, %v8532
    %v8534 = vlaneseq
    %v8535 = vshrl.u32 %v8534, 7
    %v8536 = vsub.s32 %v651, %v8535
    %v8537 = vrot.slane %v3825, %v8536
    %v8538 = vlaneseq
    %v8539 = vshrl.u32 %v8538, 7
    %v8540 = vsub.s32 %v651, %v8539
    %v8541 = vrot.slane %v3830, %v8540
    %v8542 = vlaneseq
    %v8543 = vshrl.u32 %v8542, 7
    %v8544 = vsub.s32 %v651, %v8543
    %v8545 = vrot.slane %v3835, %v8544
    %v8546 = vlaneseq
    %v8547 = vshrl.u32 %v8546, 7
    %v8548 = vsub.s32 %v651, %v8547
    %v8549 = vrot.slane %v3840, %v8548
    %v8550 = vlaneseq
    %v8551 = vshrl.u32 %v8550, 7
    %v8552 = vsub.s32 %v651, %v8551
    %v8553 = vrot.slane %v3845, %v8552
    %v8554 = vlaneseq
    %v8555 = vshrl.u32 %v8554, 7
    %v8556 = vsub.s32 %v651, %v8555
    %v8557 = vrot.slane %v3850, %v8556
    %v8566 = vlaneseq
    %v8567 = vshrl.u32 %v8566, 7
    %v8568 = vsub.s32 %v651, %v8567
    %v8569 = vrot.slane %v4777, %v8568
    %v8570 = vlaneseq
    %v8571 = vshrl.u32 %v8570, 7
    %v8572 = vsub.s32 %v651, %v8571
    %v8573 = vrot.slane %v4782, %v8572
    %v8574 = vlaneseq
    %v8575 = vshrl.u32 %v8574, 7
    %v8576 = vsub.s32 %v651, %v8575
    %v8577 = vrot.slane %v4787, %v8576
    %v8578 = vlaneseq
    %v8579 = vshrl.u32 %v8578, 7
    %v8580 = vsub.s32 %v651, %v8579
    %v8581 = vrot.slane %v4792, %v8580
    %v8582 = vlaneseq
    %v8583 = vshrl.u32 %v8582, 7
    %v8584 = vsub.s32 %v651, %v8583
    %v8585 = vrot.slane %v4797, %v8584
    %v8586 = vlaneseq
    %v8587 = vshrl.u32 %v8586, 7
    %v8588 = vsub.s32 %v651, %v8587
    %v8589 = vrot.slane %v4802, %v8588
    %v8590 = vlaneseq
    %v8591 = vshrl.u32 %v8590, 7
    %v8592 = vsub.s32 %v651, %v8591
    %v8593 = vrot.slane %v4807, %v8592
    %v8594 = vlaneseq
    %v8595 = vshrl.u32 %v8594, 7
    %v8596 = vsub.s32 %v651, %v8595
    %v8597 = vrot.slane %v4812, %v8596
    %v8606 = vlaneseq
    %v8607 = vshrl.u32 %v8606, 7
    %v8608 = vsub.s32 %v651, %v8607
    %v8609 = vrot.slane %v5739, %v8608
    %v8610 = vlaneseq
    %v8611 = vshrl.u32 %v8610, 7
    %v8612 = vsub.s32 %v651, %v8611
    %v8613 = vrot.slane %v5744, %v8612
    %v8614 = vlaneseq
    %v8615 = vshrl.u32 %v8614, 7
    %v8616 = vsub.s32 %v651, %v8615
    %v8617 = vrot.slane %v5749, %v8616
    %v8618 = vlaneseq
    %v8619 = vshrl.u32 %v8618, 7
    %v8620 = vsub.s32 %v651, %v8619
    %v8621 = vrot.slane %v5754, %v8620
    %v8622 = vlaneseq
    %v8623 = vshrl.u32 %v8622, 7
    %v8624 = vsub.s32 %v651, %v8623
    %v8625 = vrot.slane %v5759, %v8624
    %v8626 = vlaneseq
    %v8627 = vshrl.u32 %v8626, 7
    %v8628 = vsub.s32 %v651, %v8627
    %v8629 = vrot.slane %v5764, %v8628
    %v8630 = vlaneseq
    %v8631 = vshrl.u32 %v8630, 7
    %v8632 = vsub.s32 %v651, %v8631
    %v8633 = vrot.slane %v5769, %v8632
    %v8634 = vlaneseq
    %v8635 = vshrl.u32 %v8634, 7
    %v8636 = vsub.s32 %v651, %v8635
    %v8637 = vrot.slane %v5774, %v8636
    %v8646 = vlaneseq
    %v8647 = vshrl.u32 %v8646, 7
    %v8648 = vsub.s32 %v651, %v8647
    %v8649 = vrot.slane %v6701, %v8648
    %v8650 = vlaneseq
    %v8651 = vshrl.u32 %v8650, 7
    %v8652 = vsub.s32 %v651, %v8651
    %v8653 = vrot.slane %v6706, %v8652
    %v8654 = vlaneseq
    %v8655 = vshrl.u32 %v8654, 7
    %v8656 = vsub.s32 %v651, %v8655
    %v8657 = vrot.slane %v6711, %v8656
    %v8658 = vlaneseq
    %v8659 = vshrl.u32 %v8658, 7
    %v8660 = vsub.s32 %v651, %v8659
    %v8661 = vrot.slane %v6716, %v8660
    %v8662 = vlaneseq
    %v8663 = vshrl.u32 %v8662, 7
    %v8664 = vsub.s32 %v651, %v8663
    %v8665 = vrot.slane %v6721, %v8664
    %v8666 = vlaneseq
    %v8667 = vshrl.u32 %v8666, 7
    %v8668 = vsub.s32 %v651, %v8667
    %v8669 = vrot.slane %v6726, %v8668
    %v8670 = vlaneseq
    %v8671 = vshrl.u32 %v8670, 7
    %v8672 = vsub.s32 %v651, %v8671
    %v8673 = vrot.slane %v6731, %v8672
    %v8674 = vlaneseq
    %v8675 = vshrl.u32 %v8674, 7
    %v8676 = vsub.s32 %v651, %v8675
    %v8677 = vrot.slane %v6736, %v8676
    %v8686 = vlaneseq
    %v8687 = vshrl.u32 %v8686, 7
    %v8688 = vsub.s32 %v651, %v8687
    %v8689 = vrot.slane %v7663, %v8688
    %v8690 = vlaneseq
    %v8691 = vshrl.u32 %v8690, 7
    %v8692 = vsub.s32 %v651, %v8691
    %v8693 = vrot.slane %v7668, %v8692
    %v8694 = vlaneseq
    %v8695 = vshrl.u32 %v8694, 7
    %v8696 = vsub.s32 %v651, %v8695
    %v8697 = vrot.slane %v7673, %v8696
    %v8698 = vlaneseq
    %v8699 = vshrl.u32 %v8698, 7
    %v8700 = vsub.s32 %v651, %v8699
    %v8701 = vrot.slane %v7678, %v8700
    %v8702 = vlaneseq
    %v8703 = vshrl.u32 %v8702, 7
    %v8704 = vsub.s32 %v651, %v8703
    %v8705 = vrot.slane %v7683, %v8704
    %v8706 = vlaneseq
    %v8707 = vshrl.u32 %v8706, 7
    %v8708 = vsub.s32 %v651, %v8707
    %v8709 = vrot.slane %v7688, %v8708
    %v8710 = vlaneseq
    %v8711 = vshrl.u32 %v8710, 7
    %v8712 = vsub.s32 %v651, %v8711
    %v8713 = vrot.slane %v7693, %v8712
    %v8714 = vlaneseq
    %v8715 = vshrl.u32 %v8714, 7
    %v8716 = vsub.s32 %v651, %v8715
    %v8717 = vrot.slane %v7698, %v8716
    %v8726 = vsel %vm8303, %v8409, %v8449
    %v8727 = vsel %vm8303, %v8413, %v8453
    %v8728 = vsel %vm8303, %v8417, %v8457
    %v8729 = vsel %vm8303, %v8421, %v8461
    %v8730 = vsel %vm8303, %v8425, %v8465
    %v8731 = vsel %vm8303, %v8429, %v8469
    %v8732 = vsel %vm8303, %v8433, %v8473
    %v8733 = vsel %vm8303, %v8437, %v8477
    %v8734 = vsel %vm8312, %v8726, %v8489
    %v8735 = vsel %vm8312, %v8727, %v8493
    %v8736 = vsel %vm8312, %v8728, %v8497
    %v8737 = vsel %vm8312, %v8729, %v8501
    %v8738 = vsel %vm8312, %v8730, %v8505
    %v8739 = vsel %vm8312, %v8731, %v8509
    %v8740 = vsel %vm8312, %v8732, %v8513
    %v8741 = vsel %vm8312, %v8733, %v8517
    %v8742 = vsel %vm8321, %v8734, %v8529
    %v8743 = vsel %vm8321, %v8735, %v8533
    %v8744 = vsel %vm8321, %v8736, %v8537
    %v8745 = vsel %vm8321, %v8737, %v8541
    %v8746 = vsel %vm8321, %v8738, %v8545
    %v8747 = vsel %vm8321, %v8739, %v8549
    %v8748 = vsel %vm8321, %v8740, %v8553
    %v8749 = vsel %vm8321, %v8741, %v8557
    %v8750 = vsel %vm8330, %v8742, %v8569
    %v8751 = vsel %vm8330, %v8743, %v8573
    %v8752 = vsel %vm8330, %v8744, %v8577
    %v8753 = vsel %vm8330, %v8745, %v8581
    %v8754 = vsel %vm8330, %v8746, %v8585
    %v8755 = vsel %vm8330, %v8747, %v8589
    %v8756 = vsel %vm8330, %v8748, %v8593
    %v8757 = vsel %vm8330, %v8749, %v8597
    %v8758 = vsel %vm8339, %v8750, %v8609
    %v8759 = vsel %vm8339, %v8751, %v8613
    %v8760 = vsel %vm8339, %v8752, %v8617
    %v8761 = vsel %vm8339, %v8753, %v8621
    %v8762 = vsel %vm8339, %v8754, %v8625
    %v8763 = vsel %vm8339, %v8755, %v8629
    %v8764 = vsel %vm8339, %v8756, %v8633
    %v8765 = vsel %vm8339, %v8757, %v8637
    %v8766 = vsel %vm8348, %v8758, %v8649
    %v8767 = vsel %vm8348, %v8759, %v8653
    %v8768 = vsel %vm8348, %v8760, %v8657
    %v8769 = vsel %vm8348, %v8761, %v8661
    %v8770 = vsel %vm8348, %v8762, %v8665
    %v8771 = vsel %vm8348, %v8763, %v8669
    %v8772 = vsel %vm8348, %v8764, %v8673
    %v8773 = vsel %vm8348, %v8765, %v8677
    %v8774 = vsel %vm8357, %v8766, %v8689
    %v8775 = vsel %vm8357, %v8767, %v8693
    %v8776 = vsel %vm8357, %v8768, %v8697
    %v8777 = vsel %vm8357, %v8769, %v8701
    %v8778 = vsel %vm8357, %v8770, %v8705
    %v8779 = vsel %vm8357, %v8771, %v8709
    %v8780 = vsel %vm8357, %v8772, %v8713
    %v8781 = vsel %vm8357, %v8773, %v8717
    %v8782 = vsel %vm699, %v8774, 0.0
    %v8783 = vsel %vm699, %v8775, 0.0
    %v8784 = vsel %vm699, %v8776, 0.0
    %v8785 = vsel %vm699, %v8777, 0.0
    %v8786 = vsel %vm699, %v8778, 0.0
    %v8787 = vsel %vm699, %v8779, 0.0
    %v8788 = vsel %vm699, %v8780, 0.0
    %v8789 = vsel %vm699, %v8781, 0.0
    %8790 = vst [vmem:[#allocation17] sm:$0xff] %v8782
    %8791 = vst [vmem:[#allocation17 + $0x8] sm:$0xff] %v8783
    %8792 = vst [vmem:[#allocation17 + $0x10] sm:$0xff] %v8784
    %8793 = vst [vmem:[#allocation17 + $0x18] sm:$0xff] %v8785
    %8794 = vst [vmem:[#allocation17 + $0x20] sm:$0xff] %v8786
    %8795 = vst [vmem:[#allocation17 + $0x28] sm:$0xff] %v8787
    %8796 = vst [vmem:[#allocation17 + $0x30] sm:$0xff] %v8788
    %8797 = vst [vmem:[#allocation17 + $0x38] sm:$0xff] %v8789
    // Predicated region
    $region74: #{tpu_custom_call.1} parent=1 // pred_check
      _
    $region75: #{tpu_custom_call.1} parent=1 // pred_check_branch
      %8799 = sbr.rel (0) target = $region77
    $region76: #{tpu_custom_call.1} parent=1 // pred_region
      %s8801 = ssub.s32 1024, 1024
      %8802 = vsyncadd [#allocation6], %s8801
      %s8803 = sshll.u32 [#allocation16], 4
      %s8804 = int_to_ptr.vmem [resolvable:$true] %s8803
      %8809 = dma.vmem_to_hbm [thread:$0]  %s8804, 1024, %s10, [#allocation6], 128, 128, 8
    $region77: #{tpu_custom_call.1} parent=1 // pred_fallthru
      _
    // Predicated region
    $region78: #{tpu_custom_call.1} parent=1 // pred_check
      _
    $region79: #{tpu_custom_call.1} parent=1 // pred_check_branch
      %8811 = sbr.rel (0) target = $region81
    $region80: #{tpu_custom_call.1} parent=1 // pred_region
      %s8813 = ssub.s32 1024, 1024
      %8814 = vsyncadd [#allocation18], %s8813
      %s8815 = sshll.u32 [#allocation17], 4
      %s8816 = int_to_ptr.vmem [resolvable:$true] %s8815
      %8821 = dma.vmem_to_hbm [thread:$0]  %s8816, 1024, %s11, [#allocation18], 128, 128, 8
    $region81: #{tpu_custom_call.1} parent=1 // pred_fallthru
      _
    // Predicated region
    $region82: #{tpu_custom_call.1} parent=1 // pred_check
      _
    $region83: #{tpu_custom_call.1} parent=1 // pred_check_branch
      %8823 = sbr.rel (0) target = $region85
    $region84: #{tpu_custom_call.1} parent=1 // pred_region
      %8824 = dma.done [#allocation6], 1024
    $region85: #{tpu_custom_call.1} parent=1 // pred_fallthru
      _
    // Predicated region
    $region86: #{tpu_custom_call.1} parent=1 // pred_check
      _
    $region87: #{tpu_custom_call.1} parent=1 // pred_check_branch
      %8826 = sbr.rel (0) target = $region89
    $region88: #{tpu_custom_call.1} parent=1 // pred_region
      %8827 = dma.done [#allocation18], 1024
    $region89: #{tpu_custom_call.1} parent=1 // pred_fallthru
      _
    %8828 = vsyncpa [#allocation5], 1
    %8829 = vsyncpa [#allocation8], 1
    %8830 = vsyncpa [#allocation11], 1
    %8831 = vsyncpa [#allocation14], 1
    %8832 = vsyncpa [#allocation6], 1
    %8833 = vsyncpa [#allocation18], 1

</llo_original>
